<compile_context>
chip_gen: v7x
topology: tpu7x:2x2x1
jax: 0.10.0
libtpu: 0.0.40
codegen_flags: <defaults>
</compile_context>

<pallas_src>
import functools

import jax
import jax.numpy as jnp
from jax import lax
from jax.experimental import pallas as pl
from jax.experimental.pallas import tpu as pltpu

EPS_REVIN = 1e-5      # RevIN eps (module sets self.eps = 1e-05)
EPS_LN = 1e-5         # nn.LayerNorm default eps
LEAKY_SLOPE = 0.01    # nn.LeakyReLU default negative_slope

# Fused-parameter order as passed to pallas_call (after x).
PARAM_ORDER = [
    "posb", "in_W",
    "Wq", "bq", "Wk", "bk", "Wv", "bv", "Wo", "bo",
    "ln1w", "ln1b", "fc1", "fc2", "ln2w", "ln2b",
    "head_W", "head_b",
]


def _layer_norm(x, w, b):
    mu = jnp.mean(x, axis=-1, keepdims=True)
    var = jnp.mean((x - mu) ** 2, axis=-1, keepdims=True)
    return (x - mu) * lax.rsqrt(var + EPS_LN) * w + b


# ------------------------------- kernel --------------------------------------
def sensitive_hue_kernel(
    x_ref, posb_ref, inW_ref,
    Wq_ref, bq_ref, Wk_ref, bk_ref, Wv_ref, bv_ref, Wo_ref, bo_ref,
    ln1w_ref, ln1b_ref, fc1_ref, fc2_ref, ln2w_ref, ln2b_ref,
    headW_ref, headb_ref,
    out_ref,
    *, num_layers, head_num, tb, seq_len, f_in, d_model, out_pad):
    S, F, D, H, P = seq_len, f_in, d_model, head_num, out_pad
    dh = D // H
    M = tb * S
    bf16 = jnp.bfloat16

    x = x_ref[...]                                           # (tb, S, F) f32

    # --- RevIN 'norm': stats over the time axis, per (sequence, feature) -----
    mean = jnp.mean(x, axis=1, keepdims=True)                # (tb, 1, F)
    var = jnp.mean((x - mean) ** 2, axis=1, keepdims=True)   # unbiased=False
    stdev = jnp.sqrt(var + EPS_REVIN)
    xn = ((x - mean) * lax.rsqrt(var + EPS_REVIN)).reshape(M, F)

    # --- input projection + (pos_embed + in_bias) table -----------------------
    h = jnp.dot(xn.astype(bf16), inW_ref[...],
                preferred_element_type=jnp.float32)          # (M, D) f32
    h = (h.reshape(tb, S, D) + posb_ref[...]).reshape(M, D)  # broadcast over tb

    # --- transformer encoder stack (static unroll, L is small) ---------------
    for l in range(num_layers):
        hb = h.astype(bf16)
        # Full-width projections; 1/sqrt(dh) already folded into Wq/bq.
        q = jnp.dot(hb, Wq_ref[l], preferred_element_type=jnp.float32) + bq_ref[l]
        k = jnp.dot(hb, Wk_ref[l], preferred_element_type=jnp.float32) + bk_ref[l]
        v = jnp.dot(hb, Wv_ref[l], preferred_element_type=jnp.float32) + bv_ref[l]
        q3 = q.reshape(tb, S, D).astype(bf16)                # leading split only
        k3 = k.reshape(tb, S, D).astype(bf16)
        v3 = v.reshape(tb, S, D).astype(bf16)

        ctx_heads = []
        for hh in range(H):                                  # static, H is small
            sl = slice(hh * dh, (hh + 1) * dh)
            sc = jnp.einsum('bqd,bkd->bqk', q3[..., sl], k3[..., sl],
                            preferred_element_type=jnp.float32)
            m = jnp.max(sc, axis=-1, keepdims=True)
            e = jnp.exp(sc - m)
            att = e * pl.reciprocal(jnp.sum(e, axis=-1, keepdims=True),
                                    approx=True)
            ctx = jnp.einsum('bqk,bkd->bqd', att.astype(bf16), v3[..., sl],
                             preferred_element_type=jnp.float32)
            ctx_heads.append(ctx.astype(bf16))
        ctx = jnp.concatenate(ctx_heads, axis=-1).reshape(M, D)   # (M, D) bf16
        attn_out = (jnp.dot(ctx, Wo_ref[l], preferred_element_type=jnp.float32)
                    + bo_ref[l])

        h = _layer_norm(h + attn_out, ln1w_ref[l], ln1b_ref[l])
        ff = jnp.dot(h.astype(bf16), fc1_ref[l],
                     preferred_element_type=jnp.float32)     # Linear, no bias
        ff = jnp.where(ff > 0, ff, LEAKY_SLOPE * ff)         # LeakyReLU
        ff = jnp.dot(ff.astype(bf16), fc2_ref[l],
                     preferred_element_type=jnp.float32)     # Linear, no bias
        h = _layer_norm(h + ff, ln2w_ref[l], ln2b_ref[l])

    # --- fused, zero-padded rec|sigma head + RevIN denorm (one FMA) ----------
    heads = (jnp.dot(h.astype(bf16), headW_ref[...],
                     preferred_element_type=jnp.float32)
             + headb_ref[...])                               # (M, P) f32
    ones = jnp.ones((tb, 1, P - F), jnp.float32)
    zeros = jnp.zeros((tb, 1, P - F), jnp.float32)
    scale = jnp.concatenate([stdev, ones], axis=-1)          # (tb, 1, P)
    shift = jnp.concatenate([mean, zeros], axis=-1)          # (tb, 1, P)
    # lane-dense (P is a multiple of 128) unmasked block store
    out_ref[...] = heads.reshape(tb, S, P) * scale + shift


# ------------------------------- wrapper --------------------------------------
def _vmem_bytes_estimate(tb, S, F, P, D, Hfc, L):
    """Rough per-grid-step VMEM footprint (weights single-buffered, io double)."""
    f32, bf16 = 4, 2
    M = tb * S
    weights = (S * D * f32 + F * D * bf16
               + L * (3 * (D * D * bf16 + D * f32)     # Q/K/V W + b
                      + D * D * bf16 + D * f32         # out projection
                      + 4 * D * f32                    # two LayerNorms
                      + 2 * D * Hfc * bf16)            # fc1 + fc2
               + D * P * bf16 + P * f32)               # fused rec|sigma head
    io = 2 * M * F * f32 + 2 * M * P * f32             # double-buffered x / out
    acts = (M * (6 * D + Hfc + 2 * P) * f32            # h/q/k/v/ff/heads temps
            + M * 4 * D * bf16
            + 3 * tb * S * S * f32)                    # per-head score temps
    return int(1.5 * (weights + io + acts))


def _choose_tb(B, S, footprint_fn, budget, target_m=256):
    divisors = [d for d in range(1, B + 1) if B % d == 0]
    feasible = [d for d in divisors if footprint_fn(d) <= budget] or [1]
    hitting = [d for d in feasible if d * S >= target_m]
    tb = min(hitting) if hitting else max(feasible)
    # keep at least 2 grid steps when possible so v7x's two TCs both get work
    if B // tb < 2:
        smaller = [d for d in feasible if d < tb]
        if smaller:
            tb = max(smaller)
    return tb


def _param_spec(a):
    index_map = lambda b, n=a.ndim: (0,) * n
    try:
        # constant index_map -> fetched once; no need for a double buffer
        return pl.BlockSpec(a.shape, index_map, pipeline_mode=pl.Buffered(1))
    except (TypeError, ValueError):
        return pl.BlockSpec(a.shape, index_map)


def sensitive_hue_forward(x, params, *, head_num, num_layers, tb=None):
    B, S, F = x.shape
    D = params["in_W"].shape[1]
    Hfc = params["fc1"].shape[-1]
    L = num_layers
    dh = D // head_num
    P = pl.cdiv(2 * F, 128) * 128          # padded rec|sigma output width

    try:
        vmem_cap = pltpu.get_tpu_info().vmem_capacity_bytes
    except Exception:
        vmem_cap = 64 * 1024 * 1024        # conservative (v7x-sized) fallback
    vmem_budget = int(vmem_cap * 0.75)

    if tb is None:
        tb = _choose_tb(B, S,
                        lambda t: _vmem_bytes_estimate(t, S, F, P, D, Hfc, L),
                        vmem_budget)
    tb = min(tb, B)
    assert B % tb == 0, "batch must be divisible by the batch tile"

    f32, bf16 = jnp.float32, jnp.bfloat16
    scale = 1.0 / float(dh) ** 0.5
    head_W = jnp.concatenate([params["rec_W"], params["sig_W"]], axis=-1)
    head_b = jnp.concatenate([params["rec_b"], params["sig_b"]], axis=-1)
    head_W = jnp.pad(head_W, ((0, 0), (0, P - 2 * F)))       # lane-dense head
    head_b = jnp.pad(head_b, ((0, 0), (0, P - 2 * F)))
    fused = {
        "posb": (params["pos"] + params["in_b"]).astype(f32),   # pos + in_bias
        "in_W": params["in_W"].astype(bf16),
        "Wq": (params["Wq"] * scale).astype(bf16),              # scale folded
        "bq": (params["bq"] * scale).astype(f32),
        "Wk": params["Wk"].astype(bf16), "bk": params["bk"].astype(f32),
        "Wv": params["Wv"].astype(bf16), "bv": params["bv"].astype(f32),
        "Wo": params["Wo"].astype(bf16), "bo": params["bo"].astype(f32),
        "ln1w": params["ln1w"].astype(f32), "ln1b": params["ln1b"].astype(f32),
        "fc1": params["fc1"].astype(bf16), "fc2": params["fc2"].astype(bf16),
        "ln2w": params["ln2w"].astype(f32), "ln2b": params["ln2b"].astype(f32),
        "head_W": head_W.astype(bf16), "head_b": head_b.astype(f32),
    }

    kern = functools.partial(sensitive_hue_kernel, num_layers=L,
                             head_num=head_num, tb=tb, seq_len=S, f_in=F,
                             d_model=D, out_pad=P)

    in_specs = [pl.BlockSpec((tb, S, F), lambda b: (b, 0, 0))]
    for name in PARAM_ORDER:
        in_specs.append(_param_spec(fused[name]))
    out_specs = pl.BlockSpec((tb, S, P), lambda b: (b, 0, 0))

    out = pl.pallas_call(
        kern,
        grid=(B // tb,),
        in_specs=in_specs,
        out_specs=out_specs,
        out_shape=jax.ShapeDtypeStruct((B, S, P), jnp.float32),
        compiler_params=pltpu.CompilerParams(
            dimension_semantics=("parallel",),      # shard batch tiles on v7x
            vmem_limit_bytes=vmem_budget),
    )(x, *[fused[n] for n in PARAM_ORDER])
    return out[..., :F], out[..., F:2 * F]


# ----------------------------- pure-JAX reference ----------------------------
def _softmax_ref(x):
    m = jnp.max(x, axis=-1, keepdims=True)
    e = jnp.exp(x - m)
    return e / jnp.sum(e, axis=-1, keepdims=True)


def _mha_ref(h, Wq, bq, Wk, bk, Wv, bv, Wo, bo, head_num):
    S, D = h.shape
    dh = D // head_num
    q = h @ Wq + bq
    k = h @ Wk + bk
    v = h @ Wv + bv
    scale = 1.0 / float(dh) ** 0.5
    outs = []
    for hh in range(head_num):
        qs = q[:, hh * dh:(hh + 1) * dh]
        ks = k[:, hh * dh:(hh + 1) * dh]
        vs = v[:, hh * dh:(hh + 1) * dh]
        att = _softmax_ref((qs @ ks.T) * scale)
        outs.append(att @ vs)
    o = jnp.concatenate(outs, axis=-1)
    return o @ Wo + bo


def ref_forward(x, params, *, head_num, num_layers):
    """Pure-JAX f32 reference (identical math) used as a correctness check."""
    def one(xb):
        mean = jnp.mean(xb, axis=0, keepdims=True)
        var = jnp.mean((xb - mean) ** 2, axis=0, keepdims=True)
        stdev = jnp.sqrt(var + EPS_REVIN)
        xn = (xb - mean) / stdev
        h = xn @ params["in_W"] + params["in_b"] + params["pos"]
        for l in range(num_layers):
            a = _mha_ref(h, params["Wq"][l], params["bq"][l], params["Wk"][l],
                         params["bk"][l], params["Wv"][l], params["bv"][l],
                         params["Wo"][l], params["bo"][l], head_num)
            h = _layer_norm(h + a, params["ln1w"][l], params["ln1b"][l])
            ff = h @ params["fc1"][l]
            ff = jnp.where(ff > 0, ff, LEAKY_SLOPE * ff)
            ff = ff @ params["fc2"][l]
            h = _layer_norm(h + ff, params["ln2w"][l], params["ln2b"][l])
        rec = h @ params["rec_W"] + params["rec_b"]
        rec = rec * stdev + mean
        logv = h @ params["sig_W"] + params["sig_b"]
        return rec, logv
    return jax.vmap(one)(x)


def init_params(key, S, F, D, Hfc, L):
    keys = jax.random.split(key, 17)
    def w(k, shape, scale=0.1):
        return jax.random.normal(k, shape, jnp.float32) * scale
    return dict(
        pos=w(keys[0], (S, D)),                                  # nn.Embedding(step_num_in, D)
        in_W=w(keys[1], (F, D)), in_b=w(keys[2], (1, D)),        # in_linear
        Wq=w(keys[3], (L, D, D)), bq=w(keys[4], (L, 1, D)),
        Wk=w(keys[5], (L, D, D)), bk=w(keys[6], (L, 1, D)),
        Wv=w(keys[7], (L, D, D)), bv=w(keys[8], (L, 1, D)),
        Wo=w(keys[9], (L, D, D)), bo=w(keys[10], (L, 1, D)),
        ln1w=jnp.ones((L, 1, D), jnp.float32),
        ln1b=jnp.zeros((L, 1, D), jnp.float32),
        fc1=w(keys[11], (L, D, Hfc)), fc2=w(keys[12], (L, Hfc, D)),  # FF (no bias)
        ln2w=jnp.ones((L, 1, D), jnp.float32),
        ln2b=jnp.zeros((L, 1, D), jnp.float32),
        rec_W=w(keys[13], (D, F)), rec_b=w(keys[14], (1, F)),    # rec_linear
        sig_W=w(keys[15], (D, F)), sig_b=w(keys[16], (1, F)),    # sigma_linear
    )


if __name__ == "__main__":
    B, S, F = 8, 8, 4            # batch, step_num_in (seq), f_in (features)
    D, H, Hfc, L = 32, 4, 64, 2  # dim_model, head_num, dim_hidden_fc, encode_layer_num

    key = jax.random.PRNGKey(0)
    kx, kp = jax.random.split(key)
    x = jax.random.normal(kx, (B, S, F), jnp.float32)
    params = init_params(kp, S, F, D, Hfc, L)

    rec, logv = sensitive_hue_forward(x, params, head_num=H, num_layers=L)
    jax.block_until_ready((rec, logv))

    rec_ref, logv_ref = ref_forward(x, params, head_num=H, num_layers=L)
    assert rec.shape == (B, S, F) and logv.shape == (B, S, F)
    # tolerance covers bf16 matmul operands + the approx (EUP) softmax recip
    assert jnp.allclose(rec, rec_ref, atol=5e-2, rtol=5e-2), \
        float(jnp.max(jnp.abs(rec - rec_ref)))
    assert jnp.allclose(logv, logv_ref, atol=5e-2, rtol=5e-2), \
        float(jnp.max(jnp.abs(logv - logv_ref)))
    print("KERNEL_OK")
</pallas_src>

<mosaic_0001>
module attributes {stable_mosaic.version = 11 : i64} {
  func.func @sensitive_hue_kernel(%arg0: i32, %arg1: memref<4x8x4xf32, #tpu.memory_space<vmem>>, %arg2: memref<8x32xf32, #tpu.memory_space<vmem>>, %arg3: memref<4x32xbf16, #tpu.memory_space<vmem>>, %arg4: memref<2x32x32xbf16, #tpu.memory_space<vmem>>, %arg5: memref<2x1x32xf32, #tpu.memory_space<vmem>>, %arg6: memref<2x32x32xbf16, #tpu.memory_space<vmem>>, %arg7: memref<2x1x32xf32, #tpu.memory_space<vmem>>, %arg8: memref<2x32x32xbf16, #tpu.memory_space<vmem>>, %arg9: memref<2x1x32xf32, #tpu.memory_space<vmem>>, %arg10: memref<2x32x32xbf16, #tpu.memory_space<vmem>>, %arg11: memref<2x1x32xf32, #tpu.memory_space<vmem>>, %arg12: memref<2x1x32xf32, #tpu.memory_space<vmem>>, %arg13: memref<2x1x32xf32, #tpu.memory_space<vmem>>, %arg14: memref<2x32x64xbf16, #tpu.memory_space<vmem>>, %arg15: memref<2x64x32xbf16, #tpu.memory_space<vmem>>, %arg16: memref<2x1x32xf32, #tpu.memory_space<vmem>>, %arg17: memref<2x1x32xf32, #tpu.memory_space<vmem>>, %arg18: memref<32x128xbf16, #tpu.memory_space<vmem>>, %arg19: memref<1x128xf32, #tpu.memory_space<vmem>>, %arg20: memref<4x8x128xf32, #tpu.memory_space<vmem>>) attributes {dimension_semantics = [#tpu.dimension_semantics<parallel>], iteration_bounds = array<i64: 2>, scalar_prefetch = 0 : i64, scratch_operands = 0 : i64, tpu.core_type = #tpu.core_type<tc>, window_params = [{transform_indices = @transform_0, window_bounds = array<i64: 4, 8, 4>}, {pipeline_mode = #tpu.pipeline_mode<synchronous>, transform_indices = @transform_1, window_bounds = array<i64: 8, 32>}, {pipeline_mode = #tpu.pipeline_mode<synchronous>, transform_indices = @transform_2, window_bounds = array<i64: 4, 32>}, {pipeline_mode = #tpu.pipeline_mode<synchronous>, transform_indices = @transform_3, window_bounds = array<i64: 2, 32, 32>}, {pipeline_mode = #tpu.pipeline_mode<synchronous>, transform_indices = @transform_4, window_bounds = array<i64: 2, 1, 32>}, {pipeline_mode = #tpu.pipeline_mode<synchronous>, transform_indices = @transform_5, window_bounds = array<i64: 2, 32, 32>}, {pipeline_mode = #tpu.pipeline_mode<synchronous>, transform_indices = @transform_6, window_bounds = array<i64: 2, 1, 32>}, {pipeline_mode = #tpu.pipeline_mode<synchronous>, transform_indices = @transform_7, window_bounds = array<i64: 2, 32, 32>}, {pipeline_mode = #tpu.pipeline_mode<synchronous>, transform_indices = @transform_8, window_bounds = array<i64: 2, 1, 32>}, {pipeline_mode = #tpu.pipeline_mode<synchronous>, transform_indices = @transform_9, window_bounds = array<i64: 2, 32, 32>}, {pipeline_mode = #tpu.pipeline_mode<synchronous>, transform_indices = @transform_10, window_bounds = array<i64: 2, 1, 32>}, {pipeline_mode = #tpu.pipeline_mode<synchronous>, transform_indices = @transform_11, window_bounds = array<i64: 2, 1, 32>}, {pipeline_mode = #tpu.pipeline_mode<synchronous>, transform_indices = @transform_12, window_bounds = array<i64: 2, 1, 32>}, {pipeline_mode = #tpu.pipeline_mode<synchronous>, transform_indices = @transform_13, window_bounds = array<i64: 2, 32, 64>}, {pipeline_mode = #tpu.pipeline_mode<synchronous>, transform_indices = @transform_14, window_bounds = array<i64: 2, 64, 32>}, {pipeline_mode = #tpu.pipeline_mode<synchronous>, transform_indices = @transform_15, window_bounds = array<i64: 2, 1, 32>}, {pipeline_mode = #tpu.pipeline_mode<synchronous>, transform_indices = @transform_16, window_bounds = array<i64: 2, 1, 32>}, {pipeline_mode = #tpu.pipeline_mode<synchronous>, transform_indices = @transform_17, window_bounds = array<i64: 32, 128>}, {pipeline_mode = #tpu.pipeline_mode<synchronous>, transform_indices = @transform_18, window_bounds = array<i64: 1, 128>}, {transform_indices = @transform_19, window_bounds = array<i64: 4, 8, 128>}]} {
    %c0 = arith.constant 0 : index
    %c0_0 = arith.constant 0 : index
    %c0_1 = arith.constant 0 : index
    %0 = vector.load %arg1[%c0, %c0_0, %c0_1] : memref<4x8x4xf32, #tpu.memory_space<vmem>>, vector<4x8x4xf32>
    %cst = arith.constant dense<0.000000e+00> : vector<4x4xf32>
    %1 = vector.multi_reduction <add>, %0, %cst [1] : vector<4x8x4xf32> to vector<4x4xf32>
    %2 = vector.shape_cast %1 : vector<4x4xf32> to vector<4x1x4xf32>
    %cst_2 = arith.constant 8.000000e+00 : f32
    %3 = vector.broadcast %cst_2 : f32 to vector<4x1x4xf32>
    %4 = arith.divf %2, %3 : vector<4x1x4xf32>
    %5 = vector.broadcast %4 : vector<4x1x4xf32> to vector<4x8x4xf32>
    %6 = arith.subf %0, %5 : vector<4x8x4xf32>
    %7 = arith.mulf %6, %6 : vector<4x8x4xf32>
    %cst_3 = arith.constant dense<0.000000e+00> : vector<4x4xf32>
    %8 = vector.multi_reduction <add>, %7, %cst_3 [1] : vector<4x8x4xf32> to vector<4x4xf32>
    %9 = vector.shape_cast %8 : vector<4x4xf32> to vector<4x1x4xf32>
    %cst_4 = arith.constant 8.000000e+00 : f32
    %10 = vector.broadcast %cst_4 : f32 to vector<4x1x4xf32>
    %11 = arith.divf %9, %10 : vector<4x1x4xf32>
    %cst_5 = arith.constant 9.99999974E-6 : f32
    %12 = vector.broadcast %cst_5 : f32 to vector<4x1x4xf32>
    %13 = arith.addf %11, %12 : vector<4x1x4xf32>
    %14 = math.sqrt %13 : vector<4x1x4xf32>
    %15 = vector.broadcast %4 : vector<4x1x4xf32> to vector<4x8x4xf32>
    %16 = arith.subf %0, %15 : vector<4x8x4xf32>
    %cst_6 = arith.constant 9.99999974E-6 : f32
    %17 = vector.broadcast %cst_6 : f32 to vector<4x1x4xf32>
    %18 = arith.addf %11, %17 : vector<4x1x4xf32>
    %19 = math.rsqrt %18 : vector<4x1x4xf32>
    %20 = vector.broadcast %19 : vector<4x1x4xf32> to vector<4x8x4xf32>
    %21 = arith.mulf %16, %20 : vector<4x8x4xf32>
    %22 = vector.shape_cast %21 : vector<4x8x4xf32> to vector<32x4xf32>
    %23 = arith.truncf %22 : vector<32x4xf32> to vector<32x4xbf16>
    %c0_7 = arith.constant 0 : index
    %c0_8 = arith.constant 0 : index
    %24 = vector.load %arg3[%c0_7, %c0_8] : memref<4x32xbf16, #tpu.memory_space<vmem>>, vector<4x32xbf16>
    %cst_9 = arith.constant dense<0.000000e+00> : vector<32x32xf32>
    %25 = tpu.matmul %23, %24, %cst_9 {dimension_numbers = #tpu.dot_dimension_numbers<[1], [0], [0], [1], [0, 0, 1, 1], [], []>} : vector<32x4xbf16>, vector<4x32xbf16>, vector<32x32xf32> -> vector<32x32xf32>
    %26 = vector.shape_cast %25 : vector<32x32xf32> to vector<4x8x32xf32>
    %c0_10 = arith.constant 0 : index
    %c0_11 = arith.constant 0 : index
    %27 = vector.load %arg2[%c0_10, %c0_11] : memref<8x32xf32, #tpu.memory_space<vmem>>, vector<8x32xf32>
    %28 = vector.shape_cast %27 : vector<8x32xf32> to vector<1x8x32xf32>
    %29 = vector.broadcast %28 : vector<1x8x32xf32> to vector<4x8x32xf32>
    %30 = arith.addf %26, %29 : vector<4x8x32xf32>
    %31 = vector.shape_cast %30 : vector<4x8x32xf32> to vector<32x32xf32>
    %32 = arith.truncf %31 : vector<32x32xf32> to vector<32x32xbf16>
    %c0_12 = arith.constant 0 : index
    %c0_13 = arith.constant 0 : index
    %c0_14 = arith.constant 0 : index
    %33 = vector.load %arg4[%c0_12, %c0_13, %c0_14] : memref<2x32x32xbf16, #tpu.memory_space<vmem>>, vector<1x32x32xbf16>
    %34 = vector.shape_cast %33 : vector<1x32x32xbf16> to vector<32x32xbf16>
    %cst_15 = arith.constant dense<0.000000e+00> : vector<32x32xf32>
    %35 = tpu.matmul %32, %34, %cst_15 {dimension_numbers = #tpu.dot_dimension_numbers<[1], [0], [0], [1], [0, 0, 1, 1], [], []>} : vector<32x32xbf16>, vector<32x32xbf16>, vector<32x32xf32> -> vector<32x32xf32>
    %c0_16 = arith.constant 0 : index
    %c0_17 = arith.constant 0 : index
    %c0_18 = arith.constant 0 : index
    %36 = vector.load %arg5[%c0_16, %c0_17, %c0_18] : memref<2x1x32xf32, #tpu.memory_space<vmem>>, vector<1x1x32xf32>
    %37 = vector.shape_cast %36 : vector<1x1x32xf32> to vector<1x32xf32>
    %38 = vector.broadcast %37 : vector<1x32xf32> to vector<32x32xf32>
    %39 = arith.addf %35, %38 : vector<32x32xf32>
    %c0_19 = arith.constant 0 : index
    %c0_20 = arith.constant 0 : index
    %c0_21 = arith.constant 0 : index
    %40 = vector.load %arg6[%c0_19, %c0_20, %c0_21] : memref<2x32x32xbf16, #tpu.memory_space<vmem>>, vector<1x32x32xbf16>
    %41 = vector.shape_cast %40 : vector<1x32x32xbf16> to vector<32x32xbf16>
    %cst_22 = arith.constant dense<0.000000e+00> : vector<32x32xf32>
    %42 = tpu.matmul %32, %41, %cst_22 {dimension_numbers = #tpu.dot_dimension_numbers<[1], [0], [0], [1], [0, 0, 1, 1], [], []>} : vector<32x32xbf16>, vector<32x32xbf16>, vector<32x32xf32> -> vector<32x32xf32>
    %c0_23 = arith.constant 0 : index
    %c0_24 = arith.constant 0 : index
    %c0_25 = arith.constant 0 : index
    %43 = vector.load %arg7[%c0_23, %c0_24, %c0_25] : memref<2x1x32xf32, #tpu.memory_space<vmem>>, vector<1x1x32xf32>
    %44 = vector.shape_cast %43 : vector<1x1x32xf32> to vector<1x32xf32>
    %45 = vector.broadcast %44 : vector<1x32xf32> to vector<32x32xf32>
    %46 = arith.addf %42, %45 : vector<32x32xf32>
    %c0_26 = arith.constant 0 : index
    %c0_27 = arith.constant 0 : index
    %c0_28 = arith.constant 0 : index
    %47 = vector.load %arg8[%c0_26, %c0_27, %c0_28] : memref<2x32x32xbf16, #tpu.memory_space<vmem>>, vector<1x32x32xbf16>
    %48 = vector.shape_cast %47 : vector<1x32x32xbf16> to vector<32x32xbf16>
    %cst_29 = arith.constant dense<0.000000e+00> : vector<32x32xf32>
    %49 = tpu.matmul %32, %48, %cst_29 {dimension_numbers = #tpu.dot_dimension_numbers<[1], [0], [0], [1], [0, 0, 1, 1], [], []>} : vector<32x32xbf16>, vector<32x32xbf16>, vector<32x32xf32> -> vector<32x32xf32>
    %c0_30 = arith.constant 0 : index
    %c0_31 = arith.constant 0 : index
    %c0_32 = arith.constant 0 : index
    %50 = vector.load %arg9[%c0_30, %c0_31, %c0_32] : memref<2x1x32xf32, #tpu.memory_space<vmem>>, vector<1x1x32xf32>
    %51 = vector.shape_cast %50 : vector<1x1x32xf32> to vector<1x32xf32>
    %52 = vector.broadcast %51 : vector<1x32xf32> to vector<32x32xf32>
    %53 = arith.addf %49, %52 : vector<32x32xf32>
    %54 = vector.shape_cast %39 : vector<32x32xf32> to vector<4x8x32xf32>
    %55 = arith.truncf %54 : vector<4x8x32xf32> to vector<4x8x32xbf16>
    %56 = vector.shape_cast %46 : vector<32x32xf32> to vector<4x8x32xf32>
    %57 = arith.truncf %56 : vector<4x8x32xf32> to vector<4x8x32xbf16>
    %58 = vector.shape_cast %53 : vector<32x32xf32> to vector<4x8x32xf32>
    %59 = arith.truncf %58 : vector<4x8x32xf32> to vector<4x8x32xbf16>
    %60 = vector.extract_strided_slice %55 {offsets = [0, 0, 0], sizes = [4, 8, 8], strides = [1, 1, 1]} : vector<4x8x32xbf16> to vector<4x8x8xbf16>
    %61 = vector.extract_strided_slice %57 {offsets = [0, 0, 0], sizes = [4, 8, 8], strides = [1, 1, 1]} : vector<4x8x32xbf16> to vector<4x8x8xbf16>
    "tpu.trace_start"() <{level = 10 : i32, message = "bqd,bkd->bqk"}> : () -> ()
    %cst_33 = arith.constant dense<0.000000e+00> : vector<4x8x8xf32>
    %62 = tpu.matmul %60, %61, %cst_33 {dimension_numbers = #tpu.dot_dimension_numbers<[2], [2], [1], [1], [0, 0, 0, 1, 1, 1], [0], [0]>} : vector<4x8x8xbf16>, vector<4x8x8xbf16>, vector<4x8x8xf32> -> vector<4x8x8xf32>
    "tpu.trace_stop"() : () -> ()
    %cst_34 = arith.constant dense<0xFF800000> : vector<4x8xf32>
    %63 = vector.multi_reduction <maximumf>, %62, %cst_34 [2] : vector<4x8x8xf32> to vector<4x8xf32>
    %64 = vector.shape_cast %63 : vector<4x8xf32> to vector<4x8x1xf32>
    %65 = vector.broadcast %64 : vector<4x8x1xf32> to vector<4x8x8xf32>
    %66 = arith.subf %62, %65 : vector<4x8x8xf32>
    %67 = math.exp %66 : vector<4x8x8xf32>
    %cst_35 = arith.constant dense<0.000000e+00> : vector<4x8xf32>
    %68 = vector.multi_reduction <add>, %67, %cst_35 [2] : vector<4x8x8xf32> to vector<4x8xf32>
    %69 = vector.shape_cast %68 : vector<4x8xf32> to vector<4x8x1xf32>
    %70 = tpu.reciprocal %69 {approx = true} : vector<4x8x1xf32> -> vector<4x8x1xf32>
    %71 = vector.broadcast %70 : vector<4x8x1xf32> to vector<4x8x8xf32>
    %72 = arith.mulf %67, %71 : vector<4x8x8xf32>
    %73 = arith.truncf %72 : vector<4x8x8xf32> to vector<4x8x8xbf16>
    %74 = vector.extract_strided_slice %59 {offsets = [0, 0, 0], sizes = [4, 8, 8], strides = [1, 1, 1]} : vector<4x8x32xbf16> to vector<4x8x8xbf16>
    "tpu.trace_start"() <{level = 10 : i32, message = "bqk,bkd->bqd"}> : () -> ()
    %cst_36 = arith.constant dense<0.000000e+00> : vector<4x8x8xf32>
    %75 = tpu.matmul %73, %74, %cst_36 {dimension_numbers = #tpu.dot_dimension_numbers<[2], [1], [1], [2], [0, 0, 0, 1, 1, 2], [0], [0]>} : vector<4x8x8xbf16>, vector<4x8x8xbf16>, vector<4x8x8xf32> -> vector<4x8x8xf32>
    "tpu.trace_stop"() : () -> ()
    %76 = arith.truncf %75 : vector<4x8x8xf32> to vector<4x8x8xbf16>
    %77 = vector.extract_strided_slice %55 {offsets = [0, 0, 8], sizes = [4, 8, 8], strides = [1, 1, 1]} : vector<4x8x32xbf16> to vector<4x8x8xbf16>
    %78 = vector.extract_strided_slice %57 {offsets = [0, 0, 8], sizes = [4, 8, 8], strides = [1, 1, 1]} : vector<4x8x32xbf16> to vector<4x8x8xbf16>
    "tpu.trace_start"() <{level = 10 : i32, message = "bqd,bkd->bqk"}> : () -> ()
    %cst_37 = arith.constant dense<0.000000e+00> : vector<4x8x8xf32>
    %79 = tpu.matmul %77, %78, %cst_37 {dimension_numbers = #tpu.dot_dimension_numbers<[2], [2], [1], [1], [0, 0, 0, 1, 1, 1], [0], [0]>} : vector<4x8x8xbf16>, vector<4x8x8xbf16>, vector<4x8x8xf32> -> vector<4x8x8xf32>
    "tpu.trace_stop"() : () -> ()
    %cst_38 = arith.constant dense<0xFF800000> : vector<4x8xf32>
    %80 = vector.multi_reduction <maximumf>, %79, %cst_38 [2] : vector<4x8x8xf32> to vector<4x8xf32>
    %81 = vector.shape_cast %80 : vector<4x8xf32> to vector<4x8x1xf32>
    %82 = vector.broadcast %81 : vector<4x8x1xf32> to vector<4x8x8xf32>
    %83 = arith.subf %79, %82 : vector<4x8x8xf32>
    %84 = math.exp %83 : vector<4x8x8xf32>
    %cst_39 = arith.constant dense<0.000000e+00> : vector<4x8xf32>
    %85 = vector.multi_reduction <add>, %84, %cst_39 [2] : vector<4x8x8xf32> to vector<4x8xf32>
    %86 = vector.shape_cast %85 : vector<4x8xf32> to vector<4x8x1xf32>
    %87 = tpu.reciprocal %86 {approx = true} : vector<4x8x1xf32> -> vector<4x8x1xf32>
    %88 = vector.broadcast %87 : vector<4x8x1xf32> to vector<4x8x8xf32>
    %89 = arith.mulf %84, %88 : vector<4x8x8xf32>
    %90 = arith.truncf %89 : vector<4x8x8xf32> to vector<4x8x8xbf16>
    %91 = vector.extract_strided_slice %59 {offsets = [0, 0, 8], sizes = [4, 8, 8], strides = [1, 1, 1]} : vector<4x8x32xbf16> to vector<4x8x8xbf16>
    "tpu.trace_start"() <{level = 10 : i32, message = "bqk,bkd->bqd"}> : () -> ()
    %cst_40 = arith.constant dense<0.000000e+00> : vector<4x8x8xf32>
    %92 = tpu.matmul %90, %91, %cst_40 {dimension_numbers = #tpu.dot_dimension_numbers<[2], [1], [1], [2], [0, 0, 0, 1, 1, 2], [0], [0]>} : vector<4x8x8xbf16>, vector<4x8x8xbf16>, vector<4x8x8xf32> -> vector<4x8x8xf32>
    "tpu.trace_stop"() : () -> ()
    %93 = arith.truncf %92 : vector<4x8x8xf32> to vector<4x8x8xbf16>
    %94 = vector.extract_strided_slice %55 {offsets = [0, 0, 16], sizes = [4, 8, 8], strides = [1, 1, 1]} : vector<4x8x32xbf16> to vector<4x8x8xbf16>
    %95 = vector.extract_strided_slice %57 {offsets = [0, 0, 16], sizes = [4, 8, 8], strides = [1, 1, 1]} : vector<4x8x32xbf16> to vector<4x8x8xbf16>
    "tpu.trace_start"() <{level = 10 : i32, message = "bqd,bkd->bqk"}> : () -> ()
    %cst_41 = arith.constant dense<0.000000e+00> : vector<4x8x8xf32>
    %96 = tpu.matmul %94, %95, %cst_41 {dimension_numbers = #tpu.dot_dimension_numbers<[2], [2], [1], [1], [0, 0, 0, 1, 1, 1], [0], [0]>} : vector<4x8x8xbf16>, vector<4x8x8xbf16>, vector<4x8x8xf32> -> vector<4x8x8xf32>
    "tpu.trace_stop"() : () -> ()
    %cst_42 = arith.constant dense<0xFF800000> : vector<4x8xf32>
    %97 = vector.multi_reduction <maximumf>, %96, %cst_42 [2] : vector<4x8x8xf32> to vector<4x8xf32>
    %98 = vector.shape_cast %97 : vector<4x8xf32> to vector<4x8x1xf32>
    %99 = vector.broadcast %98 : vector<4x8x1xf32> to vector<4x8x8xf32>
    %100 = arith.subf %96, %99 : vector<4x8x8xf32>
    %101 = math.exp %100 : vector<4x8x8xf32>
    %cst_43 = arith.constant dense<0.000000e+00> : vector<4x8xf32>
    %102 = vector.multi_reduction <add>, %101, %cst_43 [2] : vector<4x8x8xf32> to vector<4x8xf32>
    %103 = vector.shape_cast %102 : vector<4x8xf32> to vector<4x8x1xf32>
    %104 = tpu.reciprocal %103 {approx = true} : vector<4x8x1xf32> -> vector<4x8x1xf32>
    %105 = vector.broadcast %104 : vector<4x8x1xf32> to vector<4x8x8xf32>
    %106 = arith.mulf %101, %105 : vector<4x8x8xf32>
    %107 = arith.truncf %106 : vector<4x8x8xf32> to vector<4x8x8xbf16>
    %108 = vector.extract_strided_slice %59 {offsets = [0, 0, 16], sizes = [4, 8, 8], strides = [1, 1, 1]} : vector<4x8x32xbf16> to vector<4x8x8xbf16>
    "tpu.trace_start"() <{level = 10 : i32, message = "bqk,bkd->bqd"}> : () -> ()
    %cst_44 = arith.constant dense<0.000000e+00> : vector<4x8x8xf32>
    %109 = tpu.matmul %107, %108, %cst_44 {dimension_numbers = #tpu.dot_dimension_numbers<[2], [1], [1], [2], [0, 0, 0, 1, 1, 2], [0], [0]>} : vector<4x8x8xbf16>, vector<4x8x8xbf16>, vector<4x8x8xf32> -> vector<4x8x8xf32>
    "tpu.trace_stop"() : () -> ()
    %110 = arith.truncf %109 : vector<4x8x8xf32> to vector<4x8x8xbf16>
    %111 = vector.extract_strided_slice %55 {offsets = [0, 0, 24], sizes = [4, 8, 8], strides = [1, 1, 1]} : vector<4x8x32xbf16> to vector<4x8x8xbf16>
    %112 = vector.extract_strided_slice %57 {offsets = [0, 0, 24], sizes = [4, 8, 8], strides = [1, 1, 1]} : vector<4x8x32xbf16> to vector<4x8x8xbf16>
    "tpu.trace_start"() <{level = 10 : i32, message = "bqd,bkd->bqk"}> : () -> ()
    %cst_45 = arith.constant dense<0.000000e+00> : vector<4x8x8xf32>
    %113 = tpu.matmul %111, %112, %cst_45 {dimension_numbers = #tpu.dot_dimension_numbers<[2], [2], [1], [1], [0, 0, 0, 1, 1, 1], [0], [0]>} : vector<4x8x8xbf16>, vector<4x8x8xbf16>, vector<4x8x8xf32> -> vector<4x8x8xf32>
    "tpu.trace_stop"() : () -> ()
    %cst_46 = arith.constant dense<0xFF800000> : vector<4x8xf32>
    %114 = vector.multi_reduction <maximumf>, %113, %cst_46 [2] : vector<4x8x8xf32> to vector<4x8xf32>
    %115 = vector.shape_cast %114 : vector<4x8xf32> to vector<4x8x1xf32>
    %116 = vector.broadcast %115 : vector<4x8x1xf32> to vector<4x8x8xf32>
    %117 = arith.subf %113, %116 : vector<4x8x8xf32>
    %118 = math.exp %117 : vector<4x8x8xf32>
    %cst_47 = arith.constant dense<0.000000e+00> : vector<4x8xf32>
    %119 = vector.multi_reduction <add>, %118, %cst_47 [2] : vector<4x8x8xf32> to vector<4x8xf32>
    %120 = vector.shape_cast %119 : vector<4x8xf32> to vector<4x8x1xf32>
    %121 = tpu.reciprocal %120 {approx = true} : vector<4x8x1xf32> -> vector<4x8x1xf32>
    %122 = vector.broadcast %121 : vector<4x8x1xf32> to vector<4x8x8xf32>
    %123 = arith.mulf %118, %122 : vector<4x8x8xf32>
    %124 = arith.truncf %123 : vector<4x8x8xf32> to vector<4x8x8xbf16>
    %125 = vector.extract_strided_slice %59 {offsets = [0, 0, 24], sizes = [4, 8, 8], strides = [1, 1, 1]} : vector<4x8x32xbf16> to vector<4x8x8xbf16>
    "tpu.trace_start"() <{level = 10 : i32, message = "bqk,bkd->bqd"}> : () -> ()
    %cst_48 = arith.constant dense<0.000000e+00> : vector<4x8x8xf32>
    %126 = tpu.matmul %124, %125, %cst_48 {dimension_numbers = #tpu.dot_dimension_numbers<[2], [1], [1], [2], [0, 0, 0, 1, 1, 2], [0], [0]>} : vector<4x8x8xbf16>, vector<4x8x8xbf16>, vector<4x8x8xf32> -> vector<4x8x8xf32>
    "tpu.trace_stop"() : () -> ()
    %127 = arith.truncf %126 : vector<4x8x8xf32> to vector<4x8x8xbf16>
    %128 = tpu.concatenate %76, %93, %110, %127 in 2 : vector<4x8x8xbf16>, vector<4x8x8xbf16>, vector<4x8x8xbf16>, vector<4x8x8xbf16> -> vector<4x8x32xbf16>
    %129 = vector.shape_cast %128 : vector<4x8x32xbf16> to vector<32x32xbf16>
    %c0_49 = arith.constant 0 : index
    %c0_50 = arith.constant 0 : index
    %c0_51 = arith.constant 0 : index
    %130 = vector.load %arg10[%c0_49, %c0_50, %c0_51] : memref<2x32x32xbf16, #tpu.memory_space<vmem>>, vector<1x32x32xbf16>
    %131 = vector.shape_cast %130 : vector<1x32x32xbf16> to vector<32x32xbf16>
    %cst_52 = arith.constant dense<0.000000e+00> : vector<32x32xf32>
    %132 = tpu.matmul %129, %131, %cst_52 {dimension_numbers = #tpu.dot_dimension_numbers<[1], [0], [0], [1], [0, 0, 1, 1], [], []>} : vector<32x32xbf16>, vector<32x32xbf16>, vector<32x32xf32> -> vector<32x32xf32>
    %c0_53 = arith.constant 0 : index
    %c0_54 = arith.constant 0 : index
    %c0_55 = arith.constant 0 : index
    %133 = vector.load %arg11[%c0_53, %c0_54, %c0_55] : memref<2x1x32xf32, #tpu.memory_space<vmem>>, vector<1x1x32xf32>
    %134 = vector.shape_cast %133 : vector<1x1x32xf32> to vector<1x32xf32>
    %135 = vector.broadcast %134 : vector<1x32xf32> to vector<32x32xf32>
    %136 = arith.addf %132, %135 : vector<32x32xf32>
    %137 = arith.addf %31, %136 : vector<32x32xf32>
    %c0_56 = arith.constant 0 : index
    %c0_57 = arith.constant 0 : index
    %c0_58 = arith.constant 0 : index
    %138 = vector.load %arg12[%c0_56, %c0_57, %c0_58] : memref<2x1x32xf32, #tpu.memory_space<vmem>>, vector<1x1x32xf32>
    %139 = vector.shape_cast %138 : vector<1x1x32xf32> to vector<1x32xf32>
    %c0_59 = arith.constant 0 : index
    %c0_60 = arith.constant 0 : index
    %c0_61 = arith.constant 0 : index
    %140 = vector.load %arg13[%c0_59, %c0_60, %c0_61] : memref<2x1x32xf32, #tpu.memory_space<vmem>>, vector<1x1x32xf32>
    %141 = vector.shape_cast %140 : vector<1x1x32xf32> to vector<1x32xf32>
    %cst_62 = arith.constant dense<0.000000e+00> : vector<32xf32>
    %142 = vector.multi_reduction <add>, %137, %cst_62 [1] : vector<32x32xf32> to vector<32xf32>
    %143 = vector.shape_cast %142 : vector<32xf32> to vector<32x1xf32>
    %cst_63 = arith.constant 3.200000e+01 : f32
    %144 = vector.broadcast %cst_63 : f32 to vector<32x1xf32>
    %145 = arith.divf %143, %144 : vector<32x1xf32>
    %146 = vector.broadcast %145 : vector<32x1xf32> to vector<32x32xf32>
    %147 = arith.subf %137, %146 : vector<32x32xf32>
    %148 = arith.mulf %147, %147 : vector<32x32xf32>
    %cst_64 = arith.constant dense<0.000000e+00> : vector<32xf32>
    %149 = vector.multi_reduction <add>, %148, %cst_64 [1] : vector<32x32xf32> to vector<32xf32>
    %150 = vector.shape_cast %149 : vector<32xf32> to vector<32x1xf32>
    %cst_65 = arith.constant 3.200000e+01 : f32
    %151 = vector.broadcast %cst_65 : f32 to vector<32x1xf32>
    %152 = arith.divf %150, %151 : vector<32x1xf32>
    %153 = vector.broadcast %145 : vector<32x1xf32> to vector<32x32xf32>
    %154 = arith.subf %137, %153 : vector<32x32xf32>
    %cst_66 = arith.constant 9.99999974E-6 : f32
    %155 = vector.broadcast %cst_66 : f32 to vector<32x1xf32>
    %156 = arith.addf %152, %155 : vector<32x1xf32>
    %157 = math.rsqrt %156 : vector<32x1xf32>
    %158 = vector.broadcast %157 : vector<32x1xf32> to vector<32x32xf32>
    %159 = arith.mulf %154, %158 : vector<32x32xf32>
    %160 = vector.broadcast %139 : vector<1x32xf32> to vector<32x32xf32>
    %161 = arith.mulf %159, %160 : vector<32x32xf32>
    %162 = vector.broadcast %141 : vector<1x32xf32> to vector<32x32xf32>
    %163 = arith.addf %161, %162 : vector<32x32xf32>
    %164 = arith.truncf %163 : vector<32x32xf32> to vector<32x32xbf16>
    %c0_67 = arith.constant 0 : index
    %c0_68 = arith.constant 0 : index
    %c0_69 = arith.constant 0 : index
    %165 = vector.load %arg14[%c0_67, %c0_68, %c0_69] : memref<2x32x64xbf16, #tpu.memory_space<vmem>>, vector<1x32x64xbf16>
    %166 = vector.shape_cast %165 : vector<1x32x64xbf16> to vector<32x64xbf16>
    %cst_70 = arith.constant dense<0.000000e+00> : vector<32x64xf32>
    %167 = tpu.matmul %164, %166, %cst_70 {dimension_numbers = #tpu.dot_dimension_numbers<[1], [0], [0], [1], [0, 0, 1, 1], [], []>} : vector<32x32xbf16>, vector<32x64xbf16>, vector<32x64xf32> -> vector<32x64xf32>
    %cst_71 = arith.constant 0.000000e+00 : f32
    %168 = vector.broadcast %cst_71 : f32 to vector<32x64xf32>
    %169 = arith.cmpf ogt, %167, %168 : vector<32x64xf32>
    %cst_72 = arith.constant 0.00999999977 : f32
    %170 = vector.broadcast %cst_72 : f32 to vector<32x64xf32>
    %171 = arith.mulf %170, %167 : vector<32x64xf32>
    %172 = arith.select %169, %167, %171 : vector<32x64xi1>, vector<32x64xf32>
    %173 = arith.truncf %172 : vector<32x64xf32> to vector<32x64xbf16>
    %c0_73 = arith.constant 0 : index
    %c0_74 = arith.constant 0 : index
    %c0_75 = arith.constant 0 : index
    %174 = vector.load %arg15[%c0_73, %c0_74, %c0_75] : memref<2x64x32xbf16, #tpu.memory_space<vmem>>, vector<1x64x32xbf16>
    %175 = vector.shape_cast %174 : vector<1x64x32xbf16> to vector<64x32xbf16>
    %cst_76 = arith.constant dense<0.000000e+00> : vector<32x32xf32>
    %176 = tpu.matmul %173, %175, %cst_76 {dimension_numbers = #tpu.dot_dimension_numbers<[1], [0], [0], [1], [0, 0, 1, 1], [], []>} : vector<32x64xbf16>, vector<64x32xbf16>, vector<32x32xf32> -> vector<32x32xf32>
    %177 = arith.addf %163, %176 : vector<32x32xf32>
    %c0_77 = arith.constant 0 : index
    %c0_78 = arith.constant 0 : index
    %c0_79 = arith.constant 0 : index
    %178 = vector.load %arg16[%c0_77, %c0_78, %c0_79] : memref<2x1x32xf32, #tpu.memory_space<vmem>>, vector<1x1x32xf32>
    %179 = vector.shape_cast %178 : vector<1x1x32xf32> to vector<1x32xf32>
    %c0_80 = arith.constant 0 : index
    %c0_81 = arith.constant 0 : index
    %c0_82 = arith.constant 0 : index
    %180 = vector.load %arg17[%c0_80, %c0_81, %c0_82] : memref<2x1x32xf32, #tpu.memory_space<vmem>>, vector<1x1x32xf32>
    %181 = vector.shape_cast %180 : vector<1x1x32xf32> to vector<1x32xf32>
    %cst_83 = arith.constant dense<0.000000e+00> : vector<32xf32>
    %182 = vector.multi_reduction <add>, %177, %cst_83 [1] : vector<32x32xf32> to vector<32xf32>
    %183 = vector.shape_cast %182 : vector<32xf32> to vector<32x1xf32>
    %cst_84 = arith.constant 3.200000e+01 : f32
    %184 = vector.broadcast %cst_84 : f32 to vector<32x1xf32>
    %185 = arith.divf %183, %184 : vector<32x1xf32>
    %186 = vector.broadcast %185 : vector<32x1xf32> to vector<32x32xf32>
    %187 = arith.subf %177, %186 : vector<32x32xf32>
    %188 = arith.mulf %187, %187 : vector<32x32xf32>
    %cst_85 = arith.constant dense<0.000000e+00> : vector<32xf32>
    %189 = vector.multi_reduction <add>, %188, %cst_85 [1] : vector<32x32xf32> to vector<32xf32>
    %190 = vector.shape_cast %189 : vector<32xf32> to vector<32x1xf32>
    %cst_86 = arith.constant 3.200000e+01 : f32
    %191 = vector.broadcast %cst_86 : f32 to vector<32x1xf32>
    %192 = arith.divf %190, %191 : vector<32x1xf32>
    %193 = vector.broadcast %185 : vector<32x1xf32> to vector<32x32xf32>
    %194 = arith.subf %177, %193 : vector<32x32xf32>
    %cst_87 = arith.constant 9.99999974E-6 : f32
    %195 = vector.broadcast %cst_87 : f32 to vector<32x1xf32>
    %196 = arith.addf %192, %195 : vector<32x1xf32>
    %197 = math.rsqrt %196 : vector<32x1xf32>
    %198 = vector.broadcast %197 : vector<32x1xf32> to vector<32x32xf32>
    %199 = arith.mulf %194, %198 : vector<32x32xf32>
    %200 = vector.broadcast %179 : vector<1x32xf32> to vector<32x32xf32>
    %201 = arith.mulf %199, %200 : vector<32x32xf32>
    %202 = vector.broadcast %181 : vector<1x32xf32> to vector<32x32xf32>
    %203 = arith.addf %201, %202 : vector<32x32xf32>
    %204 = arith.truncf %203 : vector<32x32xf32> to vector<32x32xbf16>
    %c1 = arith.constant 1 : index
    %c0_88 = arith.constant 0 : index
    %c0_89 = arith.constant 0 : index
    %205 = vector.load %arg4[%c1, %c0_88, %c0_89] : memref<2x32x32xbf16, #tpu.memory_space<vmem>>, vector<1x32x32xbf16>
    %206 = vector.shape_cast %205 : vector<1x32x32xbf16> to vector<32x32xbf16>
    %cst_90 = arith.constant dense<0.000000e+00> : vector<32x32xf32>
    %207 = tpu.matmul %204, %206, %cst_90 {dimension_numbers = #tpu.dot_dimension_numbers<[1], [0], [0], [1], [0, 0, 1, 1], [], []>} : vector<32x32xbf16>, vector<32x32xbf16>, vector<32x32xf32> -> vector<32x32xf32>
    %c1_91 = arith.constant 1 : index
    %c0_92 = arith.constant 0 : index
    %c0_93 = arith.constant 0 : index
    %208 = vector.load %arg5[%c1_91, %c0_92, %c0_93] : memref<2x1x32xf32, #tpu.memory_space<vmem>>, vector<1x1x32xf32>
    %209 = vector.shape_cast %208 : vector<1x1x32xf32> to vector<1x32xf32>
    %210 = vector.broadcast %209 : vector<1x32xf32> to vector<32x32xf32>
    %211 = arith.addf %207, %210 : vector<32x32xf32>
    %c1_94 = arith.constant 1 : index
    %c0_95 = arith.constant 0 : index
    %c0_96 = arith.constant 0 : index
    %212 = vector.load %arg6[%c1_94, %c0_95, %c0_96] : memref<2x32x32xbf16, #tpu.memory_space<vmem>>, vector<1x32x32xbf16>
    %213 = vector.shape_cast %212 : vector<1x32x32xbf16> to vector<32x32xbf16>
    %cst_97 = arith.constant dense<0.000000e+00> : vector<32x32xf32>
    %214 = tpu.matmul %204, %213, %cst_97 {dimension_numbers = #tpu.dot_dimension_numbers<[1], [0], [0], [1], [0, 0, 1, 1], [], []>} : vector<32x32xbf16>, vector<32x32xbf16>, vector<32x32xf32> -> vector<32x32xf32>
    %c1_98 = arith.constant 1 : index
    %c0_99 = arith.constant 0 : index
    %c0_100 = arith.constant 0 : index
    %215 = vector.load %arg7[%c1_98, %c0_99, %c0_100] : memref<2x1x32xf32, #tpu.memory_space<vmem>>, vector<1x1x32xf32>
    %216 = vector.shape_cast %215 : vector<1x1x32xf32> to vector<1x32xf32>
    %217 = vector.broadcast %216 : vector<1x32xf32> to vector<32x32xf32>
    %218 = arith.addf %214, %217 : vector<32x32xf32>
    %c1_101 = arith.constant 1 : index
    %c0_102 = arith.constant 0 : index
    %c0_103 = arith.constant 0 : index
    %219 = vector.load %arg8[%c1_101, %c0_102, %c0_103] : memref<2x32x32xbf16, #tpu.memory_space<vmem>>, vector<1x32x32xbf16>
    %220 = vector.shape_cast %219 : vector<1x32x32xbf16> to vector<32x32xbf16>
    %cst_104 = arith.constant dense<0.000000e+00> : vector<32x32xf32>
    %221 = tpu.matmul %204, %220, %cst_104 {dimension_numbers = #tpu.dot_dimension_numbers<[1], [0], [0], [1], [0, 0, 1, 1], [], []>} : vector<32x32xbf16>, vector<32x32xbf16>, vector<32x32xf32> -> vector<32x32xf32>
    %c1_105 = arith.constant 1 : index
    %c0_106 = arith.constant 0 : index
    %c0_107 = arith.constant 0 : index
    %222 = vector.load %arg9[%c1_105, %c0_106, %c0_107] : memref<2x1x32xf32, #tpu.memory_space<vmem>>, vector<1x1x32xf32>
    %223 = vector.shape_cast %222 : vector<1x1x32xf32> to vector<1x32xf32>
    %224 = vector.broadcast %223 : vector<1x32xf32> to vector<32x32xf32>
    %225 = arith.addf %221, %224 : vector<32x32xf32>
    %226 = vector.shape_cast %211 : vector<32x32xf32> to vector<4x8x32xf32>
    %227 = arith.truncf %226 : vector<4x8x32xf32> to vector<4x8x32xbf16>
    %228 = vector.shape_cast %218 : vector<32x32xf32> to vector<4x8x32xf32>
    %229 = arith.truncf %228 : vector<4x8x32xf32> to vector<4x8x32xbf16>
    %230 = vector.shape_cast %225 : vector<32x32xf32> to vector<4x8x32xf32>
    %231 = arith.truncf %230 : vector<4x8x32xf32> to vector<4x8x32xbf16>
    %232 = vector.extract_strided_slice %227 {offsets = [0, 0, 0], sizes = [4, 8, 8], strides = [1, 1, 1]} : vector<4x8x32xbf16> to vector<4x8x8xbf16>
    %233 = vector.extract_strided_slice %229 {offsets = [0, 0, 0], sizes = [4, 8, 8], strides = [1, 1, 1]} : vector<4x8x32xbf16> to vector<4x8x8xbf16>
    "tpu.trace_start"() <{level = 10 : i32, message = "bqd,bkd->bqk"}> : () -> ()
    %cst_108 = arith.constant dense<0.000000e+00> : vector<4x8x8xf32>
    %234 = tpu.matmul %232, %233, %cst_108 {dimension_numbers = #tpu.dot_dimension_numbers<[2], [2], [1], [1], [0, 0, 0, 1, 1, 1], [0], [0]>} : vector<4x8x8xbf16>, vector<4x8x8xbf16>, vector<4x8x8xf32> -> vector<4x8x8xf32>
    "tpu.trace_stop"() : () -> ()
    %cst_109 = arith.constant dense<0xFF800000> : vector<4x8xf32>
    %235 = vector.multi_reduction <maximumf>, %234, %cst_109 [2] : vector<4x8x8xf32> to vector<4x8xf32>
    %236 = vector.shape_cast %235 : vector<4x8xf32> to vector<4x8x1xf32>
    %237 = vector.broadcast %236 : vector<4x8x1xf32> to vector<4x8x8xf32>
    %238 = arith.subf %234, %237 : vector<4x8x8xf32>
    %239 = math.exp %238 : vector<4x8x8xf32>
    %cst_110 = arith.constant dense<0.000000e+00> : vector<4x8xf32>
    %240 = vector.multi_reduction <add>, %239, %cst_110 [2] : vector<4x8x8xf32> to vector<4x8xf32>
    %241 = vector.shape_cast %240 : vector<4x8xf32> to vector<4x8x1xf32>
    %242 = tpu.reciprocal %241 {approx = true} : vector<4x8x1xf32> -> vector<4x8x1xf32>
    %243 = vector.broadcast %242 : vector<4x8x1xf32> to vector<4x8x8xf32>
    %244 = arith.mulf %239, %243 : vector<4x8x8xf32>
    %245 = arith.truncf %244 : vector<4x8x8xf32> to vector<4x8x8xbf16>
    %246 = vector.extract_strided_slice %231 {offsets = [0, 0, 0], sizes = [4, 8, 8], strides = [1, 1, 1]} : vector<4x8x32xbf16> to vector<4x8x8xbf16>
    "tpu.trace_start"() <{level = 10 : i32, message = "bqk,bkd->bqd"}> : () -> ()
    %cst_111 = arith.constant dense<0.000000e+00> : vector<4x8x8xf32>
    %247 = tpu.matmul %245, %246, %cst_111 {dimension_numbers = #tpu.dot_dimension_numbers<[2], [1], [1], [2], [0, 0, 0, 1, 1, 2], [0], [0]>} : vector<4x8x8xbf16>, vector<4x8x8xbf16>, vector<4x8x8xf32> -> vector<4x8x8xf32>
    "tpu.trace_stop"() : () -> ()
    %248 = arith.truncf %247 : vector<4x8x8xf32> to vector<4x8x8xbf16>
    %249 = vector.extract_strided_slice %227 {offsets = [0, 0, 8], sizes = [4, 8, 8], strides = [1, 1, 1]} : vector<4x8x32xbf16> to vector<4x8x8xbf16>
    %250 = vector.extract_strided_slice %229 {offsets = [0, 0, 8], sizes = [4, 8, 8], strides = [1, 1, 1]} : vector<4x8x32xbf16> to vector<4x8x8xbf16>
    "tpu.trace_start"() <{level = 10 : i32, message = "bqd,bkd->bqk"}> : () -> ()
    %cst_112 = arith.constant dense<0.000000e+00> : vector<4x8x8xf32>
    %251 = tpu.matmul %249, %250, %cst_112 {dimension_numbers = #tpu.dot_dimension_numbers<[2], [2], [1], [1], [0, 0, 0, 1, 1, 1], [0], [0]>} : vector<4x8x8xbf16>, vector<4x8x8xbf16>, vector<4x8x8xf32> -> vector<4x8x8xf32>
    "tpu.trace_stop"() : () -> ()
    %cst_113 = arith.constant dense<0xFF800000> : vector<4x8xf32>
    %252 = vector.multi_reduction <maximumf>, %251, %cst_113 [2] : vector<4x8x8xf32> to vector<4x8xf32>
    %253 = vector.shape_cast %252 : vector<4x8xf32> to vector<4x8x1xf32>
    %254 = vector.broadcast %253 : vector<4x8x1xf32> to vector<4x8x8xf32>
    %255 = arith.subf %251, %254 : vector<4x8x8xf32>
    %256 = math.exp %255 : vector<4x8x8xf32>
    %cst_114 = arith.constant dense<0.000000e+00> : vector<4x8xf32>
    %257 = vector.multi_reduction <add>, %256, %cst_114 [2] : vector<4x8x8xf32> to vector<4x8xf32>
    %258 = vector.shape_cast %257 : vector<4x8xf32> to vector<4x8x1xf32>
    %259 = tpu.reciprocal %258 {approx = true} : vector<4x8x1xf32> -> vector<4x8x1xf32>
    %260 = vector.broadcast %259 : vector<4x8x1xf32> to vector<4x8x8xf32>
    %261 = arith.mulf %256, %260 : vector<4x8x8xf32>
    %262 = arith.truncf %261 : vector<4x8x8xf32> to vector<4x8x8xbf16>
    %263 = vector.extract_strided_slice %231 {offsets = [0, 0, 8], sizes = [4, 8, 8], strides = [1, 1, 1]} : vector<4x8x32xbf16> to vector<4x8x8xbf16>
    "tpu.trace_start"() <{level = 10 : i32, message = "bqk,bkd->bqd"}> : () -> ()
    %cst_115 = arith.constant dense<0.000000e+00> : vector<4x8x8xf32>
    %264 = tpu.matmul %262, %263, %cst_115 {dimension_numbers = #tpu.dot_dimension_numbers<[2], [1], [1], [2], [0, 0, 0, 1, 1, 2], [0], [0]>} : vector<4x8x8xbf16>, vector<4x8x8xbf16>, vector<4x8x8xf32> -> vector<4x8x8xf32>
    "tpu.trace_stop"() : () -> ()
    %265 = arith.truncf %264 : vector<4x8x8xf32> to vector<4x8x8xbf16>
    %266 = vector.extract_strided_slice %227 {offsets = [0, 0, 16], sizes = [4, 8, 8], strides = [1, 1, 1]} : vector<4x8x32xbf16> to vector<4x8x8xbf16>
    %267 = vector.extract_strided_slice %229 {offsets = [0, 0, 16], sizes = [4, 8, 8], strides = [1, 1, 1]} : vector<4x8x32xbf16> to vector<4x8x8xbf16>
    "tpu.trace_start"() <{level = 10 : i32, message = "bqd,bkd->bqk"}> : () -> ()
    %cst_116 = arith.constant dense<0.000000e+00> : vector<4x8x8xf32>
    %268 = tpu.matmul %266, %267, %cst_116 {dimension_numbers = #tpu.dot_dimension_numbers<[2], [2], [1], [1], [0, 0, 0, 1, 1, 1], [0], [0]>} : vector<4x8x8xbf16>, vector<4x8x8xbf16>, vector<4x8x8xf32> -> vector<4x8x8xf32>
    "tpu.trace_stop"() : () -> ()
    %cst_117 = arith.constant dense<0xFF800000> : vector<4x8xf32>
    %269 = vector.multi_reduction <maximumf>, %268, %cst_117 [2] : vector<4x8x8xf32> to vector<4x8xf32>
    %270 = vector.shape_cast %269 : vector<4x8xf32> to vector<4x8x1xf32>
    %271 = vector.broadcast %270 : vector<4x8x1xf32> to vector<4x8x8xf32>
    %272 = arith.subf %268, %271 : vector<4x8x8xf32>
    %273 = math.exp %272 : vector<4x8x8xf32>
    %cst_118 = arith.constant dense<0.000000e+00> : vector<4x8xf32>
    %274 = vector.multi_reduction <add>, %273, %cst_118 [2] : vector<4x8x8xf32> to vector<4x8xf32>
    %275 = vector.shape_cast %274 : vector<4x8xf32> to vector<4x8x1xf32>
    %276 = tpu.reciprocal %275 {approx = true} : vector<4x8x1xf32> -> vector<4x8x1xf32>
    %277 = vector.broadcast %276 : vector<4x8x1xf32> to vector<4x8x8xf32>
    %278 = arith.mulf %273, %277 : vector<4x8x8xf32>
    %279 = arith.truncf %278 : vector<4x8x8xf32> to vector<4x8x8xbf16>
    %280 = vector.extract_strided_slice %231 {offsets = [0, 0, 16], sizes = [4, 8, 8], strides = [1, 1, 1]} : vector<4x8x32xbf16> to vector<4x8x8xbf16>
    "tpu.trace_start"() <{level = 10 : i32, message = "bqk,bkd->bqd"}> : () -> ()
    %cst_119 = arith.constant dense<0.000000e+00> : vector<4x8x8xf32>
    %281 = tpu.matmul %279, %280, %cst_119 {dimension_numbers = #tpu.dot_dimension_numbers<[2], [1], [1], [2], [0, 0, 0, 1, 1, 2], [0], [0]>} : vector<4x8x8xbf16>, vector<4x8x8xbf16>, vector<4x8x8xf32> -> vector<4x8x8xf32>
    "tpu.trace_stop"() : () -> ()
    %282 = arith.truncf %281 : vector<4x8x8xf32> to vector<4x8x8xbf16>
    %283 = vector.extract_strided_slice %227 {offsets = [0, 0, 24], sizes = [4, 8, 8], strides = [1, 1, 1]} : vector<4x8x32xbf16> to vector<4x8x8xbf16>
    %284 = vector.extract_strided_slice %229 {offsets = [0, 0, 24], sizes = [4, 8, 8], strides = [1, 1, 1]} : vector<4x8x32xbf16> to vector<4x8x8xbf16>
    "tpu.trace_start"() <{level = 10 : i32, message = "bqd,bkd->bqk"}> : () -> ()
    %cst_120 = arith.constant dense<0.000000e+00> : vector<4x8x8xf32>
    %285 = tpu.matmul %283, %284, %cst_120 {dimension_numbers = #tpu.dot_dimension_numbers<[2], [2], [1], [1], [0, 0, 0, 1, 1, 1], [0], [0]>} : vector<4x8x8xbf16>, vector<4x8x8xbf16>, vector<4x8x8xf32> -> vector<4x8x8xf32>
    "tpu.trace_stop"() : () -> ()
    %cst_121 = arith.constant dense<0xFF800000> : vector<4x8xf32>
    %286 = vector.multi_reduction <maximumf>, %285, %cst_121 [2] : vector<4x8x8xf32> to vector<4x8xf32>
    %287 = vector.shape_cast %286 : vector<4x8xf32> to vector<4x8x1xf32>
    %288 = vector.broadcast %287 : vector<4x8x1xf32> to vector<4x8x8xf32>
    %289 = arith.subf %285, %288 : vector<4x8x8xf32>
    %290 = math.exp %289 : vector<4x8x8xf32>
    %cst_122 = arith.constant dense<0.000000e+00> : vector<4x8xf32>
    %291 = vector.multi_reduction <add>, %290, %cst_122 [2] : vector<4x8x8xf32> to vector<4x8xf32>
    %292 = vector.shape_cast %291 : vector<4x8xf32> to vector<4x8x1xf32>
    %293 = tpu.reciprocal %292 {approx = true} : vector<4x8x1xf32> -> vector<4x8x1xf32>
    %294 = vector.broadcast %293 : vector<4x8x1xf32> to vector<4x8x8xf32>
    %295 = arith.mulf %290, %294 : vector<4x8x8xf32>
    %296 = arith.truncf %295 : vector<4x8x8xf32> to vector<4x8x8xbf16>
    %297 = vector.extract_strided_slice %231 {offsets = [0, 0, 24], sizes = [4, 8, 8], strides = [1, 1, 1]} : vector<4x8x32xbf16> to vector<4x8x8xbf16>
    "tpu.trace_start"() <{level = 10 : i32, message = "bqk,bkd->bqd"}> : () -> ()
    %cst_123 = arith.constant dense<0.000000e+00> : vector<4x8x8xf32>
    %298 = tpu.matmul %296, %297, %cst_123 {dimension_numbers = #tpu.dot_dimension_numbers<[2], [1], [1], [2], [0, 0, 0, 1, 1, 2], [0], [0]>} : vector<4x8x8xbf16>, vector<4x8x8xbf16>, vector<4x8x8xf32> -> vector<4x8x8xf32>
    "tpu.trace_stop"() : () -> ()
    %299 = arith.truncf %298 : vector<4x8x8xf32> to vector<4x8x8xbf16>
    %300 = tpu.concatenate %248, %265, %282, %299 in 2 : vector<4x8x8xbf16>, vector<4x8x8xbf16>, vector<4x8x8xbf16>, vector<4x8x8xbf16> -> vector<4x8x32xbf16>
    %301 = vector.shape_cast %300 : vector<4x8x32xbf16> to vector<32x32xbf16>
    %c1_124 = arith.constant 1 : index
    %c0_125 = arith.constant 0 : index
    %c0_126 = arith.constant 0 : index
    %302 = vector.load %arg10[%c1_124, %c0_125, %c0_126] : memref<2x32x32xbf16, #tpu.memory_space<vmem>>, vector<1x32x32xbf16>
    %303 = vector.shape_cast %302 : vector<1x32x32xbf16> to vector<32x32xbf16>
    %cst_127 = arith.constant dense<0.000000e+00> : vector<32x32xf32>
    %304 = tpu.matmul %301, %303, %cst_127 {dimension_numbers = #tpu.dot_dimension_numbers<[1], [0], [0], [1], [0, 0, 1, 1], [], []>} : vector<32x32xbf16>, vector<32x32xbf16>, vector<32x32xf32> -> vector<32x32xf32>
    %c1_128 = arith.constant 1 : index
    %c0_129 = arith.constant 0 : index
    %c0_130 = arith.constant 0 : index
    %305 = vector.load %arg11[%c1_128, %c0_129, %c0_130] : memref<2x1x32xf32, #tpu.memory_space<vmem>>, vector<1x1x32xf32>
    %306 = vector.shape_cast %305 : vector<1x1x32xf32> to vector<1x32xf32>
    %307 = vector.broadcast %306 : vector<1x32xf32> to vector<32x32xf32>
    %308 = arith.addf %304, %307 : vector<32x32xf32>
    %309 = arith.addf %203, %308 : vector<32x32xf32>
    %c1_131 = arith.constant 1 : index
    %c0_132 = arith.constant 0 : index
    %c0_133 = arith.constant 0 : index
    %310 = vector.load %arg12[%c1_131, %c0_132, %c0_133] : memref<2x1x32xf32, #tpu.memory_space<vmem>>, vector<1x1x32xf32>
    %311 = vector.shape_cast %310 : vector<1x1x32xf32> to vector<1x32xf32>
    %c1_134 = arith.constant 1 : index
    %c0_135 = arith.constant 0 : index
    %c0_136 = arith.constant 0 : index
    %312 = vector.load %arg13[%c1_134, %c0_135, %c0_136] : memref<2x1x32xf32, #tpu.memory_space<vmem>>, vector<1x1x32xf32>
    %313 = vector.shape_cast %312 : vector<1x1x32xf32> to vector<1x32xf32>
    %cst_137 = arith.constant dense<0.000000e+00> : vector<32xf32>
    %314 = vector.multi_reduction <add>, %309, %cst_137 [1] : vector<32x32xf32> to vector<32xf32>
    %315 = vector.shape_cast %314 : vector<32xf32> to vector<32x1xf32>
    %cst_138 = arith.constant 3.200000e+01 : f32
    %316 = vector.broadcast %cst_138 : f32 to vector<32x1xf32>
    %317 = arith.divf %315, %316 : vector<32x1xf32>
    %318 = vector.broadcast %317 : vector<32x1xf32> to vector<32x32xf32>
    %319 = arith.subf %309, %318 : vector<32x32xf32>
    %320 = arith.mulf %319, %319 : vector<32x32xf32>
    %cst_139 = arith.constant dense<0.000000e+00> : vector<32xf32>
    %321 = vector.multi_reduction <add>, %320, %cst_139 [1] : vector<32x32xf32> to vector<32xf32>
    %322 = vector.shape_cast %321 : vector<32xf32> to vector<32x1xf32>
    %cst_140 = arith.constant 3.200000e+01 : f32
    %323 = vector.broadcast %cst_140 : f32 to vector<32x1xf32>
    %324 = arith.divf %322, %323 : vector<32x1xf32>
    %325 = vector.broadcast %317 : vector<32x1xf32> to vector<32x32xf32>
    %326 = arith.subf %309, %325 : vector<32x32xf32>
    %cst_141 = arith.constant 9.99999974E-6 : f32
    %327 = vector.broadcast %cst_141 : f32 to vector<32x1xf32>
    %328 = arith.addf %324, %327 : vector<32x1xf32>
    %329 = math.rsqrt %328 : vector<32x1xf32>
    %330 = vector.broadcast %329 : vector<32x1xf32> to vector<32x32xf32>
    %331 = arith.mulf %326, %330 : vector<32x32xf32>
    %332 = vector.broadcast %311 : vector<1x32xf32> to vector<32x32xf32>
    %333 = arith.mulf %331, %332 : vector<32x32xf32>
    %334 = vector.broadcast %313 : vector<1x32xf32> to vector<32x32xf32>
    %335 = arith.addf %333, %334 : vector<32x32xf32>
    %336 = arith.truncf %335 : vector<32x32xf32> to vector<32x32xbf16>
    %c1_142 = arith.constant 1 : index
    %c0_143 = arith.constant 0 : index
    %c0_144 = arith.constant 0 : index
    %337 = vector.load %arg14[%c1_142, %c0_143, %c0_144] : memref<2x32x64xbf16, #tpu.memory_space<vmem>>, vector<1x32x64xbf16>
    %338 = vector.shape_cast %337 : vector<1x32x64xbf16> to vector<32x64xbf16>
    %cst_145 = arith.constant dense<0.000000e+00> : vector<32x64xf32>
    %339 = tpu.matmul %336, %338, %cst_145 {dimension_numbers = #tpu.dot_dimension_numbers<[1], [0], [0], [1], [0, 0, 1, 1], [], []>} : vector<32x32xbf16>, vector<32x64xbf16>, vector<32x64xf32> -> vector<32x64xf32>
    %cst_146 = arith.constant 0.000000e+00 : f32
    %340 = vector.broadcast %cst_146 : f32 to vector<32x64xf32>
    %341 = arith.cmpf ogt, %339, %340 : vector<32x64xf32>
    %cst_147 = arith.constant 0.00999999977 : f32
    %342 = vector.broadcast %cst_147 : f32 to vector<32x64xf32>
    %343 = arith.mulf %342, %339 : vector<32x64xf32>
    %344 = arith.select %341, %339, %343 : vector<32x64xi1>, vector<32x64xf32>
    %345 = arith.truncf %344 : vector<32x64xf32> to vector<32x64xbf16>
    %c1_148 = arith.constant 1 : index
    %c0_149 = arith.constant 0 : index
    %c0_150 = arith.constant 0 : index
    %346 = vector.load %arg15[%c1_148, %c0_149, %c0_150] : memref<2x64x32xbf16, #tpu.memory_space<vmem>>, vector<1x64x32xbf16>
    %347 = vector.shape_cast %346 : vector<1x64x32xbf16> to vector<64x32xbf16>
    %cst_151 = arith.constant dense<0.000000e+00> : vector<32x32xf32>
    %348 = tpu.matmul %345, %347, %cst_151 {dimension_numbers = #tpu.dot_dimension_numbers<[1], [0], [0], [1], [0, 0, 1, 1], [], []>} : vector<32x64xbf16>, vector<64x32xbf16>, vector<32x32xf32> -> vector<32x32xf32>
    %349 = arith.addf %335, %348 : vector<32x32xf32>
    %c1_152 = arith.constant 1 : index
    %c0_153 = arith.constant 0 : index
    %c0_154 = arith.constant 0 : index
    %350 = vector.load %arg16[%c1_152, %c0_153, %c0_154] : memref<2x1x32xf32, #tpu.memory_space<vmem>>, vector<1x1x32xf32>
    %351 = vector.shape_cast %350 : vector<1x1x32xf32> to vector<1x32xf32>
    %c1_155 = arith.constant 1 : index
    %c0_156 = arith.constant 0 : index
    %c0_157 = arith.constant 0 : index
    %352 = vector.load %arg17[%c1_155, %c0_156, %c0_157] : memref<2x1x32xf32, #tpu.memory_space<vmem>>, vector<1x1x32xf32>
    %353 = vector.shape_cast %352 : vector<1x1x32xf32> to vector<1x32xf32>
    %cst_158 = arith.constant dense<0.000000e+00> : vector<32xf32>
    %354 = vector.multi_reduction <add>, %349, %cst_158 [1] : vector<32x32xf32> to vector<32xf32>
    %355 = vector.shape_cast %354 : vector<32xf32> to vector<32x1xf32>
    %cst_159 = arith.constant 3.200000e+01 : f32
    %356 = vector.broadcast %cst_159 : f32 to vector<32x1xf32>
    %357 = arith.divf %355, %356 : vector<32x1xf32>
    %358 = vector.broadcast %357 : vector<32x1xf32> to vector<32x32xf32>
    %359 = arith.subf %349, %358 : vector<32x32xf32>
    %360 = arith.mulf %359, %359 : vector<32x32xf32>
    %cst_160 = arith.constant dense<0.000000e+00> : vector<32xf32>
    %361 = vector.multi_reduction <add>, %360, %cst_160 [1] : vector<32x32xf32> to vector<32xf32>
    %362 = vector.shape_cast %361 : vector<32xf32> to vector<32x1xf32>
    %cst_161 = arith.constant 3.200000e+01 : f32
    %363 = vector.broadcast %cst_161 : f32 to vector<32x1xf32>
    %364 = arith.divf %362, %363 : vector<32x1xf32>
    %365 = vector.broadcast %357 : vector<32x1xf32> to vector<32x32xf32>
    %366 = arith.subf %349, %365 : vector<32x32xf32>
    %cst_162 = arith.constant 9.99999974E-6 : f32
    %367 = vector.broadcast %cst_162 : f32 to vector<32x1xf32>
    %368 = arith.addf %364, %367 : vector<32x1xf32>
    %369 = math.rsqrt %368 : vector<32x1xf32>
    %370 = vector.broadcast %369 : vector<32x1xf32> to vector<32x32xf32>
    %371 = arith.mulf %366, %370 : vector<32x32xf32>
    %372 = vector.broadcast %351 : vector<1x32xf32> to vector<32x32xf32>
    %373 = arith.mulf %371, %372 : vector<32x32xf32>
    %374 = vector.broadcast %353 : vector<1x32xf32> to vector<32x32xf32>
    %375 = arith.addf %373, %374 : vector<32x32xf32>
    %376 = arith.truncf %375 : vector<32x32xf32> to vector<32x32xbf16>
    %c0_163 = arith.constant 0 : index
    %c0_164 = arith.constant 0 : index
    %377 = vector.load %arg18[%c0_163, %c0_164] : memref<32x128xbf16, #tpu.memory_space<vmem>>, vector<32x128xbf16>
    %cst_165 = arith.constant dense<0.000000e+00> : vector<32x128xf32>
    %378 = tpu.matmul %376, %377, %cst_165 {dimension_numbers = #tpu.dot_dimension_numbers<[1], [0], [0], [1], [0, 0, 1, 1], [], []>} : vector<32x32xbf16>, vector<32x128xbf16>, vector<32x128xf32> -> vector<32x128xf32>
    %c0_166 = arith.constant 0 : index
    %c0_167 = arith.constant 0 : index
    %379 = vector.load %arg19[%c0_166, %c0_167] : memref<1x128xf32, #tpu.memory_space<vmem>>, vector<1x128xf32>
    %380 = vector.broadcast %379 : vector<1x128xf32> to vector<32x128xf32>
    %381 = arith.addf %378, %380 : vector<32x128xf32>
    %cst_168 = arith.constant 1.000000e+00 : f32
    %382 = vector.broadcast %cst_168 : f32 to vector<4x1x124xf32>
    %cst_169 = arith.constant 0.000000e+00 : f32
    %383 = vector.broadcast %cst_169 : f32 to vector<4x1x124xf32>
    %384 = tpu.concatenate %14, %382 in 2 : vector<4x1x4xf32>, vector<4x1x124xf32> -> vector<4x1x128xf32>
    %385 = tpu.concatenate %4, %383 in 2 : vector<4x1x4xf32>, vector<4x1x124xf32> -> vector<4x1x128xf32>
    %386 = vector.shape_cast %381 : vector<32x128xf32> to vector<4x8x128xf32>
    %387 = vector.broadcast %384 : vector<4x1x128xf32> to vector<4x8x128xf32>
    %388 = arith.mulf %386, %387 : vector<4x8x128xf32>
    %389 = vector.broadcast %385 : vector<4x1x128xf32> to vector<4x8x128xf32>
    %390 = arith.addf %388, %389 : vector<4x8x128xf32>
    %c0_170 = arith.constant 0 : index
    %c0_171 = arith.constant 0 : index
    %c0_172 = arith.constant 0 : index
    %391 = vector.load %arg20[%c0_170, %c0_171, %c0_172] : memref<4x8x128xf32, #tpu.memory_space<vmem>>, vector<4x8x128xf32>
    tpu.vector_store %arg20[%c0_170, %c0_171, %c0_172], %390 {strides = array<i32>} : memref<4x8x128xf32, #tpu.memory_space<vmem>>, vector<4x8x128xf32>,
    return
  }
  func.func @transform_0(%arg0: i32) -> (i32, i32, i32) {
    %c0_i32 = arith.constant 0 : i32
    %c0_i32_0 = arith.constant 0 : i32
    %c0_i32_1 = arith.constant 0 : i32
    return %arg0, %c0_i32, %c0_i32_0 : i32, i32, i32
  }
  func.func @transform_1(%arg0: i32) -> (i32, i32) {
    %c0_i32 = arith.constant 0 : i32
    %c0_i32_0 = arith.constant 0 : i32
    %c0_i32_1 = arith.constant 0 : i32
    return %c0_i32, %c0_i32_0 : i32, i32
  }
  func.func @transform_2(%arg0: i32) -> (i32, i32) {
    %c0_i32 = arith.constant 0 : i32
    %c0_i32_0 = arith.constant 0 : i32
    %c0_i32_1 = arith.constant 0 : i32
    return %c0_i32, %c0_i32_0 : i32, i32
  }
  func.func @transform_3(%arg0: i32) -> (i32, i32, i32) {
    %c0_i32 = arith.constant 0 : i32
    %c0_i32_0 = arith.constant 0 : i32
    %c0_i32_1 = arith.constant 0 : i32
    %c0_i32_2 = arith.constant 0 : i32
    return %c0_i32, %c0_i32_0, %c0_i32_1 : i32, i32, i32
  }
  func.func @transform_4(%arg0: i32) -> (i32, i32, i32) {
    %c0_i32 = arith.constant 0 : i32
    %c0_i32_0 = arith.constant 0 : i32
    %c0_i32_1 = arith.constant 0 : i32
    %c0_i32_2 = arith.constant 0 : i32
    return %c0_i32, %c0_i32_0, %c0_i32_1 : i32, i32, i32
  }
  func.func @transform_5(%arg0: i32) -> (i32, i32, i32) {
    %c0_i32 = arith.constant 0 : i32
    %c0_i32_0 = arith.constant 0 : i32
    %c0_i32_1 = arith.constant 0 : i32
    %c0_i32_2 = arith.constant 0 : i32
    return %c0_i32, %c0_i32_0, %c0_i32_1 : i32, i32, i32
  }
  func.func @transform_6(%arg0: i32) -> (i32, i32, i32) {
    %c0_i32 = arith.constant 0 : i32
    %c0_i32_0 = arith.constant 0 : i32
    %c0_i32_1 = arith.constant 0 : i32
    %c0_i32_2 = arith.constant 0 : i32
    return %c0_i32, %c0_i32_0, %c0_i32_1 : i32, i32, i32
  }
  func.func @transform_7(%arg0: i32) -> (i32, i32, i32) {
    %c0_i32 = arith.constant 0 : i32
    %c0_i32_0 = arith.constant 0 : i32
    %c0_i32_1 = arith.constant 0 : i32
    %c0_i32_2 = arith.constant 0 : i32
    return %c0_i32, %c0_i32_0, %c0_i32_1 : i32, i32, i32
  }
  func.func @transform_8(%arg0: i32) -> (i32, i32, i32) {
    %c0_i32 = arith.constant 0 : i32
    %c0_i32_0 = arith.constant 0 : i32
    %c0_i32_1 = arith.constant 0 : i32
    %c0_i32_2 = arith.constant 0 : i32
    return %c0_i32, %c0_i32_0, %c0_i32_1 : i32, i32, i32
  }
  func.func @transform_9(%arg0: i32) -> (i32, i32, i32) {
    %c0_i32 = arith.constant 0 : i32
    %c0_i32_0 = arith.constant 0 : i32
    %c0_i32_1 = arith.constant 0 : i32
    %c0_i32_2 = arith.constant 0 : i32
    return %c0_i32, %c0_i32_0, %c0_i32_1 : i32, i32, i32
  }
  func.func @transform_10(%arg0: i32) -> (i32, i32, i32) {
    %c0_i32 = arith.constant 0 : i32
    %c0_i32_0 = arith.constant 0 : i32
    %c0_i32_1 = arith.constant 0 : i32
    %c0_i32_2 = arith.constant 0 : i32
    return %c0_i32, %c0_i32_0, %c0_i32_1 : i32, i32, i32
  }
  func.func @transform_11(%arg0: i32) -> (i32, i32, i32) {
    %c0_i32 = arith.constant 0 : i32
    %c0_i32_0 = arith.constant 0 : i32
    %c0_i32_1 = arith.constant 0 : i32
    %c0_i32_2 = arith.constant 0 : i32
    return %c0_i32, %c0_i32_0, %c0_i32_1 : i32, i32, i32
  }
  func.func @transform_12(%arg0: i32) -> (i32, i32, i32) {
    %c0_i32 = arith.constant 0 : i32
    %c0_i32_0 = arith.constant 0 : i32
    %c0_i32_1 = arith.constant 0 : i32
    %c0_i32_2 = arith.constant 0 : i32
    return %c0_i32, %c0_i32_0, %c0_i32_1 : i32, i32, i32
  }
  func.func @transform_13(%arg0: i32) -> (i32, i32, i32) {
    %c0_i32 = arith.constant 0 : i32
    %c0_i32_0 = arith.constant 0 : i32
    %c0_i32_1 = arith.constant 0 : i32
    %c0_i32_2 = arith.constant 0 : i32
    return %c0_i32, %c0_i32_0, %c0_i32_1 : i32, i32, i32
  }
  func.func @transform_14(%arg0: i32) -> (i32, i32, i32) {
    %c0_i32 = arith.constant 0 : i32
    %c0_i32_0 = arith.constant 0 : i32
    %c0_i32_1 = arith.constant 0 : i32
    %c0_i32_2 = arith.constant 0 : i32
    return %c0_i32, %c0_i32_0, %c0_i32_1 : i32, i32, i32
  }
  func.func @transform_15(%arg0: i32) -> (i32, i32, i32) {
    %c0_i32 = arith.constant 0 : i32
    %c0_i32_0 = arith.constant 0 : i32
    %c0_i32_1 = arith.constant 0 : i32
    %c0_i32_2 = arith.constant 0 : i32
    return %c0_i32, %c0_i32_0, %c0_i32_1 : i32, i32, i32
  }
  func.func @transform_16(%arg0: i32) -> (i32, i32, i32) {
    %c0_i32 = arith.constant 0 : i32
    %c0_i32_0 = arith.constant 0 : i32
    %c0_i32_1 = arith.constant 0 : i32
    %c0_i32_2 = arith.constant 0 : i32
    return %c0_i32, %c0_i32_0, %c0_i32_1 : i32, i32, i32
  }
  func.func @transform_17(%arg0: i32) -> (i32, i32) {
    %c0_i32 = arith.constant 0 : i32
    %c0_i32_0 = arith.constant 0 : i32
    %c0_i32_1 = arith.constant 0 : i32
    return %c0_i32, %c0_i32_0 : i32, i32
  }
  func.func @transform_18(%arg0: i32) -> (i32, i32) {
    %c0_i32 = arith.constant 0 : i32
    %c0_i32_0 = arith.constant 0 : i32
    %c0_i32_1 = arith.constant 0 : i32
    return %c0_i32, %c0_i32_0 : i32, i32
  }
  func.func @transform_19(%arg0: i32) -> (i32, i32, i32) {
    %c0_i32 = arith.constant 0 : i32
    %c0_i32_0 = arith.constant 0 : i32
    %c0_i32_1 = arith.constant 0 : i32
    return %arg0, %c0_i32, %c0_i32_0 : i32, i32, i32
  }
}

</mosaic_0001>

<llo_original>
// kernel: tpu_custom_call.1
$region0: #{tpu_custom_call.1}
  #allocation0 [shape = 'u32[]', space=smem, size = 0x4, offset = 0x4, fixed_abs, tag = 'smem constant byte address 0x4 - core index']
  #allocation1 [shape = 'u32[144,128]{1,0:T(1,128)}', space=vmem, size = 0x12000, scoped, tag = 'internal scratch']
  %s0 = inlined_call_operand.vmem [shape: f32[8,8,4], index: 0, kind: input, shape index: {}]
  %s1 = inlined_call_operand.hbm [shape: f32[8,32], index: 1, kind: input, shape index: {}]
  %s2 = inlined_call_operand.vmem [shape: bf16[4,32], index: 2, kind: input, shape index: {}]
  %s3 = inlined_call_operand.vmem [shape: bf16[2,32,32], index: 3, kind: input, shape index: {}]
  %s4 = inlined_call_operand.hbm [shape: f32[2,1,32], index: 4, kind: input, shape index: {}]
  %s5 = inlined_call_operand.vmem [shape: bf16[2,32,32], index: 5, kind: input, shape index: {}]
  %s6 = inlined_call_operand.vmem [shape: f32[2,1,32], index: 6, kind: input, shape index: {}]
  %s7 = inlined_call_operand.vmem [shape: bf16[2,32,32], index: 7, kind: input, shape index: {}]
  %s8 = inlined_call_operand.vmem [shape: f32[2,1,32], index: 8, kind: input, shape index: {}]
  %s9 = inlined_call_operand.vmem [shape: bf16[2,32,32], index: 9, kind: input, shape index: {}]
  %s10 = inlined_call_operand.vmem [shape: f32[2,1,32], index: 10, kind: input, shape index: {}]
  %s11 = inlined_call_operand.vmem [shape: f32[2,1,32], index: 11, kind: input, shape index: {}]
  %s12 = inlined_call_operand.vmem [shape: f32[2,1,32], index: 12, kind: input, shape index: {}]
  %s13 = inlined_call_operand.vmem [shape: bf16[2,32,64], index: 13, kind: input, shape index: {}]
  %s14 = inlined_call_operand.vmem [shape: bf16[2,64,32], index: 14, kind: input, shape index: {}]
  %s15 = inlined_call_operand.vmem [shape: f32[2,1,32], index: 15, kind: input, shape index: {}]
  %s16 = inlined_call_operand.vmem [shape: f32[2,1,32], index: 16, kind: input, shape index: {}]
  %s17 = inlined_call_operand.vmem [shape: bf16[32,128], index: 17, kind: input, shape index: {}]
  %s18 = inlined_call_operand.vmem [shape: f32[1,128], index: 18, kind: input, shape index: {}]
  %s19 = inlined_call_operand.hbm [shape: f32[8,8,128], index: 19, kind: output, shape index: {}]
  %s20 = sld [smem:[#allocation0]]
  $region117: #{tpu_custom_call.1} parent=0
    _
  %s22 = ssub.s32 1, %s20
  %s23 = scalar_select 0, %s22, %s20
  $region1: #{tpu_custom_call.1} parent=0
    #allocation2 [shape = 'u8[4096]{0}', space=vmem, size = 0x1000, scoped, tag = 'input window, operand 1, single buffered']
    #allocation3 [shape = 's32[2]{0}', space=sflag, size = 0x8, scoped, tag = 'scoped memory for tpu_custom_call.1']
    #allocation4 [shape = 's32[2]{0}', space=sflag, size = 0x8, scoped, tag = 'scoped memory for tpu_custom_call.1']
    #allocation5 [shape = 'u8[1024]{0}', space=vmem, size = 0x400, scoped, tag = 'input window, operand 4, single buffered']
    #allocation6 [shape = 's32[1]{0}', space=sflag, size = 0x4, scoped, tag = 'scoped memory for tpu_custom_call.1']
    #allocation7 [shape = 'u8[32768]{0}', space=vmem, size = 0x8000, scoped, tag = 'output window, operand 0']
    %24 = vsyncpa [#allocation3], 0
    %25 = vsyncpa [#allocation6], 0
    %26 = vsyncpa [#allocation4], 0
    %s27 = scalar_lea.sflag [#allocation4], 1
    %28 = vsyncpa %s27, 0
    loop: start=0, step=1, limit=4
    $region2: #{tpu_custom_call.1} parent=1 // loop_pre_header
      _
    $region3: #{tpu_custom_call.1} parent=1 // loop_header
      %s30 = sphi 0, %s34
      %p31 = scmp.ge.s32.totalorder %s30, 4
      %s40 = sphi 0, %s42
      %s43 = sphi 0, %s40
      %s44 = sphi 0, %s43
      %s60 = sphi 0, %s44
      %s64 = sphi 0, %s64
      %s66 = sphi 0, %s64
      %s67 = sphi 0, %s66
      %s81 = sphi 0, %s67
      %s85 = sphi 0, %s85
      %s87 = sphi 0, %s85
      %s88 = sphi 0, %s87
      %s102 = sphi 0, %s88
      %s106 = sphi 0, %s106
      %s108 = sphi 0, %s106
      %s109 = sphi 0, %s108
      %s123 = sphi 0, %s109
      %s127 = sphi 0, %s127
      %s129 = sphi 0, %s127
      %s130 = sphi 0, %s129
      %s144 = sphi 0, %s130
      %s148 = sphi 0, %s148
      %s150 = sphi 0, %s148
      %s151 = sphi 0, %s150
      %s165 = sphi 0, %s151
      %s169 = sphi 0, %s169
      %s171 = sphi 0, %s169
      %s172 = sphi 0, %s171
      %s186 = sphi 0, %s172
      %s190 = sphi 0, %s190
      %s192 = sphi 0, %s190
      %s193 = sphi 0, %s192
      %s207 = sphi 0, %s193
      %s211 = sphi 0, %s211
      %s213 = sphi 0, %s211
      %s214 = sphi 0, %s213
      %s228 = sphi 0, %s214
      %s232 = sphi 0, %s232
      %s234 = sphi 0, %s232
      %s235 = sphi 0, %s234
      %s249 = sphi 0, %s235
      %s253 = sphi 0, %s253
      %s255 = sphi 0, %s253
      %s256 = sphi 0, %s255
      %s270 = sphi 0, %s256
      %s274 = sphi 0, %s274
      %s276 = sphi 0, %s274
      %s277 = sphi 0, %s276
      %s291 = sphi 0, %s277
      %s295 = sphi 0, %s295
      %s297 = sphi 0, %s295
      %s298 = sphi 0, %s297
      %s312 = sphi 0, %s298
      %s316 = sphi 0, %s316
      %s318 = sphi 0, %s316
      %s319 = sphi 0, %s318
      %s333 = sphi 0, %s319
      %s337 = sphi 0, %s337
      %s339 = sphi 0, %s337
      %s340 = sphi 0, %s339
      %s354 = sphi 0, %s340
      %s358 = sphi 0, %s358
      %s360 = sphi 0, %s358
      %s361 = sphi 0, %s360
      %s375 = sphi 0, %s361
      %s379 = sphi 0, %s379
      %s381 = sphi 0, %s379
      %s382 = sphi 0, %s381
      %s396 = sphi 0, %s382
      %s400 = sphi 0, %s400
      %s402 = sphi 0, %s400
      %s403 = sphi 0, %s402
      %s417 = sphi 0, %s403
      %s421 = sphi 0, %s421
      %s423 = sphi 0, %s421
      %s424 = sphi 0, %s423
      %s438 = sphi 0, %s424
      %s444 = sphi 0, %s446
      %s447 = sphi 0, %s444
      %s448 = sphi 0, %s447
      %s464 = sphi 0, %s448
    $region4: #{tpu_custom_call.1} parent=1 // loop_header_branch
      %33 = sbr.rel (%p31) target = $region8
    $region5: #{tpu_custom_call.1} parent=1 // loop_body
      %s35 = ssub.s32 %s30, 1
      %s36 = ssub.s32 %s30, 2
      %s37 = sadd.s32 %s30, 1
      %s38 = ssub.s32 %s30, %s37
      %p39 = scmp.eq.s32.totalorder %s38, 0
      %s41 = sadd.s32 %s40, 1
      %s42 = scalar_select %p39, %s40, %s41
      %p45 = pneg %p39
      %p46 = scmp.eq.s32.totalorder %s30, 1
      %p47 = por %p45, %p46
      %p48 = scmp.ne.s32.totalorder %s40, %s43
      %p49 = scmp.eq.s32.totalorder %s30, 0
      %p50 = por %p48, %p49
      %p51 = scmp.ne.s32.totalorder %s40, %s43
      %p52 = scmp.eq.s32.totalorder %s35, 1
      %p53 = por %p51, %p52
      %p54 = scmp.ne.s32.totalorder %s43, %s44
      %p55 = scmp.eq.s32.totalorder %s35, 0
      %p56 = por %p54, %p55
      %p57 = scmp.ne.s32.totalorder %s43, %s44
      %p58 = scmp.eq.s32.totalorder %s36, 1
      %p59 = por %p57, %p58
      %p61 = scmp.ne.s32.totalorder %s44, %s60
      %p62 = scmp.eq.s32.totalorder %s36, 0
      %p63 = por %p61, %p62
      %s65 = sadd.s32 %s64, 1
      %p68 = scmp.eq.s32.totalorder %s30, 1
      %p69 = scmp.ne.s32.totalorder %s64, %s66
      %p70 = scmp.eq.s32.totalorder %s30, 0
      %p71 = por %p69, %p70
      %p72 = scmp.ne.s32.totalorder %s64, %s66
      %p73 = scmp.eq.s32.totalorder %s35, 1
      %p74 = por %p72, %p73
      %p75 = scmp.ne.s32.totalorder %s66, %s67
      %p76 = scmp.eq.s32.totalorder %s35, 0
      %p77 = por %p75, %p76
      %p78 = scmp.ne.s32.totalorder %s66, %s67
      %p79 = scmp.eq.s32.totalorder %s36, 1
      %p80 = por %p78, %p79
      %p82 = scmp.ne.s32.totalorder %s67, %s81
      %p83 = scmp.eq.s32.totalorder %s36, 0
      %p84 = por %p82, %p83
      %s86 = sadd.s32 %s85, 1
      %p89 = scmp.eq.s32.totalorder %s30, 1
      %p90 = scmp.ne.s32.totalorder %s85, %s87
      %p91 = scmp.eq.s32.totalorder %s30, 0
      %p92 = por %p90, %p91
      %p93 = scmp.ne.s32.totalorder %s85, %s87
      %p94 = scmp.eq.s32.totalorder %s35, 1
      %p95 = por %p93, %p94
      %p96 = scmp.ne.s32.totalorder %s87, %s88
      %p97 = scmp.eq.s32.totalorder %s35, 0
      %p98 = por %p96, %p97
      %p99 = scmp.ne.s32.totalorder %s87, %s88
      %p100 = scmp.eq.s32.totalorder %s36, 1
      %p101 = por %p99, %p100
      %p103 = scmp.ne.s32.totalorder %s88, %s102
      %p104 = scmp.eq.s32.totalorder %s36, 0
      %p105 = por %p103, %p104
      %s107 = sadd.s32 %s106, 1
      %p110 = scmp.eq.s32.totalorder %s30, 1
      %p111 = scmp.ne.s32.totalorder %s106, %s108
      %p112 = scmp.eq.s32.totalorder %s30, 0
      %p113 = por %p111, %p112
      %p114 = scmp.ne.s32.totalorder %s106, %s108
      %p115 = scmp.eq.s32.totalorder %s35, 1
      %p116 = por %p114, %p115
      %p117 = scmp.ne.s32.totalorder %s108, %s109
      %p118 = scmp.eq.s32.totalorder %s35, 0
      %p119 = por %p117, %p118
      %p120 = scmp.ne.s32.totalorder %s108, %s109
      %p121 = scmp.eq.s32.totalorder %s36, 1
      %p122 = por %p120, %p121
      %p124 = scmp.ne.s32.totalorder %s109, %s123
      %p125 = scmp.eq.s32.totalorder %s36, 0
      %p126 = por %p124, %p125
      %s128 = sadd.s32 %s127, 1
      %p131 = scmp.eq.s32.totalorder %s30, 1
      %p132 = scmp.ne.s32.totalorder %s127, %s129
      %p133 = scmp.eq.s32.totalorder %s30, 0
      %p134 = por %p132, %p133
      %p135 = scmp.ne.s32.totalorder %s127, %s129
      %p136 = scmp.eq.s32.totalorder %s35, 1
      %p137 = por %p135, %p136
      %p138 = scmp.ne.s32.totalorder %s129, %s130
      %p139 = scmp.eq.s32.totalorder %s35, 0
      %p140 = por %p138, %p139
      %p141 = scmp.ne.s32.totalorder %s129, %s130
      %p142 = scmp.eq.s32.totalorder %s36, 1
      %p143 = por %p141, %p142
      %p145 = scmp.ne.s32.totalorder %s130, %s144
      %p146 = scmp.eq.s32.totalorder %s36, 0
      %p147 = por %p145, %p146
      %s149 = sadd.s32 %s148, 1
      %p152 = scmp.eq.s32.totalorder %s30, 1
      %p153 = scmp.ne.s32.totalorder %s148, %s150
      %p154 = scmp.eq.s32.totalorder %s30, 0
      %p155 = por %p153, %p154
      %p156 = scmp.ne.s32.totalorder %s148, %s150
      %p157 = scmp.eq.s32.totalorder %s35, 1
      %p158 = por %p156, %p157
      %p159 = scmp.ne.s32.totalorder %s150, %s151
      %p160 = scmp.eq.s32.totalorder %s35, 0
      %p161 = por %p159, %p160
      %p162 = scmp.ne.s32.totalorder %s150, %s151
      %p163 = scmp.eq.s32.totalorder %s36, 1
      %p164 = por %p162, %p163
      %p166 = scmp.ne.s32.totalorder %s151, %s165
      %p167 = scmp.eq.s32.totalorder %s36, 0
      %p168 = por %p166, %p167
      %s170 = sadd.s32 %s169, 1
      %p173 = scmp.eq.s32.totalorder %s30, 1
      %p174 = scmp.ne.s32.totalorder %s169, %s171
      %p175 = scmp.eq.s32.totalorder %s30, 0
      %p176 = por %p174, %p175
      %p177 = scmp.ne.s32.totalorder %s169, %s171
      %p178 = scmp.eq.s32.totalorder %s35, 1
      %p179 = por %p177, %p178
      %p180 = scmp.ne.s32.totalorder %s171, %s172
      %p181 = scmp.eq.s32.totalorder %s35, 0
      %p182 = por %p180, %p181
      %p183 = scmp.ne.s32.totalorder %s171, %s172
      %p184 = scmp.eq.s32.totalorder %s36, 1
      %p185 = por %p183, %p184
      %p187 = scmp.ne.s32.totalorder %s172, %s186
      %p188 = scmp.eq.s32.totalorder %s36, 0
      %p189 = por %p187, %p188
      %s191 = sadd.s32 %s190, 1
      %p194 = scmp.eq.s32.totalorder %s30, 1
      %p195 = scmp.ne.s32.totalorder %s190, %s192
      %p196 = scmp.eq.s32.totalorder %s30, 0
      %p197 = por %p195, %p196
      %p198 = scmp.ne.s32.totalorder %s190, %s192
      %p199 = scmp.eq.s32.totalorder %s35, 1
      %p200 = por %p198, %p199
      %p201 = scmp.ne.s32.totalorder %s192, %s193
      %p202 = scmp.eq.s32.totalorder %s35, 0
      %p203 = por %p201, %p202
      %p204 = scmp.ne.s32.totalorder %s192, %s193
      %p205 = scmp.eq.s32.totalorder %s36, 1
      %p206 = por %p204, %p205
      %p208 = scmp.ne.s32.totalorder %s193, %s207
      %p209 = scmp.eq.s32.totalorder %s36, 0
      %p210 = por %p208, %p209
      %s212 = sadd.s32 %s211, 1
      %p215 = scmp.eq.s32.totalorder %s30, 1
      %p216 = scmp.ne.s32.totalorder %s211, %s213
      %p217 = scmp.eq.s32.totalorder %s30, 0
      %p218 = por %p216, %p217
      %p219 = scmp.ne.s32.totalorder %s211, %s213
      %p220 = scmp.eq.s32.totalorder %s35, 1
      %p221 = por %p219, %p220
      %p222 = scmp.ne.s32.totalorder %s213, %s214
      %p223 = scmp.eq.s32.totalorder %s35, 0
      %p224 = por %p222, %p223
      %p225 = scmp.ne.s32.totalorder %s213, %s214
      %p226 = scmp.eq.s32.totalorder %s36, 1
      %p227 = por %p225, %p226
      %p229 = scmp.ne.s32.totalorder %s214, %s228
      %p230 = scmp.eq.s32.totalorder %s36, 0
      %p231 = por %p229, %p230
      %s233 = sadd.s32 %s232, 1
      %p236 = scmp.eq.s32.totalorder %s30, 1
      %p237 = scmp.ne.s32.totalorder %s232, %s234
      %p238 = scmp.eq.s32.totalorder %s30, 0
      %p239 = por %p237, %p238
      %p240 = scmp.ne.s32.totalorder %s232, %s234
      %p241 = scmp.eq.s32.totalorder %s35, 1
      %p242 = por %p240, %p241
      %p243 = scmp.ne.s32.totalorder %s234, %s235
      %p244 = scmp.eq.s32.totalorder %s35, 0
      %p245 = por %p243, %p244
      %p246 = scmp.ne.s32.totalorder %s234, %s235
      %p247 = scmp.eq.s32.totalorder %s36, 1
      %p248 = por %p246, %p247
      %p250 = scmp.ne.s32.totalorder %s235, %s249
      %p251 = scmp.eq.s32.totalorder %s36, 0
      %p252 = por %p250, %p251
      %s254 = sadd.s32 %s253, 1
      %p257 = scmp.eq.s32.totalorder %s30, 1
      %p258 = scmp.ne.s32.totalorder %s253, %s255
      %p259 = scmp.eq.s32.totalorder %s30, 0
      %p260 = por %p258, %p259
      %p261 = scmp.ne.s32.totalorder %s253, %s255
      %p262 = scmp.eq.s32.totalorder %s35, 1
      %p263 = por %p261, %p262
      %p264 = scmp.ne.s32.totalorder %s255, %s256
      %p265 = scmp.eq.s32.totalorder %s35, 0
      %p266 = por %p264, %p265
      %p267 = scmp.ne.s32.totalorder %s255, %s256
      %p268 = scmp.eq.s32.totalorder %s36, 1
      %p269 = por %p267, %p268
      %p271 = scmp.ne.s32.totalorder %s256, %s270
      %p272 = scmp.eq.s32.totalorder %s36, 0
      %p273 = por %p271, %p272
      %s275 = sadd.s32 %s274, 1
      %p278 = scmp.eq.s32.totalorder %s30, 1
      %p279 = scmp.ne.s32.totalorder %s274, %s276
      %p280 = scmp.eq.s32.totalorder %s30, 0
      %p281 = por %p279, %p280
      %p282 = scmp.ne.s32.totalorder %s274, %s276
      %p283 = scmp.eq.s32.totalorder %s35, 1
      %p284 = por %p282, %p283
      %p285 = scmp.ne.s32.totalorder %s276, %s277
      %p286 = scmp.eq.s32.totalorder %s35, 0
      %p287 = por %p285, %p286
      %p288 = scmp.ne.s32.totalorder %s276, %s277
      %p289 = scmp.eq.s32.totalorder %s36, 1
      %p290 = por %p288, %p289
      %p292 = scmp.ne.s32.totalorder %s277, %s291
      %p293 = scmp.eq.s32.totalorder %s36, 0
      %p294 = por %p292, %p293
      %s296 = sadd.s32 %s295, 1
      %p299 = scmp.eq.s32.totalorder %s30, 1
      %p300 = scmp.ne.s32.totalorder %s295, %s297
      %p301 = scmp.eq.s32.totalorder %s30, 0
      %p302 = por %p300, %p301
      %p303 = scmp.ne.s32.totalorder %s295, %s297
      %p304 = scmp.eq.s32.totalorder %s35, 1
      %p305 = por %p303, %p304
      %p306 = scmp.ne.s32.totalorder %s297, %s298
      %p307 = scmp.eq.s32.totalorder %s35, 0
      %p308 = por %p306, %p307
      %p309 = scmp.ne.s32.totalorder %s297, %s298
      %p310 = scmp.eq.s32.totalorder %s36, 1
      %p311 = por %p309, %p310
      %p313 = scmp.ne.s32.totalorder %s298, %s312
      %p314 = scmp.eq.s32.totalorder %s36, 0
      %p315 = por %p313, %p314
      %s317 = sadd.s32 %s316, 1
      %p320 = scmp.eq.s32.totalorder %s30, 1
      %p321 = scmp.ne.s32.totalorder %s316, %s318
      %p322 = scmp.eq.s32.totalorder %s30, 0
      %p323 = por %p321, %p322
      %p324 = scmp.ne.s32.totalorder %s316, %s318
      %p325 = scmp.eq.s32.totalorder %s35, 1
      %p326 = por %p324, %p325
      %p327 = scmp.ne.s32.totalorder %s318, %s319
      %p328 = scmp.eq.s32.totalorder %s35, 0
      %p329 = por %p327, %p328
      %p330 = scmp.ne.s32.totalorder %s318, %s319
      %p331 = scmp.eq.s32.totalorder %s36, 1
      %p332 = por %p330, %p331
      %p334 = scmp.ne.s32.totalorder %s319, %s333
      %p335 = scmp.eq.s32.totalorder %s36, 0
      %p336 = por %p334, %p335
      %s338 = sadd.s32 %s337, 1
      %p341 = scmp.eq.s32.totalorder %s30, 1
      %p342 = scmp.ne.s32.totalorder %s337, %s339
      %p343 = scmp.eq.s32.totalorder %s30, 0
      %p344 = por %p342, %p343
      %p345 = scmp.ne.s32.totalorder %s337, %s339
      %p346 = scmp.eq.s32.totalorder %s35, 1
      %p347 = por %p345, %p346
      %p348 = scmp.ne.s32.totalorder %s339, %s340
      %p349 = scmp.eq.s32.totalorder %s35, 0
      %p350 = por %p348, %p349
      %p351 = scmp.ne.s32.totalorder %s339, %s340
      %p352 = scmp.eq.s32.totalorder %s36, 1
      %p353 = por %p351, %p352
      %p355 = scmp.ne.s32.totalorder %s340, %s354
      %p356 = scmp.eq.s32.totalorder %s36, 0
      %p357 = por %p355, %p356
      %s359 = sadd.s32 %s358, 1
      %p362 = scmp.eq.s32.totalorder %s30, 1
      %p363 = scmp.ne.s32.totalorder %s358, %s360
      %p364 = scmp.eq.s32.totalorder %s30, 0
      %p365 = por %p363, %p364
      %p366 = scmp.ne.s32.totalorder %s358, %s360
      %p367 = scmp.eq.s32.totalorder %s35, 1
      %p368 = por %p366, %p367
      %p369 = scmp.ne.s32.totalorder %s360, %s361
      %p370 = scmp.eq.s32.totalorder %s35, 0
      %p371 = por %p369, %p370
      %p372 = scmp.ne.s32.totalorder %s360, %s361
      %p373 = scmp.eq.s32.totalorder %s36, 1
      %p374 = por %p372, %p373
      %p376 = scmp.ne.s32.totalorder %s361, %s375
      %p377 = scmp.eq.s32.totalorder %s36, 0
      %p378 = por %p376, %p377
      %s380 = sadd.s32 %s379, 1
      %p383 = scmp.eq.s32.totalorder %s30, 1
      %p384 = scmp.ne.s32.totalorder %s379, %s381
      %p385 = scmp.eq.s32.totalorder %s30, 0
      %p386 = por %p384, %p385
      %p387 = scmp.ne.s32.totalorder %s379, %s381
      %p388 = scmp.eq.s32.totalorder %s35, 1
      %p389 = por %p387, %p388
      %p390 = scmp.ne.s32.totalorder %s381, %s382
      %p391 = scmp.eq.s32.totalorder %s35, 0
      %p392 = por %p390, %p391
      %p393 = scmp.ne.s32.totalorder %s381, %s382
      %p394 = scmp.eq.s32.totalorder %s36, 1
      %p395 = por %p393, %p394
      %p397 = scmp.ne.s32.totalorder %s382, %s396
      %p398 = scmp.eq.s32.totalorder %s36, 0
      %p399 = por %p397, %p398
      %s401 = sadd.s32 %s400, 1
      %p404 = scmp.eq.s32.totalorder %s30, 1
      %p405 = scmp.ne.s32.totalorder %s400, %s402
      %p406 = scmp.eq.s32.totalorder %s30, 0
      %p407 = por %p405, %p406
      %p408 = scmp.ne.s32.totalorder %s400, %s402
      %p409 = scmp.eq.s32.totalorder %s35, 1
      %p410 = por %p408, %p409
      %p411 = scmp.ne.s32.totalorder %s402, %s403
      %p412 = scmp.eq.s32.totalorder %s35, 0
      %p413 = por %p411, %p412
      %p414 = scmp.ne.s32.totalorder %s402, %s403
      %p415 = scmp.eq.s32.totalorder %s36, 1
      %p416 = por %p414, %p415
      %p418 = scmp.ne.s32.totalorder %s403, %s417
      %p419 = scmp.eq.s32.totalorder %s36, 0
      %p420 = por %p418, %p419
      %s422 = sadd.s32 %s421, 1
      %p425 = scmp.eq.s32.totalorder %s30, 1
      %p426 = scmp.ne.s32.totalorder %s421, %s423
      %p427 = scmp.eq.s32.totalorder %s30, 0
      %p428 = por %p426, %p427
      %p429 = scmp.ne.s32.totalorder %s421, %s423
      %p430 = scmp.eq.s32.totalorder %s35, 1
      %p431 = por %p429, %p430
      %p432 = scmp.ne.s32.totalorder %s423, %s424
      %p433 = scmp.eq.s32.totalorder %s35, 0
      %p434 = por %p432, %p433
      %p435 = scmp.ne.s32.totalorder %s423, %s424
      %p436 = scmp.eq.s32.totalorder %s36, 1
      %p437 = por %p435, %p436
      %p439 = scmp.ne.s32.totalorder %s424, %s438
      %p440 = scmp.eq.s32.totalorder %s36, 0
      %p441 = por %p439, %p440
      %s442 = ssub.s32 %s30, %s37
      %p443 = scmp.eq.s32.totalorder %s442, 0
      %s445 = sadd.s32 %s444, 1
      %s446 = scalar_select %p443, %s444, %s445
      %p449 = pneg %p443
      %p450 = scmp.eq.s32.totalorder %s30, 1
      %p451 = por %p449, %p450
      %p452 = scmp.ne.s32.totalorder %s444, %s447
      %p453 = scmp.eq.s32.totalorder %s30, 0
      %p454 = por %p452, %p453
      %p455 = scmp.ne.s32.totalorder %s444, %s447
      %p456 = scmp.eq.s32.totalorder %s35, 1
      %p457 = por %p455, %p456
      %p458 = scmp.ne.s32.totalorder %s447, %s448
      %p459 = scmp.eq.s32.totalorder %s35, 0
      %p460 = por %p458, %p459
      %p461 = scmp.ne.s32.totalorder %s447, %s448
      %p462 = scmp.eq.s32.totalorder %s36, 1
      %p463 = por %p461, %p462
      %p465 = scmp.ne.s32.totalorder %s448, %s464
      %p466 = scmp.eq.s32.totalorder %s36, 0
      %p467 = por %p465, %p466
      %p468 = scmp.le.s32.totalorder 1, %s30
      %p469 = scmp.lt.s32.totalorder %s30, 3
      %p470 = pnand %p468, %p469
      %p471 = pneg %p470
      // Predicated region
      $region9: #{tpu_custom_call.1} parent=5 // pred_check
        _
      $region10: #{tpu_custom_call.1} parent=5 // pred_check_branch
        %473 = sbr.rel (%p470) target = $region12
      $region11: #{tpu_custom_call.1} parent=5 // pred_region
        %s474 = ssub.s32 %s30, 1
        // Predicated region
        $region13: #{tpu_custom_call.1} parent=11 // pred_check
          %p475 = pneg %p77
        $region14: #{tpu_custom_call.1} parent=11 // pred_check_branch
          %477 = sbr.rel (%p475) target = $region16
        $region15: #{tpu_custom_call.1} parent=11 // pred_region
          %s479 = ssub.s32 128, 128
          %480 = vsyncadd [#allocation3], %s479
          %s482 = sshll.u32 [#allocation2], 4
          %s483 = int_to_ptr.vmem [resolvable:$true] %s482
          %485 = dma.hbm_to_vmem [thread:$0]  %s1, 128, %s483, [#allocation3]
        $region16: #{tpu_custom_call.1} parent=11 // pred_fallthru
          _
        // Predicated region
        $region17: #{tpu_custom_call.1} parent=11 // pred_check
          %p486 = pneg %p98
        $region18: #{tpu_custom_call.1} parent=11 // pred_check_branch
          %488 = sbr.rel (%p486) target = $region20
        $region19: #{tpu_custom_call.1} parent=11 // pred_region
          _
        $region20: #{tpu_custom_call.1} parent=11 // pred_fallthru
          _
        // Predicated region
        $region21: #{tpu_custom_call.1} parent=11 // pred_check
          %p489 = pneg %p119
        $region22: #{tpu_custom_call.1} parent=11 // pred_check_branch
          %491 = sbr.rel (%p489) target = $region24
        $region23: #{tpu_custom_call.1} parent=11 // pred_region
          _
        $region24: #{tpu_custom_call.1} parent=11 // pred_fallthru
          _
        // Predicated region
        $region25: #{tpu_custom_call.1} parent=11 // pred_check
          %p492 = pneg %p140
        $region26: #{tpu_custom_call.1} parent=11 // pred_check_branch
          %494 = sbr.rel (%p492) target = $region28
        $region27: #{tpu_custom_call.1} parent=11 // pred_region
          %s496 = ssub.s32 32, 32
          %497 = vsyncadd [#allocation6], %s496
          %s498 = sshll.u32 [#allocation5], 4
          %s499 = int_to_ptr.vmem [resolvable:$true] %s498
          %504 = dma.hbm_to_vmem [thread:$0]  %s4, 32, %s499, [#allocation6], 16, 16, 1
        $region28: #{tpu_custom_call.1} parent=11 // pred_fallthru
          _
        // Predicated region
        $region29: #{tpu_custom_call.1} parent=11 // pred_check
          %p505 = pneg %p161
        $region30: #{tpu_custom_call.1} parent=11 // pred_check_branch
          %507 = sbr.rel (%p505) target = $region32
        $region31: #{tpu_custom_call.1} parent=11 // pred_region
          _
        $region32: #{tpu_custom_call.1} parent=11 // pred_fallthru
          _
        // Predicated region
        $region33: #{tpu_custom_call.1} parent=11 // pred_check
          %p508 = pneg %p182
        $region34: #{tpu_custom_call.1} parent=11 // pred_check_branch
          %510 = sbr.rel (%p508) target = $region36
        $region35: #{tpu_custom_call.1} parent=11 // pred_region
          _
        $region36: #{tpu_custom_call.1} parent=11 // pred_fallthru
          _
        // Predicated region
        $region37: #{tpu_custom_call.1} parent=11 // pred_check
          %p511 = pneg %p203
        $region38: #{tpu_custom_call.1} parent=11 // pred_check_branch
          %513 = sbr.rel (%p511) target = $region40
        $region39: #{tpu_custom_call.1} parent=11 // pred_region
          _
        $region40: #{tpu_custom_call.1} parent=11 // pred_fallthru
          _
        // Predicated region
        $region41: #{tpu_custom_call.1} parent=11 // pred_check
          %p514 = pneg %p224
        $region42: #{tpu_custom_call.1} parent=11 // pred_check_branch
          %516 = sbr.rel (%p514) target = $region44
        $region43: #{tpu_custom_call.1} parent=11 // pred_region
          _
        $region44: #{tpu_custom_call.1} parent=11 // pred_fallthru
          _
        // Predicated region
        $region45: #{tpu_custom_call.1} parent=11 // pred_check
          %p517 = pneg %p245
        $region46: #{tpu_custom_call.1} parent=11 // pred_check_branch
          %519 = sbr.rel (%p517) target = $region48
        $region47: #{tpu_custom_call.1} parent=11 // pred_region
          _
        $region48: #{tpu_custom_call.1} parent=11 // pred_fallthru
          _
        // Predicated region
        $region49: #{tpu_custom_call.1} parent=11 // pred_check
          %p520 = pneg %p266
        $region50: #{tpu_custom_call.1} parent=11 // pred_check_branch
          %522 = sbr.rel (%p520) target = $region52
        $region51: #{tpu_custom_call.1} parent=11 // pred_region
          _
        $region52: #{tpu_custom_call.1} parent=11 // pred_fallthru
          _
        // Predicated region
        $region53: #{tpu_custom_call.1} parent=11 // pred_check
          %p523 = pneg %p287
        $region54: #{tpu_custom_call.1} parent=11 // pred_check_branch
          %525 = sbr.rel (%p523) target = $region56
        $region55: #{tpu_custom_call.1} parent=11 // pred_region
          _
        $region56: #{tpu_custom_call.1} parent=11 // pred_fallthru
          _
        // Predicated region
        $region57: #{tpu_custom_call.1} parent=11 // pred_check
          %p526 = pneg %p308
        $region58: #{tpu_custom_call.1} parent=11 // pred_check_branch
          %528 = sbr.rel (%p526) target = $region60
        $region59: #{tpu_custom_call.1} parent=11 // pred_region
          _
        $region60: #{tpu_custom_call.1} parent=11 // pred_fallthru
          _
        // Predicated region
        $region61: #{tpu_custom_call.1} parent=11 // pred_check
          %p529 = pneg %p329
        $region62: #{tpu_custom_call.1} parent=11 // pred_check_branch
          %531 = sbr.rel (%p529) target = $region64
        $region63: #{tpu_custom_call.1} parent=11 // pred_region
          _
        $region64: #{tpu_custom_call.1} parent=11 // pred_fallthru
          _
        // Predicated region
        $region65: #{tpu_custom_call.1} parent=11 // pred_check
          %p532 = pneg %p350
        $region66: #{tpu_custom_call.1} parent=11 // pred_check_branch
          %534 = sbr.rel (%p532) target = $region68
        $region67: #{tpu_custom_call.1} parent=11 // pred_region
          _
        $region68: #{tpu_custom_call.1} parent=11 // pred_fallthru
          _
        // Predicated region
        $region69: #{tpu_custom_call.1} parent=11 // pred_check
          %p535 = pneg %p371
        $region70: #{tpu_custom_call.1} parent=11 // pred_check_branch
          %537 = sbr.rel (%p535) target = $region72
        $region71: #{tpu_custom_call.1} parent=11 // pred_region
          _
        $region72: #{tpu_custom_call.1} parent=11 // pred_fallthru
          _
        // Predicated region
        $region73: #{tpu_custom_call.1} parent=11 // pred_check
          %p538 = pneg %p392
        $region74: #{tpu_custom_call.1} parent=11 // pred_check_branch
          %540 = sbr.rel (%p538) target = $region76
        $region75: #{tpu_custom_call.1} parent=11 // pred_region
          _
        $region76: #{tpu_custom_call.1} parent=11 // pred_fallthru
          _
        // Predicated region
        $region77: #{tpu_custom_call.1} parent=11 // pred_check
          %p541 = pneg %p413
        $region78: #{tpu_custom_call.1} parent=11 // pred_check_branch
          %543 = sbr.rel (%p541) target = $region80
        $region79: #{tpu_custom_call.1} parent=11 // pred_region
          _
        $region80: #{tpu_custom_call.1} parent=11 // pred_fallthru
          _
        // Predicated region
        $region81: #{tpu_custom_call.1} parent=11 // pred_check
          %p544 = pneg %p434
        $region82: #{tpu_custom_call.1} parent=11 // pred_check_branch
          %546 = sbr.rel (%p544) target = $region84
        $region83: #{tpu_custom_call.1} parent=11 // pred_region
          _
        $region84: #{tpu_custom_call.1} parent=11 // pred_fallthru
          _
      $region12: #{tpu_custom_call.1} parent=5 // pred_fallthru
        _
      %p547 = scmp.lt.s32.totalorder %s30, 2
      // Predicated region
      $region85: #{tpu_custom_call.1} parent=5 // pred_check
        %p548 = pneg %p547
      $region86: #{tpu_custom_call.1} parent=5 // pred_check_branch
        %550 = sbr.rel (%p548) target = $region88
      $region87: #{tpu_custom_call.1} parent=5 // pred_region
        // Predicated region
        $region89: #{tpu_custom_call.1} parent=87 // pred_check
          %p551 = pneg %p50
        $region90: #{tpu_custom_call.1} parent=87 // pred_check_branch
          %553 = sbr.rel (%p551) target = $region92
        $region91: #{tpu_custom_call.1} parent=87 // pred_region
          %s554 = smul.u32 4, %s30
          %p555 = scmp.lt.s32.totalorder %s554, 7
          %s556 = scalar_select %p555, %s554, 7
          %s557 = smul.addr %s556, 8
          %s558 = scalar_lea.vmem %s0, %s557
          %s559 = smul.u32 4, %s30
        $region92: #{tpu_custom_call.1} parent=87 // pred_fallthru
          _
      $region88: #{tpu_custom_call.1} parent=5 // pred_fallthru
        _
      %p560 = scmp.le.s32.totalorder 1, %s30
      %p561 = scmp.lt.s32.totalorder %s30, 3
      %p562 = pnand %p560, %p561
      %p563 = pneg %p562
      // Predicated region
      $region93: #{tpu_custom_call.1} parent=5 // pred_check
        _
      $region94: #{tpu_custom_call.1} parent=5 // pred_check_branch
        %565 = sbr.rel (%p562) target = $region96
      $region95: #{tpu_custom_call.1} parent=5 // pred_region
        %s566 = ssub.s32 %s30, 1
        // Predicated region
        $region97: #{tpu_custom_call.1} parent=95 // pred_check
          %p567 = pneg %p77
        $region98: #{tpu_custom_call.1} parent=95 // pred_check_branch
          %569 = sbr.rel (%p567) target = $region100
        $region99: #{tpu_custom_call.1} parent=95 // pred_region
          %570 = dma.done [#allocation3], 128
        $region100: #{tpu_custom_call.1} parent=95 // pred_fallthru
          _
        // Predicated region
        $region101: #{tpu_custom_call.1} parent=95 // pred_check
          %p571 = pneg %p140
        $region102: #{tpu_custom_call.1} parent=95 // pred_check_branch
          %573 = sbr.rel (%p571) target = $region104
        $region103: #{tpu_custom_call.1} parent=95 // pred_region
          %574 = dma.done [#allocation6], 32
        $region104: #{tpu_custom_call.1} parent=95 // pred_fallthru
          _
        %s575 = smul.u32 4, %s35
        %p576 = scmp.lt.s32.totalorder %s575, 7
        %s577 = scalar_select %p576, %s575, 7
        %s578 = smul.addr %s577, 8
        %s579 = scalar_lea.vmem %s0, %s578
        %p580 = pneg %p56
        %p581 = pneg %p53
        %p582 = pneg %p77
        %p583 = pneg %p74
        %p584 = pneg %p98
        %p585 = pneg %p95
        %p586 = pneg %p119
        %p587 = pneg %p116
        %p588 = pneg %p140
        %p589 = pneg %p137
        %p590 = pneg %p161
        %p591 = pneg %p158
        %p592 = pneg %p182
        %p593 = pneg %p179
        %p594 = pneg %p203
        %p595 = pneg %p200
        %p596 = pneg %p224
        %p597 = pneg %p221
        %p598 = pneg %p245
        %p599 = pneg %p242
        %p600 = pneg %p266
        %p601 = pneg %p263
        %p602 = pneg %p287
        %p603 = pneg %p284
        %p604 = pneg %p308
        %p605 = pneg %p305
        %p606 = pneg %p329
        %p607 = pneg %p326
        %p608 = pneg %p350
        %p609 = pneg %p347
        %p610 = pneg %p371
        %p611 = pneg %p368
        %p612 = pneg %p392
        %p613 = pneg %p389
        %p614 = pneg %p413
        %p615 = pneg %p410
        %p616 = pneg %p434
        %p617 = pneg %p431
        %p618 = pneg %p460
        %p619 = pneg %p457
        %s620 = sand.u32 %s447, 1
        %s621 = scalar_lea.sflag [#allocation4], %s620
        %s622 = sand.u32 %s447, 1
        %s623 = smul.addr %s622, 32
        %s624 = scalar_lea.vmem [#allocation7], %s623
        %s625 = smul.u32 4, %s35
        %p626 = scmp.lt.s32.totalorder %s625, 7
        %s627 = scalar_select %p626, %s625, 7
        %s628 = smul.addr %s627, 8
        %s629 = scalar_lea.vmem %s0, %s628
        %s630 = smul.u32 4, %s35
        %s631 = smul.u32 4, %s35
        %v633 = vld [vmem:[%s629] sm:$0xff]
        %v634 = vld [vmem:[%s629 + $0x8] sm:$0xff]
        %v635 = vld [vmem:[%s629 + $0x10] sm:$0xff]
        %v636 = vld [vmem:[%s629 + $0x18] sm:$0xff]
        %vm637 = vcmask 31744
        %v638 = vsel %vm637, %v633, 0.0
        %v639 = vrot.slane %v638, 4
        %v640 = vadd.f32 %v638, %v639
        %v641 = vrot.slane %v640, 2
        %v642 = vadd.f32 %v640, %v641
        %v643 = vrot.slane %v642, 1
        %v644 = vadd.f32 %v642, %v643
        %v645 = vsel %vm637, %v634, 0.0
        %v646 = vrot.slane %v645, 4
        %v647 = vadd.f32 %v645, %v646
        %v648 = vrot.slane %v647, 2
        %v649 = vadd.f32 %v647, %v648
        %v650 = vrot.slane %v649, 1
        %v651 = vadd.f32 %v649, %v650
        %v652 = vsel %vm637, %v635, 0.0
        %v653 = vrot.slane %v652, 4
        %v654 = vadd.f32 %v652, %v653
        %v655 = vrot.slane %v654, 2
        %v656 = vadd.f32 %v654, %v655
        %v657 = vrot.slane %v656, 1
        %v658 = vadd.f32 %v656, %v657
        %v659 = vsel %vm637, %v636, 0.0
        %v660 = vrot.slane %v659, 4
        %v661 = vadd.f32 %v659, %v660
        %v662 = vrot.slane %v661, 2
        %v663 = vadd.f32 %v661, %v662
        %v664 = vrot.slane %v663, 1
        %v665 = vadd.f32 %v663, %v664
        %v666 = vrcp.pop 8.0
        %v667 = vmul.f32 %v644, %v666
        %v668 = vmul.f32 %v651, %v666
        %v669 = vmul.f32 %v658, %v666
        %v670 = vmul.f32 %v665, %v666
        %v671 = vsub.f32 %v633, %v667
        %v672 = vsub.f32 %v634, %v668
        %v673 = vsub.f32 %v635, %v669
        %v674 = vsub.f32 %v636, %v670
        %v675 = vmul.f32 %v671, %v671
        %v676 = vmul.f32 %v672, %v672
        %v677 = vmul.f32 %v673, %v673
        %v678 = vmul.f32 %v674, %v674
        %v679 = vsel %vm637, %v675, 0.0
        %v680 = vrot.slane %v679, 4
        %v681 = vadd.f32 %v679, %v680
        %v682 = vrot.slane %v681, 2
        %v683 = vadd.f32 %v681, %v682
        %v684 = vrot.slane %v683, 1
        %v685 = vadd.f32 %v683, %v684
        %v686 = vsel %vm637, %v676, 0.0
        %v687 = vrot.slane %v686, 4
        %v688 = vadd.f32 %v686, %v687
        %v689 = vrot.slane %v688, 2
        %v690 = vadd.f32 %v688, %v689
        %v691 = vrot.slane %v690, 1
        %v692 = vadd.f32 %v690, %v691
        %v693 = vsel %vm637, %v677, 0.0
        %v694 = vrot.slane %v693, 4
        %v695 = vadd.f32 %v693, %v694
        %v696 = vrot.slane %v695, 2
        %v697 = vadd.f32 %v695, %v696
        %v698 = vrot.slane %v697, 1
        %v699 = vadd.f32 %v697, %v698
        %v700 = vsel %vm637, %v678, 0.0
        %v701 = vrot.slane %v700, 4
        %v702 = vadd.f32 %v700, %v701
        %v703 = vrot.slane %v702, 2
        %v704 = vadd.f32 %v702, %v703
        %v705 = vrot.slane %v704, 1
        %v706 = vadd.f32 %v704, %v705
        %v707 = vmul.f32 %v685, %v666
        %v708 = vmul.f32 %v692, %v666
        %v709 = vmul.f32 %v699, %v666
        %v710 = vmul.f32 %v706, %v666
        %v711 = vadd.f32 %v707, 1e-05
        %v712 = vadd.f32 %v708, 1e-05
        %v713 = vadd.f32 %v709, 1e-05
        %v714 = vadd.f32 %v710, 1e-05
        %v715 = vrsqrt.pop %v711
        %v716 = vmul.f32 %v711, %v715
        %vm717 = vcmp.eq.f32.partialorder %v711, inf
        %v718 = vsel %vm717, %v711, %v716
        %vm719 = vcmp.eq.f32.partialorder %v711, 0.0
        %v720 = vand.u32 %v711, 2147483648
        %v721 = vsel %vm719, %v720, %v718
        %v722 = vrsqrt.pop %v712
        %v723 = vmul.f32 %v712, %v722
        %vm724 = vcmp.eq.f32.partialorder %v712, inf
        %v725 = vsel %vm724, %v712, %v723
        %vm726 = vcmp.eq.f32.partialorder %v712, 0.0
        %v727 = vand.u32 %v712, 2147483648
        %v728 = vsel %vm726, %v727, %v725
        %v729 = vrsqrt.pop %v713
        %v730 = vmul.f32 %v713, %v729
        %vm731 = vcmp.eq.f32.partialorder %v713, inf
        %v732 = vsel %vm731, %v713, %v730
        %vm733 = vcmp.eq.f32.partialorder %v713, 0.0
        %v734 = vand.u32 %v713, 2147483648
        %v735 = vsel %vm733, %v734, %v732
        %v736 = vrsqrt.pop %v714
        %v737 = vmul.f32 %v714, %v736
        %vm738 = vcmp.eq.f32.partialorder %v714, inf
        %v739 = vsel %vm738, %v714, %v737
        %vm740 = vcmp.eq.f32.partialorder %v714, 0.0
        %v741 = vand.u32 %v714, 2147483648
        %v742 = vsel %vm740, %v741, %v739
        %v743 = vrsqrt.pop %v711
        %v744 = vrsqrt.pop %v712
        %v745 = vrsqrt.pop %v713
        %v746 = vrsqrt.pop %v714
        %v747 = vmul.f32 %v671, %v743
        %v748 = vmul.f32 %v672, %v744
        %v749 = vmul.f32 %v673, %v745
        %v750 = vmul.f32 %v674, %v746
        %v751 = vpack.c.bf16 %v748, %v747
        %v752 = vpack.c.bf16 %v750, %v749
        %v753 = vld [vmem:[%s2] sm:$0x3]
        %v755 = vsel %vm637, %v751, 0
        %v758 = vsel %vm637, %v752, 0
        %vm760 = vcmask 1041408
        %v762 = vsel %vm760, %v753, 0
        %764 = vmatprep.subr.bf16.mxu0 0
        %765 = vmatpush1.bf16.msra.mxu0 %v762
        %766 = vmatprep.subr.bf16.mxu0 0
        %767 = vmatpush1.bf16.msra.mxu0 0
        %768 = vmatprep.subr.bf16.mxu0 0
        %769 = vmatpush1.bf16.msra.mxu0 0
        %770 = vmatprep.subr.bf16.mxu0 0
        %771 = vmatpush1.bf16.msra.mxu0 0
        %772 = vmatprep.subr.bf16.mxu0 0
        %773 = vmatpush1.bf16.msra.mxu0 0
        %774 = vmatprep.subr.bf16.mxu0 0
        %775 = vmatpush1.bf16.msra.mxu0 0
        %776 = vmatprep.subr.bf16.mxu0 0
        %777 = vmatpush1.bf16.msra.mxu0 0
        %778 = vmatprep.subr.bf16.mxu0 0
        %779 = vmatpush1.bf16.msra.mxu0 0
        %780 = vmatprep.subr.bf16.mxu0 0
        %781 = vmatpush1.bf16.msra.mxu0 0
        %782 = vmatprep.subr.bf16.mxu0 0
        %783 = vmatpush1.bf16.msra.mxu0 0
        %784 = vmatprep.subr.bf16.mxu0 0
        %785 = vmatpush1.bf16.msra.mxu0 0
        %786 = vmatprep.subr.bf16.mxu0 0
        %787 = vmatpush1.bf16.msra.mxu0 0
        %788 = vmatprep.subr.bf16.mxu0 0
        %789 = vmatpush1.bf16.msra.mxu0 0
        %790 = vmatprep.subr.bf16.mxu0 0
        %791 = vmatpush1.bf16.msra.mxu0 0
        %792 = vmatprep.subr.bf16.mxu0 0
        %793 = vmatpush1.bf16.msra.mxu0 0
        %794 = vmatprep.subr.bf16.mxu0 0
        %795 = vmatpush1.bf16.msra.mxu0 0
        %796 = vmatprep.mubr.bf16.mxu0 0
        %797 = vmatmul.mubr.bf16.gmra.mrb[0].mxu0 %v755
        %v798 = vpop.f32.mrb[0].mxu0
        %v799 = vadd.f32 0.0, %v798
        %v800 = vpop.f32.mrb[0].mxu0
        %v801 = vpop.f32.mrb[0].mxu0
        %v802 = vadd.f32 0.0, %v801
        %v803 = vpop.f32.mrb[0].mxu0
        %804 = vmatprep.mubr.bf16.mxu0 0
        %805 = vmatmul.mubr.bf16.gmra.mrb[0].mxu0 %v758
        %v806 = vpop.f32.mrb[0].mxu0
        %v807 = vadd.f32 0.0, %v806
        %v808 = vpop.f32.mrb[0].mxu0
        %v809 = vpop.f32.mrb[0].mxu0
        %v810 = vadd.f32 0.0, %v809
        %v811 = vpop.f32.mrb[0].mxu0
        %812 = vdwg.mxu0
        %v813 = vld [vmem:[#allocation2] sm:$0xff]
        %v814 = vadd.f32 %v799, %v813
        %v815 = vadd.f32 %v802, %v813
        %v816 = vadd.f32 %v807, %v813
        %v817 = vadd.f32 %v810, %v813
        %v818 = vpack.c.bf16 %v815, %v814
        %v819 = vpack.c.bf16 %v817, %v816
        %v820 = vld [vmem:[%s3] sm:$0xf]
        %v821 = vld [vmem:[%s3 + $0x4] sm:$0xf]
        %v822 = vld [vmem:[%s3 + $0x8] sm:$0xf]
        %v823 = vld [vmem:[%s3 + $0xc] sm:$0xf]
        %v824 = vld [vmem:[#allocation5] sm:$0x1]
        %v826 = vlaneseq
        %v827 = vshrl.u32 %v826, 7
        %v828 = vsub.s32 0, %v827
        %v829 = vrot.slane %v824, %v828
        %v835 = vunpack.c.l.b16 %v820
        %v836 = vunpack.c.l.b16 %v821
        %v837 = vunpack.c.l.b16 %v822
        %v838 = vunpack.c.l.b16 %v823
        %v839 = vpack.c.b16 %v836, %v835
        %v840 = vpack.c.b16 %v838, %v837
        %vm843 = vcmask 261120
        %v845 = vsel %vm843, %v818, 0
        %v848 = vsel %vm843, %v819, 0
        %850 = vmatprep.subr.bf16.mxu0 0
        %851 = vmatpush1.bf16.msra.mxu0 %v839
        %852 = vmatprep.subr.bf16.mxu0 0
        %853 = vmatpush1.bf16.msra.mxu0 %v840
        %854 = vmatprep.subr.bf16.mxu0 0
        %855 = vmatpush1.bf16.msra.mxu0 0
        %856 = vmatprep.subr.bf16.mxu0 0
        %857 = vmatpush1.bf16.msra.mxu0 0
        %858 = vmatprep.subr.bf16.mxu0 0
        %859 = vmatpush1.bf16.msra.mxu0 0
        %860 = vmatprep.subr.bf16.mxu0 0
        %861 = vmatpush1.bf16.msra.mxu0 0
        %862 = vmatprep.subr.bf16.mxu0 0
        %863 = vmatpush1.bf16.msra.mxu0 0
        %864 = vmatprep.subr.bf16.mxu0 0
        %865 = vmatpush1.bf16.msra.mxu0 0
        %866 = vmatprep.subr.bf16.mxu0 0
        %867 = vmatpush1.bf16.msra.mxu0 0
        %868 = vmatprep.subr.bf16.mxu0 0
        %869 = vmatpush1.bf16.msra.mxu0 0
        %870 = vmatprep.subr.bf16.mxu0 0
        %871 = vmatpush1.bf16.msra.mxu0 0
        %872 = vmatprep.subr.bf16.mxu0 0
        %873 = vmatpush1.bf16.msra.mxu0 0
        %874 = vmatprep.subr.bf16.mxu0 0
        %875 = vmatpush1.bf16.msra.mxu0 0
        %876 = vmatprep.subr.bf16.mxu0 0
        %877 = vmatpush1.bf16.msra.mxu0 0
        %878 = vmatprep.subr.bf16.mxu0 0
        %879 = vmatpush1.bf16.msra.mxu0 0
        %880 = vmatprep.subr.bf16.mxu0 0
        %881 = vmatpush1.bf16.msra.mxu0 0
        %882 = vmatprep.mubr.bf16.mxu0 0
        %883 = vmatmul.mubr.bf16.gmra.mrb[0].mxu0 %v845
        %v884 = vpop.f32.mrb[0].mxu0
        %v885 = vadd.f32 %v829, %v884
        %v886 = vpop.f32.mrb[0].mxu0
        %v887 = vpop.f32.mrb[0].mxu0
        %v888 = vadd.f32 %v829, %v887
        %v889 = vpop.f32.mrb[0].mxu0
        %890 = vmatprep.mubr.bf16.mxu0 0
        %891 = vmatmul.mubr.bf16.gmra.mrb[0].mxu0 %v848
        %v892 = vpop.f32.mrb[0].mxu0
        %v893 = vadd.f32 %v829, %v892
        %v894 = vpop.f32.mrb[0].mxu0
        %v895 = vpop.f32.mrb[0].mxu0
        %v896 = vadd.f32 %v829, %v895
        %v897 = vpop.f32.mrb[0].mxu0
        %898 = vdwg.mxu0
        %v899 = vld [vmem:[%s5] sm:$0xf]
        %v900 = vld [vmem:[%s5 + $0x4] sm:$0xf]
        %v901 = vld [vmem:[%s5 + $0x8] sm:$0xf]
        %v902 = vld [vmem:[%s5 + $0xc] sm:$0xf]
        %v903 = vld [vmem:[%s6] sm:$0x1]
        %v905 = vlaneseq
        %v906 = vshrl.u32 %v905, 7
        %v907 = vsub.s32 0, %v906
        %v908 = vrot.slane %v903, %v907
        %v914 = vunpack.c.l.b16 %v899
        %v915 = vunpack.c.l.b16 %v900
        %v916 = vunpack.c.l.b16 %v901
        %v917 = vunpack.c.l.b16 %v902
        %v918 = vpack.c.b16 %v915, %v914
        %v919 = vpack.c.b16 %v917, %v916
        %922 = vmatprep.subr.bf16.mxu0 0
        %923 = vmatpush1.bf16.msra.mxu0 %v918
        %924 = vmatprep.subr.bf16.mxu0 0
        %925 = vmatpush1.bf16.msra.mxu0 %v919
        %926 = vmatprep.subr.bf16.mxu0 0
        %927 = vmatpush1.bf16.msra.mxu0 0
        %928 = vmatprep.subr.bf16.mxu0 0
        %929 = vmatpush1.bf16.msra.mxu0 0
        %930 = vmatprep.subr.bf16.mxu0 0
        %931 = vmatpush1.bf16.msra.mxu0 0
        %932 = vmatprep.subr.bf16.mxu0 0
        %933 = vmatpush1.bf16.msra.mxu0 0
        %934 = vmatprep.subr.bf16.mxu0 0
        %935 = vmatpush1.bf16.msra.mxu0 0
        %936 = vmatprep.subr.bf16.mxu0 0
        %937 = vmatpush1.bf16.msra.mxu0 0
        %938 = vmatprep.subr.bf16.mxu0 0
        %939 = vmatpush1.bf16.msra.mxu0 0
        %940 = vmatprep.subr.bf16.mxu0 0
        %941 = vmatpush1.bf16.msra.mxu0 0
        %942 = vmatprep.subr.bf16.mxu0 0
        %943 = vmatpush1.bf16.msra.mxu0 0
        %944 = vmatprep.subr.bf16.mxu0 0
        %945 = vmatpush1.bf16.msra.mxu0 0
        %946 = vmatprep.subr.bf16.mxu0 0
        %947 = vmatpush1.bf16.msra.mxu0 0
        %948 = vmatprep.subr.bf16.mxu0 0
        %949 = vmatpush1.bf16.msra.mxu0 0
        %950 = vmatprep.subr.bf16.mxu0 0
        %951 = vmatpush1.bf16.msra.mxu0 0
        %952 = vmatprep.subr.bf16.mxu0 0
        %953 = vmatpush1.bf16.msra.mxu0 0
        %954 = vmatprep.mubr.bf16.mxu0 0
        %955 = vmatmul.mubr.bf16.gmra.mrb[0].mxu0 %v845
        %v956 = vpop.f32.mrb[0].mxu0
        %v957 = vadd.f32 %v908, %v956
        %v958 = vpop.f32.mrb[0].mxu0
        %v959 = vpop.f32.mrb[0].mxu0
        %v960 = vadd.f32 %v908, %v959
        %v961 = vpop.f32.mrb[0].mxu0
        %962 = vmatprep.mubr.bf16.mxu0 0
        %963 = vmatmul.mubr.bf16.gmra.mrb[0].mxu0 %v848
        %v964 = vpop.f32.mrb[0].mxu0
        %v965 = vadd.f32 %v908, %v964
        %v966 = vpop.f32.mrb[0].mxu0
        %v967 = vpop.f32.mrb[0].mxu0
        %v968 = vadd.f32 %v908, %v967
        %v969 = vpop.f32.mrb[0].mxu0
        %970 = vdwg.mxu0
        %v971 = vld [vmem:[%s7] sm:$0xf]
        %v972 = vld [vmem:[%s7 + $0x4] sm:$0xf]
        %v973 = vld [vmem:[%s7 + $0x8] sm:$0xf]
        %v974 = vld [vmem:[%s7 + $0xc] sm:$0xf]
        %v975 = vld [vmem:[%s8] sm:$0x1]
        %v977 = vlaneseq
        %v978 = vshrl.u32 %v977, 7
        %v979 = vsub.s32 0, %v978
        %v980 = vrot.slane %v975, %v979
        %v986 = vunpack.c.l.b16 %v971
        %v987 = vunpack.c.l.b16 %v972
        %v988 = vunpack.c.l.b16 %v973
        %v989 = vunpack.c.l.b16 %v974
        %v990 = vpack.c.b16 %v987, %v986
        %v991 = vpack.c.b16 %v989, %v988
        %994 = vmatprep.subr.bf16.mxu0 0
        %995 = vmatpush1.bf16.msra.mxu0 %v990
        %996 = vmatprep.subr.bf16.mxu0 0
        %997 = vmatpush1.bf16.msra.mxu0 %v991
        %998 = vmatprep.subr.bf16.mxu0 0
        %999 = vmatpush1.bf16.msra.mxu0 0
        %1000 = vmatprep.subr.bf16.mxu0 0
        %1001 = vmatpush1.bf16.msra.mxu0 0
        %1002 = vmatprep.subr.bf16.mxu0 0
        %1003 = vmatpush1.bf16.msra.mxu0 0
        %1004 = vmatprep.subr.bf16.mxu0 0
        %1005 = vmatpush1.bf16.msra.mxu0 0
        %1006 = vmatprep.subr.bf16.mxu0 0
        %1007 = vmatpush1.bf16.msra.mxu0 0
        %1008 = vmatprep.subr.bf16.mxu0 0
        %1009 = vmatpush1.bf16.msra.mxu0 0
        %1010 = vmatprep.subr.bf16.mxu0 0
        %1011 = vmatpush1.bf16.msra.mxu0 0
        %1012 = vmatprep.subr.bf16.mxu0 0
        %1013 = vmatpush1.bf16.msra.mxu0 0
        %1014 = vmatprep.subr.bf16.mxu0 0
        %1015 = vmatpush1.bf16.msra.mxu0 0
        %1016 = vmatprep.subr.bf16.mxu0 0
        %1017 = vmatpush1.bf16.msra.mxu0 0
        %1018 = vmatprep.subr.bf16.mxu0 0
        %1019 = vmatpush1.bf16.msra.mxu0 0
        %1020 = vmatprep.subr.bf16.mxu0 0
        %1021 = vmatpush1.bf16.msra.mxu0 0
        %1022 = vmatprep.subr.bf16.mxu0 0
        %1023 = vmatpush1.bf16.msra.mxu0 0
        %1024 = vmatprep.subr.bf16.mxu0 0
        %1025 = vmatpush1.bf16.msra.mxu0 0
        %1026 = vmatprep.mubr.bf16.mxu0 0
        %1027 = vmatmul.mubr.bf16.gmra.mrb[0].mxu0 %v845
        %v1028 = vpop.f32.mrb[0].mxu0
        %v1029 = vadd.f32 %v980, %v1028
        %v1030 = vpop.f32.mrb[0].mxu0
        %v1031 = vpop.f32.mrb[0].mxu0
        %v1032 = vadd.f32 %v980, %v1031
        %v1033 = vpop.f32.mrb[0].mxu0
        %1034 = vmatprep.mubr.bf16.mxu0 0
        %1035 = vmatmul.mubr.bf16.gmra.mrb[0].mxu0 %v848
        %v1036 = vpop.f32.mrb[0].mxu0
        %v1037 = vadd.f32 %v980, %v1036
        %v1038 = vpop.f32.mrb[0].mxu0
        %v1039 = vpop.f32.mrb[0].mxu0
        %v1040 = vadd.f32 %v980, %v1039
        %v1041 = vpop.f32.mrb[0].mxu0
        %1042 = vdwg.mxu0
        %v1043 = vpack.c.bf16 %v885, %v885
        %v1044 = vpack.c.bf16 %v888, %v888
        %v1045 = vpack.c.bf16 %v893, %v893
        %v1046 = vpack.c.bf16 %v896, %v896
        %v1047 = vpack.c.bf16 %v957, %v957
        %v1048 = vpack.c.bf16 %v960, %v960
        %v1049 = vpack.c.bf16 %v965, %v965
        %v1050 = vpack.c.bf16 %v968, %v968
        %v1051 = vpack.c.bf16 %v1029, %v1029
        %v1052 = vpack.c.bf16 %v1032, %v1032
        %v1053 = vpack.c.bf16 %v1037, %v1037
        %v1054 = vpack.c.bf16 %v1040, %v1040
        %vm1055 = vcmask 64512
        %v1057 = vsel %vm1055, %v1043, 0
        %v1060 = vsel %vm1055, %v1047, 0
        %1062 = vmatprep.subr.bf16.mxu0 0
        %1063 = vmatpush1.bf16.xpose.msra.mxu0 %v1060
        %1064 = vmatprep.subr.bf16.mxu0 0
        %1065 = vmatpush1.bf16.xpose.msra.mxu0 0
        %1066 = vmatprep.subr.bf16.mxu0 0
        %1067 = vmatpush1.bf16.xpose.msra.mxu0 0
        %1068 = vmatprep.subr.bf16.mxu0 0
        %1069 = vmatpush1.bf16.xpose.msra.mxu0 0
        %1070 = vmatprep.subr.bf16.mxu0 0
        %1071 = vmatpush1.bf16.xpose.msra.mxu0 0
        %1072 = vmatprep.subr.bf16.mxu0 0
        %1073 = vmatpush1.bf16.xpose.msra.mxu0 0
        %1074 = vmatprep.subr.bf16.mxu0 0
        %1075 = vmatpush1.bf16.xpose.msra.mxu0 0
        %1076 = vmatprep.subr.bf16.mxu0 0
        %1077 = vmatpush1.bf16.xpose.msra.mxu0 0
        %1078 = vmatprep.subr.bf16.mxu0 0
        %1079 = vmatpush1.bf16.xpose.msra.mxu0 0
        %1080 = vmatprep.subr.bf16.mxu0 0
        %1081 = vmatpush1.bf16.xpose.msra.mxu0 0
        %1082 = vmatprep.subr.bf16.mxu0 0
        %1083 = vmatpush1.bf16.xpose.msra.mxu0 0
        %1084 = vmatprep.subr.bf16.mxu0 0
        %1085 = vmatpush1.bf16.xpose.msra.mxu0 0
        %1086 = vmatprep.subr.bf16.mxu0 0
        %1087 = vmatpush1.bf16.xpose.msra.mxu0 0
        %1088 = vmatprep.subr.bf16.mxu0 0
        %1089 = vmatpush1.bf16.xpose.msra.mxu0 0
        %1090 = vmatprep.subr.bf16.mxu0 0
        %1091 = vmatpush1.bf16.xpose.msra.mxu0 0
        %1092 = vmatprep.subr.bf16.mxu0 0
        %1093 = vmatpush1.bf16.xpose.msra.mxu0 0
        %1094 = vmatprep.mubr.bf16.mxu0 0
        %1095 = vmatmul.mubr.bf16.gmra.mrb[0].mxu0 %v1057
        %v1096 = vpop.f32.mrb[0].mxu0
        %v1097 = vadd.f32 0.0, %v1096
        %v1098 = vpop.f32.mrb[0].mxu0
        %v1099 = vpop.f32.mrb[0].mxu0
        %v1100 = vpop.f32.mrb[0].mxu0
        %1101 = vdwg.mxu0
        %v1103 = vsel %vm1055, %v1044, 0
        %v1106 = vsel %vm1055, %v1048, 0
        %1108 = vmatprep.subr.bf16.mxu0 0
        %1109 = vmatpush1.bf16.xpose.msra.mxu0 %v1106
        %1110 = vmatprep.subr.bf16.mxu0 0
        %1111 = vmatpush1.bf16.xpose.msra.mxu0 0
        %1112 = vmatprep.subr.bf16.mxu0 0
        %1113 = vmatpush1.bf16.xpose.msra.mxu0 0
        %1114 = vmatprep.subr.bf16.mxu0 0
        %1115 = vmatpush1.bf16.xpose.msra.mxu0 0
        %1116 = vmatprep.subr.bf16.mxu0 0
        %1117 = vmatpush1.bf16.xpose.msra.mxu0 0
        %1118 = vmatprep.subr.bf16.mxu0 0
        %1119 = vmatpush1.bf16.xpose.msra.mxu0 0
        %1120 = vmatprep.subr.bf16.mxu0 0
        %1121 = vmatpush1.bf16.xpose.msra.mxu0 0
        %1122 = vmatprep.subr.bf16.mxu0 0
        %1123 = vmatpush1.bf16.xpose.msra.mxu0 0
        %1124 = vmatprep.subr.bf16.mxu0 0
        %1125 = vmatpush1.bf16.xpose.msra.mxu0 0
        %1126 = vmatprep.subr.bf16.mxu0 0
        %1127 = vmatpush1.bf16.xpose.msra.mxu0 0
        %1128 = vmatprep.subr.bf16.mxu0 0
        %1129 = vmatpush1.bf16.xpose.msra.mxu0 0
        %1130 = vmatprep.subr.bf16.mxu0 0
        %1131 = vmatpush1.bf16.xpose.msra.mxu0 0
        %1132 = vmatprep.subr.bf16.mxu0 0
        %1133 = vmatpush1.bf16.xpose.msra.mxu0 0
        %1134 = vmatprep.subr.bf16.mxu0 0
        %1135 = vmatpush1.bf16.xpose.msra.mxu0 0
        %1136 = vmatprep.subr.bf16.mxu0 0
        %1137 = vmatpush1.bf16.xpose.msra.mxu0 0
        %1138 = vmatprep.subr.bf16.mxu0 0
        %1139 = vmatpush1.bf16.xpose.msra.mxu0 0
        %1140 = vmatprep.mubr.bf16.mxu0 0
        %1141 = vmatmul.mubr.bf16.gmra.mrb[0].mxu0 %v1103
        %v1142 = vpop.f32.mrb[0].mxu0
        %v1143 = vadd.f32 0.0, %v1142
        %v1144 = vpop.f32.mrb[0].mxu0
        %v1145 = vpop.f32.mrb[0].mxu0
        %v1146 = vpop.f32.mrb[0].mxu0
        %1147 = vdwg.mxu0
        %v1149 = vsel %vm1055, %v1045, 0
        %v1152 = vsel %vm1055, %v1049, 0
        %1154 = vmatprep.subr.bf16.mxu0 0
        %1155 = vmatpush1.bf16.xpose.msra.mxu0 %v1152
        %1156 = vmatprep.subr.bf16.mxu0 0
        %1157 = vmatpush1.bf16.xpose.msra.mxu0 0
        %1158 = vmatprep.subr.bf16.mxu0 0
        %1159 = vmatpush1.bf16.xpose.msra.mxu0 0
        %1160 = vmatprep.subr.bf16.mxu0 0
        %1161 = vmatpush1.bf16.xpose.msra.mxu0 0
        %1162 = vmatprep.subr.bf16.mxu0 0
        %1163 = vmatpush1.bf16.xpose.msra.mxu0 0
        %1164 = vmatprep.subr.bf16.mxu0 0
        %1165 = vmatpush1.bf16.xpose.msra.mxu0 0
        %1166 = vmatprep.subr.bf16.mxu0 0
        %1167 = vmatpush1.bf16.xpose.msra.mxu0 0
        %1168 = vmatprep.subr.bf16.mxu0 0
        %1169 = vmatpush1.bf16.xpose.msra.mxu0 0
        %1170 = vmatprep.subr.bf16.mxu0 0
        %1171 = vmatpush1.bf16.xpose.msra.mxu0 0
        %1172 = vmatprep.subr.bf16.mxu0 0
        %1173 = vmatpush1.bf16.xpose.msra.mxu0 0
        %1174 = vmatprep.subr.bf16.mxu0 0
        %1175 = vmatpush1.bf16.xpose.msra.mxu0 0
        %1176 = vmatprep.subr.bf16.mxu0 0
        %1177 = vmatpush1.bf16.xpose.msra.mxu0 0
        %1178 = vmatprep.subr.bf16.mxu0 0
        %1179 = vmatpush1.bf16.xpose.msra.mxu0 0
        %1180 = vmatprep.subr.bf16.mxu0 0
        %1181 = vmatpush1.bf16.xpose.msra.mxu0 0
        %1182 = vmatprep.subr.bf16.mxu0 0
        %1183 = vmatpush1.bf16.xpose.msra.mxu0 0
        %1184 = vmatprep.subr.bf16.mxu0 0
        %1185 = vmatpush1.bf16.xpose.msra.mxu0 0
        %1186 = vmatprep.mubr.bf16.mxu0 0
        %1187 = vmatmul.mubr.bf16.gmra.mrb[0].mxu0 %v1149
        %v1188 = vpop.f32.mrb[0].mxu0
        %v1189 = vadd.f32 0.0, %v1188
        %v1190 = vpop.f32.mrb[0].mxu0
        %v1191 = vpop.f32.mrb[0].mxu0
        %v1192 = vpop.f32.mrb[0].mxu0
        %1193 = vdwg.mxu0
        %v1195 = vsel %vm1055, %v1046, 0
        %v1198 = vsel %vm1055, %v1050, 0
        %1200 = vmatprep.subr.bf16.mxu0 0
        %1201 = vmatpush1.bf16.xpose.msra.mxu0 %v1198
        %1202 = vmatprep.subr.bf16.mxu0 0
        %1203 = vmatpush1.bf16.xpose.msra.mxu0 0
        %1204 = vmatprep.subr.bf16.mxu0 0
        %1205 = vmatpush1.bf16.xpose.msra.mxu0 0
        %1206 = vmatprep.subr.bf16.mxu0 0
        %1207 = vmatpush1.bf16.xpose.msra.mxu0 0
        %1208 = vmatprep.subr.bf16.mxu0 0
        %1209 = vmatpush1.bf16.xpose.msra.mxu0 0
        %1210 = vmatprep.subr.bf16.mxu0 0
        %1211 = vmatpush1.bf16.xpose.msra.mxu0 0
        %1212 = vmatprep.subr.bf16.mxu0 0
        %1213 = vmatpush1.bf16.xpose.msra.mxu0 0
        %1214 = vmatprep.subr.bf16.mxu0 0
        %1215 = vmatpush1.bf16.xpose.msra.mxu0 0
        %1216 = vmatprep.subr.bf16.mxu0 0
        %1217 = vmatpush1.bf16.xpose.msra.mxu0 0
        %1218 = vmatprep.subr.bf16.mxu0 0
        %1219 = vmatpush1.bf16.xpose.msra.mxu0 0
        %1220 = vmatprep.subr.bf16.mxu0 0
        %1221 = vmatpush1.bf16.xpose.msra.mxu0 0
        %1222 = vmatprep.subr.bf16.mxu0 0
        %1223 = vmatpush1.bf16.xpose.msra.mxu0 0
        %1224 = vmatprep.subr.bf16.mxu0 0
        %1225 = vmatpush1.bf16.xpose.msra.mxu0 0
        %1226 = vmatprep.subr.bf16.mxu0 0
        %1227 = vmatpush1.bf16.xpose.msra.mxu0 0
        %1228 = vmatprep.subr.bf16.mxu0 0
        %1229 = vmatpush1.bf16.xpose.msra.mxu0 0
        %1230 = vmatprep.subr.bf16.mxu0 0
        %1231 = vmatpush1.bf16.xpose.msra.mxu0 0
        %1232 = vmatprep.mubr.bf16.mxu0 0
        %1233 = vmatmul.mubr.bf16.gmra.mrb[0].mxu0 %v1195
        %v1234 = vpop.f32.mrb[0].mxu0
        %v1235 = vadd.f32 0.0, %v1234
        %v1236 = vpop.f32.mrb[0].mxu0
        %v1237 = vpop.f32.mrb[0].mxu0
        %v1238 = vpop.f32.mrb[0].mxu0
        %1239 = vdwg.mxu0
        %v1240 = vsel %vm1055, %v1097, -inf
        %1241 = vmax.xlane.f32.xlu0 %v1240
        %v1242 = vpop.xlane.xlu0 %1241
        %v1243 = vsel %vm1055, %v1143, -inf
        %1244 = vmax.xlane.f32.xlu0 %v1243
        %v1245 = vpop.xlane.xlu0 %1244
        %v1246 = vsel %vm1055, %v1189, -inf
        %1247 = vmax.xlane.f32.xlu0 %v1246
        %v1248 = vpop.xlane.xlu0 %1247
        %v1249 = vsel %vm1055, %v1235, -inf
        %1250 = vmax.xlane.f32.xlu0 %v1249
        %v1251 = vpop.xlane.xlu0 %1250
        %v1252 = vsub.f32 %v1097, %v1242
        %v1253 = vsub.f32 %v1143, %v1245
        %v1254 = vsub.f32 %v1189, %v1248
        %v1255 = vsub.f32 %v1235, %v1251
        %v1256 = vmul.f32 %v1252, 1.442695
        %v1257 = vpow.pop %v1256
        %v1258 = vmul.f32 %v1253, 1.442695
        %v1259 = vpow.pop %v1258
        %v1260 = vmul.f32 %v1254, 1.442695
        %v1261 = vpow.pop %v1260
        %v1262 = vmul.f32 %v1255, 1.442695
        %v1263 = vpow.pop %v1262
        %v1264 = vsel %vm1055, %v1257, 0.0
        %1265 = vadd.xlane.f32.xlu0 %v1264
        %v1266 = vpop.xlane.xlu0 %1265
        %v1267 = vsel %vm1055, %v1259, 0.0
        %1268 = vadd.xlane.f32.xlu0 %v1267
        %v1269 = vpop.xlane.xlu0 %1268
        %v1270 = vsel %vm1055, %v1261, 0.0
        %1271 = vadd.xlane.f32.xlu0 %v1270
        %v1272 = vpop.xlane.xlu0 %1271
        %v1273 = vsel %vm1055, %v1263, 0.0
        %1274 = vadd.xlane.f32.xlu0 %v1273
        %v1275 = vpop.xlane.xlu0 %1274
        %v1276 = vrcp.pop %v1266
        %v1277 = vrcp.pop %v1269
        %v1278 = vrcp.pop %v1272
        %v1279 = vrcp.pop %v1275
        %v1280 = vmul.f32 %v1257, %v1276
        %v1281 = vmul.f32 %v1259, %v1277
        %v1282 = vmul.f32 %v1261, %v1278
        %v1283 = vmul.f32 %v1263, %v1279
        %v1284 = vpack.c.bf16 %v1280, %v1280
        %v1285 = vpack.c.bf16 %v1281, %v1281
        %v1286 = vpack.c.bf16 %v1282, %v1282
        %v1287 = vpack.c.bf16 %v1283, %v1283
        %v1289 = vsel %vm1055, %v1284, 0
        %vm1291 = vcmask 1043456
        %v1293 = vsel %vm1291, %v1051, 0
        %1295 = vmatprep.subr.bf16.mxu0 0
        %1296 = vmatpush1.bf16.msra.mxu0 %v1293
        %1297 = vmatprep.subr.bf16.mxu0 0
        %1298 = vmatpush1.bf16.msra.mxu0 0
        %1299 = vmatprep.subr.bf16.mxu0 0
        %1300 = vmatpush1.bf16.msra.mxu0 0
        %1301 = vmatprep.subr.bf16.mxu0 0
        %1302 = vmatpush1.bf16.msra.mxu0 0
        %1303 = vmatprep.subr.bf16.mxu0 0
        %1304 = vmatpush1.bf16.msra.mxu0 0
        %1305 = vmatprep.subr.bf16.mxu0 0
        %1306 = vmatpush1.bf16.msra.mxu0 0
        %1307 = vmatprep.subr.bf16.mxu0 0
        %1308 = vmatpush1.bf16.msra.mxu0 0
        %1309 = vmatprep.subr.bf16.mxu0 0
        %1310 = vmatpush1.bf16.msra.mxu0 0
        %1311 = vmatprep.subr.bf16.mxu0 0
        %1312 = vmatpush1.bf16.msra.mxu0 0
        %1313 = vmatprep.subr.bf16.mxu0 0
        %1314 = vmatpush1.bf16.msra.mxu0 0
        %1315 = vmatprep.subr.bf16.mxu0 0
        %1316 = vmatpush1.bf16.msra.mxu0 0
        %1317 = vmatprep.subr.bf16.mxu0 0
        %1318 = vmatpush1.bf16.msra.mxu0 0
        %1319 = vmatprep.subr.bf16.mxu0 0
        %1320 = vmatpush1.bf16.msra.mxu0 0
        %1321 = vmatprep.subr.bf16.mxu0 0
        %1322 = vmatpush1.bf16.msra.mxu0 0
        %1323 = vmatprep.subr.bf16.mxu0 0
        %1324 = vmatpush1.bf16.msra.mxu0 0
        %1325 = vmatprep.subr.bf16.mxu0 0
        %1326 = vmatpush1.bf16.msra.mxu0 0
        %1327 = vmatprep.mubr.bf16.mxu0 0
        %1328 = vmatmul.mubr.bf16.gmra.mrb[0].mxu0 %v1289
        %v1329 = vpop.f32.mrb[0].mxu0
        %v1330 = vadd.f32 0.0, %v1329
        %v1331 = vpop.f32.mrb[0].mxu0
        %v1332 = vpop.f32.mrb[0].mxu0
        %v1333 = vpop.f32.mrb[0].mxu0
        %1334 = vdwg.mxu0
        %v1336 = vsel %vm1055, %v1285, 0
        %v1339 = vsel %vm1291, %v1052, 0
        %1341 = vmatprep.subr.bf16.mxu0 0
        %1342 = vmatpush1.bf16.msra.mxu0 %v1339
        %1343 = vmatprep.subr.bf16.mxu0 0
        %1344 = vmatpush1.bf16.msra.mxu0 0
        %1345 = vmatprep.subr.bf16.mxu0 0
        %1346 = vmatpush1.bf16.msra.mxu0 0
        %1347 = vmatprep.subr.bf16.mxu0 0
        %1348 = vmatpush1.bf16.msra.mxu0 0
        %1349 = vmatprep.subr.bf16.mxu0 0
        %1350 = vmatpush1.bf16.msra.mxu0 0
        %1351 = vmatprep.subr.bf16.mxu0 0
        %1352 = vmatpush1.bf16.msra.mxu0 0
        %1353 = vmatprep.subr.bf16.mxu0 0
        %1354 = vmatpush1.bf16.msra.mxu0 0
        %1355 = vmatprep.subr.bf16.mxu0 0
        %1356 = vmatpush1.bf16.msra.mxu0 0
        %1357 = vmatprep.subr.bf16.mxu0 0
        %1358 = vmatpush1.bf16.msra.mxu0 0
        %1359 = vmatprep.subr.bf16.mxu0 0
        %1360 = vmatpush1.bf16.msra.mxu0 0
        %1361 = vmatprep.subr.bf16.mxu0 0
        %1362 = vmatpush1.bf16.msra.mxu0 0
        %1363 = vmatprep.subr.bf16.mxu0 0
        %1364 = vmatpush1.bf16.msra.mxu0 0
        %1365 = vmatprep.subr.bf16.mxu0 0
        %1366 = vmatpush1.bf16.msra.mxu0 0
        %1367 = vmatprep.subr.bf16.mxu0 0
        %1368 = vmatpush1.bf16.msra.mxu0 0
        %1369 = vmatprep.subr.bf16.mxu0 0
        %1370 = vmatpush1.bf16.msra.mxu0 0
        %1371 = vmatprep.subr.bf16.mxu0 0
        %1372 = vmatpush1.bf16.msra.mxu0 0
        %1373 = vmatprep.mubr.bf16.mxu0 0
        %1374 = vmatmul.mubr.bf16.gmra.mrb[0].mxu0 %v1336
        %v1375 = vpop.f32.mrb[0].mxu0
        %v1376 = vadd.f32 0.0, %v1375
        %v1377 = vpop.f32.mrb[0].mxu0
        %v1378 = vpop.f32.mrb[0].mxu0
        %v1379 = vpop.f32.mrb[0].mxu0
        %1380 = vdwg.mxu0
        %v1382 = vsel %vm1055, %v1286, 0
        %v1385 = vsel %vm1291, %v1053, 0
        %1387 = vmatprep.subr.bf16.mxu0 0
        %1388 = vmatpush1.bf16.msra.mxu0 %v1385
        %1389 = vmatprep.subr.bf16.mxu0 0
        %1390 = vmatpush1.bf16.msra.mxu0 0
        %1391 = vmatprep.subr.bf16.mxu0 0
        %1392 = vmatpush1.bf16.msra.mxu0 0
        %1393 = vmatprep.subr.bf16.mxu0 0
        %1394 = vmatpush1.bf16.msra.mxu0 0
        %1395 = vmatprep.subr.bf16.mxu0 0
        %1396 = vmatpush1.bf16.msra.mxu0 0
        %1397 = vmatprep.subr.bf16.mxu0 0
        %1398 = vmatpush1.bf16.msra.mxu0 0
        %1399 = vmatprep.subr.bf16.mxu0 0
        %1400 = vmatpush1.bf16.msra.mxu0 0
        %1401 = vmatprep.subr.bf16.mxu0 0
        %1402 = vmatpush1.bf16.msra.mxu0 0
        %1403 = vmatprep.subr.bf16.mxu0 0
        %1404 = vmatpush1.bf16.msra.mxu0 0
        %1405 = vmatprep.subr.bf16.mxu0 0
        %1406 = vmatpush1.bf16.msra.mxu0 0
        %1407 = vmatprep.subr.bf16.mxu0 0
        %1408 = vmatpush1.bf16.msra.mxu0 0
        %1409 = vmatprep.subr.bf16.mxu0 0
        %1410 = vmatpush1.bf16.msra.mxu0 0
        %1411 = vmatprep.subr.bf16.mxu0 0
        %1412 = vmatpush1.bf16.msra.mxu0 0
        %1413 = vmatprep.subr.bf16.mxu0 0
        %1414 = vmatpush1.bf16.msra.mxu0 0
        %1415 = vmatprep.subr.bf16.mxu0 0
        %1416 = vmatpush1.bf16.msra.mxu0 0
        %1417 = vmatprep.subr.bf16.mxu0 0
        %1418 = vmatpush1.bf16.msra.mxu0 0
        %1419 = vmatprep.mubr.bf16.mxu0 0
        %1420 = vmatmul.mubr.bf16.gmra.mrb[0].mxu0 %v1382
        %v1421 = vpop.f32.mrb[0].mxu0
        %v1422 = vadd.f32 0.0, %v1421
        %v1423 = vpop.f32.mrb[0].mxu0
        %v1424 = vpop.f32.mrb[0].mxu0
        %v1425 = vpop.f32.mrb[0].mxu0
        %1426 = vdwg.mxu0
        %v1428 = vsel %vm1055, %v1287, 0
        %v1431 = vsel %vm1291, %v1054, 0
        %1433 = vmatprep.subr.bf16.mxu0 0
        %1434 = vmatpush1.bf16.msra.mxu0 %v1431
        %1435 = vmatprep.subr.bf16.mxu0 0
        %1436 = vmatpush1.bf16.msra.mxu0 0
        %1437 = vmatprep.subr.bf16.mxu0 0
        %1438 = vmatpush1.bf16.msra.mxu0 0
        %1439 = vmatprep.subr.bf16.mxu0 0
        %1440 = vmatpush1.bf16.msra.mxu0 0
        %1441 = vmatprep.subr.bf16.mxu0 0
        %1442 = vmatpush1.bf16.msra.mxu0 0
        %1443 = vmatprep.subr.bf16.mxu0 0
        %1444 = vmatpush1.bf16.msra.mxu0 0
        %1445 = vmatprep.subr.bf16.mxu0 0
        %1446 = vmatpush1.bf16.msra.mxu0 0
        %1447 = vmatprep.subr.bf16.mxu0 0
        %1448 = vmatpush1.bf16.msra.mxu0 0
        %1449 = vmatprep.subr.bf16.mxu0 0
        %1450 = vmatpush1.bf16.msra.mxu0 0
        %1451 = vmatprep.subr.bf16.mxu0 0
        %1452 = vmatpush1.bf16.msra.mxu0 0
        %1453 = vmatprep.subr.bf16.mxu0 0
        %1454 = vmatpush1.bf16.msra.mxu0 0
        %1455 = vmatprep.subr.bf16.mxu0 0
        %1456 = vmatpush1.bf16.msra.mxu0 0
        %1457 = vmatprep.subr.bf16.mxu0 0
        %1458 = vmatpush1.bf16.msra.mxu0 0
        %1459 = vmatprep.subr.bf16.mxu0 0
        %1460 = vmatpush1.bf16.msra.mxu0 0
        %1461 = vmatprep.subr.bf16.mxu0 0
        %1462 = vmatpush1.bf16.msra.mxu0 0
        %1463 = vmatprep.subr.bf16.mxu0 0
        %1464 = vmatpush1.bf16.msra.mxu0 0
        %1465 = vmatprep.mubr.bf16.mxu0 0
        %1466 = vmatmul.mubr.bf16.gmra.mrb[0].mxu0 %v1428
        %v1467 = vpop.f32.mrb[0].mxu0
        %v1468 = vadd.f32 0.0, %v1467
        %v1469 = vpop.f32.mrb[0].mxu0
        %v1470 = vpop.f32.mrb[0].mxu0
        %v1471 = vpop.f32.mrb[0].mxu0
        %1472 = vdwg.mxu0
        %v1473 = vpack.c.bf16 %v1330, %v1330
        %v1474 = vpack.c.bf16 %v1376, %v1376
        %v1475 = vpack.c.bf16 %v1422, %v1422
        %v1476 = vpack.c.bf16 %v1468, %v1468
        %1478 = vrot.lane.b32.xlu0 %v1043, 120
        %v1479 = vpop.permute.xlu0 %1478
        %1481 = vrot.lane.b32.xlu0 %v1047, 120
        %v1482 = vpop.permute.xlu0 %1481
        %v1484 = vsel %vm1055, %v1479, 0
        %v1487 = vsel %vm1055, %v1482, 0
        %1489 = vmatprep.subr.bf16.mxu0 0
        %1490 = vmatpush1.bf16.xpose.msra.mxu0 %v1487
        %1491 = vmatprep.subr.bf16.mxu0 0
        %1492 = vmatpush1.bf16.xpose.msra.mxu0 0
        %1493 = vmatprep.subr.bf16.mxu0 0
        %1494 = vmatpush1.bf16.xpose.msra.mxu0 0
        %1495 = vmatprep.subr.bf16.mxu0 0
        %1496 = vmatpush1.bf16.xpose.msra.mxu0 0
        %1497 = vmatprep.subr.bf16.mxu0 0
        %1498 = vmatpush1.bf16.xpose.msra.mxu0 0
        %1499 = vmatprep.subr.bf16.mxu0 0
        %1500 = vmatpush1.bf16.xpose.msra.mxu0 0
        %1501 = vmatprep.subr.bf16.mxu0 0
        %1502 = vmatpush1.bf16.xpose.msra.mxu0 0
        %1503 = vmatprep.subr.bf16.mxu0 0
        %1504 = vmatpush1.bf16.xpose.msra.mxu0 0
        %1505 = vmatprep.subr.bf16.mxu0 0
        %1506 = vmatpush1.bf16.xpose.msra.mxu0 0
        %1507 = vmatprep.subr.bf16.mxu0 0
        %1508 = vmatpush1.bf16.xpose.msra.mxu0 0
        %1509 = vmatprep.subr.bf16.mxu0 0
        %1510 = vmatpush1.bf16.xpose.msra.mxu0 0
        %1511 = vmatprep.subr.bf16.mxu0 0
        %1512 = vmatpush1.bf16.xpose.msra.mxu0 0
        %1513 = vmatprep.subr.bf16.mxu0 0
        %1514 = vmatpush1.bf16.xpose.msra.mxu0 0
        %1515 = vmatprep.subr.bf16.mxu0 0
        %1516 = vmatpush1.bf16.xpose.msra.mxu0 0
        %1517 = vmatprep.subr.bf16.mxu0 0
        %1518 = vmatpush1.bf16.xpose.msra.mxu0 0
        %1519 = vmatprep.subr.bf16.mxu0 0
        %1520 = vmatpush1.bf16.xpose.msra.mxu0 0
        %1521 = vmatprep.mubr.bf16.mxu0 0
        %1522 = vmatmul.mubr.bf16.gmra.mrb[0].mxu0 %v1484
        %v1523 = vpop.f32.mrb[0].mxu0
        %v1524 = vadd.f32 0.0, %v1523
        %v1525 = vpop.f32.mrb[0].mxu0
        %v1526 = vpop.f32.mrb[0].mxu0
        %v1527 = vpop.f32.mrb[0].mxu0
        %1528 = vdwg.mxu0
        %1530 = vrot.lane.b32.xlu0 %v1044, 120
        %v1531 = vpop.permute.xlu0 %1530
        %1533 = vrot.lane.b32.xlu0 %v1048, 120
        %v1534 = vpop.permute.xlu0 %1533
        %v1536 = vsel %vm1055, %v1531, 0
        %v1539 = vsel %vm1055, %v1534, 0
        %1541 = vmatprep.subr.bf16.mxu0 0
        %1542 = vmatpush1.bf16.xpose.msra.mxu0 %v1539
        %1543 = vmatprep.subr.bf16.mxu0 0
        %1544 = vmatpush1.bf16.xpose.msra.mxu0 0
        %1545 = vmatprep.subr.bf16.mxu0 0
        %1546 = vmatpush1.bf16.xpose.msra.mxu0 0
        %1547 = vmatprep.subr.bf16.mxu0 0
        %1548 = vmatpush1.bf16.xpose.msra.mxu0 0
        %1549 = vmatprep.subr.bf16.mxu0 0
        %1550 = vmatpush1.bf16.xpose.msra.mxu0 0
        %1551 = vmatprep.subr.bf16.mxu0 0
        %1552 = vmatpush1.bf16.xpose.msra.mxu0 0
        %1553 = vmatprep.subr.bf16.mxu0 0
        %1554 = vmatpush1.bf16.xpose.msra.mxu0 0
        %1555 = vmatprep.subr.bf16.mxu0 0
        %1556 = vmatpush1.bf16.xpose.msra.mxu0 0
        %1557 = vmatprep.subr.bf16.mxu0 0
        %1558 = vmatpush1.bf16.xpose.msra.mxu0 0
        %1559 = vmatprep.subr.bf16.mxu0 0
        %1560 = vmatpush1.bf16.xpose.msra.mxu0 0
        %1561 = vmatprep.subr.bf16.mxu0 0
        %1562 = vmatpush1.bf16.xpose.msra.mxu0 0
        %1563 = vmatprep.subr.bf16.mxu0 0
        %1564 = vmatpush1.bf16.xpose.msra.mxu0 0
        %1565 = vmatprep.subr.bf16.mxu0 0
        %1566 = vmatpush1.bf16.xpose.msra.mxu0 0
        %1567 = vmatprep.subr.bf16.mxu0 0
        %1568 = vmatpush1.bf16.xpose.msra.mxu0 0
        %1569 = vmatprep.subr.bf16.mxu0 0
        %1570 = vmatpush1.bf16.xpose.msra.mxu0 0
        %1571 = vmatprep.subr.bf16.mxu0 0
        %1572 = vmatpush1.bf16.xpose.msra.mxu0 0
        %1573 = vmatprep.mubr.bf16.mxu0 0
        %1574 = vmatmul.mubr.bf16.gmra.mrb[0].mxu0 %v1536
        %v1575 = vpop.f32.mrb[0].mxu0
        %v1576 = vadd.f32 0.0, %v1575
        %v1577 = vpop.f32.mrb[0].mxu0
        %v1578 = vpop.f32.mrb[0].mxu0
        %v1579 = vpop.f32.mrb[0].mxu0
        %1580 = vdwg.mxu0
        %1582 = vrot.lane.b32.xlu0 %v1045, 120
        %v1583 = vpop.permute.xlu0 %1582
        %1585 = vrot.lane.b32.xlu0 %v1049, 120
        %v1586 = vpop.permute.xlu0 %1585
        %v1588 = vsel %vm1055, %v1583, 0
        %v1591 = vsel %vm1055, %v1586, 0
        %1593 = vmatprep.subr.bf16.mxu0 0
        %1594 = vmatpush1.bf16.xpose.msra.mxu0 %v1591
        %1595 = vmatprep.subr.bf16.mxu0 0
        %1596 = vmatpush1.bf16.xpose.msra.mxu0 0
        %1597 = vmatprep.subr.bf16.mxu0 0
        %1598 = vmatpush1.bf16.xpose.msra.mxu0 0
        %1599 = vmatprep.subr.bf16.mxu0 0
        %1600 = vmatpush1.bf16.xpose.msra.mxu0 0
        %1601 = vmatprep.subr.bf16.mxu0 0
        %1602 = vmatpush1.bf16.xpose.msra.mxu0 0
        %1603 = vmatprep.subr.bf16.mxu0 0
        %1604 = vmatpush1.bf16.xpose.msra.mxu0 0
        %1605 = vmatprep.subr.bf16.mxu0 0
        %1606 = vmatpush1.bf16.xpose.msra.mxu0 0
        %1607 = vmatprep.subr.bf16.mxu0 0
        %1608 = vmatpush1.bf16.xpose.msra.mxu0 0
        %1609 = vmatprep.subr.bf16.mxu0 0
        %1610 = vmatpush1.bf16.xpose.msra.mxu0 0
        %1611 = vmatprep.subr.bf16.mxu0 0
        %1612 = vmatpush1.bf16.xpose.msra.mxu0 0
        %1613 = vmatprep.subr.bf16.mxu0 0
        %1614 = vmatpush1.bf16.xpose.msra.mxu0 0
        %1615 = vmatprep.subr.bf16.mxu0 0
        %1616 = vmatpush1.bf16.xpose.msra.mxu0 0
        %1617 = vmatprep.subr.bf16.mxu0 0
        %1618 = vmatpush1.bf16.xpose.msra.mxu0 0
        %1619 = vmatprep.subr.bf16.mxu0 0
        %1620 = vmatpush1.bf16.xpose.msra.mxu0 0
        %1621 = vmatprep.subr.bf16.mxu0 0
        %1622 = vmatpush1.bf16.xpose.msra.mxu0 0
        %1623 = vmatprep.subr.bf16.mxu0 0
        %1624 = vmatpush1.bf16.xpose.msra.mxu0 0
        %1625 = vmatprep.mubr.bf16.mxu0 0
        %1626 = vmatmul.mubr.bf16.gmra.mrb[0].mxu0 %v1588
        %v1627 = vpop.f32.mrb[0].mxu0
        %v1628 = vadd.f32 0.0, %v1627
        %v1629 = vpop.f32.mrb[0].mxu0
        %v1630 = vpop.f32.mrb[0].mxu0
        %v1631 = vpop.f32.mrb[0].mxu0
        %1632 = vdwg.mxu0
        %1634 = vrot.lane.b32.xlu0 %v1046, 120
        %v1635 = vpop.permute.xlu0 %1634
        %1637 = vrot.lane.b32.xlu0 %v1050, 120
        %v1638 = vpop.permute.xlu0 %1637
        %v1640 = vsel %vm1055, %v1635, 0
        %v1643 = vsel %vm1055, %v1638, 0
        %1645 = vmatprep.subr.bf16.mxu0 0
        %1646 = vmatpush1.bf16.xpose.msra.mxu0 %v1643
        %1647 = vmatprep.subr.bf16.mxu0 0
        %1648 = vmatpush1.bf16.xpose.msra.mxu0 0
        %1649 = vmatprep.subr.bf16.mxu0 0
        %1650 = vmatpush1.bf16.xpose.msra.mxu0 0
        %1651 = vmatprep.subr.bf16.mxu0 0
        %1652 = vmatpush1.bf16.xpose.msra.mxu0 0
        %1653 = vmatprep.subr.bf16.mxu0 0
        %1654 = vmatpush1.bf16.xpose.msra.mxu0 0
        %1655 = vmatprep.subr.bf16.mxu0 0
        %1656 = vmatpush1.bf16.xpose.msra.mxu0 0
        %1657 = vmatprep.subr.bf16.mxu0 0
        %1658 = vmatpush1.bf16.xpose.msra.mxu0 0
        %1659 = vmatprep.subr.bf16.mxu0 0
        %1660 = vmatpush1.bf16.xpose.msra.mxu0 0
        %1661 = vmatprep.subr.bf16.mxu0 0
        %1662 = vmatpush1.bf16.xpose.msra.mxu0 0
        %1663 = vmatprep.subr.bf16.mxu0 0
        %1664 = vmatpush1.bf16.xpose.msra.mxu0 0
        %1665 = vmatprep.subr.bf16.mxu0 0
        %1666 = vmatpush1.bf16.xpose.msra.mxu0 0
        %1667 = vmatprep.subr.bf16.mxu0 0
        %1668 = vmatpush1.bf16.xpose.msra.mxu0 0
        %1669 = vmatprep.subr.bf16.mxu0 0
        %1670 = vmatpush1.bf16.xpose.msra.mxu0 0
        %1671 = vmatprep.subr.bf16.mxu0 0
        %1672 = vmatpush1.bf16.xpose.msra.mxu0 0
        %1673 = vmatprep.subr.bf16.mxu0 0
        %1674 = vmatpush1.bf16.xpose.msra.mxu0 0
        %1675 = vmatprep.subr.bf16.mxu0 0
        %1676 = vmatpush1.bf16.xpose.msra.mxu0 0
        %1677 = vmatprep.mubr.bf16.mxu0 0
        %1678 = vmatmul.mubr.bf16.gmra.mrb[0].mxu0 %v1640
        %v1679 = vpop.f32.mrb[0].mxu0
        %v1680 = vadd.f32 0.0, %v1679
        %v1681 = vpop.f32.mrb[0].mxu0
        %v1682 = vpop.f32.mrb[0].mxu0
        %v1683 = vpop.f32.mrb[0].mxu0
        %1684 = vdwg.mxu0
        %v1685 = vsel %vm1055, %v1524, -inf
        %1686 = vmax.xlane.f32.xlu0 %v1685
        %v1687 = vpop.xlane.xlu0 %1686
        %v1688 = vsel %vm1055, %v1576, -inf
        %1689 = vmax.xlane.f32.xlu0 %v1688
        %v1690 = vpop.xlane.xlu0 %1689
        %v1691 = vsel %vm1055, %v1628, -inf
        %1692 = vmax.xlane.f32.xlu0 %v1691
        %v1693 = vpop.xlane.xlu0 %1692
        %v1694 = vsel %vm1055, %v1680, -inf
        %1695 = vmax.xlane.f32.xlu0 %v1694
        %v1696 = vpop.xlane.xlu0 %1695
        %v1697 = vsub.f32 %v1524, %v1687
        %v1698 = vsub.f32 %v1576, %v1690
        %v1699 = vsub.f32 %v1628, %v1693
        %v1700 = vsub.f32 %v1680, %v1696
        %v1701 = vmul.f32 %v1697, 1.442695
        %v1702 = vpow.pop %v1701
        %v1703 = vmul.f32 %v1698, 1.442695
        %v1704 = vpow.pop %v1703
        %v1705 = vmul.f32 %v1699, 1.442695
        %v1706 = vpow.pop %v1705
        %v1707 = vmul.f32 %v1700, 1.442695
        %v1708 = vpow.pop %v1707
        %v1709 = vsel %vm1055, %v1702, 0.0
        %1710 = vadd.xlane.f32.xlu0 %v1709
        %v1711 = vpop.xlane.xlu0 %1710
        %v1712 = vsel %vm1055, %v1704, 0.0
        %1713 = vadd.xlane.f32.xlu0 %v1712
        %v1714 = vpop.xlane.xlu0 %1713
        %v1715 = vsel %vm1055, %v1706, 0.0
        %1716 = vadd.xlane.f32.xlu0 %v1715
        %v1717 = vpop.xlane.xlu0 %1716
        %v1718 = vsel %vm1055, %v1708, 0.0
        %1719 = vadd.xlane.f32.xlu0 %v1718
        %v1720 = vpop.xlane.xlu0 %1719
        %v1721 = vrcp.pop %v1711
        %v1722 = vrcp.pop %v1714
        %v1723 = vrcp.pop %v1717
        %v1724 = vrcp.pop %v1720
        %v1725 = vmul.f32 %v1702, %v1721
        %v1726 = vmul.f32 %v1704, %v1722
        %v1727 = vmul.f32 %v1706, %v1723
        %v1728 = vmul.f32 %v1708, %v1724
        %v1729 = vpack.c.bf16 %v1725, %v1725
        %v1730 = vpack.c.bf16 %v1726, %v1726
        %v1731 = vpack.c.bf16 %v1727, %v1727
        %v1732 = vpack.c.bf16 %v1728, %v1728
        %1734 = vrot.lane.b32.xlu0 %v1051, 120
        %v1735 = vpop.permute.xlu0 %1734
        %v1737 = vsel %vm1055, %v1729, 0
        %v1740 = vsel %vm1291, %v1735, 0
        %1742 = vmatprep.subr.bf16.mxu0 0
        %1743 = vmatpush1.bf16.msra.mxu0 %v1740
        %1744 = vmatprep.subr.bf16.mxu0 0
        %1745 = vmatpush1.bf16.msra.mxu0 0
        %1746 = vmatprep.subr.bf16.mxu0 0
        %1747 = vmatpush1.bf16.msra.mxu0 0
        %1748 = vmatprep.subr.bf16.mxu0 0
        %1749 = vmatpush1.bf16.msra.mxu0 0
        %1750 = vmatprep.subr.bf16.mxu0 0
        %1751 = vmatpush1.bf16.msra.mxu0 0
        %1752 = vmatprep.subr.bf16.mxu0 0
        %1753 = vmatpush1.bf16.msra.mxu0 0
        %1754 = vmatprep.subr.bf16.mxu0 0
        %1755 = vmatpush1.bf16.msra.mxu0 0
        %1756 = vmatprep.subr.bf16.mxu0 0
        %1757 = vmatpush1.bf16.msra.mxu0 0
        %1758 = vmatprep.subr.bf16.mxu0 0
        %1759 = vmatpush1.bf16.msra.mxu0 0
        %1760 = vmatprep.subr.bf16.mxu0 0
        %1761 = vmatpush1.bf16.msra.mxu0 0
        %1762 = vmatprep.subr.bf16.mxu0 0
        %1763 = vmatpush1.bf16.msra.mxu0 0
        %1764 = vmatprep.subr.bf16.mxu0 0
        %1765 = vmatpush1.bf16.msra.mxu0 0
        %1766 = vmatprep.subr.bf16.mxu0 0
        %1767 = vmatpush1.bf16.msra.mxu0 0
        %1768 = vmatprep.subr.bf16.mxu0 0
        %1769 = vmatpush1.bf16.msra.mxu0 0
        %1770 = vmatprep.subr.bf16.mxu0 0
        %1771 = vmatpush1.bf16.msra.mxu0 0
        %1772 = vmatprep.subr.bf16.mxu0 0
        %1773 = vmatpush1.bf16.msra.mxu0 0
        %1774 = vmatprep.mubr.bf16.mxu0 0
        %1775 = vmatmul.mubr.bf16.gmra.mrb[0].mxu0 %v1737
        %v1776 = vpop.f32.mrb[0].mxu0
        %v1777 = vadd.f32 0.0, %v1776
        %v1778 = vpop.f32.mrb[0].mxu0
        %v1779 = vpop.f32.mrb[0].mxu0
        %v1780 = vpop.f32.mrb[0].mxu0
        %1781 = vdwg.mxu0
        %1783 = vrot.lane.b32.xlu0 %v1052, 120
        %v1784 = vpop.permute.xlu0 %1783
        %v1786 = vsel %vm1055, %v1730, 0
        %v1789 = vsel %vm1291, %v1784, 0
        %1791 = vmatprep.subr.bf16.mxu0 0
        %1792 = vmatpush1.bf16.msra.mxu0 %v1789
        %1793 = vmatprep.subr.bf16.mxu0 0
        %1794 = vmatpush1.bf16.msra.mxu0 0
        %1795 = vmatprep.subr.bf16.mxu0 0
        %1796 = vmatpush1.bf16.msra.mxu0 0
        %1797 = vmatprep.subr.bf16.mxu0 0
        %1798 = vmatpush1.bf16.msra.mxu0 0
        %1799 = vmatprep.subr.bf16.mxu0 0
        %1800 = vmatpush1.bf16.msra.mxu0 0
        %1801 = vmatprep.subr.bf16.mxu0 0
        %1802 = vmatpush1.bf16.msra.mxu0 0
        %1803 = vmatprep.subr.bf16.mxu0 0
        %1804 = vmatpush1.bf16.msra.mxu0 0
        %1805 = vmatprep.subr.bf16.mxu0 0
        %1806 = vmatpush1.bf16.msra.mxu0 0
        %1807 = vmatprep.subr.bf16.mxu0 0
        %1808 = vmatpush1.bf16.msra.mxu0 0
        %1809 = vmatprep.subr.bf16.mxu0 0
        %1810 = vmatpush1.bf16.msra.mxu0 0
        %1811 = vmatprep.subr.bf16.mxu0 0
        %1812 = vmatpush1.bf16.msra.mxu0 0
        %1813 = vmatprep.subr.bf16.mxu0 0
        %1814 = vmatpush1.bf16.msra.mxu0 0
        %1815 = vmatprep.subr.bf16.mxu0 0
        %1816 = vmatpush1.bf16.msra.mxu0 0
        %1817 = vmatprep.subr.bf16.mxu0 0
        %1818 = vmatpush1.bf16.msra.mxu0 0
        %1819 = vmatprep.subr.bf16.mxu0 0
        %1820 = vmatpush1.bf16.msra.mxu0 0
        %1821 = vmatprep.subr.bf16.mxu0 0
        %1822 = vmatpush1.bf16.msra.mxu0 0
        %1823 = vmatprep.mubr.bf16.mxu0 0
        %1824 = vmatmul.mubr.bf16.gmra.mrb[0].mxu0 %v1786
        %v1825 = vpop.f32.mrb[0].mxu0
        %v1826 = vadd.f32 0.0, %v1825
        %v1827 = vpop.f32.mrb[0].mxu0
        %v1828 = vpop.f32.mrb[0].mxu0
        %v1829 = vpop.f32.mrb[0].mxu0
        %1830 = vdwg.mxu0
        %1832 = vrot.lane.b32.xlu0 %v1053, 120
        %v1833 = vpop.permute.xlu0 %1832
        %v1835 = vsel %vm1055, %v1731, 0
        %v1838 = vsel %vm1291, %v1833, 0
        %1840 = vmatprep.subr.bf16.mxu0 0
        %1841 = vmatpush1.bf16.msra.mxu0 %v1838
        %1842 = vmatprep.subr.bf16.mxu0 0
        %1843 = vmatpush1.bf16.msra.mxu0 0
        %1844 = vmatprep.subr.bf16.mxu0 0
        %1845 = vmatpush1.bf16.msra.mxu0 0
        %1846 = vmatprep.subr.bf16.mxu0 0
        %1847 = vmatpush1.bf16.msra.mxu0 0
        %1848 = vmatprep.subr.bf16.mxu0 0
        %1849 = vmatpush1.bf16.msra.mxu0 0
        %1850 = vmatprep.subr.bf16.mxu0 0
        %1851 = vmatpush1.bf16.msra.mxu0 0
        %1852 = vmatprep.subr.bf16.mxu0 0
        %1853 = vmatpush1.bf16.msra.mxu0 0
        %1854 = vmatprep.subr.bf16.mxu0 0
        %1855 = vmatpush1.bf16.msra.mxu0 0
        %1856 = vmatprep.subr.bf16.mxu0 0
        %1857 = vmatpush1.bf16.msra.mxu0 0
        %1858 = vmatprep.subr.bf16.mxu0 0
        %1859 = vmatpush1.bf16.msra.mxu0 0
        %1860 = vmatprep.subr.bf16.mxu0 0
        %1861 = vmatpush1.bf16.msra.mxu0 0
        %1862 = vmatprep.subr.bf16.mxu0 0
        %1863 = vmatpush1.bf16.msra.mxu0 0
        %1864 = vmatprep.subr.bf16.mxu0 0
        %1865 = vmatpush1.bf16.msra.mxu0 0
        %1866 = vmatprep.subr.bf16.mxu0 0
        %1867 = vmatpush1.bf16.msra.mxu0 0
        %1868 = vmatprep.subr.bf16.mxu0 0
        %1869 = vmatpush1.bf16.msra.mxu0 0
        %1870 = vmatprep.subr.bf16.mxu0 0
        %1871 = vmatpush1.bf16.msra.mxu0 0
        %1872 = vmatprep.mubr.bf16.mxu0 0
        %1873 = vmatmul.mubr.bf16.gmra.mrb[0].mxu0 %v1835
        %v1874 = vpop.f32.mrb[0].mxu0
        %v1875 = vadd.f32 0.0, %v1874
        %v1876 = vpop.f32.mrb[0].mxu0
        %v1877 = vpop.f32.mrb[0].mxu0
        %v1878 = vpop.f32.mrb[0].mxu0
        %1879 = vdwg.mxu0
        %1881 = vrot.lane.b32.xlu0 %v1054, 120
        %v1882 = vpop.permute.xlu0 %1881
        %v1884 = vsel %vm1055, %v1732, 0
        %v1887 = vsel %vm1291, %v1882, 0
        %1889 = vmatprep.subr.bf16.mxu0 0
        %1890 = vmatpush1.bf16.msra.mxu0 %v1887
        %1891 = vmatprep.subr.bf16.mxu0 0
        %1892 = vmatpush1.bf16.msra.mxu0 0
        %1893 = vmatprep.subr.bf16.mxu0 0
        %1894 = vmatpush1.bf16.msra.mxu0 0
        %1895 = vmatprep.subr.bf16.mxu0 0
        %1896 = vmatpush1.bf16.msra.mxu0 0
        %1897 = vmatprep.subr.bf16.mxu0 0
        %1898 = vmatpush1.bf16.msra.mxu0 0
        %1899 = vmatprep.subr.bf16.mxu0 0
        %1900 = vmatpush1.bf16.msra.mxu0 0
        %1901 = vmatprep.subr.bf16.mxu0 0
        %1902 = vmatpush1.bf16.msra.mxu0 0
        %1903 = vmatprep.subr.bf16.mxu0 0
        %1904 = vmatpush1.bf16.msra.mxu0 0
        %1905 = vmatprep.subr.bf16.mxu0 0
        %1906 = vmatpush1.bf16.msra.mxu0 0
        %1907 = vmatprep.subr.bf16.mxu0 0
        %1908 = vmatpush1.bf16.msra.mxu0 0
        %1909 = vmatprep.subr.bf16.mxu0 0
        %1910 = vmatpush1.bf16.msra.mxu0 0
        %1911 = vmatprep.subr.bf16.mxu0 0
        %1912 = vmatpush1.bf16.msra.mxu0 0
        %1913 = vmatprep.subr.bf16.mxu0 0
        %1914 = vmatpush1.bf16.msra.mxu0 0
        %1915 = vmatprep.subr.bf16.mxu0 0
        %1916 = vmatpush1.bf16.msra.mxu0 0
        %1917 = vmatprep.subr.bf16.mxu0 0
        %1918 = vmatpush1.bf16.msra.mxu0 0
        %1919 = vmatprep.subr.bf16.mxu0 0
        %1920 = vmatpush1.bf16.msra.mxu0 0
        %1921 = vmatprep.mubr.bf16.mxu0 0
        %1922 = vmatmul.mubr.bf16.gmra.mrb[0].mxu0 %v1884
        %v1923 = vpop.f32.mrb[0].mxu0
        %v1924 = vadd.f32 0.0, %v1923
        %v1925 = vpop.f32.mrb[0].mxu0
        %v1926 = vpop.f32.mrb[0].mxu0
        %v1927 = vpop.f32.mrb[0].mxu0
        %1928 = vdwg.mxu0
        %v1929 = vpack.c.bf16 %v1777, %v1777
        %v1930 = vpack.c.bf16 %v1826, %v1826
        %v1931 = vpack.c.bf16 %v1875, %v1875
        %v1932 = vpack.c.bf16 %v1924, %v1924
        %1933 = vrot.lane.b32.xlu0 %v1043, 112
        %v1934 = vpop.permute.xlu0 %1933
        %1935 = vrot.lane.b32.xlu0 %v1047, 112
        %v1936 = vpop.permute.xlu0 %1935
        %v1938 = vsel %vm1055, %v1934, 0
        %v1941 = vsel %vm1055, %v1936, 0
        %1943 = vmatprep.subr.bf16.mxu0 0
        %1944 = vmatpush1.bf16.xpose.msra.mxu0 %v1941
        %1945 = vmatprep.subr.bf16.mxu0 0
        %1946 = vmatpush1.bf16.xpose.msra.mxu0 0
        %1947 = vmatprep.subr.bf16.mxu0 0
        %1948 = vmatpush1.bf16.xpose.msra.mxu0 0
        %1949 = vmatprep.subr.bf16.mxu0 0
        %1950 = vmatpush1.bf16.xpose.msra.mxu0 0
        %1951 = vmatprep.subr.bf16.mxu0 0
        %1952 = vmatpush1.bf16.xpose.msra.mxu0 0
        %1953 = vmatprep.subr.bf16.mxu0 0
        %1954 = vmatpush1.bf16.xpose.msra.mxu0 0
        %1955 = vmatprep.subr.bf16.mxu0 0
        %1956 = vmatpush1.bf16.xpose.msra.mxu0 0
        %1957 = vmatprep.subr.bf16.mxu0 0
        %1958 = vmatpush1.bf16.xpose.msra.mxu0 0
        %1959 = vmatprep.subr.bf16.mxu0 0
        %1960 = vmatpush1.bf16.xpose.msra.mxu0 0
        %1961 = vmatprep.subr.bf16.mxu0 0
        %1962 = vmatpush1.bf16.xpose.msra.mxu0 0
        %1963 = vmatprep.subr.bf16.mxu0 0
        %1964 = vmatpush1.bf16.xpose.msra.mxu0 0
        %1965 = vmatprep.subr.bf16.mxu0 0
        %1966 = vmatpush1.bf16.xpose.msra.mxu0 0
        %1967 = vmatprep.subr.bf16.mxu0 0
        %1968 = vmatpush1.bf16.xpose.msra.mxu0 0
        %1969 = vmatprep.subr.bf16.mxu0 0
        %1970 = vmatpush1.bf16.xpose.msra.mxu0 0
        %1971 = vmatprep.subr.bf16.mxu0 0
        %1972 = vmatpush1.bf16.xpose.msra.mxu0 0
        %1973 = vmatprep.subr.bf16.mxu0 0
        %1974 = vmatpush1.bf16.xpose.msra.mxu0 0
        %1975 = vmatprep.mubr.bf16.mxu0 0
        %1976 = vmatmul.mubr.bf16.gmra.mrb[0].mxu0 %v1938
        %v1977 = vpop.f32.mrb[0].mxu0
        %v1978 = vadd.f32 0.0, %v1977
        %v1979 = vpop.f32.mrb[0].mxu0
        %v1980 = vpop.f32.mrb[0].mxu0
        %v1981 = vpop.f32.mrb[0].mxu0
        %1982 = vdwg.mxu0
        %1983 = vrot.lane.b32.xlu0 %v1044, 112
        %v1984 = vpop.permute.xlu0 %1983
        %1985 = vrot.lane.b32.xlu0 %v1048, 112
        %v1986 = vpop.permute.xlu0 %1985
        %v1988 = vsel %vm1055, %v1984, 0
        %v1991 = vsel %vm1055, %v1986, 0
        %1993 = vmatprep.subr.bf16.mxu0 0
        %1994 = vmatpush1.bf16.xpose.msra.mxu0 %v1991
        %1995 = vmatprep.subr.bf16.mxu0 0
        %1996 = vmatpush1.bf16.xpose.msra.mxu0 0
        %1997 = vmatprep.subr.bf16.mxu0 0
        %1998 = vmatpush1.bf16.xpose.msra.mxu0 0
        %1999 = vmatprep.subr.bf16.mxu0 0
        %2000 = vmatpush1.bf16.xpose.msra.mxu0 0
        %2001 = vmatprep.subr.bf16.mxu0 0
        %2002 = vmatpush1.bf16.xpose.msra.mxu0 0
        %2003 = vmatprep.subr.bf16.mxu0 0
        %2004 = vmatpush1.bf16.xpose.msra.mxu0 0
        %2005 = vmatprep.subr.bf16.mxu0 0
        %2006 = vmatpush1.bf16.xpose.msra.mxu0 0
        %2007 = vmatprep.subr.bf16.mxu0 0
        %2008 = vmatpush1.bf16.xpose.msra.mxu0 0
        %2009 = vmatprep.subr.bf16.mxu0 0
        %2010 = vmatpush1.bf16.xpose.msra.mxu0 0
        %2011 = vmatprep.subr.bf16.mxu0 0
        %2012 = vmatpush1.bf16.xpose.msra.mxu0 0
        %2013 = vmatprep.subr.bf16.mxu0 0
        %2014 = vmatpush1.bf16.xpose.msra.mxu0 0
        %2015 = vmatprep.subr.bf16.mxu0 0
        %2016 = vmatpush1.bf16.xpose.msra.mxu0 0
        %2017 = vmatprep.subr.bf16.mxu0 0
        %2018 = vmatpush1.bf16.xpose.msra.mxu0 0
        %2019 = vmatprep.subr.bf16.mxu0 0
        %2020 = vmatpush1.bf16.xpose.msra.mxu0 0
        %2021 = vmatprep.subr.bf16.mxu0 0
        %2022 = vmatpush1.bf16.xpose.msra.mxu0 0
        %2023 = vmatprep.subr.bf16.mxu0 0
        %2024 = vmatpush1.bf16.xpose.msra.mxu0 0
        %2025 = vmatprep.mubr.bf16.mxu0 0
        %2026 = vmatmul.mubr.bf16.gmra.mrb[0].mxu0 %v1988
        %v2027 = vpop.f32.mrb[0].mxu0
        %v2028 = vadd.f32 0.0, %v2027
        %v2029 = vpop.f32.mrb[0].mxu0
        %v2030 = vpop.f32.mrb[0].mxu0
        %v2031 = vpop.f32.mrb[0].mxu0
        %2032 = vdwg.mxu0
        %2033 = vrot.lane.b32.xlu0 %v1045, 112
        %v2034 = vpop.permute.xlu0 %2033
        %2035 = vrot.lane.b32.xlu0 %v1049, 112
        %v2036 = vpop.permute.xlu0 %2035
        %v2038 = vsel %vm1055, %v2034, 0
        %v2041 = vsel %vm1055, %v2036, 0
        %2043 = vmatprep.subr.bf16.mxu0 0
        %2044 = vmatpush1.bf16.xpose.msra.mxu0 %v2041
        %2045 = vmatprep.subr.bf16.mxu0 0
        %2046 = vmatpush1.bf16.xpose.msra.mxu0 0
        %2047 = vmatprep.subr.bf16.mxu0 0
        %2048 = vmatpush1.bf16.xpose.msra.mxu0 0
        %2049 = vmatprep.subr.bf16.mxu0 0
        %2050 = vmatpush1.bf16.xpose.msra.mxu0 0
        %2051 = vmatprep.subr.bf16.mxu0 0
        %2052 = vmatpush1.bf16.xpose.msra.mxu0 0
        %2053 = vmatprep.subr.bf16.mxu0 0
        %2054 = vmatpush1.bf16.xpose.msra.mxu0 0
        %2055 = vmatprep.subr.bf16.mxu0 0
        %2056 = vmatpush1.bf16.xpose.msra.mxu0 0
        %2057 = vmatprep.subr.bf16.mxu0 0
        %2058 = vmatpush1.bf16.xpose.msra.mxu0 0
        %2059 = vmatprep.subr.bf16.mxu0 0
        %2060 = vmatpush1.bf16.xpose.msra.mxu0 0
        %2061 = vmatprep.subr.bf16.mxu0 0
        %2062 = vmatpush1.bf16.xpose.msra.mxu0 0
        %2063 = vmatprep.subr.bf16.mxu0 0
        %2064 = vmatpush1.bf16.xpose.msra.mxu0 0
        %2065 = vmatprep.subr.bf16.mxu0 0
        %2066 = vmatpush1.bf16.xpose.msra.mxu0 0
        %2067 = vmatprep.subr.bf16.mxu0 0
        %2068 = vmatpush1.bf16.xpose.msra.mxu0 0
        %2069 = vmatprep.subr.bf16.mxu0 0
        %2070 = vmatpush1.bf16.xpose.msra.mxu0 0
        %2071 = vmatprep.subr.bf16.mxu0 0
        %2072 = vmatpush1.bf16.xpose.msra.mxu0 0
        %2073 = vmatprep.subr.bf16.mxu0 0
        %2074 = vmatpush1.bf16.xpose.msra.mxu0 0
        %2075 = vmatprep.mubr.bf16.mxu0 0
        %2076 = vmatmul.mubr.bf16.gmra.mrb[0].mxu0 %v2038
        %v2077 = vpop.f32.mrb[0].mxu0
        %v2078 = vadd.f32 0.0, %v2077
        %v2079 = vpop.f32.mrb[0].mxu0
        %v2080 = vpop.f32.mrb[0].mxu0
        %v2081 = vpop.f32.mrb[0].mxu0
        %2082 = vdwg.mxu0
        %2083 = vrot.lane.b32.xlu0 %v1046, 112
        %v2084 = vpop.permute.xlu0 %2083
        %2085 = vrot.lane.b32.xlu0 %v1050, 112
        %v2086 = vpop.permute.xlu0 %2085
        %v2088 = vsel %vm1055, %v2084, 0
        %v2091 = vsel %vm1055, %v2086, 0
        %2093 = vmatprep.subr.bf16.mxu0 0
        %2094 = vmatpush1.bf16.xpose.msra.mxu0 %v2091
        %2095 = vmatprep.subr.bf16.mxu0 0
        %2096 = vmatpush1.bf16.xpose.msra.mxu0 0
        %2097 = vmatprep.subr.bf16.mxu0 0
        %2098 = vmatpush1.bf16.xpose.msra.mxu0 0
        %2099 = vmatprep.subr.bf16.mxu0 0
        %2100 = vmatpush1.bf16.xpose.msra.mxu0 0
        %2101 = vmatprep.subr.bf16.mxu0 0
        %2102 = vmatpush1.bf16.xpose.msra.mxu0 0
        %2103 = vmatprep.subr.bf16.mxu0 0
        %2104 = vmatpush1.bf16.xpose.msra.mxu0 0
        %2105 = vmatprep.subr.bf16.mxu0 0
        %2106 = vmatpush1.bf16.xpose.msra.mxu0 0
        %2107 = vmatprep.subr.bf16.mxu0 0
        %2108 = vmatpush1.bf16.xpose.msra.mxu0 0
        %2109 = vmatprep.subr.bf16.mxu0 0
        %2110 = vmatpush1.bf16.xpose.msra.mxu0 0
        %2111 = vmatprep.subr.bf16.mxu0 0
        %2112 = vmatpush1.bf16.xpose.msra.mxu0 0
        %2113 = vmatprep.subr.bf16.mxu0 0
        %2114 = vmatpush1.bf16.xpose.msra.mxu0 0
        %2115 = vmatprep.subr.bf16.mxu0 0
        %2116 = vmatpush1.bf16.xpose.msra.mxu0 0
        %2117 = vmatprep.subr.bf16.mxu0 0
        %2118 = vmatpush1.bf16.xpose.msra.mxu0 0
        %2119 = vmatprep.subr.bf16.mxu0 0
        %2120 = vmatpush1.bf16.xpose.msra.mxu0 0
        %2121 = vmatprep.subr.bf16.mxu0 0
        %2122 = vmatpush1.bf16.xpose.msra.mxu0 0
        %2123 = vmatprep.subr.bf16.mxu0 0
        %2124 = vmatpush1.bf16.xpose.msra.mxu0 0
        %2125 = vmatprep.mubr.bf16.mxu0 0
        %2126 = vmatmul.mubr.bf16.gmra.mrb[0].mxu0 %v2088
        %v2127 = vpop.f32.mrb[0].mxu0
        %v2128 = vadd.f32 0.0, %v2127
        %v2129 = vpop.f32.mrb[0].mxu0
        %v2130 = vpop.f32.mrb[0].mxu0
        %v2131 = vpop.f32.mrb[0].mxu0
        %2132 = vdwg.mxu0
        %v2133 = vsel %vm1055, %v1978, -inf
        %2134 = vmax.xlane.f32.xlu0 %v2133
        %v2135 = vpop.xlane.xlu0 %2134
        %v2136 = vsel %vm1055, %v2028, -inf
        %2137 = vmax.xlane.f32.xlu0 %v2136
        %v2138 = vpop.xlane.xlu0 %2137
        %v2139 = vsel %vm1055, %v2078, -inf
        %2140 = vmax.xlane.f32.xlu0 %v2139
        %v2141 = vpop.xlane.xlu0 %2140
        %v2142 = vsel %vm1055, %v2128, -inf
        %2143 = vmax.xlane.f32.xlu0 %v2142
        %v2144 = vpop.xlane.xlu0 %2143
        %v2145 = vsub.f32 %v1978, %v2135
        %v2146 = vsub.f32 %v2028, %v2138
        %v2147 = vsub.f32 %v2078, %v2141
        %v2148 = vsub.f32 %v2128, %v2144
        %v2149 = vmul.f32 %v2145, 1.442695
        %v2150 = vpow.pop %v2149
        %v2151 = vmul.f32 %v2146, 1.442695
        %v2152 = vpow.pop %v2151
        %v2153 = vmul.f32 %v2147, 1.442695
        %v2154 = vpow.pop %v2153
        %v2155 = vmul.f32 %v2148, 1.442695
        %v2156 = vpow.pop %v2155
        %v2157 = vsel %vm1055, %v2150, 0.0
        %2158 = vadd.xlane.f32.xlu0 %v2157
        %v2159 = vpop.xlane.xlu0 %2158
        %v2160 = vsel %vm1055, %v2152, 0.0
        %2161 = vadd.xlane.f32.xlu0 %v2160
        %v2162 = vpop.xlane.xlu0 %2161
        %v2163 = vsel %vm1055, %v2154, 0.0
        %2164 = vadd.xlane.f32.xlu0 %v2163
        %v2165 = vpop.xlane.xlu0 %2164
        %v2166 = vsel %vm1055, %v2156, 0.0
        %2167 = vadd.xlane.f32.xlu0 %v2166
        %v2168 = vpop.xlane.xlu0 %2167
        %v2169 = vrcp.pop %v2159
        %v2170 = vrcp.pop %v2162
        %v2171 = vrcp.pop %v2165
        %v2172 = vrcp.pop %v2168
        %v2173 = vmul.f32 %v2150, %v2169
        %v2174 = vmul.f32 %v2152, %v2170
        %v2175 = vmul.f32 %v2154, %v2171
        %v2176 = vmul.f32 %v2156, %v2172
        %v2177 = vpack.c.bf16 %v2173, %v2173
        %v2178 = vpack.c.bf16 %v2174, %v2174
        %v2179 = vpack.c.bf16 %v2175, %v2175
        %v2180 = vpack.c.bf16 %v2176, %v2176
        %2181 = vrot.lane.b32.xlu0 %v1051, 112
        %v2182 = vpop.permute.xlu0 %2181
        %v2184 = vsel %vm1055, %v2177, 0
        %v2187 = vsel %vm1291, %v2182, 0
        %2189 = vmatprep.subr.bf16.mxu0 0
        %2190 = vmatpush1.bf16.msra.mxu0 %v2187
        %2191 = vmatprep.subr.bf16.mxu0 0
        %2192 = vmatpush1.bf16.msra.mxu0 0
        %2193 = vmatprep.subr.bf16.mxu0 0
        %2194 = vmatpush1.bf16.msra.mxu0 0
        %2195 = vmatprep.subr.bf16.mxu0 0
        %2196 = vmatpush1.bf16.msra.mxu0 0
        %2197 = vmatprep.subr.bf16.mxu0 0
        %2198 = vmatpush1.bf16.msra.mxu0 0
        %2199 = vmatprep.subr.bf16.mxu0 0
        %2200 = vmatpush1.bf16.msra.mxu0 0
        %2201 = vmatprep.subr.bf16.mxu0 0
        %2202 = vmatpush1.bf16.msra.mxu0 0
        %2203 = vmatprep.subr.bf16.mxu0 0
        %2204 = vmatpush1.bf16.msra.mxu0 0
        %2205 = vmatprep.subr.bf16.mxu0 0
        %2206 = vmatpush1.bf16.msra.mxu0 0
        %2207 = vmatprep.subr.bf16.mxu0 0
        %2208 = vmatpush1.bf16.msra.mxu0 0
        %2209 = vmatprep.subr.bf16.mxu0 0
        %2210 = vmatpush1.bf16.msra.mxu0 0
        %2211 = vmatprep.subr.bf16.mxu0 0
        %2212 = vmatpush1.bf16.msra.mxu0 0
        %2213 = vmatprep.subr.bf16.mxu0 0
        %2214 = vmatpush1.bf16.msra.mxu0 0
        %2215 = vmatprep.subr.bf16.mxu0 0
        %2216 = vmatpush1.bf16.msra.mxu0 0
        %2217 = vmatprep.subr.bf16.mxu0 0
        %2218 = vmatpush1.bf16.msra.mxu0 0
        %2219 = vmatprep.subr.bf16.mxu0 0
        %2220 = vmatpush1.bf16.msra.mxu0 0
        %2221 = vmatprep.mubr.bf16.mxu0 0
        %2222 = vmatmul.mubr.bf16.gmra.mrb[0].mxu0 %v2184
        %v2223 = vpop.f32.mrb[0].mxu0
        %v2224 = vadd.f32 0.0, %v2223
        %v2225 = vpop.f32.mrb[0].mxu0
        %v2226 = vpop.f32.mrb[0].mxu0
        %v2227 = vpop.f32.mrb[0].mxu0
        %2228 = vdwg.mxu0
        %2229 = vrot.lane.b32.xlu0 %v1052, 112
        %v2230 = vpop.permute.xlu0 %2229
        %v2232 = vsel %vm1055, %v2178, 0
        %v2235 = vsel %vm1291, %v2230, 0
        %2237 = vmatprep.subr.bf16.mxu0 0
        %2238 = vmatpush1.bf16.msra.mxu0 %v2235
        %2239 = vmatprep.subr.bf16.mxu0 0
        %2240 = vmatpush1.bf16.msra.mxu0 0
        %2241 = vmatprep.subr.bf16.mxu0 0
        %2242 = vmatpush1.bf16.msra.mxu0 0
        %2243 = vmatprep.subr.bf16.mxu0 0
        %2244 = vmatpush1.bf16.msra.mxu0 0
        %2245 = vmatprep.subr.bf16.mxu0 0
        %2246 = vmatpush1.bf16.msra.mxu0 0
        %2247 = vmatprep.subr.bf16.mxu0 0
        %2248 = vmatpush1.bf16.msra.mxu0 0
        %2249 = vmatprep.subr.bf16.mxu0 0
        %2250 = vmatpush1.bf16.msra.mxu0 0
        %2251 = vmatprep.subr.bf16.mxu0 0
        %2252 = vmatpush1.bf16.msra.mxu0 0
        %2253 = vmatprep.subr.bf16.mxu0 0
        %2254 = vmatpush1.bf16.msra.mxu0 0
        %2255 = vmatprep.subr.bf16.mxu0 0
        %2256 = vmatpush1.bf16.msra.mxu0 0
        %2257 = vmatprep.subr.bf16.mxu0 0
        %2258 = vmatpush1.bf16.msra.mxu0 0
        %2259 = vmatprep.subr.bf16.mxu0 0
        %2260 = vmatpush1.bf16.msra.mxu0 0
        %2261 = vmatprep.subr.bf16.mxu0 0
        %2262 = vmatpush1.bf16.msra.mxu0 0
        %2263 = vmatprep.subr.bf16.mxu0 0
        %2264 = vmatpush1.bf16.msra.mxu0 0
        %2265 = vmatprep.subr.bf16.mxu0 0
        %2266 = vmatpush1.bf16.msra.mxu0 0
        %2267 = vmatprep.subr.bf16.mxu0 0
        %2268 = vmatpush1.bf16.msra.mxu0 0
        %2269 = vmatprep.mubr.bf16.mxu0 0
        %2270 = vmatmul.mubr.bf16.gmra.mrb[0].mxu0 %v2232
        %v2271 = vpop.f32.mrb[0].mxu0
        %v2272 = vadd.f32 0.0, %v2271
        %v2273 = vpop.f32.mrb[0].mxu0
        %v2274 = vpop.f32.mrb[0].mxu0
        %v2275 = vpop.f32.mrb[0].mxu0
        %2276 = vdwg.mxu0
        %2277 = vrot.lane.b32.xlu0 %v1053, 112
        %v2278 = vpop.permute.xlu0 %2277
        %v2280 = vsel %vm1055, %v2179, 0
        %v2283 = vsel %vm1291, %v2278, 0
        %2285 = vmatprep.subr.bf16.mxu0 0
        %2286 = vmatpush1.bf16.msra.mxu0 %v2283
        %2287 = vmatprep.subr.bf16.mxu0 0
        %2288 = vmatpush1.bf16.msra.mxu0 0
        %2289 = vmatprep.subr.bf16.mxu0 0
        %2290 = vmatpush1.bf16.msra.mxu0 0
        %2291 = vmatprep.subr.bf16.mxu0 0
        %2292 = vmatpush1.bf16.msra.mxu0 0
        %2293 = vmatprep.subr.bf16.mxu0 0
        %2294 = vmatpush1.bf16.msra.mxu0 0
        %2295 = vmatprep.subr.bf16.mxu0 0
        %2296 = vmatpush1.bf16.msra.mxu0 0
        %2297 = vmatprep.subr.bf16.mxu0 0
        %2298 = vmatpush1.bf16.msra.mxu0 0
        %2299 = vmatprep.subr.bf16.mxu0 0
        %2300 = vmatpush1.bf16.msra.mxu0 0
        %2301 = vmatprep.subr.bf16.mxu0 0
        %2302 = vmatpush1.bf16.msra.mxu0 0
        %2303 = vmatprep.subr.bf16.mxu0 0
        %2304 = vmatpush1.bf16.msra.mxu0 0
        %2305 = vmatprep.subr.bf16.mxu0 0
        %2306 = vmatpush1.bf16.msra.mxu0 0
        %2307 = vmatprep.subr.bf16.mxu0 0
        %2308 = vmatpush1.bf16.msra.mxu0 0
        %2309 = vmatprep.subr.bf16.mxu0 0
        %2310 = vmatpush1.bf16.msra.mxu0 0
        %2311 = vmatprep.subr.bf16.mxu0 0
        %2312 = vmatpush1.bf16.msra.mxu0 0
        %2313 = vmatprep.subr.bf16.mxu0 0
        %2314 = vmatpush1.bf16.msra.mxu0 0
        %2315 = vmatprep.subr.bf16.mxu0 0
        %2316 = vmatpush1.bf16.msra.mxu0 0
        %2317 = vmatprep.mubr.bf16.mxu0 0
        %2318 = vmatmul.mubr.bf16.gmra.mrb[0].mxu0 %v2280
        %v2319 = vpop.f32.mrb[0].mxu0
        %v2320 = vadd.f32 0.0, %v2319
        %v2321 = vpop.f32.mrb[0].mxu0
        %v2322 = vpop.f32.mrb[0].mxu0
        %v2323 = vpop.f32.mrb[0].mxu0
        %2324 = vdwg.mxu0
        %2325 = vrot.lane.b32.xlu0 %v1054, 112
        %v2326 = vpop.permute.xlu0 %2325
        %v2328 = vsel %vm1055, %v2180, 0
        %v2331 = vsel %vm1291, %v2326, 0
        %2333 = vmatprep.subr.bf16.mxu0 0
        %2334 = vmatpush1.bf16.msra.mxu0 %v2331
        %2335 = vmatprep.subr.bf16.mxu0 0
        %2336 = vmatpush1.bf16.msra.mxu0 0
        %2337 = vmatprep.subr.bf16.mxu0 0
        %2338 = vmatpush1.bf16.msra.mxu0 0
        %2339 = vmatprep.subr.bf16.mxu0 0
        %2340 = vmatpush1.bf16.msra.mxu0 0
        %2341 = vmatprep.subr.bf16.mxu0 0
        %2342 = vmatpush1.bf16.msra.mxu0 0
        %2343 = vmatprep.subr.bf16.mxu0 0
        %2344 = vmatpush1.bf16.msra.mxu0 0
        %2345 = vmatprep.subr.bf16.mxu0 0
        %2346 = vmatpush1.bf16.msra.mxu0 0
        %2347 = vmatprep.subr.bf16.mxu0 0
        %2348 = vmatpush1.bf16.msra.mxu0 0
        %2349 = vmatprep.subr.bf16.mxu0 0
        %2350 = vmatpush1.bf16.msra.mxu0 0
        %2351 = vmatprep.subr.bf16.mxu0 0
        %2352 = vmatpush1.bf16.msra.mxu0 0
        %2353 = vmatprep.subr.bf16.mxu0 0
        %2354 = vmatpush1.bf16.msra.mxu0 0
        %2355 = vmatprep.subr.bf16.mxu0 0
        %2356 = vmatpush1.bf16.msra.mxu0 0
        %2357 = vmatprep.subr.bf16.mxu0 0
        %2358 = vmatpush1.bf16.msra.mxu0 0
        %2359 = vmatprep.subr.bf16.mxu0 0
        %2360 = vmatpush1.bf16.msra.mxu0 0
        %2361 = vmatprep.subr.bf16.mxu0 0
        %2362 = vmatpush1.bf16.msra.mxu0 0
        %2363 = vmatprep.subr.bf16.mxu0 0
        %2364 = vmatpush1.bf16.msra.mxu0 0
        %2365 = vmatprep.mubr.bf16.mxu0 0
        %2366 = vmatmul.mubr.bf16.gmra.mrb[0].mxu0 %v2328
        %v2367 = vpop.f32.mrb[0].mxu0
        %v2368 = vadd.f32 0.0, %v2367
        %v2369 = vpop.f32.mrb[0].mxu0
        %v2370 = vpop.f32.mrb[0].mxu0
        %v2371 = vpop.f32.mrb[0].mxu0
        %2372 = vdwg.mxu0
        %v2373 = vpack.c.bf16 %v2224, %v2224
        %v2374 = vpack.c.bf16 %v2272, %v2272
        %v2375 = vpack.c.bf16 %v2320, %v2320
        %v2376 = vpack.c.bf16 %v2368, %v2368
        %2377 = vrot.lane.b32.xlu0 %v1043, 104
        %v2378 = vpop.permute.xlu0 %2377
        %2379 = vrot.lane.b32.xlu0 %v1047, 104
        %v2380 = vpop.permute.xlu0 %2379
        %v2382 = vsel %vm1055, %v2378, 0
        %v2385 = vsel %vm1055, %v2380, 0
        %2387 = vmatprep.subr.bf16.mxu0 0
        %2388 = vmatpush1.bf16.xpose.msra.mxu0 %v2385
        %2389 = vmatprep.subr.bf16.mxu0 0
        %2390 = vmatpush1.bf16.xpose.msra.mxu0 0
        %2391 = vmatprep.subr.bf16.mxu0 0
        %2392 = vmatpush1.bf16.xpose.msra.mxu0 0
        %2393 = vmatprep.subr.bf16.mxu0 0
        %2394 = vmatpush1.bf16.xpose.msra.mxu0 0
        %2395 = vmatprep.subr.bf16.mxu0 0
        %2396 = vmatpush1.bf16.xpose.msra.mxu0 0
        %2397 = vmatprep.subr.bf16.mxu0 0
        %2398 = vmatpush1.bf16.xpose.msra.mxu0 0
        %2399 = vmatprep.subr.bf16.mxu0 0
        %2400 = vmatpush1.bf16.xpose.msra.mxu0 0
        %2401 = vmatprep.subr.bf16.mxu0 0
        %2402 = vmatpush1.bf16.xpose.msra.mxu0 0
        %2403 = vmatprep.subr.bf16.mxu0 0
        %2404 = vmatpush1.bf16.xpose.msra.mxu0 0
        %2405 = vmatprep.subr.bf16.mxu0 0
        %2406 = vmatpush1.bf16.xpose.msra.mxu0 0
        %2407 = vmatprep.subr.bf16.mxu0 0
        %2408 = vmatpush1.bf16.xpose.msra.mxu0 0
        %2409 = vmatprep.subr.bf16.mxu0 0
        %2410 = vmatpush1.bf16.xpose.msra.mxu0 0
        %2411 = vmatprep.subr.bf16.mxu0 0
        %2412 = vmatpush1.bf16.xpose.msra.mxu0 0
        %2413 = vmatprep.subr.bf16.mxu0 0
        %2414 = vmatpush1.bf16.xpose.msra.mxu0 0
        %2415 = vmatprep.subr.bf16.mxu0 0
        %2416 = vmatpush1.bf16.xpose.msra.mxu0 0
        %2417 = vmatprep.subr.bf16.mxu0 0
        %2418 = vmatpush1.bf16.xpose.msra.mxu0 0
        %2419 = vmatprep.mubr.bf16.mxu0 0
        %2420 = vmatmul.mubr.bf16.gmra.mrb[0].mxu0 %v2382
        %v2421 = vpop.f32.mrb[0].mxu0
        %v2422 = vadd.f32 0.0, %v2421
        %v2423 = vpop.f32.mrb[0].mxu0
        %v2424 = vpop.f32.mrb[0].mxu0
        %v2425 = vpop.f32.mrb[0].mxu0
        %2426 = vdwg.mxu0
        %2427 = vrot.lane.b32.xlu0 %v1044, 104
        %v2428 = vpop.permute.xlu0 %2427
        %2429 = vrot.lane.b32.xlu0 %v1048, 104
        %v2430 = vpop.permute.xlu0 %2429
        %v2432 = vsel %vm1055, %v2428, 0
        %v2435 = vsel %vm1055, %v2430, 0
        %2437 = vmatprep.subr.bf16.mxu0 0
        %2438 = vmatpush1.bf16.xpose.msra.mxu0 %v2435
        %2439 = vmatprep.subr.bf16.mxu0 0
        %2440 = vmatpush1.bf16.xpose.msra.mxu0 0
        %2441 = vmatprep.subr.bf16.mxu0 0
        %2442 = vmatpush1.bf16.xpose.msra.mxu0 0
        %2443 = vmatprep.subr.bf16.mxu0 0
        %2444 = vmatpush1.bf16.xpose.msra.mxu0 0
        %2445 = vmatprep.subr.bf16.mxu0 0
        %2446 = vmatpush1.bf16.xpose.msra.mxu0 0
        %2447 = vmatprep.subr.bf16.mxu0 0
        %2448 = vmatpush1.bf16.xpose.msra.mxu0 0
        %2449 = vmatprep.subr.bf16.mxu0 0
        %2450 = vmatpush1.bf16.xpose.msra.mxu0 0
        %2451 = vmatprep.subr.bf16.mxu0 0
        %2452 = vmatpush1.bf16.xpose.msra.mxu0 0
        %2453 = vmatprep.subr.bf16.mxu0 0
        %2454 = vmatpush1.bf16.xpose.msra.mxu0 0
        %2455 = vmatprep.subr.bf16.mxu0 0
        %2456 = vmatpush1.bf16.xpose.msra.mxu0 0
        %2457 = vmatprep.subr.bf16.mxu0 0
        %2458 = vmatpush1.bf16.xpose.msra.mxu0 0
        %2459 = vmatprep.subr.bf16.mxu0 0
        %2460 = vmatpush1.bf16.xpose.msra.mxu0 0
        %2461 = vmatprep.subr.bf16.mxu0 0
        %2462 = vmatpush1.bf16.xpose.msra.mxu0 0
        %2463 = vmatprep.subr.bf16.mxu0 0
        %2464 = vmatpush1.bf16.xpose.msra.mxu0 0
        %2465 = vmatprep.subr.bf16.mxu0 0
        %2466 = vmatpush1.bf16.xpose.msra.mxu0 0
        %2467 = vmatprep.subr.bf16.mxu0 0
        %2468 = vmatpush1.bf16.xpose.msra.mxu0 0
        %2469 = vmatprep.mubr.bf16.mxu0 0
        %2470 = vmatmul.mubr.bf16.gmra.mrb[0].mxu0 %v2432
        %v2471 = vpop.f32.mrb[0].mxu0
        %v2472 = vadd.f32 0.0, %v2471
        %v2473 = vpop.f32.mrb[0].mxu0
        %v2474 = vpop.f32.mrb[0].mxu0
        %v2475 = vpop.f32.mrb[0].mxu0
        %2476 = vdwg.mxu0
        %2477 = vrot.lane.b32.xlu0 %v1045, 104
        %v2478 = vpop.permute.xlu0 %2477
        %2479 = vrot.lane.b32.xlu0 %v1049, 104
        %v2480 = vpop.permute.xlu0 %2479
        %v2482 = vsel %vm1055, %v2478, 0
        %v2485 = vsel %vm1055, %v2480, 0
        %2487 = vmatprep.subr.bf16.mxu0 0
        %2488 = vmatpush1.bf16.xpose.msra.mxu0 %v2485
        %2489 = vmatprep.subr.bf16.mxu0 0
        %2490 = vmatpush1.bf16.xpose.msra.mxu0 0
        %2491 = vmatprep.subr.bf16.mxu0 0
        %2492 = vmatpush1.bf16.xpose.msra.mxu0 0
        %2493 = vmatprep.subr.bf16.mxu0 0
        %2494 = vmatpush1.bf16.xpose.msra.mxu0 0
        %2495 = vmatprep.subr.bf16.mxu0 0
        %2496 = vmatpush1.bf16.xpose.msra.mxu0 0
        %2497 = vmatprep.subr.bf16.mxu0 0
        %2498 = vmatpush1.bf16.xpose.msra.mxu0 0
        %2499 = vmatprep.subr.bf16.mxu0 0
        %2500 = vmatpush1.bf16.xpose.msra.mxu0 0
        %2501 = vmatprep.subr.bf16.mxu0 0
        %2502 = vmatpush1.bf16.xpose.msra.mxu0 0
        %2503 = vmatprep.subr.bf16.mxu0 0
        %2504 = vmatpush1.bf16.xpose.msra.mxu0 0
        %2505 = vmatprep.subr.bf16.mxu0 0
        %2506 = vmatpush1.bf16.xpose.msra.mxu0 0
        %2507 = vmatprep.subr.bf16.mxu0 0
        %2508 = vmatpush1.bf16.xpose.msra.mxu0 0
        %2509 = vmatprep.subr.bf16.mxu0 0
        %2510 = vmatpush1.bf16.xpose.msra.mxu0 0
        %2511 = vmatprep.subr.bf16.mxu0 0
        %2512 = vmatpush1.bf16.xpose.msra.mxu0 0
        %2513 = vmatprep.subr.bf16.mxu0 0
        %2514 = vmatpush1.bf16.xpose.msra.mxu0 0
        %2515 = vmatprep.subr.bf16.mxu0 0
        %2516 = vmatpush1.bf16.xpose.msra.mxu0 0
        %2517 = vmatprep.subr.bf16.mxu0 0
        %2518 = vmatpush1.bf16.xpose.msra.mxu0 0
        %2519 = vmatprep.mubr.bf16.mxu0 0
        %2520 = vmatmul.mubr.bf16.gmra.mrb[0].mxu0 %v2482
        %v2521 = vpop.f32.mrb[0].mxu0
        %v2522 = vadd.f32 0.0, %v2521
        %v2523 = vpop.f32.mrb[0].mxu0
        %v2524 = vpop.f32.mrb[0].mxu0
        %v2525 = vpop.f32.mrb[0].mxu0
        %2526 = vdwg.mxu0
        %2527 = vrot.lane.b32.xlu0 %v1046, 104
        %v2528 = vpop.permute.xlu0 %2527
        %2529 = vrot.lane.b32.xlu0 %v1050, 104
        %v2530 = vpop.permute.xlu0 %2529
        %v2532 = vsel %vm1055, %v2528, 0
        %v2535 = vsel %vm1055, %v2530, 0
        %2537 = vmatprep.subr.bf16.mxu0 0
        %2538 = vmatpush1.bf16.xpose.msra.mxu0 %v2535
        %2539 = vmatprep.subr.bf16.mxu0 0
        %2540 = vmatpush1.bf16.xpose.msra.mxu0 0
        %2541 = vmatprep.subr.bf16.mxu0 0
        %2542 = vmatpush1.bf16.xpose.msra.mxu0 0
        %2543 = vmatprep.subr.bf16.mxu0 0
        %2544 = vmatpush1.bf16.xpose.msra.mxu0 0
        %2545 = vmatprep.subr.bf16.mxu0 0
        %2546 = vmatpush1.bf16.xpose.msra.mxu0 0
        %2547 = vmatprep.subr.bf16.mxu0 0
        %2548 = vmatpush1.bf16.xpose.msra.mxu0 0
        %2549 = vmatprep.subr.bf16.mxu0 0
        %2550 = vmatpush1.bf16.xpose.msra.mxu0 0
        %2551 = vmatprep.subr.bf16.mxu0 0
        %2552 = vmatpush1.bf16.xpose.msra.mxu0 0
        %2553 = vmatprep.subr.bf16.mxu0 0
        %2554 = vmatpush1.bf16.xpose.msra.mxu0 0
        %2555 = vmatprep.subr.bf16.mxu0 0
        %2556 = vmatpush1.bf16.xpose.msra.mxu0 0
        %2557 = vmatprep.subr.bf16.mxu0 0
        %2558 = vmatpush1.bf16.xpose.msra.mxu0 0
        %2559 = vmatprep.subr.bf16.mxu0 0
        %2560 = vmatpush1.bf16.xpose.msra.mxu0 0
        %2561 = vmatprep.subr.bf16.mxu0 0
        %2562 = vmatpush1.bf16.xpose.msra.mxu0 0
        %2563 = vmatprep.subr.bf16.mxu0 0
        %2564 = vmatpush1.bf16.xpose.msra.mxu0 0
        %2565 = vmatprep.subr.bf16.mxu0 0
        %2566 = vmatpush1.bf16.xpose.msra.mxu0 0
        %2567 = vmatprep.subr.bf16.mxu0 0
        %2568 = vmatpush1.bf16.xpose.msra.mxu0 0
        %2569 = vmatprep.mubr.bf16.mxu0 0
        %2570 = vmatmul.mubr.bf16.gmra.mrb[0].mxu0 %v2532
        %v2571 = vpop.f32.mrb[0].mxu0
        %v2572 = vadd.f32 0.0, %v2571
        %v2573 = vpop.f32.mrb[0].mxu0
        %v2574 = vpop.f32.mrb[0].mxu0
        %v2575 = vpop.f32.mrb[0].mxu0
        %2576 = vdwg.mxu0
        %v2577 = vsel %vm1055, %v2422, -inf
        %2578 = vmax.xlane.f32.xlu0 %v2577
        %v2579 = vpop.xlane.xlu0 %2578
        %v2580 = vsel %vm1055, %v2472, -inf
        %2581 = vmax.xlane.f32.xlu0 %v2580
        %v2582 = vpop.xlane.xlu0 %2581
        %v2583 = vsel %vm1055, %v2522, -inf
        %2584 = vmax.xlane.f32.xlu0 %v2583
        %v2585 = vpop.xlane.xlu0 %2584
        %v2586 = vsel %vm1055, %v2572, -inf
        %2587 = vmax.xlane.f32.xlu0 %v2586
        %v2588 = vpop.xlane.xlu0 %2587
        %v2589 = vsub.f32 %v2422, %v2579
        %v2590 = vsub.f32 %v2472, %v2582
        %v2591 = vsub.f32 %v2522, %v2585
        %v2592 = vsub.f32 %v2572, %v2588
        %v2593 = vmul.f32 %v2589, 1.442695
        %v2594 = vpow.pop %v2593
        %v2595 = vmul.f32 %v2590, 1.442695
        %v2596 = vpow.pop %v2595
        %v2597 = vmul.f32 %v2591, 1.442695
        %v2598 = vpow.pop %v2597
        %v2599 = vmul.f32 %v2592, 1.442695
        %v2600 = vpow.pop %v2599
        %v2601 = vsel %vm1055, %v2594, 0.0
        %2602 = vadd.xlane.f32.xlu0 %v2601
        %v2603 = vpop.xlane.xlu0 %2602
        %v2604 = vsel %vm1055, %v2596, 0.0
        %2605 = vadd.xlane.f32.xlu0 %v2604
        %v2606 = vpop.xlane.xlu0 %2605
        %v2607 = vsel %vm1055, %v2598, 0.0
        %2608 = vadd.xlane.f32.xlu0 %v2607
        %v2609 = vpop.xlane.xlu0 %2608
        %v2610 = vsel %vm1055, %v2600, 0.0
        %2611 = vadd.xlane.f32.xlu0 %v2610
        %v2612 = vpop.xlane.xlu0 %2611
        %v2613 = vrcp.pop %v2603
        %v2614 = vrcp.pop %v2606
        %v2615 = vrcp.pop %v2609
        %v2616 = vrcp.pop %v2612
        %v2617 = vmul.f32 %v2594, %v2613
        %v2618 = vmul.f32 %v2596, %v2614
        %v2619 = vmul.f32 %v2598, %v2615
        %v2620 = vmul.f32 %v2600, %v2616
        %v2621 = vpack.c.bf16 %v2617, %v2617
        %v2622 = vpack.c.bf16 %v2618, %v2618
        %v2623 = vpack.c.bf16 %v2619, %v2619
        %v2624 = vpack.c.bf16 %v2620, %v2620
        %2625 = vrot.lane.b32.xlu0 %v1051, 104
        %v2626 = vpop.permute.xlu0 %2625
        %v2628 = vsel %vm1055, %v2621, 0
        %v2631 = vsel %vm1291, %v2626, 0
        %2633 = vmatprep.subr.bf16.mxu0 0
        %2634 = vmatpush1.bf16.msra.mxu0 %v2631
        %2635 = vmatprep.subr.bf16.mxu0 0
        %2636 = vmatpush1.bf16.msra.mxu0 0
        %2637 = vmatprep.subr.bf16.mxu0 0
        %2638 = vmatpush1.bf16.msra.mxu0 0
        %2639 = vmatprep.subr.bf16.mxu0 0
        %2640 = vmatpush1.bf16.msra.mxu0 0
        %2641 = vmatprep.subr.bf16.mxu0 0
        %2642 = vmatpush1.bf16.msra.mxu0 0
        %2643 = vmatprep.subr.bf16.mxu0 0
        %2644 = vmatpush1.bf16.msra.mxu0 0
        %2645 = vmatprep.subr.bf16.mxu0 0
        %2646 = vmatpush1.bf16.msra.mxu0 0
        %2647 = vmatprep.subr.bf16.mxu0 0
        %2648 = vmatpush1.bf16.msra.mxu0 0
        %2649 = vmatprep.subr.bf16.mxu0 0
        %2650 = vmatpush1.bf16.msra.mxu0 0
        %2651 = vmatprep.subr.bf16.mxu0 0
        %2652 = vmatpush1.bf16.msra.mxu0 0
        %2653 = vmatprep.subr.bf16.mxu0 0
        %2654 = vmatpush1.bf16.msra.mxu0 0
        %2655 = vmatprep.subr.bf16.mxu0 0
        %2656 = vmatpush1.bf16.msra.mxu0 0
        %2657 = vmatprep.subr.bf16.mxu0 0
        %2658 = vmatpush1.bf16.msra.mxu0 0
        %2659 = vmatprep.subr.bf16.mxu0 0
        %2660 = vmatpush1.bf16.msra.mxu0 0
        %2661 = vmatprep.subr.bf16.mxu0 0
        %2662 = vmatpush1.bf16.msra.mxu0 0
        %2663 = vmatprep.subr.bf16.mxu0 0
        %2664 = vmatpush1.bf16.msra.mxu0 0
        %2665 = vmatprep.mubr.bf16.mxu0 0
        %2666 = vmatmul.mubr.bf16.gmra.mrb[0].mxu0 %v2628
        %v2667 = vpop.f32.mrb[0].mxu0
        %v2668 = vadd.f32 0.0, %v2667
        %v2669 = vpop.f32.mrb[0].mxu0
        %v2670 = vpop.f32.mrb[0].mxu0
        %v2671 = vpop.f32.mrb[0].mxu0
        %2672 = vdwg.mxu0
        %2673 = vrot.lane.b32.xlu0 %v1052, 104
        %v2674 = vpop.permute.xlu0 %2673
        %v2676 = vsel %vm1055, %v2622, 0
        %v2679 = vsel %vm1291, %v2674, 0
        %2681 = vmatprep.subr.bf16.mxu0 0
        %2682 = vmatpush1.bf16.msra.mxu0 %v2679
        %2683 = vmatprep.subr.bf16.mxu0 0
        %2684 = vmatpush1.bf16.msra.mxu0 0
        %2685 = vmatprep.subr.bf16.mxu0 0
        %2686 = vmatpush1.bf16.msra.mxu0 0
        %2687 = vmatprep.subr.bf16.mxu0 0
        %2688 = vmatpush1.bf16.msra.mxu0 0
        %2689 = vmatprep.subr.bf16.mxu0 0
        %2690 = vmatpush1.bf16.msra.mxu0 0
        %2691 = vmatprep.subr.bf16.mxu0 0
        %2692 = vmatpush1.bf16.msra.mxu0 0
        %2693 = vmatprep.subr.bf16.mxu0 0
        %2694 = vmatpush1.bf16.msra.mxu0 0
        %2695 = vmatprep.subr.bf16.mxu0 0
        %2696 = vmatpush1.bf16.msra.mxu0 0
        %2697 = vmatprep.subr.bf16.mxu0 0
        %2698 = vmatpush1.bf16.msra.mxu0 0
        %2699 = vmatprep.subr.bf16.mxu0 0
        %2700 = vmatpush1.bf16.msra.mxu0 0
        %2701 = vmatprep.subr.bf16.mxu0 0
        %2702 = vmatpush1.bf16.msra.mxu0 0
        %2703 = vmatprep.subr.bf16.mxu0 0
        %2704 = vmatpush1.bf16.msra.mxu0 0
        %2705 = vmatprep.subr.bf16.mxu0 0
        %2706 = vmatpush1.bf16.msra.mxu0 0
        %2707 = vmatprep.subr.bf16.mxu0 0
        %2708 = vmatpush1.bf16.msra.mxu0 0
        %2709 = vmatprep.subr.bf16.mxu0 0
        %2710 = vmatpush1.bf16.msra.mxu0 0
        %2711 = vmatprep.subr.bf16.mxu0 0
        %2712 = vmatpush1.bf16.msra.mxu0 0
        %2713 = vmatprep.mubr.bf16.mxu0 0
        %2714 = vmatmul.mubr.bf16.gmra.mrb[0].mxu0 %v2676
        %v2715 = vpop.f32.mrb[0].mxu0
        %v2716 = vadd.f32 0.0, %v2715
        %v2717 = vpop.f32.mrb[0].mxu0
        %v2718 = vpop.f32.mrb[0].mxu0
        %v2719 = vpop.f32.mrb[0].mxu0
        %2720 = vdwg.mxu0
        %2721 = vrot.lane.b32.xlu0 %v1053, 104
        %v2722 = vpop.permute.xlu0 %2721
        %v2724 = vsel %vm1055, %v2623, 0
        %v2727 = vsel %vm1291, %v2722, 0
        %2729 = vmatprep.subr.bf16.mxu0 0
        %2730 = vmatpush1.bf16.msra.mxu0 %v2727
        %2731 = vmatprep.subr.bf16.mxu0 0
        %2732 = vmatpush1.bf16.msra.mxu0 0
        %2733 = vmatprep.subr.bf16.mxu0 0
        %2734 = vmatpush1.bf16.msra.mxu0 0
        %2735 = vmatprep.subr.bf16.mxu0 0
        %2736 = vmatpush1.bf16.msra.mxu0 0
        %2737 = vmatprep.subr.bf16.mxu0 0
        %2738 = vmatpush1.bf16.msra.mxu0 0
        %2739 = vmatprep.subr.bf16.mxu0 0
        %2740 = vmatpush1.bf16.msra.mxu0 0
        %2741 = vmatprep.subr.bf16.mxu0 0
        %2742 = vmatpush1.bf16.msra.mxu0 0
        %2743 = vmatprep.subr.bf16.mxu0 0
        %2744 = vmatpush1.bf16.msra.mxu0 0
        %2745 = vmatprep.subr.bf16.mxu0 0
        %2746 = vmatpush1.bf16.msra.mxu0 0
        %2747 = vmatprep.subr.bf16.mxu0 0
        %2748 = vmatpush1.bf16.msra.mxu0 0
        %2749 = vmatprep.subr.bf16.mxu0 0
        %2750 = vmatpush1.bf16.msra.mxu0 0
        %2751 = vmatprep.subr.bf16.mxu0 0
        %2752 = vmatpush1.bf16.msra.mxu0 0
        %2753 = vmatprep.subr.bf16.mxu0 0
        %2754 = vmatpush1.bf16.msra.mxu0 0
        %2755 = vmatprep.subr.bf16.mxu0 0
        %2756 = vmatpush1.bf16.msra.mxu0 0
        %2757 = vmatprep.subr.bf16.mxu0 0
        %2758 = vmatpush1.bf16.msra.mxu0 0
        %2759 = vmatprep.subr.bf16.mxu0 0
        %2760 = vmatpush1.bf16.msra.mxu0 0
        %2761 = vmatprep.mubr.bf16.mxu0 0
        %2762 = vmatmul.mubr.bf16.gmra.mrb[0].mxu0 %v2724
        %v2763 = vpop.f32.mrb[0].mxu0
        %v2764 = vadd.f32 0.0, %v2763
        %v2765 = vpop.f32.mrb[0].mxu0
        %v2766 = vpop.f32.mrb[0].mxu0
        %v2767 = vpop.f32.mrb[0].mxu0
        %2768 = vdwg.mxu0
        %2769 = vrot.lane.b32.xlu0 %v1054, 104
        %v2770 = vpop.permute.xlu0 %2769
        %v2772 = vsel %vm1055, %v2624, 0
        %v2775 = vsel %vm1291, %v2770, 0
        %2777 = vmatprep.subr.bf16.mxu0 0
        %2778 = vmatpush1.bf16.msra.mxu0 %v2775
        %2779 = vmatprep.subr.bf16.mxu0 0
        %2780 = vmatpush1.bf16.msra.mxu0 0
        %2781 = vmatprep.subr.bf16.mxu0 0
        %2782 = vmatpush1.bf16.msra.mxu0 0
        %2783 = vmatprep.subr.bf16.mxu0 0
        %2784 = vmatpush1.bf16.msra.mxu0 0
        %2785 = vmatprep.subr.bf16.mxu0 0
        %2786 = vmatpush1.bf16.msra.mxu0 0
        %2787 = vmatprep.subr.bf16.mxu0 0
        %2788 = vmatpush1.bf16.msra.mxu0 0
        %2789 = vmatprep.subr.bf16.mxu0 0
        %2790 = vmatpush1.bf16.msra.mxu0 0
        %2791 = vmatprep.subr.bf16.mxu0 0
        %2792 = vmatpush1.bf16.msra.mxu0 0
        %2793 = vmatprep.subr.bf16.mxu0 0
        %2794 = vmatpush1.bf16.msra.mxu0 0
        %2795 = vmatprep.subr.bf16.mxu0 0
        %2796 = vmatpush1.bf16.msra.mxu0 0
        %2797 = vmatprep.subr.bf16.mxu0 0
        %2798 = vmatpush1.bf16.msra.mxu0 0
        %2799 = vmatprep.subr.bf16.mxu0 0
        %2800 = vmatpush1.bf16.msra.mxu0 0
        %2801 = vmatprep.subr.bf16.mxu0 0
        %2802 = vmatpush1.bf16.msra.mxu0 0
        %2803 = vmatprep.subr.bf16.mxu0 0
        %2804 = vmatpush1.bf16.msra.mxu0 0
        %2805 = vmatprep.subr.bf16.mxu0 0
        %2806 = vmatpush1.bf16.msra.mxu0 0
        %2807 = vmatprep.subr.bf16.mxu0 0
        %2808 = vmatpush1.bf16.msra.mxu0 0
        %2809 = vmatprep.mubr.bf16.mxu0 0
        %2810 = vmatmul.mubr.bf16.gmra.mrb[0].mxu0 %v2772
        %v2811 = vpop.f32.mrb[0].mxu0
        %v2812 = vadd.f32 0.0, %v2811
        %v2813 = vpop.f32.mrb[0].mxu0
        %v2814 = vpop.f32.mrb[0].mxu0
        %v2815 = vpop.f32.mrb[0].mxu0
        %2816 = vdwg.mxu0
        %v2817 = vpack.c.bf16 %v2668, %v2668
        %v2818 = vpack.c.bf16 %v2716, %v2716
        %v2819 = vpack.c.bf16 %v2764, %v2764
        %v2820 = vpack.c.bf16 %v2812, %v2812
        %2825 = vrot.lane.b32.xlu0 %v1929, 8
        %v2826 = vpop.permute.xlu0 %2825
        %2827 = vrot.lane.b32.xlu0 %v1930, 8
        %v2828 = vpop.permute.xlu0 %2827
        %2829 = vrot.lane.b32.xlu0 %v1931, 8
        %v2830 = vpop.permute.xlu0 %2829
        %2831 = vrot.lane.b32.xlu0 %v1932, 8
        %v2832 = vpop.permute.xlu0 %2831
        %2837 = vrot.lane.b32.xlu0 %v2373, 16
        %v2838 = vpop.permute.xlu0 %2837
        %2839 = vrot.lane.b32.xlu0 %v2374, 16
        %v2840 = vpop.permute.xlu0 %2839
        %2841 = vrot.lane.b32.xlu0 %v2375, 16
        %v2842 = vpop.permute.xlu0 %2841
        %2843 = vrot.lane.b32.xlu0 %v2376, 16
        %v2844 = vpop.permute.xlu0 %2843
        %2849 = vrot.lane.b32.xlu0 %v2817, 24
        %v2850 = vpop.permute.xlu0 %2849
        %2851 = vrot.lane.b32.xlu0 %v2818, 24
        %v2852 = vpop.permute.xlu0 %2851
        %2853 = vrot.lane.b32.xlu0 %v2819, 24
        %v2854 = vpop.permute.xlu0 %2853
        %2855 = vrot.lane.b32.xlu0 %v2820, 24
        %v2856 = vpop.permute.xlu0 %2855
        %v2859 = vsel %vm1055, %v1473, %v2826
        %v2862 = vsel %vm1055, %v1474, %v2828
        %v2865 = vsel %vm1055, %v1475, %v2830
        %v2868 = vsel %vm1055, %v1476, %v2832
        %vm2869 = vcmask 130048
        %v2871 = vsel %vm2869, %v2859, %v2838
        %v2873 = vsel %vm2869, %v2862, %v2840
        %v2875 = vsel %vm2869, %v2865, %v2842
        %v2877 = vsel %vm2869, %v2868, %v2844
        %vm2878 = vcmask 195584
        %v2880 = vsel %vm2878, %v2871, %v2850
        %v2882 = vsel %vm2878, %v2873, %v2852
        %v2884 = vsel %vm2878, %v2875, %v2854
        %v2886 = vsel %vm2878, %v2877, %v2856
        %v2887 = vld [vmem:[%s9] sm:$0xf]
        %v2888 = vld [vmem:[%s9 + $0x4] sm:$0xf]
        %v2889 = vld [vmem:[%s9 + $0x8] sm:$0xf]
        %v2890 = vld [vmem:[%s9 + $0xc] sm:$0xf]
        %v2891 = vld [vmem:[%s10] sm:$0x1]
        %v2893 = vlaneseq
        %v2894 = vshrl.u32 %v2893, 7
        %v2895 = vsub.s32 0, %v2894
        %v2896 = vrot.slane %v2891, %v2895
        %v2902 = vunpack.c.l.b16 %v2880
        %v2903 = vunpack.c.l.b16 %v2882
        %v2904 = vunpack.c.l.b16 %v2884
        %v2905 = vunpack.c.l.b16 %v2886
        %v2906 = vpack.c.b16 %v2903, %v2902
        %v2907 = vpack.c.b16 %v2905, %v2904
        %v2912 = vunpack.c.l.b16 %v2887
        %v2913 = vunpack.c.l.b16 %v2888
        %v2914 = vunpack.c.l.b16 %v2889
        %v2915 = vunpack.c.l.b16 %v2890
        %v2916 = vpack.c.b16 %v2913, %v2912
        %v2917 = vpack.c.b16 %v2915, %v2914
        %v2921 = vsel %vm843, %v2906, 0
        %v2924 = vsel %vm843, %v2907, 0
        %2926 = vmatprep.subr.bf16.mxu0 0
        %2927 = vmatpush1.bf16.msra.mxu0 %v2916
        %2928 = vmatprep.subr.bf16.mxu0 0
        %2929 = vmatpush1.bf16.msra.mxu0 %v2917
        %2930 = vmatprep.subr.bf16.mxu0 0
        %2931 = vmatpush1.bf16.msra.mxu0 0
        %2932 = vmatprep.subr.bf16.mxu0 0
        %2933 = vmatpush1.bf16.msra.mxu0 0
        %2934 = vmatprep.subr.bf16.mxu0 0
        %2935 = vmatpush1.bf16.msra.mxu0 0
        %2936 = vmatprep.subr.bf16.mxu0 0
        %2937 = vmatpush1.bf16.msra.mxu0 0
        %2938 = vmatprep.subr.bf16.mxu0 0
        %2939 = vmatpush1.bf16.msra.mxu0 0
        %2940 = vmatprep.subr.bf16.mxu0 0
        %2941 = vmatpush1.bf16.msra.mxu0 0
        %2942 = vmatprep.subr.bf16.mxu0 0
        %2943 = vmatpush1.bf16.msra.mxu0 0
        %2944 = vmatprep.subr.bf16.mxu0 0
        %2945 = vmatpush1.bf16.msra.mxu0 0
        %2946 = vmatprep.subr.bf16.mxu0 0
        %2947 = vmatpush1.bf16.msra.mxu0 0
        %2948 = vmatprep.subr.bf16.mxu0 0
        %2949 = vmatpush1.bf16.msra.mxu0 0
        %2950 = vmatprep.subr.bf16.mxu0 0
        %2951 = vmatpush1.bf16.msra.mxu0 0
        %2952 = vmatprep.subr.bf16.mxu0 0
        %2953 = vmatpush1.bf16.msra.mxu0 0
        %2954 = vmatprep.subr.bf16.mxu0 0
        %2955 = vmatpush1.bf16.msra.mxu0 0
        %2956 = vmatprep.subr.bf16.mxu0 0
        %2957 = vmatpush1.bf16.msra.mxu0 0
        %2958 = vmatprep.mubr.bf16.mxu0 0
        %2959 = vmatmul.mubr.bf16.gmra.mrb[0].mxu0 %v2921
        %v2960 = vpop.f32.mrb[0].mxu0
        %v2961 = vadd.f32 %v2896, %v2960
        %v2962 = vpop.f32.mrb[0].mxu0
        %v2963 = vpop.f32.mrb[0].mxu0
        %v2964 = vadd.f32 %v2896, %v2963
        %v2965 = vpop.f32.mrb[0].mxu0
        %2966 = vmatprep.mubr.bf16.mxu0 0
        %2967 = vmatmul.mubr.bf16.gmra.mrb[0].mxu0 %v2924
        %v2968 = vpop.f32.mrb[0].mxu0
        %v2969 = vadd.f32 %v2896, %v2968
        %v2970 = vpop.f32.mrb[0].mxu0
        %v2971 = vpop.f32.mrb[0].mxu0
        %v2972 = vadd.f32 %v2896, %v2971
        %v2973 = vpop.f32.mrb[0].mxu0
        %2974 = vdwg.mxu0
        %v2975 = vadd.f32 %v814, %v2961
        %v2976 = vadd.f32 %v815, %v2964
        %v2977 = vadd.f32 %v816, %v2969
        %v2978 = vadd.f32 %v817, %v2972
        %v2979 = vld [vmem:[%s11] sm:$0x1]
        %v2980 = vld [vmem:[%s12] sm:$0x1]
        %v2981 = vsel %vm843, %v2975, 0.0
        %2982 = vadd.xlane.f32.xlu0 %v2981
        %v2983 = vpop.xlane.xlu0 %2982
        %v2984 = vsel %vm843, %v2976, 0.0
        %2985 = vadd.xlane.f32.xlu0 %v2984
        %v2986 = vpop.xlane.xlu0 %2985
        %v2987 = vsel %vm843, %v2977, 0.0
        %2988 = vadd.xlane.f32.xlu0 %v2987
        %v2989 = vpop.xlane.xlu0 %2988
        %v2990 = vsel %vm843, %v2978, 0.0
        %2991 = vadd.xlane.f32.xlu0 %v2990
        %v2992 = vpop.xlane.xlu0 %2991
        %v2993 = vrcp.pop 32.0
        %v2994 = vmul.f32 %v2983, %v2993
        %v2995 = vmul.f32 %v2986, %v2993
        %v2996 = vmul.f32 %v2989, %v2993
        %v2997 = vmul.f32 %v2992, %v2993
        %v2998 = vsub.f32 %v2975, %v2994
        %v2999 = vsub.f32 %v2976, %v2995
        %v3000 = vsub.f32 %v2977, %v2996
        %v3001 = vsub.f32 %v2978, %v2997
        %v3002 = vmul.f32 %v2998, %v2998
        %v3003 = vmul.f32 %v2999, %v2999
        %v3004 = vmul.f32 %v3000, %v3000
        %v3005 = vmul.f32 %v3001, %v3001
        %v3006 = vsel %vm843, %v3002, 0.0
        %3007 = vadd.xlane.f32.xlu0 %v3006
        %v3008 = vpop.xlane.xlu0 %3007
        %v3009 = vsel %vm843, %v3003, 0.0
        %3010 = vadd.xlane.f32.xlu0 %v3009
        %v3011 = vpop.xlane.xlu0 %3010
        %v3012 = vsel %vm843, %v3004, 0.0
        %3013 = vadd.xlane.f32.xlu0 %v3012
        %v3014 = vpop.xlane.xlu0 %3013
        %v3015 = vsel %vm843, %v3005, 0.0
        %3016 = vadd.xlane.f32.xlu0 %v3015
        %v3017 = vpop.xlane.xlu0 %3016
        %v3018 = vmul.f32 %v3008, %v2993
        %v3019 = vmul.f32 %v3011, %v2993
        %v3020 = vmul.f32 %v3014, %v2993
        %v3021 = vmul.f32 %v3017, %v2993
        %v3022 = vadd.f32 %v3018, 1e-05
        %v3023 = vadd.f32 %v3019, 1e-05
        %v3024 = vadd.f32 %v3020, 1e-05
        %v3025 = vadd.f32 %v3021, 1e-05
        %v3026 = vrsqrt.pop %v3022
        %v3027 = vrsqrt.pop %v3023
        %v3028 = vrsqrt.pop %v3024
        %v3029 = vrsqrt.pop %v3025
        %v3030 = vmul.f32 %v2998, %v3026
        %v3031 = vmul.f32 %v2999, %v3027
        %v3032 = vmul.f32 %v3000, %v3028
        %v3033 = vmul.f32 %v3001, %v3029
        %v3035 = vlaneseq
        %v3036 = vshrl.u32 %v3035, 7
        %v3037 = vsub.s32 0, %v3036
        %v3038 = vrot.slane %v2979, %v3037
        %v3040 = vmul.f32 %v3030, %v3038
        %v3041 = vmul.f32 %v3031, %v3038
        %v3042 = vmul.f32 %v3032, %v3038
        %v3043 = vmul.f32 %v3033, %v3038
        %v3045 = vlaneseq
        %v3046 = vshrl.u32 %v3045, 7
        %v3047 = vsub.s32 0, %v3046
        %v3048 = vrot.slane %v2980, %v3047
        %v3050 = vadd.f32 %v3040, %v3048
        %v3051 = vadd.f32 %v3041, %v3048
        %v3052 = vadd.f32 %v3042, %v3048
        %v3053 = vadd.f32 %v3043, %v3048
        %v3054 = vpack.c.bf16 %v3051, %v3050
        %v3055 = vpack.c.bf16 %v3053, %v3052
        %v3056 = vld [vmem:[%s13] sm:$0xf]
        %v3057 = vld [vmem:[%s13 + $0x4] sm:$0xf]
        %v3058 = vld [vmem:[%s13 + $0x8] sm:$0xf]
        %v3059 = vld [vmem:[%s13 + $0xc] sm:$0xf]
        %v3064 = vunpack.c.l.b16 %v3056
        %v3065 = vunpack.c.l.b16 %v3057
        %v3066 = vunpack.c.l.b16 %v3058
        %v3067 = vunpack.c.l.b16 %v3059
        %v3068 = vpack.c.b16 %v3065, %v3064
        %v3069 = vpack.c.b16 %v3067, %v3066
        %v3073 = vsel %vm843, %v3054, 0
        %v3076 = vsel %vm843, %v3055, 0
        %3078 = vmatprep.subr.bf16.mxu0 0
        %3079 = vmatpush1.bf16.msra.mxu0 %v3068
        %3080 = vmatprep.subr.bf16.mxu0 0
        %3081 = vmatpush1.bf16.msra.mxu0 %v3069
        %3082 = vmatprep.subr.bf16.mxu0 0
        %3083 = vmatpush1.bf16.msra.mxu0 0
        %3084 = vmatprep.subr.bf16.mxu0 0
        %3085 = vmatpush1.bf16.msra.mxu0 0
        %3086 = vmatprep.subr.bf16.mxu0 0
        %3087 = vmatpush1.bf16.msra.mxu0 0
        %3088 = vmatprep.subr.bf16.mxu0 0
        %3089 = vmatpush1.bf16.msra.mxu0 0
        %3090 = vmatprep.subr.bf16.mxu0 0
        %3091 = vmatpush1.bf16.msra.mxu0 0
        %3092 = vmatprep.subr.bf16.mxu0 0
        %3093 = vmatpush1.bf16.msra.mxu0 0
        %3094 = vmatprep.subr.bf16.mxu0 0
        %3095 = vmatpush1.bf16.msra.mxu0 0
        %3096 = vmatprep.subr.bf16.mxu0 0
        %3097 = vmatpush1.bf16.msra.mxu0 0
        %3098 = vmatprep.subr.bf16.mxu0 0
        %3099 = vmatpush1.bf16.msra.mxu0 0
        %3100 = vmatprep.subr.bf16.mxu0 0
        %3101 = vmatpush1.bf16.msra.mxu0 0
        %3102 = vmatprep.subr.bf16.mxu0 0
        %3103 = vmatpush1.bf16.msra.mxu0 0
        %3104 = vmatprep.subr.bf16.mxu0 0
        %3105 = vmatpush1.bf16.msra.mxu0 0
        %3106 = vmatprep.subr.bf16.mxu0 0
        %3107 = vmatpush1.bf16.msra.mxu0 0
        %3108 = vmatprep.subr.bf16.mxu0 0
        %3109 = vmatpush1.bf16.msra.mxu0 0
        %3110 = vmatprep.mubr.bf16.mxu0 0
        %3111 = vmatmul.mubr.bf16.gmra.mrb[0].mxu0 %v3073
        %v3112 = vpop.f32.mrb[0].mxu0
        %v3113 = vadd.f32 0.0, %v3112
        %v3114 = vpop.f32.mrb[0].mxu0
        %v3115 = vpop.f32.mrb[0].mxu0
        %v3116 = vadd.f32 0.0, %v3115
        %v3117 = vpop.f32.mrb[0].mxu0
        %3118 = vmatprep.mubr.bf16.mxu0 0
        %3119 = vmatmul.mubr.bf16.gmra.mrb[0].mxu0 %v3076
        %v3120 = vpop.f32.mrb[0].mxu0
        %v3121 = vadd.f32 0.0, %v3120
        %v3122 = vpop.f32.mrb[0].mxu0
        %v3123 = vpop.f32.mrb[0].mxu0
        %v3124 = vadd.f32 0.0, %v3123
        %v3125 = vpop.f32.mrb[0].mxu0
        %3126 = vdwg.mxu0
        %vm3127 = vcmp.gt.f32.partialorder %v3113, 0.0
        %vm3128 = vcmp.gt.f32.partialorder %v3116, 0.0
        %vm3129 = vcmp.gt.f32.partialorder %v3121, 0.0
        %vm3130 = vcmp.gt.f32.partialorder %v3124, 0.0
        %v3131 = vmul.f32 %v3113, 0.01
        %v3132 = vmul.f32 %v3116, 0.01
        %v3133 = vmul.f32 %v3121, 0.01
        %v3134 = vmul.f32 %v3124, 0.01
        %v3135 = vsel %vm3127, %v3113, %v3131
        %v3136 = vsel %vm3128, %v3116, %v3132
        %v3137 = vsel %vm3129, %v3121, %v3133
        %v3138 = vsel %vm3130, %v3124, %v3134
        %v3139 = vpack.c.bf16 %v3136, %v3135
        %v3140 = vpack.c.bf16 %v3138, %v3137
        %v3141 = vld [vmem:[%s14] sm:$0xf]
        %v3142 = vld [vmem:[%s14 + $0x4] sm:$0xf]
        %v3143 = vld [vmem:[%s14 + $0x8] sm:$0xf]
        %v3144 = vld [vmem:[%s14 + $0xc] sm:$0xf]
        %v3145 = vld [vmem:[%s14 + $0x10] sm:$0xf]
        %v3146 = vld [vmem:[%s14 + $0x14] sm:$0xf]
        %v3147 = vld [vmem:[%s14 + $0x18] sm:$0xf]
        %v3148 = vld [vmem:[%s14 + $0x1c] sm:$0xf]
        %v3157 = vunpack.c.l.b16 %v3141
        %v3158 = vunpack.c.l.b16 %v3142
        %v3159 = vunpack.c.l.b16 %v3143
        %v3160 = vunpack.c.l.b16 %v3144
        %v3161 = vunpack.c.l.b16 %v3145
        %v3162 = vunpack.c.l.b16 %v3146
        %v3163 = vunpack.c.l.b16 %v3147
        %v3164 = vunpack.c.l.b16 %v3148
        %v3165 = vpack.c.b16 %v3158, %v3157
        %v3166 = vpack.c.b16 %v3160, %v3159
        %v3167 = vpack.c.b16 %v3162, %v3161
        %v3168 = vpack.c.b16 %v3164, %v3163
        %vm3173 = vcmask 523264
        %v3175 = vsel %vm3173, %v3139, 0
        %v3178 = vsel %vm3173, %v3140, 0
        %3180 = vmatprep.subr.bf16.mxu0 0
        %3181 = vmatpush1.bf16.msra.mxu0 %v3165
        %3182 = vmatprep.subr.bf16.mxu0 0
        %3183 = vmatpush1.bf16.msra.mxu0 %v3166
        %3184 = vmatprep.subr.bf16.mxu0 0
        %3185 = vmatpush1.bf16.msra.mxu0 %v3167
        %3186 = vmatprep.subr.bf16.mxu0 0
        %3187 = vmatpush1.bf16.msra.mxu0 %v3168
        %3188 = vmatprep.subr.bf16.mxu0 0
        %3189 = vmatpush1.bf16.msra.mxu0 0
        %3190 = vmatprep.subr.bf16.mxu0 0
        %3191 = vmatpush1.bf16.msra.mxu0 0
        %3192 = vmatprep.subr.bf16.mxu0 0
        %3193 = vmatpush1.bf16.msra.mxu0 0
        %3194 = vmatprep.subr.bf16.mxu0 0
        %3195 = vmatpush1.bf16.msra.mxu0 0
        %3196 = vmatprep.subr.bf16.mxu0 0
        %3197 = vmatpush1.bf16.msra.mxu0 0
        %3198 = vmatprep.subr.bf16.mxu0 0
        %3199 = vmatpush1.bf16.msra.mxu0 0
        %3200 = vmatprep.subr.bf16.mxu0 0
        %3201 = vmatpush1.bf16.msra.mxu0 0
        %3202 = vmatprep.subr.bf16.mxu0 0
        %3203 = vmatpush1.bf16.msra.mxu0 0
        %3204 = vmatprep.subr.bf16.mxu0 0
        %3205 = vmatpush1.bf16.msra.mxu0 0
        %3206 = vmatprep.subr.bf16.mxu0 0
        %3207 = vmatpush1.bf16.msra.mxu0 0
        %3208 = vmatprep.subr.bf16.mxu0 0
        %3209 = vmatpush1.bf16.msra.mxu0 0
        %3210 = vmatprep.subr.bf16.mxu0 0
        %3211 = vmatpush1.bf16.msra.mxu0 0
        %3212 = vmatprep.mubr.bf16.mxu0 0
        %3213 = vmatmul.mubr.bf16.gmra.mrb[0].mxu0 %v3175
        %v3214 = vpop.f32.mrb[0].mxu0
        %v3215 = vadd.f32 0.0, %v3214
        %v3216 = vpop.f32.mrb[0].mxu0
        %v3217 = vpop.f32.mrb[0].mxu0
        %v3218 = vadd.f32 0.0, %v3217
        %v3219 = vpop.f32.mrb[0].mxu0
        %3220 = vmatprep.mubr.bf16.mxu0 0
        %3221 = vmatmul.mubr.bf16.gmra.mrb[0].mxu0 %v3178
        %v3222 = vpop.f32.mrb[0].mxu0
        %v3223 = vadd.f32 0.0, %v3222
        %v3224 = vpop.f32.mrb[0].mxu0
        %v3225 = vpop.f32.mrb[0].mxu0
        %v3226 = vadd.f32 0.0, %v3225
        %v3227 = vpop.f32.mrb[0].mxu0
        %3228 = vdwg.mxu0
        %v3229 = vadd.f32 %v3050, %v3215
        %v3230 = vadd.f32 %v3051, %v3218
        %v3231 = vadd.f32 %v3052, %v3223
        %v3232 = vadd.f32 %v3053, %v3226
        %v3233 = vld [vmem:[%s15] sm:$0x1]
        %v3234 = vld [vmem:[%s16] sm:$0x1]
        %v3235 = vsel %vm843, %v3229, 0.0
        %3236 = vadd.xlane.f32.xlu0 %v3235
        %v3237 = vpop.xlane.xlu0 %3236
        %v3238 = vsel %vm843, %v3230, 0.0
        %3239 = vadd.xlane.f32.xlu0 %v3238
        %v3240 = vpop.xlane.xlu0 %3239
        %v3241 = vsel %vm843, %v3231, 0.0
        %3242 = vadd.xlane.f32.xlu0 %v3241
        %v3243 = vpop.xlane.xlu0 %3242
        %v3244 = vsel %vm843, %v3232, 0.0
        %3245 = vadd.xlane.f32.xlu0 %v3244
        %v3246 = vpop.xlane.xlu0 %3245
        %v3247 = vmul.f32 %v3237, %v2993
        %v3248 = vmul.f32 %v3240, %v2993
        %v3249 = vmul.f32 %v3243, %v2993
        %v3250 = vmul.f32 %v3246, %v2993
        %v3251 = vsub.f32 %v3229, %v3247
        %v3252 = vsub.f32 %v3230, %v3248
        %v3253 = vsub.f32 %v3231, %v3249
        %v3254 = vsub.f32 %v3232, %v3250
        %v3255 = vmul.f32 %v3251, %v3251
        %v3256 = vmul.f32 %v3252, %v3252
        %v3257 = vmul.f32 %v3253, %v3253
        %v3258 = vmul.f32 %v3254, %v3254
        %v3259 = vsel %vm843, %v3255, 0.0
        %3260 = vadd.xlane.f32.xlu0 %v3259
        %v3261 = vpop.xlane.xlu0 %3260
        %v3262 = vsel %vm843, %v3256, 0.0
        %3263 = vadd.xlane.f32.xlu0 %v3262
        %v3264 = vpop.xlane.xlu0 %3263
        %v3265 = vsel %vm843, %v3257, 0.0
        %3266 = vadd.xlane.f32.xlu0 %v3265
        %v3267 = vpop.xlane.xlu0 %3266
        %v3268 = vsel %vm843, %v3258, 0.0
        %3269 = vadd.xlane.f32.xlu0 %v3268
        %v3270 = vpop.xlane.xlu0 %3269
        %v3271 = vmul.f32 %v3261, %v2993
        %v3272 = vmul.f32 %v3264, %v2993
        %v3273 = vmul.f32 %v3267, %v2993
        %v3274 = vmul.f32 %v3270, %v2993
        %v3275 = vadd.f32 %v3271, 1e-05
        %v3276 = vadd.f32 %v3272, 1e-05
        %v3277 = vadd.f32 %v3273, 1e-05
        %v3278 = vadd.f32 %v3274, 1e-05
        %v3279 = vrsqrt.pop %v3275
        %v3280 = vrsqrt.pop %v3276
        %v3281 = vrsqrt.pop %v3277
        %v3282 = vrsqrt.pop %v3278
        %v3283 = vmul.f32 %v3251, %v3279
        %v3284 = vmul.f32 %v3252, %v3280
        %v3285 = vmul.f32 %v3253, %v3281
        %v3286 = vmul.f32 %v3254, %v3282
        %v3288 = vlaneseq
        %v3289 = vshrl.u32 %v3288, 7
        %v3290 = vsub.s32 0, %v3289
        %v3291 = vrot.slane %v3233, %v3290
        %v3293 = vmul.f32 %v3283, %v3291
        %v3294 = vmul.f32 %v3284, %v3291
        %v3295 = vmul.f32 %v3285, %v3291
        %v3296 = vmul.f32 %v3286, %v3291
        %v3298 = vlaneseq
        %v3299 = vshrl.u32 %v3298, 7
        %v3300 = vsub.s32 0, %v3299
        %v3301 = vrot.slane %v3234, %v3300
        %v3303 = vadd.f32 %v3293, %v3301
        %v3304 = vadd.f32 %v3294, %v3301
        %v3305 = vadd.f32 %v3295, %v3301
        %v3306 = vadd.f32 %v3296, %v3301
        %v3307 = vpack.c.bf16 %v3304, %v3303
        %v3308 = vpack.c.bf16 %v3306, %v3305
        %s3309 = scalar_lea.vmem %s3, 16
        %v3310 = vld [vmem:[%s3309] sm:$0xf]
        %v3311 = vld [vmem:[%s3309 + $0x4] sm:$0xf]
        %v3312 = vld [vmem:[%s3309 + $0x8] sm:$0xf]
        %v3313 = vld [vmem:[%s3309 + $0xc] sm:$0xf]
        %s3314 = scalar_lea.vmem [#allocation5], 1
        %v3315 = vld [vmem:[%s3314] sm:$0x1]
        %v3317 = vlaneseq
        %v3318 = vshrl.u32 %v3317, 7
        %v3319 = vsub.s32 0, %v3318
        %v3320 = vrot.slane %v3315, %v3319
        %v3326 = vunpack.c.l.b16 %v3310
        %v3327 = vunpack.c.l.b16 %v3311
        %v3328 = vunpack.c.l.b16 %v3312
        %v3329 = vunpack.c.l.b16 %v3313
        %v3330 = vpack.c.b16 %v3327, %v3326
        %v3331 = vpack.c.b16 %v3329, %v3328
        %v3335 = vsel %vm843, %v3307, 0
        %v3338 = vsel %vm843, %v3308, 0
        %3340 = vmatprep.subr.bf16.mxu0 0
        %3341 = vmatpush1.bf16.msra.mxu0 %v3330
        %3342 = vmatprep.subr.bf16.mxu0 0
        %3343 = vmatpush1.bf16.msra.mxu0 %v3331
        %3344 = vmatprep.subr.bf16.mxu0 0
        %3345 = vmatpush1.bf16.msra.mxu0 0
        %3346 = vmatprep.subr.bf16.mxu0 0
        %3347 = vmatpush1.bf16.msra.mxu0 0
        %3348 = vmatprep.subr.bf16.mxu0 0
        %3349 = vmatpush1.bf16.msra.mxu0 0
        %3350 = vmatprep.subr.bf16.mxu0 0
        %3351 = vmatpush1.bf16.msra.mxu0 0
        %3352 = vmatprep.subr.bf16.mxu0 0
        %3353 = vmatpush1.bf16.msra.mxu0 0
        %3354 = vmatprep.subr.bf16.mxu0 0
        %3355 = vmatpush1.bf16.msra.mxu0 0
        %3356 = vmatprep.subr.bf16.mxu0 0
        %3357 = vmatpush1.bf16.msra.mxu0 0
        %3358 = vmatprep.subr.bf16.mxu0 0
        %3359 = vmatpush1.bf16.msra.mxu0 0
        %3360 = vmatprep.subr.bf16.mxu0 0
        %3361 = vmatpush1.bf16.msra.mxu0 0
        %3362 = vmatprep.subr.bf16.mxu0 0
        %3363 = vmatpush1.bf16.msra.mxu0 0
        %3364 = vmatprep.subr.bf16.mxu0 0
        %3365 = vmatpush1.bf16.msra.mxu0 0
        %3366 = vmatprep.subr.bf16.mxu0 0
        %3367 = vmatpush1.bf16.msra.mxu0 0
        %3368 = vmatprep.subr.bf16.mxu0 0
        %3369 = vmatpush1.bf16.msra.mxu0 0
        %3370 = vmatprep.subr.bf16.mxu0 0
        %3371 = vmatpush1.bf16.msra.mxu0 0
        %3372 = vmatprep.mubr.bf16.mxu0 0
        %3373 = vmatmul.mubr.bf16.gmra.mrb[0].mxu0 %v3335
        %v3374 = vpop.f32.mrb[0].mxu0
        %v3375 = vadd.f32 %v3320, %v3374
        %v3376 = vpop.f32.mrb[0].mxu0
        %v3377 = vpop.f32.mrb[0].mxu0
        %v3378 = vadd.f32 %v3320, %v3377
        %v3379 = vpop.f32.mrb[0].mxu0
        %3380 = vmatprep.mubr.bf16.mxu0 0
        %3381 = vmatmul.mubr.bf16.gmra.mrb[0].mxu0 %v3338
        %v3382 = vpop.f32.mrb[0].mxu0
        %v3383 = vadd.f32 %v3320, %v3382
        %v3384 = vpop.f32.mrb[0].mxu0
        %v3385 = vpop.f32.mrb[0].mxu0
        %v3386 = vadd.f32 %v3320, %v3385
        %v3387 = vpop.f32.mrb[0].mxu0
        %3388 = vdwg.mxu0
        %s3389 = scalar_lea.vmem %s5, 16
        %v3390 = vld [vmem:[%s3389] sm:$0xf]
        %v3391 = vld [vmem:[%s3389 + $0x4] sm:$0xf]
        %v3392 = vld [vmem:[%s3389 + $0x8] sm:$0xf]
        %v3393 = vld [vmem:[%s3389 + $0xc] sm:$0xf]
        %s3394 = scalar_lea.vmem %s6, 1
        %v3395 = vld [vmem:[%s3394] sm:$0x1]
        %v3397 = vlaneseq
        %v3398 = vshrl.u32 %v3397, 7
        %v3399 = vsub.s32 0, %v3398
        %v3400 = vrot.slane %v3395, %v3399
        %v3406 = vunpack.c.l.b16 %v3390
        %v3407 = vunpack.c.l.b16 %v3391
        %v3408 = vunpack.c.l.b16 %v3392
        %v3409 = vunpack.c.l.b16 %v3393
        %v3410 = vpack.c.b16 %v3407, %v3406
        %v3411 = vpack.c.b16 %v3409, %v3408
        %3414 = vmatprep.subr.bf16.mxu0 0
        %3415 = vmatpush1.bf16.msra.mxu0 %v3410
        %3416 = vmatprep.subr.bf16.mxu0 0
        %3417 = vmatpush1.bf16.msra.mxu0 %v3411
        %3418 = vmatprep.subr.bf16.mxu0 0
        %3419 = vmatpush1.bf16.msra.mxu0 0
        %3420 = vmatprep.subr.bf16.mxu0 0
        %3421 = vmatpush1.bf16.msra.mxu0 0
        %3422 = vmatprep.subr.bf16.mxu0 0
        %3423 = vmatpush1.bf16.msra.mxu0 0
        %3424 = vmatprep.subr.bf16.mxu0 0
        %3425 = vmatpush1.bf16.msra.mxu0 0
        %3426 = vmatprep.subr.bf16.mxu0 0
        %3427 = vmatpush1.bf16.msra.mxu0 0
        %3428 = vmatprep.subr.bf16.mxu0 0
        %3429 = vmatpush1.bf16.msra.mxu0 0
        %3430 = vmatprep.subr.bf16.mxu0 0
        %3431 = vmatpush1.bf16.msra.mxu0 0
        %3432 = vmatprep.subr.bf16.mxu0 0
        %3433 = vmatpush1.bf16.msra.mxu0 0
        %3434 = vmatprep.subr.bf16.mxu0 0
        %3435 = vmatpush1.bf16.msra.mxu0 0
        %3436 = vmatprep.subr.bf16.mxu0 0
        %3437 = vmatpush1.bf16.msra.mxu0 0
        %3438 = vmatprep.subr.bf16.mxu0 0
        %3439 = vmatpush1.bf16.msra.mxu0 0
        %3440 = vmatprep.subr.bf16.mxu0 0
        %3441 = vmatpush1.bf16.msra.mxu0 0
        %3442 = vmatprep.subr.bf16.mxu0 0
        %3443 = vmatpush1.bf16.msra.mxu0 0
        %3444 = vmatprep.subr.bf16.mxu0 0
        %3445 = vmatpush1.bf16.msra.mxu0 0
        %3446 = vmatprep.mubr.bf16.mxu0 0
        %3447 = vmatmul.mubr.bf16.gmra.mrb[0].mxu0 %v3335
        %v3448 = vpop.f32.mrb[0].mxu0
        %v3449 = vadd.f32 %v3400, %v3448
        %v3450 = vpop.f32.mrb[0].mxu0
        %v3451 = vpop.f32.mrb[0].mxu0
        %v3452 = vadd.f32 %v3400, %v3451
        %v3453 = vpop.f32.mrb[0].mxu0
        %3454 = vmatprep.mubr.bf16.mxu0 0
        %3455 = vmatmul.mubr.bf16.gmra.mrb[0].mxu0 %v3338
        %v3456 = vpop.f32.mrb[0].mxu0
        %v3457 = vadd.f32 %v3400, %v3456
        %v3458 = vpop.f32.mrb[0].mxu0
        %v3459 = vpop.f32.mrb[0].mxu0
        %v3460 = vadd.f32 %v3400, %v3459
        %v3461 = vpop.f32.mrb[0].mxu0
        %3462 = vdwg.mxu0
        %s3463 = scalar_lea.vmem %s7, 16
        %v3464 = vld [vmem:[%s3463] sm:$0xf]
        %v3465 = vld [vmem:[%s3463 + $0x4] sm:$0xf]
        %v3466 = vld [vmem:[%s3463 + $0x8] sm:$0xf]
        %v3467 = vld [vmem:[%s3463 + $0xc] sm:$0xf]
        %s3468 = scalar_lea.vmem %s8, 1
        %v3469 = vld [vmem:[%s3468] sm:$0x1]
        %v3471 = vlaneseq
        %v3472 = vshrl.u32 %v3471, 7
        %v3473 = vsub.s32 0, %v3472
        %v3474 = vrot.slane %v3469, %v3473
        %v3480 = vunpack.c.l.b16 %v3464
        %v3481 = vunpack.c.l.b16 %v3465
        %v3482 = vunpack.c.l.b16 %v3466
        %v3483 = vunpack.c.l.b16 %v3467
        %v3484 = vpack.c.b16 %v3481, %v3480
        %v3485 = vpack.c.b16 %v3483, %v3482
        %3488 = vmatprep.subr.bf16.mxu0 0
        %3489 = vmatpush1.bf16.msra.mxu0 %v3484
        %3490 = vmatprep.subr.bf16.mxu0 0
        %3491 = vmatpush1.bf16.msra.mxu0 %v3485
        %3492 = vmatprep.subr.bf16.mxu0 0
        %3493 = vmatpush1.bf16.msra.mxu0 0
        %3494 = vmatprep.subr.bf16.mxu0 0
        %3495 = vmatpush1.bf16.msra.mxu0 0
        %3496 = vmatprep.subr.bf16.mxu0 0
        %3497 = vmatpush1.bf16.msra.mxu0 0
        %3498 = vmatprep.subr.bf16.mxu0 0
        %3499 = vmatpush1.bf16.msra.mxu0 0
        %3500 = vmatprep.subr.bf16.mxu0 0
        %3501 = vmatpush1.bf16.msra.mxu0 0
        %3502 = vmatprep.subr.bf16.mxu0 0
        %3503 = vmatpush1.bf16.msra.mxu0 0
        %3504 = vmatprep.subr.bf16.mxu0 0
        %3505 = vmatpush1.bf16.msra.mxu0 0
        %3506 = vmatprep.subr.bf16.mxu0 0
        %3507 = vmatpush1.bf16.msra.mxu0 0
        %3508 = vmatprep.subr.bf16.mxu0 0
        %3509 = vmatpush1.bf16.msra.mxu0 0
        %3510 = vmatprep.subr.bf16.mxu0 0
        %3511 = vmatpush1.bf16.msra.mxu0 0
        %3512 = vmatprep.subr.bf16.mxu0 0
        %3513 = vmatpush1.bf16.msra.mxu0 0
        %3514 = vmatprep.subr.bf16.mxu0 0
        %3515 = vmatpush1.bf16.msra.mxu0 0
        %3516 = vmatprep.subr.bf16.mxu0 0
        %3517 = vmatpush1.bf16.msra.mxu0 0
        %3518 = vmatprep.subr.bf16.mxu0 0
        %3519 = vmatpush1.bf16.msra.mxu0 0
        %3520 = vmatprep.mubr.bf16.mxu0 0
        %3521 = vmatmul.mubr.bf16.gmra.mrb[0].mxu0 %v3335
        %v3522 = vpop.f32.mrb[0].mxu0
        %v3523 = vadd.f32 %v3474, %v3522
        %v3524 = vpop.f32.mrb[0].mxu0
        %v3525 = vpop.f32.mrb[0].mxu0
        %v3526 = vadd.f32 %v3474, %v3525
        %v3527 = vpop.f32.mrb[0].mxu0
        %3528 = vmatprep.mubr.bf16.mxu0 0
        %3529 = vmatmul.mubr.bf16.gmra.mrb[0].mxu0 %v3338
        %v3530 = vpop.f32.mrb[0].mxu0
        %v3531 = vadd.f32 %v3474, %v3530
        %v3532 = vpop.f32.mrb[0].mxu0
        %v3533 = vpop.f32.mrb[0].mxu0
        %v3534 = vadd.f32 %v3474, %v3533
        %v3535 = vpop.f32.mrb[0].mxu0
        %3536 = vdwg.mxu0
        %v3537 = vpack.c.bf16 %v3375, %v3375
        %v3538 = vpack.c.bf16 %v3378, %v3378
        %v3539 = vpack.c.bf16 %v3383, %v3383
        %v3540 = vpack.c.bf16 %v3386, %v3386
        %v3541 = vpack.c.bf16 %v3449, %v3449
        %v3542 = vpack.c.bf16 %v3452, %v3452
        %v3543 = vpack.c.bf16 %v3457, %v3457
        %v3544 = vpack.c.bf16 %v3460, %v3460
        %v3545 = vpack.c.bf16 %v3523, %v3523
        %v3546 = vpack.c.bf16 %v3526, %v3526
        %v3547 = vpack.c.bf16 %v3531, %v3531
        %v3548 = vpack.c.bf16 %v3534, %v3534
        %v3550 = vsel %vm1055, %v3537, 0
        %v3553 = vsel %vm1055, %v3541, 0
        %3555 = vmatprep.subr.bf16.mxu0 0
        %3556 = vmatpush1.bf16.xpose.msra.mxu0 %v3553
        %3557 = vmatprep.subr.bf16.mxu0 0
        %3558 = vmatpush1.bf16.xpose.msra.mxu0 0
        %3559 = vmatprep.subr.bf16.mxu0 0
        %3560 = vmatpush1.bf16.xpose.msra.mxu0 0
        %3561 = vmatprep.subr.bf16.mxu0 0
        %3562 = vmatpush1.bf16.xpose.msra.mxu0 0
        %3563 = vmatprep.subr.bf16.mxu0 0
        %3564 = vmatpush1.bf16.xpose.msra.mxu0 0
        %3565 = vmatprep.subr.bf16.mxu0 0
        %3566 = vmatpush1.bf16.xpose.msra.mxu0 0
        %3567 = vmatprep.subr.bf16.mxu0 0
        %3568 = vmatpush1.bf16.xpose.msra.mxu0 0
        %3569 = vmatprep.subr.bf16.mxu0 0
        %3570 = vmatpush1.bf16.xpose.msra.mxu0 0
        %3571 = vmatprep.subr.bf16.mxu0 0
        %3572 = vmatpush1.bf16.xpose.msra.mxu0 0
        %3573 = vmatprep.subr.bf16.mxu0 0
        %3574 = vmatpush1.bf16.xpose.msra.mxu0 0
        %3575 = vmatprep.subr.bf16.mxu0 0
        %3576 = vmatpush1.bf16.xpose.msra.mxu0 0
        %3577 = vmatprep.subr.bf16.mxu0 0
        %3578 = vmatpush1.bf16.xpose.msra.mxu0 0
        %3579 = vmatprep.subr.bf16.mxu0 0
        %3580 = vmatpush1.bf16.xpose.msra.mxu0 0
        %3581 = vmatprep.subr.bf16.mxu0 0
        %3582 = vmatpush1.bf16.xpose.msra.mxu0 0
        %3583 = vmatprep.subr.bf16.mxu0 0
        %3584 = vmatpush1.bf16.xpose.msra.mxu0 0
        %3585 = vmatprep.subr.bf16.mxu0 0
        %3586 = vmatpush1.bf16.xpose.msra.mxu0 0
        %3587 = vmatprep.mubr.bf16.mxu0 0
        %3588 = vmatmul.mubr.bf16.gmra.mrb[0].mxu0 %v3550
        %v3589 = vpop.f32.mrb[0].mxu0
        %v3590 = vadd.f32 0.0, %v3589
        %v3591 = vpop.f32.mrb[0].mxu0
        %v3592 = vpop.f32.mrb[0].mxu0
        %v3593 = vpop.f32.mrb[0].mxu0
        %3594 = vdwg.mxu0
        %v3596 = vsel %vm1055, %v3538, 0
        %v3599 = vsel %vm1055, %v3542, 0
        %3601 = vmatprep.subr.bf16.mxu0 0
        %3602 = vmatpush1.bf16.xpose.msra.mxu0 %v3599
        %3603 = vmatprep.subr.bf16.mxu0 0
        %3604 = vmatpush1.bf16.xpose.msra.mxu0 0
        %3605 = vmatprep.subr.bf16.mxu0 0
        %3606 = vmatpush1.bf16.xpose.msra.mxu0 0
        %3607 = vmatprep.subr.bf16.mxu0 0
        %3608 = vmatpush1.bf16.xpose.msra.mxu0 0
        %3609 = vmatprep.subr.bf16.mxu0 0
        %3610 = vmatpush1.bf16.xpose.msra.mxu0 0
        %3611 = vmatprep.subr.bf16.mxu0 0
        %3612 = vmatpush1.bf16.xpose.msra.mxu0 0
        %3613 = vmatprep.subr.bf16.mxu0 0
        %3614 = vmatpush1.bf16.xpose.msra.mxu0 0
        %3615 = vmatprep.subr.bf16.mxu0 0
        %3616 = vmatpush1.bf16.xpose.msra.mxu0 0
        %3617 = vmatprep.subr.bf16.mxu0 0
        %3618 = vmatpush1.bf16.xpose.msra.mxu0 0
        %3619 = vmatprep.subr.bf16.mxu0 0
        %3620 = vmatpush1.bf16.xpose.msra.mxu0 0
        %3621 = vmatprep.subr.bf16.mxu0 0
        %3622 = vmatpush1.bf16.xpose.msra.mxu0 0
        %3623 = vmatprep.subr.bf16.mxu0 0
        %3624 = vmatpush1.bf16.xpose.msra.mxu0 0
        %3625 = vmatprep.subr.bf16.mxu0 0
        %3626 = vmatpush1.bf16.xpose.msra.mxu0 0
        %3627 = vmatprep.subr.bf16.mxu0 0
        %3628 = vmatpush1.bf16.xpose.msra.mxu0 0
        %3629 = vmatprep.subr.bf16.mxu0 0
        %3630 = vmatpush1.bf16.xpose.msra.mxu0 0
        %3631 = vmatprep.subr.bf16.mxu0 0
        %3632 = vmatpush1.bf16.xpose.msra.mxu0 0
        %3633 = vmatprep.mubr.bf16.mxu0 0
        %3634 = vmatmul.mubr.bf16.gmra.mrb[0].mxu0 %v3596
        %v3635 = vpop.f32.mrb[0].mxu0
        %v3636 = vadd.f32 0.0, %v3635
        %v3637 = vpop.f32.mrb[0].mxu0
        %v3638 = vpop.f32.mrb[0].mxu0
        %v3639 = vpop.f32.mrb[0].mxu0
        %3640 = vdwg.mxu0
        %v3642 = vsel %vm1055, %v3539, 0
        %v3645 = vsel %vm1055, %v3543, 0
        %3647 = vmatprep.subr.bf16.mxu0 0
        %3648 = vmatpush1.bf16.xpose.msra.mxu0 %v3645
        %3649 = vmatprep.subr.bf16.mxu0 0
        %3650 = vmatpush1.bf16.xpose.msra.mxu0 0
        %3651 = vmatprep.subr.bf16.mxu0 0
        %3652 = vmatpush1.bf16.xpose.msra.mxu0 0
        %3653 = vmatprep.subr.bf16.mxu0 0
        %3654 = vmatpush1.bf16.xpose.msra.mxu0 0
        %3655 = vmatprep.subr.bf16.mxu0 0
        %3656 = vmatpush1.bf16.xpose.msra.mxu0 0
        %3657 = vmatprep.subr.bf16.mxu0 0
        %3658 = vmatpush1.bf16.xpose.msra.mxu0 0
        %3659 = vmatprep.subr.bf16.mxu0 0
        %3660 = vmatpush1.bf16.xpose.msra.mxu0 0
        %3661 = vmatprep.subr.bf16.mxu0 0
        %3662 = vmatpush1.bf16.xpose.msra.mxu0 0
        %3663 = vmatprep.subr.bf16.mxu0 0
        %3664 = vmatpush1.bf16.xpose.msra.mxu0 0
        %3665 = vmatprep.subr.bf16.mxu0 0
        %3666 = vmatpush1.bf16.xpose.msra.mxu0 0
        %3667 = vmatprep.subr.bf16.mxu0 0
        %3668 = vmatpush1.bf16.xpose.msra.mxu0 0
        %3669 = vmatprep.subr.bf16.mxu0 0
        %3670 = vmatpush1.bf16.xpose.msra.mxu0 0
        %3671 = vmatprep.subr.bf16.mxu0 0
        %3672 = vmatpush1.bf16.xpose.msra.mxu0 0
        %3673 = vmatprep.subr.bf16.mxu0 0
        %3674 = vmatpush1.bf16.xpose.msra.mxu0 0
        %3675 = vmatprep.subr.bf16.mxu0 0
        %3676 = vmatpush1.bf16.xpose.msra.mxu0 0
        %3677 = vmatprep.subr.bf16.mxu0 0
        %3678 = vmatpush1.bf16.xpose.msra.mxu0 0
        %3679 = vmatprep.mubr.bf16.mxu0 0
        %3680 = vmatmul.mubr.bf16.gmra.mrb[0].mxu0 %v3642
        %v3681 = vpop.f32.mrb[0].mxu0
        %v3682 = vadd.f32 0.0, %v3681
        %v3683 = vpop.f32.mrb[0].mxu0
        %v3684 = vpop.f32.mrb[0].mxu0
        %v3685 = vpop.f32.mrb[0].mxu0
        %3686 = vdwg.mxu0
        %v3688 = vsel %vm1055, %v3540, 0
        %v3691 = vsel %vm1055, %v3544, 0
        %3693 = vmatprep.subr.bf16.mxu0 0
        %3694 = vmatpush1.bf16.xpose.msra.mxu0 %v3691
        %3695 = vmatprep.subr.bf16.mxu0 0
        %3696 = vmatpush1.bf16.xpose.msra.mxu0 0
        %3697 = vmatprep.subr.bf16.mxu0 0
        %3698 = vmatpush1.bf16.xpose.msra.mxu0 0
        %3699 = vmatprep.subr.bf16.mxu0 0
        %3700 = vmatpush1.bf16.xpose.msra.mxu0 0
        %3701 = vmatprep.subr.bf16.mxu0 0
        %3702 = vmatpush1.bf16.xpose.msra.mxu0 0
        %3703 = vmatprep.subr.bf16.mxu0 0
        %3704 = vmatpush1.bf16.xpose.msra.mxu0 0
        %3705 = vmatprep.subr.bf16.mxu0 0
        %3706 = vmatpush1.bf16.xpose.msra.mxu0 0
        %3707 = vmatprep.subr.bf16.mxu0 0
        %3708 = vmatpush1.bf16.xpose.msra.mxu0 0
        %3709 = vmatprep.subr.bf16.mxu0 0
        %3710 = vmatpush1.bf16.xpose.msra.mxu0 0
        %3711 = vmatprep.subr.bf16.mxu0 0
        %3712 = vmatpush1.bf16.xpose.msra.mxu0 0
        %3713 = vmatprep.subr.bf16.mxu0 0
        %3714 = vmatpush1.bf16.xpose.msra.mxu0 0
        %3715 = vmatprep.subr.bf16.mxu0 0
        %3716 = vmatpush1.bf16.xpose.msra.mxu0 0
        %3717 = vmatprep.subr.bf16.mxu0 0
        %3718 = vmatpush1.bf16.xpose.msra.mxu0 0
        %3719 = vmatprep.subr.bf16.mxu0 0
        %3720 = vmatpush1.bf16.xpose.msra.mxu0 0
        %3721 = vmatprep.subr.bf16.mxu0 0
        %3722 = vmatpush1.bf16.xpose.msra.mxu0 0
        %3723 = vmatprep.subr.bf16.mxu0 0
        %3724 = vmatpush1.bf16.xpose.msra.mxu0 0
        %3725 = vmatprep.mubr.bf16.mxu0 0
        %3726 = vmatmul.mubr.bf16.gmra.mrb[0].mxu0 %v3688
        %v3727 = vpop.f32.mrb[0].mxu0
        %v3728 = vadd.f32 0.0, %v3727
        %v3729 = vpop.f32.mrb[0].mxu0
        %v3730 = vpop.f32.mrb[0].mxu0
        %v3731 = vpop.f32.mrb[0].mxu0
        %3732 = vdwg.mxu0
        %v3733 = vsel %vm1055, %v3590, -inf
        %3734 = vmax.xlane.f32.xlu0 %v3733
        %v3735 = vpop.xlane.xlu0 %3734
        %v3736 = vsel %vm1055, %v3636, -inf
        %3737 = vmax.xlane.f32.xlu0 %v3736
        %v3738 = vpop.xlane.xlu0 %3737
        %v3739 = vsel %vm1055, %v3682, -inf
        %3740 = vmax.xlane.f32.xlu0 %v3739
        %v3741 = vpop.xlane.xlu0 %3740
        %v3742 = vsel %vm1055, %v3728, -inf
        %3743 = vmax.xlane.f32.xlu0 %v3742
        %v3744 = vpop.xlane.xlu0 %3743
        %v3745 = vsub.f32 %v3590, %v3735
        %v3746 = vsub.f32 %v3636, %v3738
        %v3747 = vsub.f32 %v3682, %v3741
        %v3748 = vsub.f32 %v3728, %v3744
        %v3749 = vmul.f32 %v3745, 1.442695
        %v3750 = vpow.pop %v3749
        %v3751 = vmul.f32 %v3746, 1.442695
        %v3752 = vpow.pop %v3751
        %v3753 = vmul.f32 %v3747, 1.442695
        %v3754 = vpow.pop %v3753
        %v3755 = vmul.f32 %v3748, 1.442695
        %v3756 = vpow.pop %v3755
        %v3757 = vsel %vm1055, %v3750, 0.0
        %3758 = vadd.xlane.f32.xlu0 %v3757
        %v3759 = vpop.xlane.xlu0 %3758
        %v3760 = vsel %vm1055, %v3752, 0.0
        %3761 = vadd.xlane.f32.xlu0 %v3760
        %v3762 = vpop.xlane.xlu0 %3761
        %v3763 = vsel %vm1055, %v3754, 0.0
        %3764 = vadd.xlane.f32.xlu0 %v3763
        %v3765 = vpop.xlane.xlu0 %3764
        %v3766 = vsel %vm1055, %v3756, 0.0
        %3767 = vadd.xlane.f32.xlu0 %v3766
        %v3768 = vpop.xlane.xlu0 %3767
        %v3769 = vrcp.pop %v3759
        %v3770 = vrcp.pop %v3762
        %v3771 = vrcp.pop %v3765
        %v3772 = vrcp.pop %v3768
        %v3773 = vmul.f32 %v3750, %v3769
        %v3774 = vmul.f32 %v3752, %v3770
        %v3775 = vmul.f32 %v3754, %v3771
        %v3776 = vmul.f32 %v3756, %v3772
        %v3777 = vpack.c.bf16 %v3773, %v3773
        %v3778 = vpack.c.bf16 %v3774, %v3774
        %v3779 = vpack.c.bf16 %v3775, %v3775
        %v3780 = vpack.c.bf16 %v3776, %v3776
        %v3782 = vsel %vm1055, %v3777, 0
        %v3785 = vsel %vm1291, %v3545, 0
        %3787 = vmatprep.subr.bf16.mxu0 0
        %3788 = vmatpush1.bf16.msra.mxu0 %v3785
        %3789 = vmatprep.subr.bf16.mxu0 0
        %3790 = vmatpush1.bf16.msra.mxu0 0
        %3791 = vmatprep.subr.bf16.mxu0 0
        %3792 = vmatpush1.bf16.msra.mxu0 0
        %3793 = vmatprep.subr.bf16.mxu0 0
        %3794 = vmatpush1.bf16.msra.mxu0 0
        %3795 = vmatprep.subr.bf16.mxu0 0
        %3796 = vmatpush1.bf16.msra.mxu0 0
        %3797 = vmatprep.subr.bf16.mxu0 0
        %3798 = vmatpush1.bf16.msra.mxu0 0
        %3799 = vmatprep.subr.bf16.mxu0 0
        %3800 = vmatpush1.bf16.msra.mxu0 0
        %3801 = vmatprep.subr.bf16.mxu0 0
        %3802 = vmatpush1.bf16.msra.mxu0 0
        %3803 = vmatprep.subr.bf16.mxu0 0
        %3804 = vmatpush1.bf16.msra.mxu0 0
        %3805 = vmatprep.subr.bf16.mxu0 0
        %3806 = vmatpush1.bf16.msra.mxu0 0
        %3807 = vmatprep.subr.bf16.mxu0 0
        %3808 = vmatpush1.bf16.msra.mxu0 0
        %3809 = vmatprep.subr.bf16.mxu0 0
        %3810 = vmatpush1.bf16.msra.mxu0 0
        %3811 = vmatprep.subr.bf16.mxu0 0
        %3812 = vmatpush1.bf16.msra.mxu0 0
        %3813 = vmatprep.subr.bf16.mxu0 0
        %3814 = vmatpush1.bf16.msra.mxu0 0
        %3815 = vmatprep.subr.bf16.mxu0 0
        %3816 = vmatpush1.bf16.msra.mxu0 0
        %3817 = vmatprep.subr.bf16.mxu0 0
        %3818 = vmatpush1.bf16.msra.mxu0 0
        %3819 = vmatprep.mubr.bf16.mxu0 0
        %3820 = vmatmul.mubr.bf16.gmra.mrb[0].mxu0 %v3782
        %v3821 = vpop.f32.mrb[0].mxu0
        %v3822 = vadd.f32 0.0, %v3821
        %v3823 = vpop.f32.mrb[0].mxu0
        %v3824 = vpop.f32.mrb[0].mxu0
        %v3825 = vpop.f32.mrb[0].mxu0
        %3826 = vdwg.mxu0
        %v3828 = vsel %vm1055, %v3778, 0
        %v3831 = vsel %vm1291, %v3546, 0
        %3833 = vmatprep.subr.bf16.mxu0 0
        %3834 = vmatpush1.bf16.msra.mxu0 %v3831
        %3835 = vmatprep.subr.bf16.mxu0 0
        %3836 = vmatpush1.bf16.msra.mxu0 0
        %3837 = vmatprep.subr.bf16.mxu0 0
        %3838 = vmatpush1.bf16.msra.mxu0 0
        %3839 = vmatprep.subr.bf16.mxu0 0
        %3840 = vmatpush1.bf16.msra.mxu0 0
        %3841 = vmatprep.subr.bf16.mxu0 0
        %3842 = vmatpush1.bf16.msra.mxu0 0
        %3843 = vmatprep.subr.bf16.mxu0 0
        %3844 = vmatpush1.bf16.msra.mxu0 0
        %3845 = vmatprep.subr.bf16.mxu0 0
        %3846 = vmatpush1.bf16.msra.mxu0 0
        %3847 = vmatprep.subr.bf16.mxu0 0
        %3848 = vmatpush1.bf16.msra.mxu0 0
        %3849 = vmatprep.subr.bf16.mxu0 0
        %3850 = vmatpush1.bf16.msra.mxu0 0
        %3851 = vmatprep.subr.bf16.mxu0 0
        %3852 = vmatpush1.bf16.msra.mxu0 0
        %3853 = vmatprep.subr.bf16.mxu0 0
        %3854 = vmatpush1.bf16.msra.mxu0 0
        %3855 = vmatprep.subr.bf16.mxu0 0
        %3856 = vmatpush1.bf16.msra.mxu0 0
        %3857 = vmatprep.subr.bf16.mxu0 0
        %3858 = vmatpush1.bf16.msra.mxu0 0
        %3859 = vmatprep.subr.bf16.mxu0 0
        %3860 = vmatpush1.bf16.msra.mxu0 0
        %3861 = vmatprep.subr.bf16.mxu0 0
        %3862 = vmatpush1.bf16.msra.mxu0 0
        %3863 = vmatprep.subr.bf16.mxu0 0
        %3864 = vmatpush1.bf16.msra.mxu0 0
        %3865 = vmatprep.mubr.bf16.mxu0 0
        %3866 = vmatmul.mubr.bf16.gmra.mrb[0].mxu0 %v3828
        %v3867 = vpop.f32.mrb[0].mxu0
        %v3868 = vadd.f32 0.0, %v3867
        %v3869 = vpop.f32.mrb[0].mxu0
        %v3870 = vpop.f32.mrb[0].mxu0
        %v3871 = vpop.f32.mrb[0].mxu0
        %3872 = vdwg.mxu0
        %v3874 = vsel %vm1055, %v3779, 0
        %v3877 = vsel %vm1291, %v3547, 0
        %3879 = vmatprep.subr.bf16.mxu0 0
        %3880 = vmatpush1.bf16.msra.mxu0 %v3877
        %3881 = vmatprep.subr.bf16.mxu0 0
        %3882 = vmatpush1.bf16.msra.mxu0 0
        %3883 = vmatprep.subr.bf16.mxu0 0
        %3884 = vmatpush1.bf16.msra.mxu0 0
        %3885 = vmatprep.subr.bf16.mxu0 0
        %3886 = vmatpush1.bf16.msra.mxu0 0
        %3887 = vmatprep.subr.bf16.mxu0 0
        %3888 = vmatpush1.bf16.msra.mxu0 0
        %3889 = vmatprep.subr.bf16.mxu0 0
        %3890 = vmatpush1.bf16.msra.mxu0 0
        %3891 = vmatprep.subr.bf16.mxu0 0
        %3892 = vmatpush1.bf16.msra.mxu0 0
        %3893 = vmatprep.subr.bf16.mxu0 0
        %3894 = vmatpush1.bf16.msra.mxu0 0
        %3895 = vmatprep.subr.bf16.mxu0 0
        %3896 = vmatpush1.bf16.msra.mxu0 0
        %3897 = vmatprep.subr.bf16.mxu0 0
        %3898 = vmatpush1.bf16.msra.mxu0 0
        %3899 = vmatprep.subr.bf16.mxu0 0
        %3900 = vmatpush1.bf16.msra.mxu0 0
        %3901 = vmatprep.subr.bf16.mxu0 0
        %3902 = vmatpush1.bf16.msra.mxu0 0
        %3903 = vmatprep.subr.bf16.mxu0 0
        %3904 = vmatpush1.bf16.msra.mxu0 0
        %3905 = vmatprep.subr.bf16.mxu0 0
        %3906 = vmatpush1.bf16.msra.mxu0 0
        %3907 = vmatprep.subr.bf16.mxu0 0
        %3908 = vmatpush1.bf16.msra.mxu0 0
        %3909 = vmatprep.subr.bf16.mxu0 0
        %3910 = vmatpush1.bf16.msra.mxu0 0
        %3911 = vmatprep.mubr.bf16.mxu0 0
        %3912 = vmatmul.mubr.bf16.gmra.mrb[0].mxu0 %v3874
        %v3913 = vpop.f32.mrb[0].mxu0
        %v3914 = vadd.f32 0.0, %v3913
        %v3915 = vpop.f32.mrb[0].mxu0
        %v3916 = vpop.f32.mrb[0].mxu0
        %v3917 = vpop.f32.mrb[0].mxu0
        %3918 = vdwg.mxu0
        %v3920 = vsel %vm1055, %v3780, 0
        %v3923 = vsel %vm1291, %v3548, 0
        %3925 = vmatprep.subr.bf16.mxu0 0
        %3926 = vmatpush1.bf16.msra.mxu0 %v3923
        %3927 = vmatprep.subr.bf16.mxu0 0
        %3928 = vmatpush1.bf16.msra.mxu0 0
        %3929 = vmatprep.subr.bf16.mxu0 0
        %3930 = vmatpush1.bf16.msra.mxu0 0
        %3931 = vmatprep.subr.bf16.mxu0 0
        %3932 = vmatpush1.bf16.msra.mxu0 0
        %3933 = vmatprep.subr.bf16.mxu0 0
        %3934 = vmatpush1.bf16.msra.mxu0 0
        %3935 = vmatprep.subr.bf16.mxu0 0
        %3936 = vmatpush1.bf16.msra.mxu0 0
        %3937 = vmatprep.subr.bf16.mxu0 0
        %3938 = vmatpush1.bf16.msra.mxu0 0
        %3939 = vmatprep.subr.bf16.mxu0 0
        %3940 = vmatpush1.bf16.msra.mxu0 0
        %3941 = vmatprep.subr.bf16.mxu0 0
        %3942 = vmatpush1.bf16.msra.mxu0 0
        %3943 = vmatprep.subr.bf16.mxu0 0
        %3944 = vmatpush1.bf16.msra.mxu0 0
        %3945 = vmatprep.subr.bf16.mxu0 0
        %3946 = vmatpush1.bf16.msra.mxu0 0
        %3947 = vmatprep.subr.bf16.mxu0 0
        %3948 = vmatpush1.bf16.msra.mxu0 0
        %3949 = vmatprep.subr.bf16.mxu0 0
        %3950 = vmatpush1.bf16.msra.mxu0 0
        %3951 = vmatprep.subr.bf16.mxu0 0
        %3952 = vmatpush1.bf16.msra.mxu0 0
        %3953 = vmatprep.subr.bf16.mxu0 0
        %3954 = vmatpush1.bf16.msra.mxu0 0
        %3955 = vmatprep.subr.bf16.mxu0 0
        %3956 = vmatpush1.bf16.msra.mxu0 0
        %3957 = vmatprep.mubr.bf16.mxu0 0
        %3958 = vmatmul.mubr.bf16.gmra.mrb[0].mxu0 %v3920
        %v3959 = vpop.f32.mrb[0].mxu0
        %v3960 = vadd.f32 0.0, %v3959
        %v3961 = vpop.f32.mrb[0].mxu0
        %v3962 = vpop.f32.mrb[0].mxu0
        %v3963 = vpop.f32.mrb[0].mxu0
        %3964 = vdwg.mxu0
        %v3965 = vpack.c.bf16 %v3822, %v3822
        %v3966 = vpack.c.bf16 %v3868, %v3868
        %v3967 = vpack.c.bf16 %v3914, %v3914
        %v3968 = vpack.c.bf16 %v3960, %v3960
        %3970 = vrot.lane.b32.xlu0 %v3537, 120
        %v3971 = vpop.permute.xlu0 %3970
        %3973 = vrot.lane.b32.xlu0 %v3541, 120
        %v3974 = vpop.permute.xlu0 %3973
        %v3976 = vsel %vm1055, %v3971, 0
        %v3979 = vsel %vm1055, %v3974, 0
        %3981 = vmatprep.subr.bf16.mxu0 0
        %3982 = vmatpush1.bf16.xpose.msra.mxu0 %v3979
        %3983 = vmatprep.subr.bf16.mxu0 0
        %3984 = vmatpush1.bf16.xpose.msra.mxu0 0
        %3985 = vmatprep.subr.bf16.mxu0 0
        %3986 = vmatpush1.bf16.xpose.msra.mxu0 0
        %3987 = vmatprep.subr.bf16.mxu0 0
        %3988 = vmatpush1.bf16.xpose.msra.mxu0 0
        %3989 = vmatprep.subr.bf16.mxu0 0
        %3990 = vmatpush1.bf16.xpose.msra.mxu0 0
        %3991 = vmatprep.subr.bf16.mxu0 0
        %3992 = vmatpush1.bf16.xpose.msra.mxu0 0
        %3993 = vmatprep.subr.bf16.mxu0 0
        %3994 = vmatpush1.bf16.xpose.msra.mxu0 0
        %3995 = vmatprep.subr.bf16.mxu0 0
        %3996 = vmatpush1.bf16.xpose.msra.mxu0 0
        %3997 = vmatprep.subr.bf16.mxu0 0
        %3998 = vmatpush1.bf16.xpose.msra.mxu0 0
        %3999 = vmatprep.subr.bf16.mxu0 0
        %4000 = vmatpush1.bf16.xpose.msra.mxu0 0
        %4001 = vmatprep.subr.bf16.mxu0 0
        %4002 = vmatpush1.bf16.xpose.msra.mxu0 0
        %4003 = vmatprep.subr.bf16.mxu0 0
        %4004 = vmatpush1.bf16.xpose.msra.mxu0 0
        %4005 = vmatprep.subr.bf16.mxu0 0
        %4006 = vmatpush1.bf16.xpose.msra.mxu0 0
        %4007 = vmatprep.subr.bf16.mxu0 0
        %4008 = vmatpush1.bf16.xpose.msra.mxu0 0
        %4009 = vmatprep.subr.bf16.mxu0 0
        %4010 = vmatpush1.bf16.xpose.msra.mxu0 0
        %4011 = vmatprep.subr.bf16.mxu0 0
        %4012 = vmatpush1.bf16.xpose.msra.mxu0 0
        %4013 = vmatprep.mubr.bf16.mxu0 0
        %4014 = vmatmul.mubr.bf16.gmra.mrb[0].mxu0 %v3976
        %v4015 = vpop.f32.mrb[0].mxu0
        %v4016 = vadd.f32 0.0, %v4015
        %v4017 = vpop.f32.mrb[0].mxu0
        %v4018 = vpop.f32.mrb[0].mxu0
        %v4019 = vpop.f32.mrb[0].mxu0
        %4020 = vdwg.mxu0
        %4022 = vrot.lane.b32.xlu0 %v3538, 120
        %v4023 = vpop.permute.xlu0 %4022
        %4025 = vrot.lane.b32.xlu0 %v3542, 120
        %v4026 = vpop.permute.xlu0 %4025
        %v4028 = vsel %vm1055, %v4023, 0
        %v4031 = vsel %vm1055, %v4026, 0
        %4033 = vmatprep.subr.bf16.mxu0 0
        %4034 = vmatpush1.bf16.xpose.msra.mxu0 %v4031
        %4035 = vmatprep.subr.bf16.mxu0 0
        %4036 = vmatpush1.bf16.xpose.msra.mxu0 0
        %4037 = vmatprep.subr.bf16.mxu0 0
        %4038 = vmatpush1.bf16.xpose.msra.mxu0 0
        %4039 = vmatprep.subr.bf16.mxu0 0
        %4040 = vmatpush1.bf16.xpose.msra.mxu0 0
        %4041 = vmatprep.subr.bf16.mxu0 0
        %4042 = vmatpush1.bf16.xpose.msra.mxu0 0
        %4043 = vmatprep.subr.bf16.mxu0 0
        %4044 = vmatpush1.bf16.xpose.msra.mxu0 0
        %4045 = vmatprep.subr.bf16.mxu0 0
        %4046 = vmatpush1.bf16.xpose.msra.mxu0 0
        %4047 = vmatprep.subr.bf16.mxu0 0
        %4048 = vmatpush1.bf16.xpose.msra.mxu0 0
        %4049 = vmatprep.subr.bf16.mxu0 0
        %4050 = vmatpush1.bf16.xpose.msra.mxu0 0
        %4051 = vmatprep.subr.bf16.mxu0 0
        %4052 = vmatpush1.bf16.xpose.msra.mxu0 0
        %4053 = vmatprep.subr.bf16.mxu0 0
        %4054 = vmatpush1.bf16.xpose.msra.mxu0 0
        %4055 = vmatprep.subr.bf16.mxu0 0
        %4056 = vmatpush1.bf16.xpose.msra.mxu0 0
        %4057 = vmatprep.subr.bf16.mxu0 0
        %4058 = vmatpush1.bf16.xpose.msra.mxu0 0
        %4059 = vmatprep.subr.bf16.mxu0 0
        %4060 = vmatpush1.bf16.xpose.msra.mxu0 0
        %4061 = vmatprep.subr.bf16.mxu0 0
        %4062 = vmatpush1.bf16.xpose.msra.mxu0 0
        %4063 = vmatprep.subr.bf16.mxu0 0
        %4064 = vmatpush1.bf16.xpose.msra.mxu0 0
        %4065 = vmatprep.mubr.bf16.mxu0 0
        %4066 = vmatmul.mubr.bf16.gmra.mrb[0].mxu0 %v4028
        %v4067 = vpop.f32.mrb[0].mxu0
        %v4068 = vadd.f32 0.0, %v4067
        %v4069 = vpop.f32.mrb[0].mxu0
        %v4070 = vpop.f32.mrb[0].mxu0
        %v4071 = vpop.f32.mrb[0].mxu0
        %4072 = vdwg.mxu0
        %4074 = vrot.lane.b32.xlu0 %v3539, 120
        %v4075 = vpop.permute.xlu0 %4074
        %4077 = vrot.lane.b32.xlu0 %v3543, 120
        %v4078 = vpop.permute.xlu0 %4077
        %v4080 = vsel %vm1055, %v4075, 0
        %v4083 = vsel %vm1055, %v4078, 0
        %4085 = vmatprep.subr.bf16.mxu0 0
        %4086 = vmatpush1.bf16.xpose.msra.mxu0 %v4083
        %4087 = vmatprep.subr.bf16.mxu0 0
        %4088 = vmatpush1.bf16.xpose.msra.mxu0 0
        %4089 = vmatprep.subr.bf16.mxu0 0
        %4090 = vmatpush1.bf16.xpose.msra.mxu0 0
        %4091 = vmatprep.subr.bf16.mxu0 0
        %4092 = vmatpush1.bf16.xpose.msra.mxu0 0
        %4093 = vmatprep.subr.bf16.mxu0 0
        %4094 = vmatpush1.bf16.xpose.msra.mxu0 0
        %4095 = vmatprep.subr.bf16.mxu0 0
        %4096 = vmatpush1.bf16.xpose.msra.mxu0 0
        %4097 = vmatprep.subr.bf16.mxu0 0
        %4098 = vmatpush1.bf16.xpose.msra.mxu0 0
        %4099 = vmatprep.subr.bf16.mxu0 0
        %4100 = vmatpush1.bf16.xpose.msra.mxu0 0
        %4101 = vmatprep.subr.bf16.mxu0 0
        %4102 = vmatpush1.bf16.xpose.msra.mxu0 0
        %4103 = vmatprep.subr.bf16.mxu0 0
        %4104 = vmatpush1.bf16.xpose.msra.mxu0 0
        %4105 = vmatprep.subr.bf16.mxu0 0
        %4106 = vmatpush1.bf16.xpose.msra.mxu0 0
        %4107 = vmatprep.subr.bf16.mxu0 0
        %4108 = vmatpush1.bf16.xpose.msra.mxu0 0
        %4109 = vmatprep.subr.bf16.mxu0 0
        %4110 = vmatpush1.bf16.xpose.msra.mxu0 0
        %4111 = vmatprep.subr.bf16.mxu0 0
        %4112 = vmatpush1.bf16.xpose.msra.mxu0 0
        %4113 = vmatprep.subr.bf16.mxu0 0
        %4114 = vmatpush1.bf16.xpose.msra.mxu0 0
        %4115 = vmatprep.subr.bf16.mxu0 0
        %4116 = vmatpush1.bf16.xpose.msra.mxu0 0
        %4117 = vmatprep.mubr.bf16.mxu0 0
        %4118 = vmatmul.mubr.bf16.gmra.mrb[0].mxu0 %v4080
        %v4119 = vpop.f32.mrb[0].mxu0
        %v4120 = vadd.f32 0.0, %v4119
        %v4121 = vpop.f32.mrb[0].mxu0
        %v4122 = vpop.f32.mrb[0].mxu0
        %v4123 = vpop.f32.mrb[0].mxu0
        %4124 = vdwg.mxu0
        %4126 = vrot.lane.b32.xlu0 %v3540, 120
        %v4127 = vpop.permute.xlu0 %4126
        %4129 = vrot.lane.b32.xlu0 %v3544, 120
        %v4130 = vpop.permute.xlu0 %4129
        %v4132 = vsel %vm1055, %v4127, 0
        %v4135 = vsel %vm1055, %v4130, 0
        %4137 = vmatprep.subr.bf16.mxu0 0
        %4138 = vmatpush1.bf16.xpose.msra.mxu0 %v4135
        %4139 = vmatprep.subr.bf16.mxu0 0
        %4140 = vmatpush1.bf16.xpose.msra.mxu0 0
        %4141 = vmatprep.subr.bf16.mxu0 0
        %4142 = vmatpush1.bf16.xpose.msra.mxu0 0
        %4143 = vmatprep.subr.bf16.mxu0 0
        %4144 = vmatpush1.bf16.xpose.msra.mxu0 0
        %4145 = vmatprep.subr.bf16.mxu0 0
        %4146 = vmatpush1.bf16.xpose.msra.mxu0 0
        %4147 = vmatprep.subr.bf16.mxu0 0
        %4148 = vmatpush1.bf16.xpose.msra.mxu0 0
        %4149 = vmatprep.subr.bf16.mxu0 0
        %4150 = vmatpush1.bf16.xpose.msra.mxu0 0
        %4151 = vmatprep.subr.bf16.mxu0 0
        %4152 = vmatpush1.bf16.xpose.msra.mxu0 0
        %4153 = vmatprep.subr.bf16.mxu0 0
        %4154 = vmatpush1.bf16.xpose.msra.mxu0 0
        %4155 = vmatprep.subr.bf16.mxu0 0
        %4156 = vmatpush1.bf16.xpose.msra.mxu0 0
        %4157 = vmatprep.subr.bf16.mxu0 0
        %4158 = vmatpush1.bf16.xpose.msra.mxu0 0
        %4159 = vmatprep.subr.bf16.mxu0 0
        %4160 = vmatpush1.bf16.xpose.msra.mxu0 0
        %4161 = vmatprep.subr.bf16.mxu0 0
        %4162 = vmatpush1.bf16.xpose.msra.mxu0 0
        %4163 = vmatprep.subr.bf16.mxu0 0
        %4164 = vmatpush1.bf16.xpose.msra.mxu0 0
        %4165 = vmatprep.subr.bf16.mxu0 0
        %4166 = vmatpush1.bf16.xpose.msra.mxu0 0
        %4167 = vmatprep.subr.bf16.mxu0 0
        %4168 = vmatpush1.bf16.xpose.msra.mxu0 0
        %4169 = vmatprep.mubr.bf16.mxu0 0
        %4170 = vmatmul.mubr.bf16.gmra.mrb[0].mxu0 %v4132
        %v4171 = vpop.f32.mrb[0].mxu0
        %v4172 = vadd.f32 0.0, %v4171
        %v4173 = vpop.f32.mrb[0].mxu0
        %v4174 = vpop.f32.mrb[0].mxu0
        %v4175 = vpop.f32.mrb[0].mxu0
        %4176 = vdwg.mxu0
        %v4177 = vsel %vm1055, %v4016, -inf
        %4178 = vmax.xlane.f32.xlu0 %v4177
        %v4179 = vpop.xlane.xlu0 %4178
        %v4180 = vsel %vm1055, %v4068, -inf
        %4181 = vmax.xlane.f32.xlu0 %v4180
        %v4182 = vpop.xlane.xlu0 %4181
        %v4183 = vsel %vm1055, %v4120, -inf
        %4184 = vmax.xlane.f32.xlu0 %v4183
        %v4185 = vpop.xlane.xlu0 %4184
        %v4186 = vsel %vm1055, %v4172, -inf
        %4187 = vmax.xlane.f32.xlu0 %v4186
        %v4188 = vpop.xlane.xlu0 %4187
        %v4189 = vsub.f32 %v4016, %v4179
        %v4190 = vsub.f32 %v4068, %v4182
        %v4191 = vsub.f32 %v4120, %v4185
        %v4192 = vsub.f32 %v4172, %v4188
        %v4193 = vmul.f32 %v4189, 1.442695
        %v4194 = vpow.pop %v4193
        %v4195 = vmul.f32 %v4190, 1.442695
        %v4196 = vpow.pop %v4195
        %v4197 = vmul.f32 %v4191, 1.442695
        %v4198 = vpow.pop %v4197
        %v4199 = vmul.f32 %v4192, 1.442695
        %v4200 = vpow.pop %v4199
        %v4201 = vsel %vm1055, %v4194, 0.0
        %4202 = vadd.xlane.f32.xlu0 %v4201
        %v4203 = vpop.xlane.xlu0 %4202
        %v4204 = vsel %vm1055, %v4196, 0.0
        %4205 = vadd.xlane.f32.xlu0 %v4204
        %v4206 = vpop.xlane.xlu0 %4205
        %v4207 = vsel %vm1055, %v4198, 0.0
        %4208 = vadd.xlane.f32.xlu0 %v4207
        %v4209 = vpop.xlane.xlu0 %4208
        %v4210 = vsel %vm1055, %v4200, 0.0
        %4211 = vadd.xlane.f32.xlu0 %v4210
        %v4212 = vpop.xlane.xlu0 %4211
        %v4213 = vrcp.pop %v4203
        %v4214 = vrcp.pop %v4206
        %v4215 = vrcp.pop %v4209
        %v4216 = vrcp.pop %v4212
        %v4217 = vmul.f32 %v4194, %v4213
        %v4218 = vmul.f32 %v4196, %v4214
        %v4219 = vmul.f32 %v4198, %v4215
        %v4220 = vmul.f32 %v4200, %v4216
        %v4221 = vpack.c.bf16 %v4217, %v4217
        %v4222 = vpack.c.bf16 %v4218, %v4218
        %v4223 = vpack.c.bf16 %v4219, %v4219
        %v4224 = vpack.c.bf16 %v4220, %v4220
        %4226 = vrot.lane.b32.xlu0 %v3545, 120
        %v4227 = vpop.permute.xlu0 %4226
        %v4229 = vsel %vm1055, %v4221, 0
        %v4232 = vsel %vm1291, %v4227, 0
        %4234 = vmatprep.subr.bf16.mxu0 0
        %4235 = vmatpush1.bf16.msra.mxu0 %v4232
        %4236 = vmatprep.subr.bf16.mxu0 0
        %4237 = vmatpush1.bf16.msra.mxu0 0
        %4238 = vmatprep.subr.bf16.mxu0 0
        %4239 = vmatpush1.bf16.msra.mxu0 0
        %4240 = vmatprep.subr.bf16.mxu0 0
        %4241 = vmatpush1.bf16.msra.mxu0 0
        %4242 = vmatprep.subr.bf16.mxu0 0
        %4243 = vmatpush1.bf16.msra.mxu0 0
        %4244 = vmatprep.subr.bf16.mxu0 0
        %4245 = vmatpush1.bf16.msra.mxu0 0
        %4246 = vmatprep.subr.bf16.mxu0 0
        %4247 = vmatpush1.bf16.msra.mxu0 0
        %4248 = vmatprep.subr.bf16.mxu0 0
        %4249 = vmatpush1.bf16.msra.mxu0 0
        %4250 = vmatprep.subr.bf16.mxu0 0
        %4251 = vmatpush1.bf16.msra.mxu0 0
        %4252 = vmatprep.subr.bf16.mxu0 0
        %4253 = vmatpush1.bf16.msra.mxu0 0
        %4254 = vmatprep.subr.bf16.mxu0 0
        %4255 = vmatpush1.bf16.msra.mxu0 0
        %4256 = vmatprep.subr.bf16.mxu0 0
        %4257 = vmatpush1.bf16.msra.mxu0 0
        %4258 = vmatprep.subr.bf16.mxu0 0
        %4259 = vmatpush1.bf16.msra.mxu0 0
        %4260 = vmatprep.subr.bf16.mxu0 0
        %4261 = vmatpush1.bf16.msra.mxu0 0
        %4262 = vmatprep.subr.bf16.mxu0 0
        %4263 = vmatpush1.bf16.msra.mxu0 0
        %4264 = vmatprep.subr.bf16.mxu0 0
        %4265 = vmatpush1.bf16.msra.mxu0 0
        %4266 = vmatprep.mubr.bf16.mxu0 0
        %4267 = vmatmul.mubr.bf16.gmra.mrb[0].mxu0 %v4229
        %v4268 = vpop.f32.mrb[0].mxu0
        %v4269 = vadd.f32 0.0, %v4268
        %v4270 = vpop.f32.mrb[0].mxu0
        %v4271 = vpop.f32.mrb[0].mxu0
        %v4272 = vpop.f32.mrb[0].mxu0
        %4273 = vdwg.mxu0
        %4275 = vrot.lane.b32.xlu0 %v3546, 120
        %v4276 = vpop.permute.xlu0 %4275
        %v4278 = vsel %vm1055, %v4222, 0
        %v4281 = vsel %vm1291, %v4276, 0
        %4283 = vmatprep.subr.bf16.mxu0 0
        %4284 = vmatpush1.bf16.msra.mxu0 %v4281
        %4285 = vmatprep.subr.bf16.mxu0 0
        %4286 = vmatpush1.bf16.msra.mxu0 0
        %4287 = vmatprep.subr.bf16.mxu0 0
        %4288 = vmatpush1.bf16.msra.mxu0 0
        %4289 = vmatprep.subr.bf16.mxu0 0
        %4290 = vmatpush1.bf16.msra.mxu0 0
        %4291 = vmatprep.subr.bf16.mxu0 0
        %4292 = vmatpush1.bf16.msra.mxu0 0
        %4293 = vmatprep.subr.bf16.mxu0 0
        %4294 = vmatpush1.bf16.msra.mxu0 0
        %4295 = vmatprep.subr.bf16.mxu0 0
        %4296 = vmatpush1.bf16.msra.mxu0 0
        %4297 = vmatprep.subr.bf16.mxu0 0
        %4298 = vmatpush1.bf16.msra.mxu0 0
        %4299 = vmatprep.subr.bf16.mxu0 0
        %4300 = vmatpush1.bf16.msra.mxu0 0
        %4301 = vmatprep.subr.bf16.mxu0 0
        %4302 = vmatpush1.bf16.msra.mxu0 0
        %4303 = vmatprep.subr.bf16.mxu0 0
        %4304 = vmatpush1.bf16.msra.mxu0 0
        %4305 = vmatprep.subr.bf16.mxu0 0
        %4306 = vmatpush1.bf16.msra.mxu0 0
        %4307 = vmatprep.subr.bf16.mxu0 0
        %4308 = vmatpush1.bf16.msra.mxu0 0
        %4309 = vmatprep.subr.bf16.mxu0 0
        %4310 = vmatpush1.bf16.msra.mxu0 0
        %4311 = vmatprep.subr.bf16.mxu0 0
        %4312 = vmatpush1.bf16.msra.mxu0 0
        %4313 = vmatprep.subr.bf16.mxu0 0
        %4314 = vmatpush1.bf16.msra.mxu0 0
        %4315 = vmatprep.mubr.bf16.mxu0 0
        %4316 = vmatmul.mubr.bf16.gmra.mrb[0].mxu0 %v4278
        %v4317 = vpop.f32.mrb[0].mxu0
        %v4318 = vadd.f32 0.0, %v4317
        %v4319 = vpop.f32.mrb[0].mxu0
        %v4320 = vpop.f32.mrb[0].mxu0
        %v4321 = vpop.f32.mrb[0].mxu0
        %4322 = vdwg.mxu0
        %4324 = vrot.lane.b32.xlu0 %v3547, 120
        %v4325 = vpop.permute.xlu0 %4324
        %v4327 = vsel %vm1055, %v4223, 0
        %v4330 = vsel %vm1291, %v4325, 0
        %4332 = vmatprep.subr.bf16.mxu0 0
        %4333 = vmatpush1.bf16.msra.mxu0 %v4330
        %4334 = vmatprep.subr.bf16.mxu0 0
        %4335 = vmatpush1.bf16.msra.mxu0 0
        %4336 = vmatprep.subr.bf16.mxu0 0
        %4337 = vmatpush1.bf16.msra.mxu0 0
        %4338 = vmatprep.subr.bf16.mxu0 0
        %4339 = vmatpush1.bf16.msra.mxu0 0
        %4340 = vmatprep.subr.bf16.mxu0 0
        %4341 = vmatpush1.bf16.msra.mxu0 0
        %4342 = vmatprep.subr.bf16.mxu0 0
        %4343 = vmatpush1.bf16.msra.mxu0 0
        %4344 = vmatprep.subr.bf16.mxu0 0
        %4345 = vmatpush1.bf16.msra.mxu0 0
        %4346 = vmatprep.subr.bf16.mxu0 0
        %4347 = vmatpush1.bf16.msra.mxu0 0
        %4348 = vmatprep.subr.bf16.mxu0 0
        %4349 = vmatpush1.bf16.msra.mxu0 0
        %4350 = vmatprep.subr.bf16.mxu0 0
        %4351 = vmatpush1.bf16.msra.mxu0 0
        %4352 = vmatprep.subr.bf16.mxu0 0
        %4353 = vmatpush1.bf16.msra.mxu0 0
        %4354 = vmatprep.subr.bf16.mxu0 0
        %4355 = vmatpush1.bf16.msra.mxu0 0
        %4356 = vmatprep.subr.bf16.mxu0 0
        %4357 = vmatpush1.bf16.msra.mxu0 0
        %4358 = vmatprep.subr.bf16.mxu0 0
        %4359 = vmatpush1.bf16.msra.mxu0 0
        %4360 = vmatprep.subr.bf16.mxu0 0
        %4361 = vmatpush1.bf16.msra.mxu0 0
        %4362 = vmatprep.subr.bf16.mxu0 0
        %4363 = vmatpush1.bf16.msra.mxu0 0
        %4364 = vmatprep.mubr.bf16.mxu0 0
        %4365 = vmatmul.mubr.bf16.gmra.mrb[0].mxu0 %v4327
        %v4366 = vpop.f32.mrb[0].mxu0
        %v4367 = vadd.f32 0.0, %v4366
        %v4368 = vpop.f32.mrb[0].mxu0
        %v4369 = vpop.f32.mrb[0].mxu0
        %v4370 = vpop.f32.mrb[0].mxu0
        %4371 = vdwg.mxu0
        %4373 = vrot.lane.b32.xlu0 %v3548, 120
        %v4374 = vpop.permute.xlu0 %4373
        %v4376 = vsel %vm1055, %v4224, 0
        %v4379 = vsel %vm1291, %v4374, 0
        %4381 = vmatprep.subr.bf16.mxu0 0
        %4382 = vmatpush1.bf16.msra.mxu0 %v4379
        %4383 = vmatprep.subr.bf16.mxu0 0
        %4384 = vmatpush1.bf16.msra.mxu0 0
        %4385 = vmatprep.subr.bf16.mxu0 0
        %4386 = vmatpush1.bf16.msra.mxu0 0
        %4387 = vmatprep.subr.bf16.mxu0 0
        %4388 = vmatpush1.bf16.msra.mxu0 0
        %4389 = vmatprep.subr.bf16.mxu0 0
        %4390 = vmatpush1.bf16.msra.mxu0 0
        %4391 = vmatprep.subr.bf16.mxu0 0
        %4392 = vmatpush1.bf16.msra.mxu0 0
        %4393 = vmatprep.subr.bf16.mxu0 0
        %4394 = vmatpush1.bf16.msra.mxu0 0
        %4395 = vmatprep.subr.bf16.mxu0 0
        %4396 = vmatpush1.bf16.msra.mxu0 0
        %4397 = vmatprep.subr.bf16.mxu0 0
        %4398 = vmatpush1.bf16.msra.mxu0 0
        %4399 = vmatprep.subr.bf16.mxu0 0
        %4400 = vmatpush1.bf16.msra.mxu0 0
        %4401 = vmatprep.subr.bf16.mxu0 0
        %4402 = vmatpush1.bf16.msra.mxu0 0
        %4403 = vmatprep.subr.bf16.mxu0 0
        %4404 = vmatpush1.bf16.msra.mxu0 0
        %4405 = vmatprep.subr.bf16.mxu0 0
        %4406 = vmatpush1.bf16.msra.mxu0 0
        %4407 = vmatprep.subr.bf16.mxu0 0
        %4408 = vmatpush1.bf16.msra.mxu0 0
        %4409 = vmatprep.subr.bf16.mxu0 0
        %4410 = vmatpush1.bf16.msra.mxu0 0
        %4411 = vmatprep.subr.bf16.mxu0 0
        %4412 = vmatpush1.bf16.msra.mxu0 0
        %4413 = vmatprep.mubr.bf16.mxu0 0
        %4414 = vmatmul.mubr.bf16.gmra.mrb[0].mxu0 %v4376
        %v4415 = vpop.f32.mrb[0].mxu0
        %v4416 = vadd.f32 0.0, %v4415
        %v4417 = vpop.f32.mrb[0].mxu0
        %v4418 = vpop.f32.mrb[0].mxu0
        %v4419 = vpop.f32.mrb[0].mxu0
        %4420 = vdwg.mxu0
        %v4421 = vpack.c.bf16 %v4269, %v4269
        %v4422 = vpack.c.bf16 %v4318, %v4318
        %v4423 = vpack.c.bf16 %v4367, %v4367
        %v4424 = vpack.c.bf16 %v4416, %v4416
        %4425 = vrot.lane.b32.xlu0 %v3537, 112
        %v4426 = vpop.permute.xlu0 %4425
        %4427 = vrot.lane.b32.xlu0 %v3541, 112
        %v4428 = vpop.permute.xlu0 %4427
        %v4430 = vsel %vm1055, %v4426, 0
        %v4433 = vsel %vm1055, %v4428, 0
        %4435 = vmatprep.subr.bf16.mxu0 0
        %4436 = vmatpush1.bf16.xpose.msra.mxu0 %v4433
        %4437 = vmatprep.subr.bf16.mxu0 0
        %4438 = vmatpush1.bf16.xpose.msra.mxu0 0
        %4439 = vmatprep.subr.bf16.mxu0 0
        %4440 = vmatpush1.bf16.xpose.msra.mxu0 0
        %4441 = vmatprep.subr.bf16.mxu0 0
        %4442 = vmatpush1.bf16.xpose.msra.mxu0 0
        %4443 = vmatprep.subr.bf16.mxu0 0
        %4444 = vmatpush1.bf16.xpose.msra.mxu0 0
        %4445 = vmatprep.subr.bf16.mxu0 0
        %4446 = vmatpush1.bf16.xpose.msra.mxu0 0
        %4447 = vmatprep.subr.bf16.mxu0 0
        %4448 = vmatpush1.bf16.xpose.msra.mxu0 0
        %4449 = vmatprep.subr.bf16.mxu0 0
        %4450 = vmatpush1.bf16.xpose.msra.mxu0 0
        %4451 = vmatprep.subr.bf16.mxu0 0
        %4452 = vmatpush1.bf16.xpose.msra.mxu0 0
        %4453 = vmatprep.subr.bf16.mxu0 0
        %4454 = vmatpush1.bf16.xpose.msra.mxu0 0
        %4455 = vmatprep.subr.bf16.mxu0 0
        %4456 = vmatpush1.bf16.xpose.msra.mxu0 0
        %4457 = vmatprep.subr.bf16.mxu0 0
        %4458 = vmatpush1.bf16.xpose.msra.mxu0 0
        %4459 = vmatprep.subr.bf16.mxu0 0
        %4460 = vmatpush1.bf16.xpose.msra.mxu0 0
        %4461 = vmatprep.subr.bf16.mxu0 0
        %4462 = vmatpush1.bf16.xpose.msra.mxu0 0
        %4463 = vmatprep.subr.bf16.mxu0 0
        %4464 = vmatpush1.bf16.xpose.msra.mxu0 0
        %4465 = vmatprep.subr.bf16.mxu0 0
        %4466 = vmatpush1.bf16.xpose.msra.mxu0 0
        %4467 = vmatprep.mubr.bf16.mxu0 0
        %4468 = vmatmul.mubr.bf16.gmra.mrb[0].mxu0 %v4430
        %v4469 = vpop.f32.mrb[0].mxu0
        %v4470 = vadd.f32 0.0, %v4469
        %v4471 = vpop.f32.mrb[0].mxu0
        %v4472 = vpop.f32.mrb[0].mxu0
        %v4473 = vpop.f32.mrb[0].mxu0
        %4474 = vdwg.mxu0
        %4475 = vrot.lane.b32.xlu0 %v3538, 112
        %v4476 = vpop.permute.xlu0 %4475
        %4477 = vrot.lane.b32.xlu0 %v3542, 112
        %v4478 = vpop.permute.xlu0 %4477
        %v4480 = vsel %vm1055, %v4476, 0
        %v4483 = vsel %vm1055, %v4478, 0
        %4485 = vmatprep.subr.bf16.mxu0 0
        %4486 = vmatpush1.bf16.xpose.msra.mxu0 %v4483
        %4487 = vmatprep.subr.bf16.mxu0 0
        %4488 = vmatpush1.bf16.xpose.msra.mxu0 0
        %4489 = vmatprep.subr.bf16.mxu0 0
        %4490 = vmatpush1.bf16.xpose.msra.mxu0 0
        %4491 = vmatprep.subr.bf16.mxu0 0
        %4492 = vmatpush1.bf16.xpose.msra.mxu0 0
        %4493 = vmatprep.subr.bf16.mxu0 0
        %4494 = vmatpush1.bf16.xpose.msra.mxu0 0
        %4495 = vmatprep.subr.bf16.mxu0 0
        %4496 = vmatpush1.bf16.xpose.msra.mxu0 0
        %4497 = vmatprep.subr.bf16.mxu0 0
        %4498 = vmatpush1.bf16.xpose.msra.mxu0 0
        %4499 = vmatprep.subr.bf16.mxu0 0
        %4500 = vmatpush1.bf16.xpose.msra.mxu0 0
        %4501 = vmatprep.subr.bf16.mxu0 0
        %4502 = vmatpush1.bf16.xpose.msra.mxu0 0
        %4503 = vmatprep.subr.bf16.mxu0 0
        %4504 = vmatpush1.bf16.xpose.msra.mxu0 0
        %4505 = vmatprep.subr.bf16.mxu0 0
        %4506 = vmatpush1.bf16.xpose.msra.mxu0 0
        %4507 = vmatprep.subr.bf16.mxu0 0
        %4508 = vmatpush1.bf16.xpose.msra.mxu0 0
        %4509 = vmatprep.subr.bf16.mxu0 0
        %4510 = vmatpush1.bf16.xpose.msra.mxu0 0
        %4511 = vmatprep.subr.bf16.mxu0 0
        %4512 = vmatpush1.bf16.xpose.msra.mxu0 0
        %4513 = vmatprep.subr.bf16.mxu0 0
        %4514 = vmatpush1.bf16.xpose.msra.mxu0 0
        %4515 = vmatprep.subr.bf16.mxu0 0
        %4516 = vmatpush1.bf16.xpose.msra.mxu0 0
        %4517 = vmatprep.mubr.bf16.mxu0 0
        %4518 = vmatmul.mubr.bf16.gmra.mrb[0].mxu0 %v4480
        %v4519 = vpop.f32.mrb[0].mxu0
        %v4520 = vadd.f32 0.0, %v4519
        %v4521 = vpop.f32.mrb[0].mxu0
        %v4522 = vpop.f32.mrb[0].mxu0
        %v4523 = vpop.f32.mrb[0].mxu0
        %4524 = vdwg.mxu0
        %4525 = vrot.lane.b32.xlu0 %v3539, 112
        %v4526 = vpop.permute.xlu0 %4525
        %4527 = vrot.lane.b32.xlu0 %v3543, 112
        %v4528 = vpop.permute.xlu0 %4527
        %v4530 = vsel %vm1055, %v4526, 0
        %v4533 = vsel %vm1055, %v4528, 0
        %4535 = vmatprep.subr.bf16.mxu0 0
        %4536 = vmatpush1.bf16.xpose.msra.mxu0 %v4533
        %4537 = vmatprep.subr.bf16.mxu0 0
        %4538 = vmatpush1.bf16.xpose.msra.mxu0 0
        %4539 = vmatprep.subr.bf16.mxu0 0
        %4540 = vmatpush1.bf16.xpose.msra.mxu0 0
        %4541 = vmatprep.subr.bf16.mxu0 0
        %4542 = vmatpush1.bf16.xpose.msra.mxu0 0
        %4543 = vmatprep.subr.bf16.mxu0 0
        %4544 = vmatpush1.bf16.xpose.msra.mxu0 0
        %4545 = vmatprep.subr.bf16.mxu0 0
        %4546 = vmatpush1.bf16.xpose.msra.mxu0 0
        %4547 = vmatprep.subr.bf16.mxu0 0
        %4548 = vmatpush1.bf16.xpose.msra.mxu0 0
        %4549 = vmatprep.subr.bf16.mxu0 0
        %4550 = vmatpush1.bf16.xpose.msra.mxu0 0
        %4551 = vmatprep.subr.bf16.mxu0 0
        %4552 = vmatpush1.bf16.xpose.msra.mxu0 0
        %4553 = vmatprep.subr.bf16.mxu0 0
        %4554 = vmatpush1.bf16.xpose.msra.mxu0 0
        %4555 = vmatprep.subr.bf16.mxu0 0
        %4556 = vmatpush1.bf16.xpose.msra.mxu0 0
        %4557 = vmatprep.subr.bf16.mxu0 0
        %4558 = vmatpush1.bf16.xpose.msra.mxu0 0
        %4559 = vmatprep.subr.bf16.mxu0 0
        %4560 = vmatpush1.bf16.xpose.msra.mxu0 0
        %4561 = vmatprep.subr.bf16.mxu0 0
        %4562 = vmatpush1.bf16.xpose.msra.mxu0 0
        %4563 = vmatprep.subr.bf16.mxu0 0
        %4564 = vmatpush1.bf16.xpose.msra.mxu0 0
        %4565 = vmatprep.subr.bf16.mxu0 0
        %4566 = vmatpush1.bf16.xpose.msra.mxu0 0
        %4567 = vmatprep.mubr.bf16.mxu0 0
        %4568 = vmatmul.mubr.bf16.gmra.mrb[0].mxu0 %v4530
        %v4569 = vpop.f32.mrb[0].mxu0
        %v4570 = vadd.f32 0.0, %v4569
        %v4571 = vpop.f32.mrb[0].mxu0
        %v4572 = vpop.f32.mrb[0].mxu0
        %v4573 = vpop.f32.mrb[0].mxu0
        %4574 = vdwg.mxu0
        %4575 = vrot.lane.b32.xlu0 %v3540, 112
        %v4576 = vpop.permute.xlu0 %4575
        %4577 = vrot.lane.b32.xlu0 %v3544, 112
        %v4578 = vpop.permute.xlu0 %4577
        %v4580 = vsel %vm1055, %v4576, 0
        %v4583 = vsel %vm1055, %v4578, 0
        %4585 = vmatprep.subr.bf16.mxu0 0
        %4586 = vmatpush1.bf16.xpose.msra.mxu0 %v4583
        %4587 = vmatprep.subr.bf16.mxu0 0
        %4588 = vmatpush1.bf16.xpose.msra.mxu0 0
        %4589 = vmatprep.subr.bf16.mxu0 0
        %4590 = vmatpush1.bf16.xpose.msra.mxu0 0
        %4591 = vmatprep.subr.bf16.mxu0 0
        %4592 = vmatpush1.bf16.xpose.msra.mxu0 0
        %4593 = vmatprep.subr.bf16.mxu0 0
        %4594 = vmatpush1.bf16.xpose.msra.mxu0 0
        %4595 = vmatprep.subr.bf16.mxu0 0
        %4596 = vmatpush1.bf16.xpose.msra.mxu0 0
        %4597 = vmatprep.subr.bf16.mxu0 0
        %4598 = vmatpush1.bf16.xpose.msra.mxu0 0
        %4599 = vmatprep.subr.bf16.mxu0 0
        %4600 = vmatpush1.bf16.xpose.msra.mxu0 0
        %4601 = vmatprep.subr.bf16.mxu0 0
        %4602 = vmatpush1.bf16.xpose.msra.mxu0 0
        %4603 = vmatprep.subr.bf16.mxu0 0
        %4604 = vmatpush1.bf16.xpose.msra.mxu0 0
        %4605 = vmatprep.subr.bf16.mxu0 0
        %4606 = vmatpush1.bf16.xpose.msra.mxu0 0
        %4607 = vmatprep.subr.bf16.mxu0 0
        %4608 = vmatpush1.bf16.xpose.msra.mxu0 0
        %4609 = vmatprep.subr.bf16.mxu0 0
        %4610 = vmatpush1.bf16.xpose.msra.mxu0 0
        %4611 = vmatprep.subr.bf16.mxu0 0
        %4612 = vmatpush1.bf16.xpose.msra.mxu0 0
        %4613 = vmatprep.subr.bf16.mxu0 0
        %4614 = vmatpush1.bf16.xpose.msra.mxu0 0
        %4615 = vmatprep.subr.bf16.mxu0 0
        %4616 = vmatpush1.bf16.xpose.msra.mxu0 0
        %4617 = vmatprep.mubr.bf16.mxu0 0
        %4618 = vmatmul.mubr.bf16.gmra.mrb[0].mxu0 %v4580
        %v4619 = vpop.f32.mrb[0].mxu0
        %v4620 = vadd.f32 0.0, %v4619
        %v4621 = vpop.f32.mrb[0].mxu0
        %v4622 = vpop.f32.mrb[0].mxu0
        %v4623 = vpop.f32.mrb[0].mxu0
        %4624 = vdwg.mxu0
        %v4625 = vsel %vm1055, %v4470, -inf
        %4626 = vmax.xlane.f32.xlu0 %v4625
        %v4627 = vpop.xlane.xlu0 %4626
        %v4628 = vsel %vm1055, %v4520, -inf
        %4629 = vmax.xlane.f32.xlu0 %v4628
        %v4630 = vpop.xlane.xlu0 %4629
        %v4631 = vsel %vm1055, %v4570, -inf
        %4632 = vmax.xlane.f32.xlu0 %v4631
        %v4633 = vpop.xlane.xlu0 %4632
        %v4634 = vsel %vm1055, %v4620, -inf
        %4635 = vmax.xlane.f32.xlu0 %v4634
        %v4636 = vpop.xlane.xlu0 %4635
        %v4637 = vsub.f32 %v4470, %v4627
        %v4638 = vsub.f32 %v4520, %v4630
        %v4639 = vsub.f32 %v4570, %v4633
        %v4640 = vsub.f32 %v4620, %v4636
        %v4641 = vmul.f32 %v4637, 1.442695
        %v4642 = vpow.pop %v4641
        %v4643 = vmul.f32 %v4638, 1.442695
        %v4644 = vpow.pop %v4643
        %v4645 = vmul.f32 %v4639, 1.442695
        %v4646 = vpow.pop %v4645
        %v4647 = vmul.f32 %v4640, 1.442695
        %v4648 = vpow.pop %v4647
        %v4649 = vsel %vm1055, %v4642, 0.0
        %4650 = vadd.xlane.f32.xlu0 %v4649
        %v4651 = vpop.xlane.xlu0 %4650
        %v4652 = vsel %vm1055, %v4644, 0.0
        %4653 = vadd.xlane.f32.xlu0 %v4652
        %v4654 = vpop.xlane.xlu0 %4653
        %v4655 = vsel %vm1055, %v4646, 0.0
        %4656 = vadd.xlane.f32.xlu0 %v4655
        %v4657 = vpop.xlane.xlu0 %4656
        %v4658 = vsel %vm1055, %v4648, 0.0
        %4659 = vadd.xlane.f32.xlu0 %v4658
        %v4660 = vpop.xlane.xlu0 %4659
        %v4661 = vrcp.pop %v4651
        %v4662 = vrcp.pop %v4654
        %v4663 = vrcp.pop %v4657
        %v4664 = vrcp.pop %v4660
        %v4665 = vmul.f32 %v4642, %v4661
        %v4666 = vmul.f32 %v4644, %v4662
        %v4667 = vmul.f32 %v4646, %v4663
        %v4668 = vmul.f32 %v4648, %v4664
        %v4669 = vpack.c.bf16 %v4665, %v4665
        %v4670 = vpack.c.bf16 %v4666, %v4666
        %v4671 = vpack.c.bf16 %v4667, %v4667
        %v4672 = vpack.c.bf16 %v4668, %v4668
        %4673 = vrot.lane.b32.xlu0 %v3545, 112
        %v4674 = vpop.permute.xlu0 %4673
        %v4676 = vsel %vm1055, %v4669, 0
        %v4679 = vsel %vm1291, %v4674, 0
        %4681 = vmatprep.subr.bf16.mxu0 0
        %4682 = vmatpush1.bf16.msra.mxu0 %v4679
        %4683 = vmatprep.subr.bf16.mxu0 0
        %4684 = vmatpush1.bf16.msra.mxu0 0
        %4685 = vmatprep.subr.bf16.mxu0 0
        %4686 = vmatpush1.bf16.msra.mxu0 0
        %4687 = vmatprep.subr.bf16.mxu0 0
        %4688 = vmatpush1.bf16.msra.mxu0 0
        %4689 = vmatprep.subr.bf16.mxu0 0
        %4690 = vmatpush1.bf16.msra.mxu0 0
        %4691 = vmatprep.subr.bf16.mxu0 0
        %4692 = vmatpush1.bf16.msra.mxu0 0
        %4693 = vmatprep.subr.bf16.mxu0 0
        %4694 = vmatpush1.bf16.msra.mxu0 0
        %4695 = vmatprep.subr.bf16.mxu0 0
        %4696 = vmatpush1.bf16.msra.mxu0 0
        %4697 = vmatprep.subr.bf16.mxu0 0
        %4698 = vmatpush1.bf16.msra.mxu0 0
        %4699 = vmatprep.subr.bf16.mxu0 0
        %4700 = vmatpush1.bf16.msra.mxu0 0
        %4701 = vmatprep.subr.bf16.mxu0 0
        %4702 = vmatpush1.bf16.msra.mxu0 0
        %4703 = vmatprep.subr.bf16.mxu0 0
        %4704 = vmatpush1.bf16.msra.mxu0 0
        %4705 = vmatprep.subr.bf16.mxu0 0
        %4706 = vmatpush1.bf16.msra.mxu0 0
        %4707 = vmatprep.subr.bf16.mxu0 0
        %4708 = vmatpush1.bf16.msra.mxu0 0
        %4709 = vmatprep.subr.bf16.mxu0 0
        %4710 = vmatpush1.bf16.msra.mxu0 0
        %4711 = vmatprep.subr.bf16.mxu0 0
        %4712 = vmatpush1.bf16.msra.mxu0 0
        %4713 = vmatprep.mubr.bf16.mxu0 0
        %4714 = vmatmul.mubr.bf16.gmra.mrb[0].mxu0 %v4676
        %v4715 = vpop.f32.mrb[0].mxu0
        %v4716 = vadd.f32 0.0, %v4715
        %v4717 = vpop.f32.mrb[0].mxu0
        %v4718 = vpop.f32.mrb[0].mxu0
        %v4719 = vpop.f32.mrb[0].mxu0
        %4720 = vdwg.mxu0
        %4721 = vrot.lane.b32.xlu0 %v3546, 112
        %v4722 = vpop.permute.xlu0 %4721
        %v4724 = vsel %vm1055, %v4670, 0
        %v4727 = vsel %vm1291, %v4722, 0
        %4729 = vmatprep.subr.bf16.mxu0 0
        %4730 = vmatpush1.bf16.msra.mxu0 %v4727
        %4731 = vmatprep.subr.bf16.mxu0 0
        %4732 = vmatpush1.bf16.msra.mxu0 0
        %4733 = vmatprep.subr.bf16.mxu0 0
        %4734 = vmatpush1.bf16.msra.mxu0 0
        %4735 = vmatprep.subr.bf16.mxu0 0
        %4736 = vmatpush1.bf16.msra.mxu0 0
        %4737 = vmatprep.subr.bf16.mxu0 0
        %4738 = vmatpush1.bf16.msra.mxu0 0
        %4739 = vmatprep.subr.bf16.mxu0 0
        %4740 = vmatpush1.bf16.msra.mxu0 0
        %4741 = vmatprep.subr.bf16.mxu0 0
        %4742 = vmatpush1.bf16.msra.mxu0 0
        %4743 = vmatprep.subr.bf16.mxu0 0
        %4744 = vmatpush1.bf16.msra.mxu0 0
        %4745 = vmatprep.subr.bf16.mxu0 0
        %4746 = vmatpush1.bf16.msra.mxu0 0
        %4747 = vmatprep.subr.bf16.mxu0 0
        %4748 = vmatpush1.bf16.msra.mxu0 0
        %4749 = vmatprep.subr.bf16.mxu0 0
        %4750 = vmatpush1.bf16.msra.mxu0 0
        %4751 = vmatprep.subr.bf16.mxu0 0
        %4752 = vmatpush1.bf16.msra.mxu0 0
        %4753 = vmatprep.subr.bf16.mxu0 0
        %4754 = vmatpush1.bf16.msra.mxu0 0
        %4755 = vmatprep.subr.bf16.mxu0 0
        %4756 = vmatpush1.bf16.msra.mxu0 0
        %4757 = vmatprep.subr.bf16.mxu0 0
        %4758 = vmatpush1.bf16.msra.mxu0 0
        %4759 = vmatprep.subr.bf16.mxu0 0
        %4760 = vmatpush1.bf16.msra.mxu0 0
        %4761 = vmatprep.mubr.bf16.mxu0 0
        %4762 = vmatmul.mubr.bf16.gmra.mrb[0].mxu0 %v4724
        %v4763 = vpop.f32.mrb[0].mxu0
        %v4764 = vadd.f32 0.0, %v4763
        %v4765 = vpop.f32.mrb[0].mxu0
        %v4766 = vpop.f32.mrb[0].mxu0
        %v4767 = vpop.f32.mrb[0].mxu0
        %4768 = vdwg.mxu0
        %4769 = vrot.lane.b32.xlu0 %v3547, 112
        %v4770 = vpop.permute.xlu0 %4769
        %v4772 = vsel %vm1055, %v4671, 0
        %v4775 = vsel %vm1291, %v4770, 0
        %4777 = vmatprep.subr.bf16.mxu0 0
        %4778 = vmatpush1.bf16.msra.mxu0 %v4775
        %4779 = vmatprep.subr.bf16.mxu0 0
        %4780 = vmatpush1.bf16.msra.mxu0 0
        %4781 = vmatprep.subr.bf16.mxu0 0
        %4782 = vmatpush1.bf16.msra.mxu0 0
        %4783 = vmatprep.subr.bf16.mxu0 0
        %4784 = vmatpush1.bf16.msra.mxu0 0
        %4785 = vmatprep.subr.bf16.mxu0 0
        %4786 = vmatpush1.bf16.msra.mxu0 0
        %4787 = vmatprep.subr.bf16.mxu0 0
        %4788 = vmatpush1.bf16.msra.mxu0 0
        %4789 = vmatprep.subr.bf16.mxu0 0
        %4790 = vmatpush1.bf16.msra.mxu0 0
        %4791 = vmatprep.subr.bf16.mxu0 0
        %4792 = vmatpush1.bf16.msra.mxu0 0
        %4793 = vmatprep.subr.bf16.mxu0 0
        %4794 = vmatpush1.bf16.msra.mxu0 0
        %4795 = vmatprep.subr.bf16.mxu0 0
        %4796 = vmatpush1.bf16.msra.mxu0 0
        %4797 = vmatprep.subr.bf16.mxu0 0
        %4798 = vmatpush1.bf16.msra.mxu0 0
        %4799 = vmatprep.subr.bf16.mxu0 0
        %4800 = vmatpush1.bf16.msra.mxu0 0
        %4801 = vmatprep.subr.bf16.mxu0 0
        %4802 = vmatpush1.bf16.msra.mxu0 0
        %4803 = vmatprep.subr.bf16.mxu0 0
        %4804 = vmatpush1.bf16.msra.mxu0 0
        %4805 = vmatprep.subr.bf16.mxu0 0
        %4806 = vmatpush1.bf16.msra.mxu0 0
        %4807 = vmatprep.subr.bf16.mxu0 0
        %4808 = vmatpush1.bf16.msra.mxu0 0
        %4809 = vmatprep.mubr.bf16.mxu0 0
        %4810 = vmatmul.mubr.bf16.gmra.mrb[0].mxu0 %v4772
        %v4811 = vpop.f32.mrb[0].mxu0
        %v4812 = vadd.f32 0.0, %v4811
        %v4813 = vpop.f32.mrb[0].mxu0
        %v4814 = vpop.f32.mrb[0].mxu0
        %v4815 = vpop.f32.mrb[0].mxu0
        %4816 = vdwg.mxu0
        %4817 = vrot.lane.b32.xlu0 %v3548, 112
        %v4818 = vpop.permute.xlu0 %4817
        %v4820 = vsel %vm1055, %v4672, 0
        %v4823 = vsel %vm1291, %v4818, 0
        %4825 = vmatprep.subr.bf16.mxu0 0
        %4826 = vmatpush1.bf16.msra.mxu0 %v4823
        %4827 = vmatprep.subr.bf16.mxu0 0
        %4828 = vmatpush1.bf16.msra.mxu0 0
        %4829 = vmatprep.subr.bf16.mxu0 0
        %4830 = vmatpush1.bf16.msra.mxu0 0
        %4831 = vmatprep.subr.bf16.mxu0 0
        %4832 = vmatpush1.bf16.msra.mxu0 0
        %4833 = vmatprep.subr.bf16.mxu0 0
        %4834 = vmatpush1.bf16.msra.mxu0 0
        %4835 = vmatprep.subr.bf16.mxu0 0
        %4836 = vmatpush1.bf16.msra.mxu0 0
        %4837 = vmatprep.subr.bf16.mxu0 0
        %4838 = vmatpush1.bf16.msra.mxu0 0
        %4839 = vmatprep.subr.bf16.mxu0 0
        %4840 = vmatpush1.bf16.msra.mxu0 0
        %4841 = vmatprep.subr.bf16.mxu0 0
        %4842 = vmatpush1.bf16.msra.mxu0 0
        %4843 = vmatprep.subr.bf16.mxu0 0
        %4844 = vmatpush1.bf16.msra.mxu0 0
        %4845 = vmatprep.subr.bf16.mxu0 0
        %4846 = vmatpush1.bf16.msra.mxu0 0
        %4847 = vmatprep.subr.bf16.mxu0 0
        %4848 = vmatpush1.bf16.msra.mxu0 0
        %4849 = vmatprep.subr.bf16.mxu0 0
        %4850 = vmatpush1.bf16.msra.mxu0 0
        %4851 = vmatprep.subr.bf16.mxu0 0
        %4852 = vmatpush1.bf16.msra.mxu0 0
        %4853 = vmatprep.subr.bf16.mxu0 0
        %4854 = vmatpush1.bf16.msra.mxu0 0
        %4855 = vmatprep.subr.bf16.mxu0 0
        %4856 = vmatpush1.bf16.msra.mxu0 0
        %4857 = vmatprep.mubr.bf16.mxu0 0
        %4858 = vmatmul.mubr.bf16.gmra.mrb[0].mxu0 %v4820
        %v4859 = vpop.f32.mrb[0].mxu0
        %v4860 = vadd.f32 0.0, %v4859
        %v4861 = vpop.f32.mrb[0].mxu0
        %v4862 = vpop.f32.mrb[0].mxu0
        %v4863 = vpop.f32.mrb[0].mxu0
        %4864 = vdwg.mxu0
        %v4865 = vpack.c.bf16 %v4716, %v4716
        %v4866 = vpack.c.bf16 %v4764, %v4764
        %v4867 = vpack.c.bf16 %v4812, %v4812
        %v4868 = vpack.c.bf16 %v4860, %v4860
        %4869 = vrot.lane.b32.xlu0 %v3537, 104
        %v4870 = vpop.permute.xlu0 %4869
        %4871 = vrot.lane.b32.xlu0 %v3541, 104
        %v4872 = vpop.permute.xlu0 %4871
        %v4874 = vsel %vm1055, %v4870, 0
        %v4877 = vsel %vm1055, %v4872, 0
        %4879 = vmatprep.subr.bf16.mxu0 0
        %4880 = vmatpush1.bf16.xpose.msra.mxu0 %v4877
        %4881 = vmatprep.subr.bf16.mxu0 0
        %4882 = vmatpush1.bf16.xpose.msra.mxu0 0
        %4883 = vmatprep.subr.bf16.mxu0 0
        %4884 = vmatpush1.bf16.xpose.msra.mxu0 0
        %4885 = vmatprep.subr.bf16.mxu0 0
        %4886 = vmatpush1.bf16.xpose.msra.mxu0 0
        %4887 = vmatprep.subr.bf16.mxu0 0
        %4888 = vmatpush1.bf16.xpose.msra.mxu0 0
        %4889 = vmatprep.subr.bf16.mxu0 0
        %4890 = vmatpush1.bf16.xpose.msra.mxu0 0
        %4891 = vmatprep.subr.bf16.mxu0 0
        %4892 = vmatpush1.bf16.xpose.msra.mxu0 0
        %4893 = vmatprep.subr.bf16.mxu0 0
        %4894 = vmatpush1.bf16.xpose.msra.mxu0 0
        %4895 = vmatprep.subr.bf16.mxu0 0
        %4896 = vmatpush1.bf16.xpose.msra.mxu0 0
        %4897 = vmatprep.subr.bf16.mxu0 0
        %4898 = vmatpush1.bf16.xpose.msra.mxu0 0
        %4899 = vmatprep.subr.bf16.mxu0 0
        %4900 = vmatpush1.bf16.xpose.msra.mxu0 0
        %4901 = vmatprep.subr.bf16.mxu0 0
        %4902 = vmatpush1.bf16.xpose.msra.mxu0 0
        %4903 = vmatprep.subr.bf16.mxu0 0
        %4904 = vmatpush1.bf16.xpose.msra.mxu0 0
        %4905 = vmatprep.subr.bf16.mxu0 0
        %4906 = vmatpush1.bf16.xpose.msra.mxu0 0
        %4907 = vmatprep.subr.bf16.mxu0 0
        %4908 = vmatpush1.bf16.xpose.msra.mxu0 0
        %4909 = vmatprep.subr.bf16.mxu0 0
        %4910 = vmatpush1.bf16.xpose.msra.mxu0 0
        %4911 = vmatprep.mubr.bf16.mxu0 0
        %4912 = vmatmul.mubr.bf16.gmra.mrb[0].mxu0 %v4874
        %v4913 = vpop.f32.mrb[0].mxu0
        %v4914 = vadd.f32 0.0, %v4913
        %v4915 = vpop.f32.mrb[0].mxu0
        %v4916 = vpop.f32.mrb[0].mxu0
        %v4917 = vpop.f32.mrb[0].mxu0
        %4918 = vdwg.mxu0
        %4919 = vrot.lane.b32.xlu0 %v3538, 104
        %v4920 = vpop.permute.xlu0 %4919
        %4921 = vrot.lane.b32.xlu0 %v3542, 104
        %v4922 = vpop.permute.xlu0 %4921
        %v4924 = vsel %vm1055, %v4920, 0
        %v4927 = vsel %vm1055, %v4922, 0
        %4929 = vmatprep.subr.bf16.mxu0 0
        %4930 = vmatpush1.bf16.xpose.msra.mxu0 %v4927
        %4931 = vmatprep.subr.bf16.mxu0 0
        %4932 = vmatpush1.bf16.xpose.msra.mxu0 0
        %4933 = vmatprep.subr.bf16.mxu0 0
        %4934 = vmatpush1.bf16.xpose.msra.mxu0 0
        %4935 = vmatprep.subr.bf16.mxu0 0
        %4936 = vmatpush1.bf16.xpose.msra.mxu0 0
        %4937 = vmatprep.subr.bf16.mxu0 0
        %4938 = vmatpush1.bf16.xpose.msra.mxu0 0
        %4939 = vmatprep.subr.bf16.mxu0 0
        %4940 = vmatpush1.bf16.xpose.msra.mxu0 0
        %4941 = vmatprep.subr.bf16.mxu0 0
        %4942 = vmatpush1.bf16.xpose.msra.mxu0 0
        %4943 = vmatprep.subr.bf16.mxu0 0
        %4944 = vmatpush1.bf16.xpose.msra.mxu0 0
        %4945 = vmatprep.subr.bf16.mxu0 0
        %4946 = vmatpush1.bf16.xpose.msra.mxu0 0
        %4947 = vmatprep.subr.bf16.mxu0 0
        %4948 = vmatpush1.bf16.xpose.msra.mxu0 0
        %4949 = vmatprep.subr.bf16.mxu0 0
        %4950 = vmatpush1.bf16.xpose.msra.mxu0 0
        %4951 = vmatprep.subr.bf16.mxu0 0
        %4952 = vmatpush1.bf16.xpose.msra.mxu0 0
        %4953 = vmatprep.subr.bf16.mxu0 0
        %4954 = vmatpush1.bf16.xpose.msra.mxu0 0
        %4955 = vmatprep.subr.bf16.mxu0 0
        %4956 = vmatpush1.bf16.xpose.msra.mxu0 0
        %4957 = vmatprep.subr.bf16.mxu0 0
        %4958 = vmatpush1.bf16.xpose.msra.mxu0 0
        %4959 = vmatprep.subr.bf16.mxu0 0
        %4960 = vmatpush1.bf16.xpose.msra.mxu0 0
        %4961 = vmatprep.mubr.bf16.mxu0 0
        %4962 = vmatmul.mubr.bf16.gmra.mrb[0].mxu0 %v4924
        %v4963 = vpop.f32.mrb[0].mxu0
        %v4964 = vadd.f32 0.0, %v4963
        %v4965 = vpop.f32.mrb[0].mxu0
        %v4966 = vpop.f32.mrb[0].mxu0
        %v4967 = vpop.f32.mrb[0].mxu0
        %4968 = vdwg.mxu0
        %4969 = vrot.lane.b32.xlu0 %v3539, 104
        %v4970 = vpop.permute.xlu0 %4969
        %4971 = vrot.lane.b32.xlu0 %v3543, 104
        %v4972 = vpop.permute.xlu0 %4971
        %v4974 = vsel %vm1055, %v4970, 0
        %v4977 = vsel %vm1055, %v4972, 0
        %4979 = vmatprep.subr.bf16.mxu0 0
        %4980 = vmatpush1.bf16.xpose.msra.mxu0 %v4977
        %4981 = vmatprep.subr.bf16.mxu0 0
        %4982 = vmatpush1.bf16.xpose.msra.mxu0 0
        %4983 = vmatprep.subr.bf16.mxu0 0
        %4984 = vmatpush1.bf16.xpose.msra.mxu0 0
        %4985 = vmatprep.subr.bf16.mxu0 0
        %4986 = vmatpush1.bf16.xpose.msra.mxu0 0
        %4987 = vmatprep.subr.bf16.mxu0 0
        %4988 = vmatpush1.bf16.xpose.msra.mxu0 0
        %4989 = vmatprep.subr.bf16.mxu0 0
        %4990 = vmatpush1.bf16.xpose.msra.mxu0 0
        %4991 = vmatprep.subr.bf16.mxu0 0
        %4992 = vmatpush1.bf16.xpose.msra.mxu0 0
        %4993 = vmatprep.subr.bf16.mxu0 0
        %4994 = vmatpush1.bf16.xpose.msra.mxu0 0
        %4995 = vmatprep.subr.bf16.mxu0 0
        %4996 = vmatpush1.bf16.xpose.msra.mxu0 0
        %4997 = vmatprep.subr.bf16.mxu0 0
        %4998 = vmatpush1.bf16.xpose.msra.mxu0 0
        %4999 = vmatprep.subr.bf16.mxu0 0
        %5000 = vmatpush1.bf16.xpose.msra.mxu0 0
        %5001 = vmatprep.subr.bf16.mxu0 0
        %5002 = vmatpush1.bf16.xpose.msra.mxu0 0
        %5003 = vmatprep.subr.bf16.mxu0 0
        %5004 = vmatpush1.bf16.xpose.msra.mxu0 0
        %5005 = vmatprep.subr.bf16.mxu0 0
        %5006 = vmatpush1.bf16.xpose.msra.mxu0 0
        %5007 = vmatprep.subr.bf16.mxu0 0
        %5008 = vmatpush1.bf16.xpose.msra.mxu0 0
        %5009 = vmatprep.subr.bf16.mxu0 0
        %5010 = vmatpush1.bf16.xpose.msra.mxu0 0
        %5011 = vmatprep.mubr.bf16.mxu0 0
        %5012 = vmatmul.mubr.bf16.gmra.mrb[0].mxu0 %v4974
        %v5013 = vpop.f32.mrb[0].mxu0
        %v5014 = vadd.f32 0.0, %v5013
        %v5015 = vpop.f32.mrb[0].mxu0
        %v5016 = vpop.f32.mrb[0].mxu0
        %v5017 = vpop.f32.mrb[0].mxu0
        %5018 = vdwg.mxu0
        %5019 = vrot.lane.b32.xlu0 %v3540, 104
        %v5020 = vpop.permute.xlu0 %5019
        %5021 = vrot.lane.b32.xlu0 %v3544, 104
        %v5022 = vpop.permute.xlu0 %5021
        %v5024 = vsel %vm1055, %v5020, 0
        %v5027 = vsel %vm1055, %v5022, 0
        %5029 = vmatprep.subr.bf16.mxu0 0
        %5030 = vmatpush1.bf16.xpose.msra.mxu0 %v5027
        %5031 = vmatprep.subr.bf16.mxu0 0
        %5032 = vmatpush1.bf16.xpose.msra.mxu0 0
        %5033 = vmatprep.subr.bf16.mxu0 0
        %5034 = vmatpush1.bf16.xpose.msra.mxu0 0
        %5035 = vmatprep.subr.bf16.mxu0 0
        %5036 = vmatpush1.bf16.xpose.msra.mxu0 0
        %5037 = vmatprep.subr.bf16.mxu0 0
        %5038 = vmatpush1.bf16.xpose.msra.mxu0 0
        %5039 = vmatprep.subr.bf16.mxu0 0
        %5040 = vmatpush1.bf16.xpose.msra.mxu0 0
        %5041 = vmatprep.subr.bf16.mxu0 0
        %5042 = vmatpush1.bf16.xpose.msra.mxu0 0
        %5043 = vmatprep.subr.bf16.mxu0 0
        %5044 = vmatpush1.bf16.xpose.msra.mxu0 0
        %5045 = vmatprep.subr.bf16.mxu0 0
        %5046 = vmatpush1.bf16.xpose.msra.mxu0 0
        %5047 = vmatprep.subr.bf16.mxu0 0
        %5048 = vmatpush1.bf16.xpose.msra.mxu0 0
        %5049 = vmatprep.subr.bf16.mxu0 0
        %5050 = vmatpush1.bf16.xpose.msra.mxu0 0
        %5051 = vmatprep.subr.bf16.mxu0 0
        %5052 = vmatpush1.bf16.xpose.msra.mxu0 0
        %5053 = vmatprep.subr.bf16.mxu0 0
        %5054 = vmatpush1.bf16.xpose.msra.mxu0 0
        %5055 = vmatprep.subr.bf16.mxu0 0
        %5056 = vmatpush1.bf16.xpose.msra.mxu0 0
        %5057 = vmatprep.subr.bf16.mxu0 0
        %5058 = vmatpush1.bf16.xpose.msra.mxu0 0
        %5059 = vmatprep.subr.bf16.mxu0 0
        %5060 = vmatpush1.bf16.xpose.msra.mxu0 0
        %5061 = vmatprep.mubr.bf16.mxu0 0
        %5062 = vmatmul.mubr.bf16.gmra.mrb[0].mxu0 %v5024
        %v5063 = vpop.f32.mrb[0].mxu0
        %v5064 = vadd.f32 0.0, %v5063
        %v5065 = vpop.f32.mrb[0].mxu0
        %v5066 = vpop.f32.mrb[0].mxu0
        %v5067 = vpop.f32.mrb[0].mxu0
        %5068 = vdwg.mxu0
        %v5069 = vsel %vm1055, %v4914, -inf
        %5070 = vmax.xlane.f32.xlu0 %v5069
        %v5071 = vpop.xlane.xlu0 %5070
        %v5072 = vsel %vm1055, %v4964, -inf
        %5073 = vmax.xlane.f32.xlu0 %v5072
        %v5074 = vpop.xlane.xlu0 %5073
        %v5075 = vsel %vm1055, %v5014, -inf
        %5076 = vmax.xlane.f32.xlu0 %v5075
        %v5077 = vpop.xlane.xlu0 %5076
        %v5078 = vsel %vm1055, %v5064, -inf
        %5079 = vmax.xlane.f32.xlu0 %v5078
        %v5080 = vpop.xlane.xlu0 %5079
        %v5081 = vsub.f32 %v4914, %v5071
        %v5082 = vsub.f32 %v4964, %v5074
        %v5083 = vsub.f32 %v5014, %v5077
        %v5084 = vsub.f32 %v5064, %v5080
        %v5085 = vmul.f32 %v5081, 1.442695
        %v5086 = vpow.pop %v5085
        %v5087 = vmul.f32 %v5082, 1.442695
        %v5088 = vpow.pop %v5087
        %v5089 = vmul.f32 %v5083, 1.442695
        %v5090 = vpow.pop %v5089
        %v5091 = vmul.f32 %v5084, 1.442695
        %v5092 = vpow.pop %v5091
        %v5093 = vsel %vm1055, %v5086, 0.0
        %5094 = vadd.xlane.f32.xlu0 %v5093
        %v5095 = vpop.xlane.xlu0 %5094
        %v5096 = vsel %vm1055, %v5088, 0.0
        %5097 = vadd.xlane.f32.xlu0 %v5096
        %v5098 = vpop.xlane.xlu0 %5097
        %v5099 = vsel %vm1055, %v5090, 0.0
        %5100 = vadd.xlane.f32.xlu0 %v5099
        %v5101 = vpop.xlane.xlu0 %5100
        %v5102 = vsel %vm1055, %v5092, 0.0
        %5103 = vadd.xlane.f32.xlu0 %v5102
        %v5104 = vpop.xlane.xlu0 %5103
        %v5105 = vrcp.pop %v5095
        %v5106 = vrcp.pop %v5098
        %v5107 = vrcp.pop %v5101
        %v5108 = vrcp.pop %v5104
        %v5109 = vmul.f32 %v5086, %v5105
        %v5110 = vmul.f32 %v5088, %v5106
        %v5111 = vmul.f32 %v5090, %v5107
        %v5112 = vmul.f32 %v5092, %v5108
        %v5113 = vpack.c.bf16 %v5109, %v5109
        %v5114 = vpack.c.bf16 %v5110, %v5110
        %v5115 = vpack.c.bf16 %v5111, %v5111
        %v5116 = vpack.c.bf16 %v5112, %v5112
        %5117 = vrot.lane.b32.xlu0 %v3545, 104
        %v5118 = vpop.permute.xlu0 %5117
        %v5120 = vsel %vm1055, %v5113, 0
        %v5123 = vsel %vm1291, %v5118, 0
        %5125 = vmatprep.subr.bf16.mxu0 0
        %5126 = vmatpush1.bf16.msra.mxu0 %v5123
        %5127 = vmatprep.subr.bf16.mxu0 0
        %5128 = vmatpush1.bf16.msra.mxu0 0
        %5129 = vmatprep.subr.bf16.mxu0 0
        %5130 = vmatpush1.bf16.msra.mxu0 0
        %5131 = vmatprep.subr.bf16.mxu0 0
        %5132 = vmatpush1.bf16.msra.mxu0 0
        %5133 = vmatprep.subr.bf16.mxu0 0
        %5134 = vmatpush1.bf16.msra.mxu0 0
        %5135 = vmatprep.subr.bf16.mxu0 0
        %5136 = vmatpush1.bf16.msra.mxu0 0
        %5137 = vmatprep.subr.bf16.mxu0 0
        %5138 = vmatpush1.bf16.msra.mxu0 0
        %5139 = vmatprep.subr.bf16.mxu0 0
        %5140 = vmatpush1.bf16.msra.mxu0 0
        %5141 = vmatprep.subr.bf16.mxu0 0
        %5142 = vmatpush1.bf16.msra.mxu0 0
        %5143 = vmatprep.subr.bf16.mxu0 0
        %5144 = vmatpush1.bf16.msra.mxu0 0
        %5145 = vmatprep.subr.bf16.mxu0 0
        %5146 = vmatpush1.bf16.msra.mxu0 0
        %5147 = vmatprep.subr.bf16.mxu0 0
        %5148 = vmatpush1.bf16.msra.mxu0 0
        %5149 = vmatprep.subr.bf16.mxu0 0
        %5150 = vmatpush1.bf16.msra.mxu0 0
        %5151 = vmatprep.subr.bf16.mxu0 0
        %5152 = vmatpush1.bf16.msra.mxu0 0
        %5153 = vmatprep.subr.bf16.mxu0 0
        %5154 = vmatpush1.bf16.msra.mxu0 0
        %5155 = vmatprep.subr.bf16.mxu0 0
        %5156 = vmatpush1.bf16.msra.mxu0 0
        %5157 = vmatprep.mubr.bf16.mxu0 0
        %5158 = vmatmul.mubr.bf16.gmra.mrb[0].mxu0 %v5120
        %v5159 = vpop.f32.mrb[0].mxu0
        %v5160 = vadd.f32 0.0, %v5159
        %v5161 = vpop.f32.mrb[0].mxu0
        %v5162 = vpop.f32.mrb[0].mxu0
        %v5163 = vpop.f32.mrb[0].mxu0
        %5164 = vdwg.mxu0
        %5165 = vrot.lane.b32.xlu0 %v3546, 104
        %v5166 = vpop.permute.xlu0 %5165
        %v5168 = vsel %vm1055, %v5114, 0
        %v5171 = vsel %vm1291, %v5166, 0
        %5173 = vmatprep.subr.bf16.mxu0 0
        %5174 = vmatpush1.bf16.msra.mxu0 %v5171
        %5175 = vmatprep.subr.bf16.mxu0 0
        %5176 = vmatpush1.bf16.msra.mxu0 0
        %5177 = vmatprep.subr.bf16.mxu0 0
        %5178 = vmatpush1.bf16.msra.mxu0 0
        %5179 = vmatprep.subr.bf16.mxu0 0
        %5180 = vmatpush1.bf16.msra.mxu0 0
        %5181 = vmatprep.subr.bf16.mxu0 0
        %5182 = vmatpush1.bf16.msra.mxu0 0
        %5183 = vmatprep.subr.bf16.mxu0 0
        %5184 = vmatpush1.bf16.msra.mxu0 0
        %5185 = vmatprep.subr.bf16.mxu0 0
        %5186 = vmatpush1.bf16.msra.mxu0 0
        %5187 = vmatprep.subr.bf16.mxu0 0
        %5188 = vmatpush1.bf16.msra.mxu0 0
        %5189 = vmatprep.subr.bf16.mxu0 0
        %5190 = vmatpush1.bf16.msra.mxu0 0
        %5191 = vmatprep.subr.bf16.mxu0 0
        %5192 = vmatpush1.bf16.msra.mxu0 0
        %5193 = vmatprep.subr.bf16.mxu0 0
        %5194 = vmatpush1.bf16.msra.mxu0 0
        %5195 = vmatprep.subr.bf16.mxu0 0
        %5196 = vmatpush1.bf16.msra.mxu0 0
        %5197 = vmatprep.subr.bf16.mxu0 0
        %5198 = vmatpush1.bf16.msra.mxu0 0
        %5199 = vmatprep.subr.bf16.mxu0 0
        %5200 = vmatpush1.bf16.msra.mxu0 0
        %5201 = vmatprep.subr.bf16.mxu0 0
        %5202 = vmatpush1.bf16.msra.mxu0 0
        %5203 = vmatprep.subr.bf16.mxu0 0
        %5204 = vmatpush1.bf16.msra.mxu0 0
        %5205 = vmatprep.mubr.bf16.mxu0 0
        %5206 = vmatmul.mubr.bf16.gmra.mrb[0].mxu0 %v5168
        %v5207 = vpop.f32.mrb[0].mxu0
        %v5208 = vadd.f32 0.0, %v5207
        %v5209 = vpop.f32.mrb[0].mxu0
        %v5210 = vpop.f32.mrb[0].mxu0
        %v5211 = vpop.f32.mrb[0].mxu0
        %5212 = vdwg.mxu0
        %5213 = vrot.lane.b32.xlu0 %v3547, 104
        %v5214 = vpop.permute.xlu0 %5213
        %v5216 = vsel %vm1055, %v5115, 0
        %v5219 = vsel %vm1291, %v5214, 0
        %5221 = vmatprep.subr.bf16.mxu0 0
        %5222 = vmatpush1.bf16.msra.mxu0 %v5219
        %5223 = vmatprep.subr.bf16.mxu0 0
        %5224 = vmatpush1.bf16.msra.mxu0 0
        %5225 = vmatprep.subr.bf16.mxu0 0
        %5226 = vmatpush1.bf16.msra.mxu0 0
        %5227 = vmatprep.subr.bf16.mxu0 0
        %5228 = vmatpush1.bf16.msra.mxu0 0
        %5229 = vmatprep.subr.bf16.mxu0 0
        %5230 = vmatpush1.bf16.msra.mxu0 0
        %5231 = vmatprep.subr.bf16.mxu0 0
        %5232 = vmatpush1.bf16.msra.mxu0 0
        %5233 = vmatprep.subr.bf16.mxu0 0
        %5234 = vmatpush1.bf16.msra.mxu0 0
        %5235 = vmatprep.subr.bf16.mxu0 0
        %5236 = vmatpush1.bf16.msra.mxu0 0
        %5237 = vmatprep.subr.bf16.mxu0 0
        %5238 = vmatpush1.bf16.msra.mxu0 0
        %5239 = vmatprep.subr.bf16.mxu0 0
        %5240 = vmatpush1.bf16.msra.mxu0 0
        %5241 = vmatprep.subr.bf16.mxu0 0
        %5242 = vmatpush1.bf16.msra.mxu0 0
        %5243 = vmatprep.subr.bf16.mxu0 0
        %5244 = vmatpush1.bf16.msra.mxu0 0
        %5245 = vmatprep.subr.bf16.mxu0 0
        %5246 = vmatpush1.bf16.msra.mxu0 0
        %5247 = vmatprep.subr.bf16.mxu0 0
        %5248 = vmatpush1.bf16.msra.mxu0 0
        %5249 = vmatprep.subr.bf16.mxu0 0
        %5250 = vmatpush1.bf16.msra.mxu0 0
        %5251 = vmatprep.subr.bf16.mxu0 0
        %5252 = vmatpush1.bf16.msra.mxu0 0
        %5253 = vmatprep.mubr.bf16.mxu0 0
        %5254 = vmatmul.mubr.bf16.gmra.mrb[0].mxu0 %v5216
        %v5255 = vpop.f32.mrb[0].mxu0
        %v5256 = vadd.f32 0.0, %v5255
        %v5257 = vpop.f32.mrb[0].mxu0
        %v5258 = vpop.f32.mrb[0].mxu0
        %v5259 = vpop.f32.mrb[0].mxu0
        %5260 = vdwg.mxu0
        %5261 = vrot.lane.b32.xlu0 %v3548, 104
        %v5262 = vpop.permute.xlu0 %5261
        %v5264 = vsel %vm1055, %v5116, 0
        %v5267 = vsel %vm1291, %v5262, 0
        %5269 = vmatprep.subr.bf16.mxu0 0
        %5270 = vmatpush1.bf16.msra.mxu0 %v5267
        %5271 = vmatprep.subr.bf16.mxu0 0
        %5272 = vmatpush1.bf16.msra.mxu0 0
        %5273 = vmatprep.subr.bf16.mxu0 0
        %5274 = vmatpush1.bf16.msra.mxu0 0
        %5275 = vmatprep.subr.bf16.mxu0 0
        %5276 = vmatpush1.bf16.msra.mxu0 0
        %5277 = vmatprep.subr.bf16.mxu0 0
        %5278 = vmatpush1.bf16.msra.mxu0 0
        %5279 = vmatprep.subr.bf16.mxu0 0
        %5280 = vmatpush1.bf16.msra.mxu0 0
        %5281 = vmatprep.subr.bf16.mxu0 0
        %5282 = vmatpush1.bf16.msra.mxu0 0
        %5283 = vmatprep.subr.bf16.mxu0 0
        %5284 = vmatpush1.bf16.msra.mxu0 0
        %5285 = vmatprep.subr.bf16.mxu0 0
        %5286 = vmatpush1.bf16.msra.mxu0 0
        %5287 = vmatprep.subr.bf16.mxu0 0
        %5288 = vmatpush1.bf16.msra.mxu0 0
        %5289 = vmatprep.subr.bf16.mxu0 0
        %5290 = vmatpush1.bf16.msra.mxu0 0
        %5291 = vmatprep.subr.bf16.mxu0 0
        %5292 = vmatpush1.bf16.msra.mxu0 0
        %5293 = vmatprep.subr.bf16.mxu0 0
        %5294 = vmatpush1.bf16.msra.mxu0 0
        %5295 = vmatprep.subr.bf16.mxu0 0
        %5296 = vmatpush1.bf16.msra.mxu0 0
        %5297 = vmatprep.subr.bf16.mxu0 0
        %5298 = vmatpush1.bf16.msra.mxu0 0
        %5299 = vmatprep.subr.bf16.mxu0 0
        %5300 = vmatpush1.bf16.msra.mxu0 0
        %5301 = vmatprep.mubr.bf16.mxu0 0
        %5302 = vmatmul.mubr.bf16.gmra.mrb[0].mxu0 %v5264
        %v5303 = vpop.f32.mrb[0].mxu0
        %v5304 = vadd.f32 0.0, %v5303
        %v5305 = vpop.f32.mrb[0].mxu0
        %v5306 = vpop.f32.mrb[0].mxu0
        %v5307 = vpop.f32.mrb[0].mxu0
        %5308 = vdwg.mxu0
        %v5309 = vpack.c.bf16 %v5160, %v5160
        %v5310 = vpack.c.bf16 %v5208, %v5208
        %v5311 = vpack.c.bf16 %v5256, %v5256
        %v5312 = vpack.c.bf16 %v5304, %v5304
        %5317 = vrot.lane.b32.xlu0 %v4421, 8
        %v5318 = vpop.permute.xlu0 %5317
        %5319 = vrot.lane.b32.xlu0 %v4422, 8
        %v5320 = vpop.permute.xlu0 %5319
        %5321 = vrot.lane.b32.xlu0 %v4423, 8
        %v5322 = vpop.permute.xlu0 %5321
        %5323 = vrot.lane.b32.xlu0 %v4424, 8
        %v5324 = vpop.permute.xlu0 %5323
        %5329 = vrot.lane.b32.xlu0 %v4865, 16
        %v5330 = vpop.permute.xlu0 %5329
        %5331 = vrot.lane.b32.xlu0 %v4866, 16
        %v5332 = vpop.permute.xlu0 %5331
        %5333 = vrot.lane.b32.xlu0 %v4867, 16
        %v5334 = vpop.permute.xlu0 %5333
        %5335 = vrot.lane.b32.xlu0 %v4868, 16
        %v5336 = vpop.permute.xlu0 %5335
        %5341 = vrot.lane.b32.xlu0 %v5309, 24
        %v5342 = vpop.permute.xlu0 %5341
        %5343 = vrot.lane.b32.xlu0 %v5310, 24
        %v5344 = vpop.permute.xlu0 %5343
        %5345 = vrot.lane.b32.xlu0 %v5311, 24
        %v5346 = vpop.permute.xlu0 %5345
        %5347 = vrot.lane.b32.xlu0 %v5312, 24
        %v5348 = vpop.permute.xlu0 %5347
        %v5351 = vsel %vm1055, %v3965, %v5318
        %v5354 = vsel %vm1055, %v3966, %v5320
        %v5357 = vsel %vm1055, %v3967, %v5322
        %v5360 = vsel %vm1055, %v3968, %v5324
        %v5362 = vsel %vm2869, %v5351, %v5330
        %v5364 = vsel %vm2869, %v5354, %v5332
        %v5366 = vsel %vm2869, %v5357, %v5334
        %v5368 = vsel %vm2869, %v5360, %v5336
        %v5370 = vsel %vm2878, %v5362, %v5342
        %v5372 = vsel %vm2878, %v5364, %v5344
        %v5374 = vsel %vm2878, %v5366, %v5346
        %v5376 = vsel %vm2878, %v5368, %v5348
        %s5377 = scalar_lea.vmem %s9, 16
        %v5378 = vld [vmem:[%s5377] sm:$0xf]
        %v5379 = vld [vmem:[%s5377 + $0x4] sm:$0xf]
        %v5380 = vld [vmem:[%s5377 + $0x8] sm:$0xf]
        %v5381 = vld [vmem:[%s5377 + $0xc] sm:$0xf]
        %s5382 = scalar_lea.vmem %s10, 1
        %v5383 = vld [vmem:[%s5382] sm:$0x1]
        %v5385 = vlaneseq
        %v5386 = vshrl.u32 %v5385, 7
        %v5387 = vsub.s32 0, %v5386
        %v5388 = vrot.slane %v5383, %v5387
        %v5394 = vunpack.c.l.b16 %v5370
        %v5395 = vunpack.c.l.b16 %v5372
        %v5396 = vunpack.c.l.b16 %v5374
        %v5397 = vunpack.c.l.b16 %v5376
        %v5398 = vpack.c.b16 %v5395, %v5394
        %v5399 = vpack.c.b16 %v5397, %v5396
        %v5404 = vunpack.c.l.b16 %v5378
        %v5405 = vunpack.c.l.b16 %v5379
        %v5406 = vunpack.c.l.b16 %v5380
        %v5407 = vunpack.c.l.b16 %v5381
        %v5408 = vpack.c.b16 %v5405, %v5404
        %v5409 = vpack.c.b16 %v5407, %v5406
        %v5413 = vsel %vm843, %v5398, 0
        %v5416 = vsel %vm843, %v5399, 0
        %5418 = vmatprep.subr.bf16.mxu0 0
        %5419 = vmatpush1.bf16.msra.mxu0 %v5408
        %5420 = vmatprep.subr.bf16.mxu0 0
        %5421 = vmatpush1.bf16.msra.mxu0 %v5409
        %5422 = vmatprep.subr.bf16.mxu0 0
        %5423 = vmatpush1.bf16.msra.mxu0 0
        %5424 = vmatprep.subr.bf16.mxu0 0
        %5425 = vmatpush1.bf16.msra.mxu0 0
        %5426 = vmatprep.subr.bf16.mxu0 0
        %5427 = vmatpush1.bf16.msra.mxu0 0
        %5428 = vmatprep.subr.bf16.mxu0 0
        %5429 = vmatpush1.bf16.msra.mxu0 0
        %5430 = vmatprep.subr.bf16.mxu0 0
        %5431 = vmatpush1.bf16.msra.mxu0 0
        %5432 = vmatprep.subr.bf16.mxu0 0
        %5433 = vmatpush1.bf16.msra.mxu0 0
        %5434 = vmatprep.subr.bf16.mxu0 0
        %5435 = vmatpush1.bf16.msra.mxu0 0
        %5436 = vmatprep.subr.bf16.mxu0 0
        %5437 = vmatpush1.bf16.msra.mxu0 0
        %5438 = vmatprep.subr.bf16.mxu0 0
        %5439 = vmatpush1.bf16.msra.mxu0 0
        %5440 = vmatprep.subr.bf16.mxu0 0
        %5441 = vmatpush1.bf16.msra.mxu0 0
        %5442 = vmatprep.subr.bf16.mxu0 0
        %5443 = vmatpush1.bf16.msra.mxu0 0
        %5444 = vmatprep.subr.bf16.mxu0 0
        %5445 = vmatpush1.bf16.msra.mxu0 0
        %5446 = vmatprep.subr.bf16.mxu0 0
        %5447 = vmatpush1.bf16.msra.mxu0 0
        %5448 = vmatprep.subr.bf16.mxu0 0
        %5449 = vmatpush1.bf16.msra.mxu0 0
        %5450 = vmatprep.mubr.bf16.mxu0 0
        %5451 = vmatmul.mubr.bf16.gmra.mrb[0].mxu0 %v5413
        %v5452 = vpop.f32.mrb[0].mxu0
        %v5453 = vadd.f32 %v5388, %v5452
        %v5454 = vpop.f32.mrb[0].mxu0
        %v5455 = vpop.f32.mrb[0].mxu0
        %v5456 = vadd.f32 %v5388, %v5455
        %v5457 = vpop.f32.mrb[0].mxu0
        %5458 = vmatprep.mubr.bf16.mxu0 0
        %5459 = vmatmul.mubr.bf16.gmra.mrb[0].mxu0 %v5416
        %v5460 = vpop.f32.mrb[0].mxu0
        %v5461 = vadd.f32 %v5388, %v5460
        %v5462 = vpop.f32.mrb[0].mxu0
        %v5463 = vpop.f32.mrb[0].mxu0
        %v5464 = vadd.f32 %v5388, %v5463
        %v5465 = vpop.f32.mrb[0].mxu0
        %5466 = vdwg.mxu0
        %v5467 = vadd.f32 %v3303, %v5453
        %v5468 = vadd.f32 %v3304, %v5456
        %v5469 = vadd.f32 %v3305, %v5461
        %v5470 = vadd.f32 %v3306, %v5464
        %s5471 = scalar_lea.vmem %s11, 1
        %v5472 = vld [vmem:[%s5471] sm:$0x1]
        %s5473 = scalar_lea.vmem %s12, 1
        %v5474 = vld [vmem:[%s5473] sm:$0x1]
        %v5475 = vsel %vm843, %v5467, 0.0
        %5476 = vadd.xlane.f32.xlu0 %v5475
        %v5477 = vpop.xlane.xlu0 %5476
        %v5478 = vsel %vm843, %v5468, 0.0
        %5479 = vadd.xlane.f32.xlu0 %v5478
        %v5480 = vpop.xlane.xlu0 %5479
        %v5481 = vsel %vm843, %v5469, 0.0
        %5482 = vadd.xlane.f32.xlu0 %v5481
        %v5483 = vpop.xlane.xlu0 %5482
        %v5484 = vsel %vm843, %v5470, 0.0
        %5485 = vadd.xlane.f32.xlu0 %v5484
        %v5486 = vpop.xlane.xlu0 %5485
        %v5487 = vmul.f32 %v5477, %v2993
        %v5488 = vmul.f32 %v5480, %v2993
        %v5489 = vmul.f32 %v5483, %v2993
        %v5490 = vmul.f32 %v5486, %v2993
        %v5491 = vsub.f32 %v5467, %v5487
        %v5492 = vsub.f32 %v5468, %v5488
        %v5493 = vsub.f32 %v5469, %v5489
        %v5494 = vsub.f32 %v5470, %v5490
        %v5495 = vmul.f32 %v5491, %v5491
        %v5496 = vmul.f32 %v5492, %v5492
        %v5497 = vmul.f32 %v5493, %v5493
        %v5498 = vmul.f32 %v5494, %v5494
        %v5499 = vsel %vm843, %v5495, 0.0
        %5500 = vadd.xlane.f32.xlu0 %v5499
        %v5501 = vpop.xlane.xlu0 %5500
        %v5502 = vsel %vm843, %v5496, 0.0
        %5503 = vadd.xlane.f32.xlu0 %v5502
        %v5504 = vpop.xlane.xlu0 %5503
        %v5505 = vsel %vm843, %v5497, 0.0
        %5506 = vadd.xlane.f32.xlu0 %v5505
        %v5507 = vpop.xlane.xlu0 %5506
        %v5508 = vsel %vm843, %v5498, 0.0
        %5509 = vadd.xlane.f32.xlu0 %v5508
        %v5510 = vpop.xlane.xlu0 %5509
        %v5511 = vmul.f32 %v5501, %v2993
        %v5512 = vmul.f32 %v5504, %v2993
        %v5513 = vmul.f32 %v5507, %v2993
        %v5514 = vmul.f32 %v5510, %v2993
        %v5515 = vadd.f32 %v5511, 1e-05
        %v5516 = vadd.f32 %v5512, 1e-05
        %v5517 = vadd.f32 %v5513, 1e-05
        %v5518 = vadd.f32 %v5514, 1e-05
        %v5519 = vrsqrt.pop %v5515
        %v5520 = vrsqrt.pop %v5516
        %v5521 = vrsqrt.pop %v5517
        %v5522 = vrsqrt.pop %v5518
        %v5523 = vmul.f32 %v5491, %v5519
        %v5524 = vmul.f32 %v5492, %v5520
        %v5525 = vmul.f32 %v5493, %v5521
        %v5526 = vmul.f32 %v5494, %v5522
        %v5528 = vlaneseq
        %v5529 = vshrl.u32 %v5528, 7
        %v5530 = vsub.s32 0, %v5529
        %v5531 = vrot.slane %v5472, %v5530
        %v5533 = vmul.f32 %v5523, %v5531
        %v5534 = vmul.f32 %v5524, %v5531
        %v5535 = vmul.f32 %v5525, %v5531
        %v5536 = vmul.f32 %v5526, %v5531
        %v5538 = vlaneseq
        %v5539 = vshrl.u32 %v5538, 7
        %v5540 = vsub.s32 0, %v5539
        %v5541 = vrot.slane %v5474, %v5540
        %v5543 = vadd.f32 %v5533, %v5541
        %v5544 = vadd.f32 %v5534, %v5541
        %v5545 = vadd.f32 %v5535, %v5541
        %v5546 = vadd.f32 %v5536, %v5541
        %v5547 = vpack.c.bf16 %v5544, %v5543
        %v5548 = vpack.c.bf16 %v5546, %v5545
        %s5549 = scalar_lea.vmem %s13, 16
        %v5550 = vld [vmem:[%s5549] sm:$0xf]
        %v5551 = vld [vmem:[%s5549 + $0x4] sm:$0xf]
        %v5552 = vld [vmem:[%s5549 + $0x8] sm:$0xf]
        %v5553 = vld [vmem:[%s5549 + $0xc] sm:$0xf]
        %v5558 = vunpack.c.l.b16 %v5550
        %v5559 = vunpack.c.l.b16 %v5551
        %v5560 = vunpack.c.l.b16 %v5552
        %v5561 = vunpack.c.l.b16 %v5553
        %v5562 = vpack.c.b16 %v5559, %v5558
        %v5563 = vpack.c.b16 %v5561, %v5560
        %v5567 = vsel %vm843, %v5547, 0
        %v5570 = vsel %vm843, %v5548, 0
        %5572 = vmatprep.subr.bf16.mxu0 0
        %5573 = vmatpush1.bf16.msra.mxu0 %v5562
        %5574 = vmatprep.subr.bf16.mxu0 0
        %5575 = vmatpush1.bf16.msra.mxu0 %v5563
        %5576 = vmatprep.subr.bf16.mxu0 0
        %5577 = vmatpush1.bf16.msra.mxu0 0
        %5578 = vmatprep.subr.bf16.mxu0 0
        %5579 = vmatpush1.bf16.msra.mxu0 0
        %5580 = vmatprep.subr.bf16.mxu0 0
        %5581 = vmatpush1.bf16.msra.mxu0 0
        %5582 = vmatprep.subr.bf16.mxu0 0
        %5583 = vmatpush1.bf16.msra.mxu0 0
        %5584 = vmatprep.subr.bf16.mxu0 0
        %5585 = vmatpush1.bf16.msra.mxu0 0
        %5586 = vmatprep.subr.bf16.mxu0 0
        %5587 = vmatpush1.bf16.msra.mxu0 0
        %5588 = vmatprep.subr.bf16.mxu0 0
        %5589 = vmatpush1.bf16.msra.mxu0 0
        %5590 = vmatprep.subr.bf16.mxu0 0
        %5591 = vmatpush1.bf16.msra.mxu0 0
        %5592 = vmatprep.subr.bf16.mxu0 0
        %5593 = vmatpush1.bf16.msra.mxu0 0
        %5594 = vmatprep.subr.bf16.mxu0 0
        %5595 = vmatpush1.bf16.msra.mxu0 0
        %5596 = vmatprep.subr.bf16.mxu0 0
        %5597 = vmatpush1.bf16.msra.mxu0 0
        %5598 = vmatprep.subr.bf16.mxu0 0
        %5599 = vmatpush1.bf16.msra.mxu0 0
        %5600 = vmatprep.subr.bf16.mxu0 0
        %5601 = vmatpush1.bf16.msra.mxu0 0
        %5602 = vmatprep.subr.bf16.mxu0 0
        %5603 = vmatpush1.bf16.msra.mxu0 0
        %5604 = vmatprep.mubr.bf16.mxu0 0
        %5605 = vmatmul.mubr.bf16.gmra.mrb[0].mxu0 %v5567
        %v5606 = vpop.f32.mrb[0].mxu0
        %v5607 = vadd.f32 0.0, %v5606
        %v5608 = vpop.f32.mrb[0].mxu0
        %v5609 = vpop.f32.mrb[0].mxu0
        %v5610 = vadd.f32 0.0, %v5609
        %v5611 = vpop.f32.mrb[0].mxu0
        %5612 = vmatprep.mubr.bf16.mxu0 0
        %5613 = vmatmul.mubr.bf16.gmra.mrb[0].mxu0 %v5570
        %v5614 = vpop.f32.mrb[0].mxu0
        %v5615 = vadd.f32 0.0, %v5614
        %v5616 = vpop.f32.mrb[0].mxu0
        %v5617 = vpop.f32.mrb[0].mxu0
        %v5618 = vadd.f32 0.0, %v5617
        %v5619 = vpop.f32.mrb[0].mxu0
        %5620 = vdwg.mxu0
        %vm5621 = vcmp.gt.f32.partialorder %v5607, 0.0
        %vm5622 = vcmp.gt.f32.partialorder %v5610, 0.0
        %vm5623 = vcmp.gt.f32.partialorder %v5615, 0.0
        %vm5624 = vcmp.gt.f32.partialorder %v5618, 0.0
        %v5625 = vmul.f32 %v5607, 0.01
        %v5626 = vmul.f32 %v5610, 0.01
        %v5627 = vmul.f32 %v5615, 0.01
        %v5628 = vmul.f32 %v5618, 0.01
        %v5629 = vsel %vm5621, %v5607, %v5625
        %v5630 = vsel %vm5622, %v5610, %v5626
        %v5631 = vsel %vm5623, %v5615, %v5627
        %v5632 = vsel %vm5624, %v5618, %v5628
        %v5633 = vpack.c.bf16 %v5630, %v5629
        %v5634 = vpack.c.bf16 %v5632, %v5631
        %s5635 = scalar_lea.vmem %s14, 32
        %v5636 = vld [vmem:[%s5635] sm:$0xf]
        %v5637 = vld [vmem:[%s5635 + $0x4] sm:$0xf]
        %v5638 = vld [vmem:[%s5635 + $0x8] sm:$0xf]
        %v5639 = vld [vmem:[%s5635 + $0xc] sm:$0xf]
        %v5640 = vld [vmem:[%s5635 + $0x10] sm:$0xf]
        %v5641 = vld [vmem:[%s5635 + $0x14] sm:$0xf]
        %v5642 = vld [vmem:[%s5635 + $0x18] sm:$0xf]
        %v5643 = vld [vmem:[%s5635 + $0x1c] sm:$0xf]
        %v5652 = vunpack.c.l.b16 %v5636
        %v5653 = vunpack.c.l.b16 %v5637
        %v5654 = vunpack.c.l.b16 %v5638
        %v5655 = vunpack.c.l.b16 %v5639
        %v5656 = vunpack.c.l.b16 %v5640
        %v5657 = vunpack.c.l.b16 %v5641
        %v5658 = vunpack.c.l.b16 %v5642
        %v5659 = vunpack.c.l.b16 %v5643
        %v5660 = vpack.c.b16 %v5653, %v5652
        %v5661 = vpack.c.b16 %v5655, %v5654
        %v5662 = vpack.c.b16 %v5657, %v5656
        %v5663 = vpack.c.b16 %v5659, %v5658
        %v5669 = vsel %vm3173, %v5633, 0
        %v5672 = vsel %vm3173, %v5634, 0
        %5674 = vmatprep.subr.bf16.mxu0 0
        %5675 = vmatpush1.bf16.msra.mxu0 %v5660
        %5676 = vmatprep.subr.bf16.mxu0 0
        %5677 = vmatpush1.bf16.msra.mxu0 %v5661
        %5678 = vmatprep.subr.bf16.mxu0 0
        %5679 = vmatpush1.bf16.msra.mxu0 %v5662
        %5680 = vmatprep.subr.bf16.mxu0 0
        %5681 = vmatpush1.bf16.msra.mxu0 %v5663
        %5682 = vmatprep.subr.bf16.mxu0 0
        %5683 = vmatpush1.bf16.msra.mxu0 0
        %5684 = vmatprep.subr.bf16.mxu0 0
        %5685 = vmatpush1.bf16.msra.mxu0 0
        %5686 = vmatprep.subr.bf16.mxu0 0
        %5687 = vmatpush1.bf16.msra.mxu0 0
        %5688 = vmatprep.subr.bf16.mxu0 0
        %5689 = vmatpush1.bf16.msra.mxu0 0
        %5690 = vmatprep.subr.bf16.mxu0 0
        %5691 = vmatpush1.bf16.msra.mxu0 0
        %5692 = vmatprep.subr.bf16.mxu0 0
        %5693 = vmatpush1.bf16.msra.mxu0 0
        %5694 = vmatprep.subr.bf16.mxu0 0
        %5695 = vmatpush1.bf16.msra.mxu0 0
        %5696 = vmatprep.subr.bf16.mxu0 0
        %5697 = vmatpush1.bf16.msra.mxu0 0
        %5698 = vmatprep.subr.bf16.mxu0 0
        %5699 = vmatpush1.bf16.msra.mxu0 0
        %5700 = vmatprep.subr.bf16.mxu0 0
        %5701 = vmatpush1.bf16.msra.mxu0 0
        %5702 = vmatprep.subr.bf16.mxu0 0
        %5703 = vmatpush1.bf16.msra.mxu0 0
        %5704 = vmatprep.subr.bf16.mxu0 0
        %5705 = vmatpush1.bf16.msra.mxu0 0
        %5706 = vmatprep.mubr.bf16.mxu0 0
        %5707 = vmatmul.mubr.bf16.gmra.mrb[0].mxu0 %v5669
        %v5708 = vpop.f32.mrb[0].mxu0
        %v5709 = vadd.f32 0.0, %v5708
        %v5710 = vpop.f32.mrb[0].mxu0
        %v5711 = vpop.f32.mrb[0].mxu0
        %v5712 = vadd.f32 0.0, %v5711
        %v5713 = vpop.f32.mrb[0].mxu0
        %5714 = vmatprep.mubr.bf16.mxu0 0
        %5715 = vmatmul.mubr.bf16.gmra.mrb[0].mxu0 %v5672
        %v5716 = vpop.f32.mrb[0].mxu0
        %v5717 = vadd.f32 0.0, %v5716
        %v5718 = vpop.f32.mrb[0].mxu0
        %v5719 = vpop.f32.mrb[0].mxu0
        %v5720 = vadd.f32 0.0, %v5719
        %v5721 = vpop.f32.mrb[0].mxu0
        %5722 = vdwg.mxu0
        %v5723 = vadd.f32 %v5543, %v5709
        %v5724 = vadd.f32 %v5544, %v5712
        %v5725 = vadd.f32 %v5545, %v5717
        %v5726 = vadd.f32 %v5546, %v5720
        %s5727 = scalar_lea.vmem %s15, 1
        %v5728 = vld [vmem:[%s5727] sm:$0x1]
        %s5729 = scalar_lea.vmem %s16, 1
        %v5730 = vld [vmem:[%s5729] sm:$0x1]
        %v5731 = vsel %vm843, %v5723, 0.0
        %5732 = vadd.xlane.f32.xlu0 %v5731
        %v5733 = vpop.xlane.xlu0 %5732
        %v5734 = vsel %vm843, %v5724, 0.0
        %5735 = vadd.xlane.f32.xlu0 %v5734
        %v5736 = vpop.xlane.xlu0 %5735
        %v5737 = vsel %vm843, %v5725, 0.0
        %5738 = vadd.xlane.f32.xlu0 %v5737
        %v5739 = vpop.xlane.xlu0 %5738
        %v5740 = vsel %vm843, %v5726, 0.0
        %5741 = vadd.xlane.f32.xlu0 %v5740
        %v5742 = vpop.xlane.xlu0 %5741
        %v5743 = vmul.f32 %v5733, %v2993
        %v5744 = vmul.f32 %v5736, %v2993
        %v5745 = vmul.f32 %v5739, %v2993
        %v5746 = vmul.f32 %v5742, %v2993
        %v5747 = vsub.f32 %v5723, %v5743
        %v5748 = vsub.f32 %v5724, %v5744
        %v5749 = vsub.f32 %v5725, %v5745
        %v5750 = vsub.f32 %v5726, %v5746
        %v5751 = vmul.f32 %v5747, %v5747
        %v5752 = vmul.f32 %v5748, %v5748
        %v5753 = vmul.f32 %v5749, %v5749
        %v5754 = vmul.f32 %v5750, %v5750
        %v5755 = vsel %vm843, %v5751, 0.0
        %5756 = vadd.xlane.f32.xlu0 %v5755
        %v5757 = vpop.xlane.xlu0 %5756
        %v5758 = vsel %vm843, %v5752, 0.0
        %5759 = vadd.xlane.f32.xlu0 %v5758
        %v5760 = vpop.xlane.xlu0 %5759
        %v5761 = vsel %vm843, %v5753, 0.0
        %5762 = vadd.xlane.f32.xlu0 %v5761
        %v5763 = vpop.xlane.xlu0 %5762
        %v5764 = vsel %vm843, %v5754, 0.0
        %5765 = vadd.xlane.f32.xlu0 %v5764
        %v5766 = vpop.xlane.xlu0 %5765
        %v5767 = vmul.f32 %v5757, %v2993
        %v5768 = vmul.f32 %v5760, %v2993
        %v5769 = vmul.f32 %v5763, %v2993
        %v5770 = vmul.f32 %v5766, %v2993
        %v5771 = vadd.f32 %v5767, 1e-05
        %v5772 = vadd.f32 %v5768, 1e-05
        %v5773 = vadd.f32 %v5769, 1e-05
        %v5774 = vadd.f32 %v5770, 1e-05
        %v5775 = vrsqrt.pop %v5771
        %v5776 = vrsqrt.pop %v5772
        %v5777 = vrsqrt.pop %v5773
        %v5778 = vrsqrt.pop %v5774
        %v5779 = vmul.f32 %v5747, %v5775
        %v5780 = vmul.f32 %v5748, %v5776
        %v5781 = vmul.f32 %v5749, %v5777
        %v5782 = vmul.f32 %v5750, %v5778
        %v5784 = vlaneseq
        %v5785 = vshrl.u32 %v5784, 7
        %v5786 = vsub.s32 0, %v5785
        %v5787 = vrot.slane %v5728, %v5786
        %v5789 = vmul.f32 %v5779, %v5787
        %v5790 = vmul.f32 %v5780, %v5787
        %v5791 = vmul.f32 %v5781, %v5787
        %v5792 = vmul.f32 %v5782, %v5787
        %v5794 = vlaneseq
        %v5795 = vshrl.u32 %v5794, 7
        %v5796 = vsub.s32 0, %v5795
        %v5797 = vrot.slane %v5730, %v5796
        %v5799 = vadd.f32 %v5789, %v5797
        %v5800 = vadd.f32 %v5790, %v5797
        %v5801 = vadd.f32 %v5791, %v5797
        %v5802 = vadd.f32 %v5792, %v5797
        %v5803 = vpack.c.bf16 %v5800, %v5799
        %v5804 = vpack.c.bf16 %v5802, %v5801
        %v5805 = vld [vmem:[%s17] sm:$0xf]
        %v5806 = vld [vmem:[%s17 + $0x4] sm:$0xf]
        %v5807 = vld [vmem:[%s17 + $0x8] sm:$0xf]
        %v5808 = vld [vmem:[%s17 + $0xc] sm:$0xf]
        %v5809 = vld [vmem:[%s18] sm:$0x1]
        %v5811 = vlaneseq
        %v5812 = vshrl.u32 %v5811, 7
        %v5813 = vsub.s32 0, %v5812
        %v5814 = vrot.slane %v5809, %v5813
        %v5820 = vunpack.c.l.b16 %v5805
        %v5821 = vunpack.c.l.b16 %v5806
        %v5822 = vunpack.c.l.b16 %v5807
        %v5823 = vunpack.c.l.b16 %v5808
        %v5824 = vpack.c.b16 %v5821, %v5820
        %v5825 = vpack.c.b16 %v5823, %v5822
        %v5829 = vsel %vm843, %v5803, 0
        %v5832 = vsel %vm843, %v5804, 0
        %5834 = vmatprep.subr.bf16.mxu0 0
        %5835 = vmatpush1.bf16.msra.mxu0 %v5824
        %5836 = vmatprep.subr.bf16.mxu0 0
        %5837 = vmatpush1.bf16.msra.mxu0 %v5825
        %5838 = vmatprep.subr.bf16.mxu0 0
        %5839 = vmatpush1.bf16.msra.mxu0 0
        %5840 = vmatprep.subr.bf16.mxu0 0
        %5841 = vmatpush1.bf16.msra.mxu0 0
        %5842 = vmatprep.subr.bf16.mxu0 0
        %5843 = vmatpush1.bf16.msra.mxu0 0
        %5844 = vmatprep.subr.bf16.mxu0 0
        %5845 = vmatpush1.bf16.msra.mxu0 0
        %5846 = vmatprep.subr.bf16.mxu0 0
        %5847 = vmatpush1.bf16.msra.mxu0 0
        %5848 = vmatprep.subr.bf16.mxu0 0
        %5849 = vmatpush1.bf16.msra.mxu0 0
        %5850 = vmatprep.subr.bf16.mxu0 0
        %5851 = vmatpush1.bf16.msra.mxu0 0
        %5852 = vmatprep.subr.bf16.mxu0 0
        %5853 = vmatpush1.bf16.msra.mxu0 0
        %5854 = vmatprep.subr.bf16.mxu0 0
        %5855 = vmatpush1.bf16.msra.mxu0 0
        %5856 = vmatprep.subr.bf16.mxu0 0
        %5857 = vmatpush1.bf16.msra.mxu0 0
        %5858 = vmatprep.subr.bf16.mxu0 0
        %5859 = vmatpush1.bf16.msra.mxu0 0
        %5860 = vmatprep.subr.bf16.mxu0 0
        %5861 = vmatpush1.bf16.msra.mxu0 0
        %5862 = vmatprep.subr.bf16.mxu0 0
        %5863 = vmatpush1.bf16.msra.mxu0 0
        %5864 = vmatprep.subr.bf16.mxu0 0
        %5865 = vmatpush1.bf16.msra.mxu0 0
        %5866 = vmatprep.mubr.bf16.mxu0 0
        %5867 = vmatmul.mubr.bf16.gmra.mrb[0].mxu0 %v5829
        %v5868 = vpop.f32.mrb[0].mxu0
        %v5869 = vadd.f32 %v5814, %v5868
        %v5870 = vpop.f32.mrb[0].mxu0
        %v5871 = vpop.f32.mrb[0].mxu0
        %v5872 = vadd.f32 %v5814, %v5871
        %v5873 = vpop.f32.mrb[0].mxu0
        %5874 = vmatprep.mubr.bf16.mxu0 0
        %5875 = vmatmul.mubr.bf16.gmra.mrb[0].mxu0 %v5832
        %v5876 = vpop.f32.mrb[0].mxu0
        %v5877 = vadd.f32 %v5814, %v5876
        %v5878 = vpop.f32.mrb[0].mxu0
        %v5879 = vpop.f32.mrb[0].mxu0
        %v5880 = vadd.f32 %v5814, %v5879
        %v5881 = vpop.f32.mrb[0].mxu0
        %5882 = vdwg.mxu0
        %v5883 = vsel %vm637, %v721, 1.0
        %v5884 = vsel %vm637, %v728, 1.0
        %v5885 = vsel %vm637, %v735, 1.0
        %v5886 = vsel %vm637, %v742, 1.0
        %v5887 = vsel %vm637, %v667, 0.0
        %v5888 = vsel %vm637, %v668, 0.0
        %v5889 = vsel %vm637, %v669, 0.0
        %v5890 = vsel %vm637, %v670, 0.0
        %v5891 = vlaneseq
        %v5892 = vshrl.u32 %v5891, 7
        %v5893 = vsub.s32 0, %v5892
        %v5894 = vrot.slane %v5883, %v5893
        %v5895 = vlaneseq
        %v5896 = vshrl.u32 %v5895, 7
        %v5897 = vsub.s32 0, %v5896
        %v5898 = vrot.slane %v5884, %v5897
        %v5899 = vlaneseq
        %v5900 = vshrl.u32 %v5899, 7
        %v5901 = vsub.s32 0, %v5900
        %v5902 = vrot.slane %v5885, %v5901
        %v5903 = vlaneseq
        %v5904 = vshrl.u32 %v5903, 7
        %v5905 = vsub.s32 0, %v5904
        %v5906 = vrot.slane %v5886, %v5905
        %v5907 = vmul.f32 %v5869, %v5894
        %v5908 = vmul.f32 %v5872, %v5898
        %v5909 = vmul.f32 %v5877, %v5902
        %v5910 = vmul.f32 %v5880, %v5906
        %v5911 = vlaneseq
        %v5912 = vshrl.u32 %v5911, 7
        %v5913 = vsub.s32 0, %v5912
        %v5914 = vrot.slane %v5887, %v5913
        %v5915 = vlaneseq
        %v5916 = vshrl.u32 %v5915, 7
        %v5917 = vsub.s32 0, %v5916
        %v5918 = vrot.slane %v5888, %v5917
        %v5919 = vlaneseq
        %v5920 = vshrl.u32 %v5919, 7
        %v5921 = vsub.s32 0, %v5920
        %v5922 = vrot.slane %v5889, %v5921
        %v5923 = vlaneseq
        %v5924 = vshrl.u32 %v5923, 7
        %v5925 = vsub.s32 0, %v5924
        %v5926 = vrot.slane %v5890, %v5925
        %v5927 = vadd.f32 %v5907, %v5914
        %v5928 = vadd.f32 %v5908, %v5918
        %v5929 = vadd.f32 %v5909, %v5922
        %v5930 = vadd.f32 %v5910, %v5926
        %5931 = vst [vmem:[%s624] sm:$0xff] %v5927
        %5932 = vst [vmem:[%s624 + $0x8] sm:$0xff] %v5928
        %5933 = vst [vmem:[%s624 + $0x10] sm:$0xff] %v5929
        %5934 = vst [vmem:[%s624 + $0x18] sm:$0xff] %v5930
        %s5935 = sand.u32 %s447, 1
        %s5936 = scalar_lea.sflag [#allocation4], %s5935
        %s5937 = sand.u32 %s447, 1
        %s5938 = smul.addr %s5937, 32
        %s5939 = scalar_lea.vmem [#allocation7], %s5938
        // Predicated region
        $region105: #{tpu_custom_call.1} parent=95 // pred_check
          %p5940 = pneg %p457
        $region106: #{tpu_custom_call.1} parent=95 // pred_check_branch
          %5942 = sbr.rel (%p5940) target = $region108
        $region107: #{tpu_custom_call.1} parent=95 // pred_region
          %s5943 = smul.u32 4, %s35
          %s5945 = ssub.s32 512, 512
          %5946 = vsyncadd %s5936, %s5945
          %s5947 = smul.addr %s5943, 128
          %s5948 = scalar_lea.hbm %s19, %s5947
          %s5949 = sshll.u32 %s5939, 4
          %s5950 = int_to_ptr.vmem [resolvable:$true] %s5949
          %5955 = dma.vmem_to_hbm [thread:$0]  %s5950, 512, %s5948, %s5936, 128, 128, 8
        $region108: #{tpu_custom_call.1} parent=95 // pred_fallthru
          _
      $region96: #{tpu_custom_call.1} parent=5 // pred_fallthru
        _
      %p5956 = scmp.le.s32.totalorder 2, %s30
      // Predicated region
      $region109: #{tpu_custom_call.1} parent=5 // pred_check
        %p5957 = pneg %p5956
      $region110: #{tpu_custom_call.1} parent=5 // pred_check_branch
        %5959 = sbr.rel (%p5957) target = $region112
      $region111: #{tpu_custom_call.1} parent=5 // pred_region
        %s5960 = ssub.s32 %s30, 2
        // Predicated region
        $region113: #{tpu_custom_call.1} parent=111 // pred_check
          %p5961 = pneg %p463
        $region114: #{tpu_custom_call.1} parent=111 // pred_check_branch
          %5963 = sbr.rel (%p5961) target = $region116
        $region115: #{tpu_custom_call.1} parent=111 // pred_region
          %s5964 = sand.u32 %s448, 1
          %s5965 = scalar_lea.sflag [#allocation4], %s5964
          %s5966 = sand.u32 %s448, 1
          %s5967 = smul.addr %s5966, 32
          %s5968 = scalar_lea.vmem [#allocation7], %s5967
          %5969 = dma.done %s5965, 512
        $region116: #{tpu_custom_call.1} parent=111 // pred_fallthru
          _
      $region112: #{tpu_custom_call.1} parent=5 // pred_fallthru
        _
    $region6: #{tpu_custom_call.1} parent=1 // loop_footer
      %s34 = sadd.s32 1, %s30
    $region7: #{tpu_custom_call.1} parent=1 // loop_footer_branch
      %29 = sbr.rel target = $region3
    $region8: #{tpu_custom_call.1} parent=1 // loop_exit
      _
    %5970 = vsyncpa [#allocation3], 1
    %s5971 = scalar_lea.sflag [#allocation3], 1
    %5972 = vsyncpa %s5971, 1
    %5973 = vsyncpa [#allocation6], 1
    %5974 = vsyncpa [#allocation4], 1
    %s5975 = scalar_lea.sflag [#allocation4], 1
    %5976 = vsyncpa %s5975, 1

</llo_original>
